<compile_context>
chip_gen: v6e
topology: v6e:2x2x1
jax: 0.10.0
libtpu: 0.0.40
codegen_flags: <defaults>
</compile_context>

<pallas_src>
import math
from functools import partial

import jax
import jax.numpy as jnp
from jax import lax
from jax.experimental import pallas as pl
from jax.experimental.pallas import tpu as pltpu


def _round_up(x, m):
    return ((x + m - 1) // m) * m


def _make_fused_kernel(num_layers, T, B_tile, num_act):
    """Build the fused decoder kernel for static (num_layers, T, B_tile)."""

    def kernel(*refs):
        z_ref = refs[0]                                  # [B_tile, P]        f32
        w_refs = refs[1:1 + 3 * num_layers]              # wih/whh (bf16), b (f32)
        y_ref = refs[1 + 3 * num_layers]                 # [T, B_tile, P]     f32
        scratch = refs[2 + 3 * num_layers:]
        acts = scratch[:num_act]                         # [T*B_tile, P]      f32
        xp_scr = scratch[num_act]                        # [xp_rows, 4P]      f32
        P = z_ref.shape[-1]

        def run_layer(li, src_ref):
            wih = w_refs[3 * li]
            whh = w_refs[3 * li + 1]
            b = w_refs[3 * li + 2]
            is_last = (li == num_layers - 1)
            dst = None if is_last else acts[li % max(num_act, 1)]

            # ---- input projection, hoisted out of the serial recurrence ----
            if li == 0:
                # Layer 0's input (z) is constant across time: project once,
                # park in VMEM, re-load per step (bounds the live range).
                xp_scr[pl.ds(0, B_tile), :] = (
                    jnp.dot(z_ref[...].astype(jnp.bfloat16), wih[...],
                            preferred_element_type=jnp.float32) + b[...])
            else:
                # One big [T*B, P] @ [P, 4P] bf16 MXU matmul for all timesteps.
                xp_scr[...] = (
                    jnp.dot(src_ref[...].astype(jnp.bfloat16), wih[...],
                            preferred_element_type=jnp.float32) + b[...])

            # ---- serial recurrence over time ----
            def step(t, carry):
                h, c = carry
                if li == 0:
                    xp = xp_scr[pl.ds(0, B_tile), :]
                else:
                    off = pl.multiple_of(t * B_tile, B_tile)
                    xp = xp_scr[pl.ds(off, B_tile), :]
                gates = xp + jnp.dot(h.astype(jnp.bfloat16), whh[...],
                                     preferred_element_type=jnp.float32)
                # Packed band order (i, f, o, g): one fused sigmoid on [B, 3P],
                # tanh on the trailing [B, P] band.
                sig = jax.nn.sigmoid(gates[:, :3 * P])
                g = jnp.tanh(gates[:, 3 * P:])
                c_new = sig[:, P:2 * P] * c + sig[:, :P] * g
                h_new = sig[:, 2 * P:3 * P] * jnp.tanh(c_new)
                if is_last:
                    y_ref[t] = h_new                          # lane-dense store
                else:
                    off_w = pl.multiple_of(t * B_tile, B_tile)
                    dst[pl.ds(off_w, B_tile), :] = h_new      # lane-dense store
                return h_new, c_new

            h0 = jnp.zeros((B_tile, P), jnp.float32)
            c0 = jnp.zeros((B_tile, P), jnp.float32)
            lax.fori_loop(0, T, step, (h0, c0), unroll=True)
            return dst

        src = None
        for li in range(num_layers):                     # static unroll over layers
            src = run_layer(li, src)

    return kernel


def _pack_layer(w_ih, w_hh, b_ih, b_hh, P):
    """Pad + transpose one LSTM layer's params to lane-aligned bf16 blocks.

    PyTorch layout: w_ih [4H, Din], w_hh [4H, H], gate order (i, f, g, o).
    Packed band order is (i, f, o, g) so the kernel can fuse the 3 sigmoids.
    Returns wih_p [P, 4P] bf16, whh_p [P, 4P] bf16, b_p [1, 4P] f32.  Each gate
    occupies a full P-wide (128-aligned) band with real values in the first H
    lanes and zeros elsewhere; zero padding keeps padded h/c lanes exactly 0
    and also realizes the per-module `input[:, :, :input_size]` slicing.
    """
    H = w_hh.shape[1]
    Din = w_ih.shape[1]
    wt_ih = jnp.asarray(w_ih, jnp.float32).T            # [Din, 4H]
    wt_hh = jnp.asarray(w_hh, jnp.float32).T            # [H,   4H]
    bsum = (b_ih + b_hh).astype(jnp.float32)             # [4H]
    wih_p = jnp.zeros((P, 4 * P), jnp.float32)
    whh_p = jnp.zeros((P, 4 * P), jnp.float32)
    b_p = jnp.zeros((1, 4 * P), jnp.float32)
    perm = (0, 1, 3, 2)                                   # pytorch gate per packed band
    for band, g in enumerate(perm):
        wih_p = wih_p.at[:Din, band * P:band * P + H].set(wt_ih[:, g * H:(g + 1) * H])
        whh_p = whh_p.at[:H, band * P:band * P + H].set(wt_hh[:, g * H:(g + 1) * H])
        b_p = b_p.at[:, band * P:band * P + H].set(bsum[g * H:(g + 1) * H])
    return wih_p.astype(jnp.bfloat16), whh_p.astype(jnp.bfloat16), b_p


@partial(jax.jit, static_argnums=(2,))
def aernn_dec_forward(params, z, seqlen):
    """AERNNNetDec.forward: z [B, code_dim] -> [B, freqlen, seqlen]."""
    B, code_dim = z.shape
    T = seqlen
    flat = [layer for module in params for layer in module]
    hidden_dims = [layer['w_hh'].shape[1] for layer in flat]
    H_last = hidden_dims[-1]                              # == freqlen
    P = _round_up(max([code_dim] + hidden_dims), 128)
    num_layers = len(flat)

    # Sublane-pad batch to a multiple of 8 and tile it over a (parallel) grid.
    B8 = _round_up(B, 8)
    B_tile = min(B8, 32)
    B_pad = _round_up(B8, B_tile)
    num_tiles = B_pad // B_tile

    packed = []
    for layer in flat:
        packed += list(_pack_layer(layer['w_ih'], layer['w_hh'],
                                   layer['b_ih'], layer['b_hh'], P))

    z_p = jnp.zeros((B_pad, P), jnp.float32).at[:B, :code_dim].set(
        z.astype(jnp.float32))

    num_act = 0 if num_layers == 1 else (1 if num_layers == 2 else 2)
    xp_rows = B_tile if num_layers == 1 else T * B_tile

    # VMEM budget: bf16 weights + f32 bias (2 bufs worst case), double-buffered
    # z / out blocks, activation + x-projection scratch; headroom, clamped to
    # the smallest physical VMEM (v7x: 64 MiB).
    wbytes = num_layers * (2 * (P * 4 * P) * 2 + 4 * P * 4)
    iobytes = 2 * (B_tile * P * 4 + T * B_tile * P * 4)
    sbytes = num_act * T * B_tile * P * 4 + xp_rows * 4 * P * 4
    vmem_limit = int(min(max(2 * (wbytes + iobytes + sbytes) + (4 << 20),
                             32 << 20), 64 << 20))

    kernel = _make_fused_kernel(num_layers, T, B_tile, num_act)

    def _full(shape):
        return pl.BlockSpec(shape, lambda b, _n=len(shape): (0,) * _n)

    w_specs = []
    for _ in range(num_layers):
        w_specs += [_full((P, 4 * P)), _full((P, 4 * P)), _full((1, 4 * P))]

    y = pl.pallas_call(
        kernel,
        out_shape=jax.ShapeDtypeStruct((T, B_pad, P), jnp.float32),
        grid=(num_tiles,),
        in_specs=[pl.BlockSpec((B_tile, P), lambda b: (b, 0))] + w_specs,
        out_specs=pl.BlockSpec((T, B_tile, P), lambda b: (0, b, 0)),
        scratch_shapes=[pltpu.VMEM((T * B_tile, P), jnp.float32)] * num_act
                       + [pltpu.VMEM((xp_rows, 4 * P), jnp.float32)],
        compiler_params=pltpu.CompilerParams(
            dimension_semantics=("parallel",),
            vmem_limit_bytes=vmem_limit),
    )(z_p, *packed)

    # [T, B_pad, P] -> [T, B, H_last] -> [B, H_last, T]  (== out.permute(0, 2, 1))
    y = y[:, :B, :H_last]
    return jnp.transpose(y, (1, 2, 0))


def init_decoder_params(key, code_dim, freqlen, rnn_dims, stacked_layers_nums):
    """Deterministic init mirroring nn.LSTM: U(-1/sqrt(H), 1/sqrt(H))."""
    dims = [code_dim] + rnn_dims[::-1] + [freqlen]        # self.RNN_dims
    modules = []
    for li in range(len(dims) - 1):
        in_size, hidden = dims[li], dims[li + 1]
        stdv = 1.0 / math.sqrt(hidden)
        layers = []
        for s in range(stacked_layers_nums):
            lin = in_size if s == 0 else hidden
            key, k1, k2, k3, k4 = jax.random.split(key, 5)
            layers.append(dict(
                w_ih=jax.random.uniform(k1, (4 * hidden, lin), jnp.float32, -stdv, stdv),
                w_hh=jax.random.uniform(k2, (4 * hidden, hidden), jnp.float32, -stdv, stdv),
                b_ih=jax.random.uniform(k3, (4 * hidden,), jnp.float32, -stdv, stdv),
                b_hh=jax.random.uniform(k4, (4 * hidden,), jnp.float32, -stdv, stdv),
            ))
        modules.append(layers)
    return modules


# ----------------------- pure-JAX f32 reference (for checking) -----------------------
def _lstm_layer_ref(x_tm, w_ih, w_hh, b_ih, b_hh):
    T, B, _ = x_tm.shape
    H = w_hh.shape[1]

    def step(carry, x_t):
        h, c = carry
        gates = x_t @ w_ih.T + h @ w_hh.T + b_ih + b_hh
        i, f, g, o = jnp.split(gates, 4, axis=-1)
        c = jax.nn.sigmoid(f) * c + jax.nn.sigmoid(i) * jnp.tanh(g)
        h = jax.nn.sigmoid(o) * jnp.tanh(c)
        return (h, c), h

    init = (jnp.zeros((B, H), jnp.float32), jnp.zeros((B, H), jnp.float32))
    _, ys = lax.scan(step, init, x_tm)
    return ys


def aernn_dec_ref(params, z, seqlen):
    B, code_dim = z.shape
    x_tm = jnp.transpose(jnp.broadcast_to(z[:, None, :], (B, seqlen, code_dim)),
                         (1, 0, 2))
    for module in params:
        x_tm = x_tm[:, :, :module[0]['w_ih'].shape[1]]
        for layer in module:
            x_tm = _lstm_layer_ref(x_tm, layer['w_ih'], layer['w_hh'],
                                   layer['b_ih'], layer['b_hh'])
    return jnp.transpose(x_tm, (1, 2, 0))


if __name__ == "__main__":
    # Small config: freqlen=16, seqlen=8, hidden_size(code)=32, RNN_dims=[24],
    # stacked_layers_nums=2  ->  self.RNN_dims = [32, 24, 16] (4 LSTM layers).
    B, code_dim, seqlen, freqlen = 2, 32, 8, 16
    rnn_dims = [24]
    stacked_layers_nums = 2

    key = jax.random.PRNGKey(0)
    key, kz, kp = jax.random.split(key, 3)
    z = jax.random.normal(kz, (B, code_dim), jnp.float32)
    params = init_decoder_params(kp, code_dim, freqlen, rnn_dims, stacked_layers_nums)

    out = jax.block_until_ready(aernn_dec_forward(params, z, seqlen))
    assert out.shape == (B, freqlen, seqlen), out.shape

    ref = jax.block_until_ready(aernn_dec_ref(params, z, seqlen))
    err = float(jnp.abs(out - ref).max())
    # bf16 matmul operands (f32 accumulation) -> relaxed tolerance vs f32 reference.
    assert jnp.allclose(out, ref, atol=2e-2, rtol=2e-2), err

    print("KERNEL_OK")
</pallas_src>

<mosaic_0001>
module attributes {stable_mosaic.version = 11 : i64} {
  func.func @kernel(%arg0: i32, %arg1: memref<8x128xf32, #tpu.memory_space<vmem>>, %arg2: memref<128x512xbf16, #tpu.memory_space<vmem>>, %arg3: memref<128x512xbf16, #tpu.memory_space<vmem>>, %arg4: memref<1x512xf32, #tpu.memory_space<vmem>>, %arg5: memref<128x512xbf16, #tpu.memory_space<vmem>>, %arg6: memref<128x512xbf16, #tpu.memory_space<vmem>>, %arg7: memref<1x512xf32, #tpu.memory_space<vmem>>, %arg8: memref<128x512xbf16, #tpu.memory_space<vmem>>, %arg9: memref<128x512xbf16, #tpu.memory_space<vmem>>, %arg10: memref<1x512xf32, #tpu.memory_space<vmem>>, %arg11: memref<128x512xbf16, #tpu.memory_space<vmem>>, %arg12: memref<128x512xbf16, #tpu.memory_space<vmem>>, %arg13: memref<1x512xf32, #tpu.memory_space<vmem>>, %arg14: memref<8x8x128xf32, #tpu.memory_space<vmem>>, %arg15: memref<64x128xf32, #tpu.memory_space<vmem>>, %arg16: memref<64x128xf32, #tpu.memory_space<vmem>>, %arg17: memref<64x512xf32, #tpu.memory_space<vmem>>) attributes {dimension_semantics = [#tpu.dimension_semantics<parallel>], iteration_bounds = array<i64: 1>, scalar_prefetch = 0 : i64, scratch_operands = 3 : i64, tpu.core_type = #tpu.core_type<tc>, window_params = [{transform_indices = @transform_0, window_bounds = array<i64: 8, 128>}, {pipeline_mode = #tpu.pipeline_mode<synchronous>, transform_indices = @transform_1, window_bounds = array<i64: 128, 512>}, {pipeline_mode = #tpu.pipeline_mode<synchronous>, transform_indices = @transform_2, window_bounds = array<i64: 128, 512>}, {pipeline_mode = #tpu.pipeline_mode<synchronous>, transform_indices = @transform_3, window_bounds = array<i64: 1, 512>}, {pipeline_mode = #tpu.pipeline_mode<synchronous>, transform_indices = @transform_4, window_bounds = array<i64: 128, 512>}, {pipeline_mode = #tpu.pipeline_mode<synchronous>, transform_indices = @transform_5, window_bounds = array<i64: 128, 512>}, {pipeline_mode = #tpu.pipeline_mode<synchronous>, transform_indices = @transform_6, window_bounds = array<i64: 1, 512>}, {pipeline_mode = #tpu.pipeline_mode<synchronous>, transform_indices = @transform_7, window_bounds = array<i64: 128, 512>}, {pipeline_mode = #tpu.pipeline_mode<synchronous>, transform_indices = @transform_8, window_bounds = array<i64: 128, 512>}, {pipeline_mode = #tpu.pipeline_mode<synchronous>, transform_indices = @transform_9, window_bounds = array<i64: 1, 512>}, {pipeline_mode = #tpu.pipeline_mode<synchronous>, transform_indices = @transform_10, window_bounds = array<i64: 128, 512>}, {pipeline_mode = #tpu.pipeline_mode<synchronous>, transform_indices = @transform_11, window_bounds = array<i64: 128, 512>}, {pipeline_mode = #tpu.pipeline_mode<synchronous>, transform_indices = @transform_12, window_bounds = array<i64: 1, 512>}, {transform_indices = @transform_13, window_bounds = array<i64: 8, 8, 128>}]} {
    %c0 = arith.constant 0 : index
    %c0_0 = arith.constant 0 : index
    %0 = vector.load %arg1[%c0, %c0_0] : memref<8x128xf32, #tpu.memory_space<vmem>>, vector<8x128xf32>
    %1 = arith.truncf %0 : vector<8x128xf32> to vector<8x128xbf16>
    %c0_1 = arith.constant 0 : index
    %c0_2 = arith.constant 0 : index
    %2 = vector.load %arg2[%c0_1, %c0_2] : memref<128x512xbf16, #tpu.memory_space<vmem>>, vector<128x512xbf16>
    %cst = arith.constant dense<0.000000e+00> : vector<8x512xf32>
    %3 = tpu.matmul %1, %2, %cst {dimension_numbers = #tpu.dot_dimension_numbers<[1], [0], [0], [1], [0, 0, 1, 1], [], []>} : vector<8x128xbf16>, vector<128x512xbf16>, vector<8x512xf32> -> vector<8x512xf32>
    %c0_3 = arith.constant 0 : index
    %c0_4 = arith.constant 0 : index
    %4 = vector.load %arg4[%c0_3, %c0_4] : memref<1x512xf32, #tpu.memory_space<vmem>>, vector<1x512xf32>
    %5 = vector.broadcast %4 : vector<1x512xf32> to vector<8x512xf32>
    %6 = arith.addf %3, %5 : vector<8x512xf32>
    %c0_5 = arith.constant 0 : index
    %c0_6 = arith.constant 0 : index
    %7 = vector.load %arg17[%c0_5, %c0_6] : memref<64x512xf32, #tpu.memory_space<vmem>>, vector<8x512xf32>
    tpu.vector_store %arg17[%c0_5, %c0_6], %6 {strides = array<i32>} : memref<64x512xf32, #tpu.memory_space<vmem>>, vector<8x512xf32>,
    %cst_7 = arith.constant 0.000000e+00 : f32
    %8 = vector.broadcast %cst_7 : f32 to vector<8x128xf32>
    %cst_8 = arith.constant 0.000000e+00 : f32
    %9 = vector.broadcast %cst_8 : f32 to vector<8x128xf32>
    %c0_i32 = arith.constant 0 : i32
    %c0_9 = arith.constant 0 : index
    %c0_10 = arith.constant 0 : index
    %10 = vector.load %arg17[%c0_9, %c0_10] : memref<64x512xf32, #tpu.memory_space<vmem>>, vector<8x512xf32>
    %11 = arith.truncf %8 : vector<8x128xf32> to vector<8x128xbf16>
    %c0_11 = arith.constant 0 : index
    %c0_12 = arith.constant 0 : index
    %12 = vector.load %arg3[%c0_11, %c0_12] : memref<128x512xbf16, #tpu.memory_space<vmem>>, vector<128x512xbf16>
    %cst_13 = arith.constant dense<0.000000e+00> : vector<8x512xf32>
    %13 = tpu.matmul %11, %12, %cst_13 {dimension_numbers = #tpu.dot_dimension_numbers<[1], [0], [0], [1], [0, 0, 1, 1], [], []>} : vector<8x128xbf16>, vector<128x512xbf16>, vector<8x512xf32> -> vector<8x512xf32>
    %14 = arith.addf %10, %13 : vector<8x512xf32>
    %15 = vector.extract_strided_slice %14 {offsets = [0, 0], sizes = [8, 384], strides = [1, 1]} : vector<8x512xf32> to vector<8x384xf32>
    %16 = arith.negf %15 : vector<8x384xf32>
    %17 = math.exp %16 : vector<8x384xf32>
    %cst_14 = arith.constant 1.000000e+00 : f32
    %18 = vector.broadcast %cst_14 : f32 to vector<8x384xf32>
    %19 = arith.addf %18, %17 : vector<8x384xf32>
    %20 = arith.divf %18, %19 : vector<8x384xf32>
    %21 = vector.extract_strided_slice %14 {offsets = [0, 384], sizes = [8, 128], strides = [1, 1]} : vector<8x512xf32> to vector<8x128xf32>
    %22 = math.tanh %21 : vector<8x128xf32>
    %23 = vector.extract_strided_slice %20 {offsets = [0, 128], sizes = [8, 128], strides = [1, 1]} : vector<8x384xf32> to vector<8x128xf32>
    %24 = arith.mulf %23, %9 : vector<8x128xf32>
    %25 = vector.extract_strided_slice %20 {offsets = [0, 0], sizes = [8, 128], strides = [1, 1]} : vector<8x384xf32> to vector<8x128xf32>
    %26 = arith.mulf %25, %22 : vector<8x128xf32>
    %27 = arith.addf %24, %26 : vector<8x128xf32>
    %28 = vector.extract_strided_slice %20 {offsets = [0, 256], sizes = [8, 128], strides = [1, 1]} : vector<8x384xf32> to vector<8x128xf32>
    %29 = math.tanh %27 : vector<8x128xf32>
    %30 = arith.mulf %28, %29 : vector<8x128xf32>
    %c8_i32 = arith.constant 8 : i32
    %31 = arith.muli %c0_i32, %c8_i32 : i32
    %32 = tpu.assume_multiple %31, 8 : i32
    %33 = arith.index_cast %32 : i32 to index
    %c0_15 = arith.constant 0 : index
    %34 = vector.load %arg15[%33, %c0_15] : memref<64x128xf32, #tpu.memory_space<vmem>>, vector<8x128xf32>
    tpu.vector_store %arg15[%33, %c0_15], %30 {strides = array<i32>} : memref<64x128xf32, #tpu.memory_space<vmem>>, vector<8x128xf32>,
    %c1_i32 = arith.constant 1 : i32
    %c0_16 = arith.constant 0 : index
    %c0_17 = arith.constant 0 : index
    %35 = vector.load %arg17[%c0_16, %c0_17] : memref<64x512xf32, #tpu.memory_space<vmem>>, vector<8x512xf32>
    %36 = arith.truncf %30 : vector<8x128xf32> to vector<8x128xbf16>
    %c0_18 = arith.constant 0 : index
    %c0_19 = arith.constant 0 : index
    %37 = vector.load %arg3[%c0_18, %c0_19] : memref<128x512xbf16, #tpu.memory_space<vmem>>, vector<128x512xbf16>
    %cst_20 = arith.constant dense<0.000000e+00> : vector<8x512xf32>
    %38 = tpu.matmul %36, %37, %cst_20 {dimension_numbers = #tpu.dot_dimension_numbers<[1], [0], [0], [1], [0, 0, 1, 1], [], []>} : vector<8x128xbf16>, vector<128x512xbf16>, vector<8x512xf32> -> vector<8x512xf32>
    %39 = arith.addf %35, %38 : vector<8x512xf32>
    %40 = vector.extract_strided_slice %39 {offsets = [0, 0], sizes = [8, 384], strides = [1, 1]} : vector<8x512xf32> to vector<8x384xf32>
    %41 = arith.negf %40 : vector<8x384xf32>
    %42 = math.exp %41 : vector<8x384xf32>
    %cst_21 = arith.constant 1.000000e+00 : f32
    %43 = vector.broadcast %cst_21 : f32 to vector<8x384xf32>
    %44 = arith.addf %43, %42 : vector<8x384xf32>
    %45 = arith.divf %43, %44 : vector<8x384xf32>
    %46 = vector.extract_strided_slice %39 {offsets = [0, 384], sizes = [8, 128], strides = [1, 1]} : vector<8x512xf32> to vector<8x128xf32>
    %47 = math.tanh %46 : vector<8x128xf32>
    %48 = vector.extract_strided_slice %45 {offsets = [0, 128], sizes = [8, 128], strides = [1, 1]} : vector<8x384xf32> to vector<8x128xf32>
    %49 = arith.mulf %48, %27 : vector<8x128xf32>
    %50 = vector.extract_strided_slice %45 {offsets = [0, 0], sizes = [8, 128], strides = [1, 1]} : vector<8x384xf32> to vector<8x128xf32>
    %51 = arith.mulf %50, %47 : vector<8x128xf32>
    %52 = arith.addf %49, %51 : vector<8x128xf32>
    %53 = vector.extract_strided_slice %45 {offsets = [0, 256], sizes = [8, 128], strides = [1, 1]} : vector<8x384xf32> to vector<8x128xf32>
    %54 = math.tanh %52 : vector<8x128xf32>
    %55 = arith.mulf %53, %54 : vector<8x128xf32>
    %c8_i32_22 = arith.constant 8 : i32
    %56 = arith.muli %c1_i32, %c8_i32_22 : i32
    %57 = tpu.assume_multiple %56, 8 : i32
    %58 = arith.index_cast %57 : i32 to index
    %c0_23 = arith.constant 0 : index
    %59 = vector.load %arg15[%58, %c0_23] : memref<64x128xf32, #tpu.memory_space<vmem>>, vector<8x128xf32>
    tpu.vector_store %arg15[%58, %c0_23], %55 {strides = array<i32>} : memref<64x128xf32, #tpu.memory_space<vmem>>, vector<8x128xf32>,
    %c2_i32 = arith.constant 2 : i32
    %c0_24 = arith.constant 0 : index
    %c0_25 = arith.constant 0 : index
    %60 = vector.load %arg17[%c0_24, %c0_25] : memref<64x512xf32, #tpu.memory_space<vmem>>, vector<8x512xf32>
    %61 = arith.truncf %55 : vector<8x128xf32> to vector<8x128xbf16>
    %c0_26 = arith.constant 0 : index
    %c0_27 = arith.constant 0 : index
    %62 = vector.load %arg3[%c0_26, %c0_27] : memref<128x512xbf16, #tpu.memory_space<vmem>>, vector<128x512xbf16>
    %cst_28 = arith.constant dense<0.000000e+00> : vector<8x512xf32>
    %63 = tpu.matmul %61, %62, %cst_28 {dimension_numbers = #tpu.dot_dimension_numbers<[1], [0], [0], [1], [0, 0, 1, 1], [], []>} : vector<8x128xbf16>, vector<128x512xbf16>, vector<8x512xf32> -> vector<8x512xf32>
    %64 = arith.addf %60, %63 : vector<8x512xf32>
    %65 = vector.extract_strided_slice %64 {offsets = [0, 0], sizes = [8, 384], strides = [1, 1]} : vector<8x512xf32> to vector<8x384xf32>
    %66 = arith.negf %65 : vector<8x384xf32>
    %67 = math.exp %66 : vector<8x384xf32>
    %cst_29 = arith.constant 1.000000e+00 : f32
    %68 = vector.broadcast %cst_29 : f32 to vector<8x384xf32>
    %69 = arith.addf %68, %67 : vector<8x384xf32>
    %70 = arith.divf %68, %69 : vector<8x384xf32>
    %71 = vector.extract_strided_slice %64 {offsets = [0, 384], sizes = [8, 128], strides = [1, 1]} : vector<8x512xf32> to vector<8x128xf32>
    %72 = math.tanh %71 : vector<8x128xf32>
    %73 = vector.extract_strided_slice %70 {offsets = [0, 128], sizes = [8, 128], strides = [1, 1]} : vector<8x384xf32> to vector<8x128xf32>
    %74 = arith.mulf %73, %52 : vector<8x128xf32>
    %75 = vector.extract_strided_slice %70 {offsets = [0, 0], sizes = [8, 128], strides = [1, 1]} : vector<8x384xf32> to vector<8x128xf32>
    %76 = arith.mulf %75, %72 : vector<8x128xf32>
    %77 = arith.addf %74, %76 : vector<8x128xf32>
    %78 = vector.extract_strided_slice %70 {offsets = [0, 256], sizes = [8, 128], strides = [1, 1]} : vector<8x384xf32> to vector<8x128xf32>
    %79 = math.tanh %77 : vector<8x128xf32>
    %80 = arith.mulf %78, %79 : vector<8x128xf32>
    %c8_i32_30 = arith.constant 8 : i32
    %81 = arith.muli %c2_i32, %c8_i32_30 : i32
    %82 = tpu.assume_multiple %81, 8 : i32
    %83 = arith.index_cast %82 : i32 to index
    %c0_31 = arith.constant 0 : index
    %84 = vector.load %arg15[%83, %c0_31] : memref<64x128xf32, #tpu.memory_space<vmem>>, vector<8x128xf32>
    tpu.vector_store %arg15[%83, %c0_31], %80 {strides = array<i32>} : memref<64x128xf32, #tpu.memory_space<vmem>>, vector<8x128xf32>,
    %c3_i32 = arith.constant 3 : i32
    %c0_32 = arith.constant 0 : index
    %c0_33 = arith.constant 0 : index
    %85 = vector.load %arg17[%c0_32, %c0_33] : memref<64x512xf32, #tpu.memory_space<vmem>>, vector<8x512xf32>
    %86 = arith.truncf %80 : vector<8x128xf32> to vector<8x128xbf16>
    %c0_34 = arith.constant 0 : index
    %c0_35 = arith.constant 0 : index
    %87 = vector.load %arg3[%c0_34, %c0_35] : memref<128x512xbf16, #tpu.memory_space<vmem>>, vector<128x512xbf16>
    %cst_36 = arith.constant dense<0.000000e+00> : vector<8x512xf32>
    %88 = tpu.matmul %86, %87, %cst_36 {dimension_numbers = #tpu.dot_dimension_numbers<[1], [0], [0], [1], [0, 0, 1, 1], [], []>} : vector<8x128xbf16>, vector<128x512xbf16>, vector<8x512xf32> -> vector<8x512xf32>
    %89 = arith.addf %85, %88 : vector<8x512xf32>
    %90 = vector.extract_strided_slice %89 {offsets = [0, 0], sizes = [8, 384], strides = [1, 1]} : vector<8x512xf32> to vector<8x384xf32>
    %91 = arith.negf %90 : vector<8x384xf32>
    %92 = math.exp %91 : vector<8x384xf32>
    %cst_37 = arith.constant 1.000000e+00 : f32
    %93 = vector.broadcast %cst_37 : f32 to vector<8x384xf32>
    %94 = arith.addf %93, %92 : vector<8x384xf32>
    %95 = arith.divf %93, %94 : vector<8x384xf32>
    %96 = vector.extract_strided_slice %89 {offsets = [0, 384], sizes = [8, 128], strides = [1, 1]} : vector<8x512xf32> to vector<8x128xf32>
    %97 = math.tanh %96 : vector<8x128xf32>
    %98 = vector.extract_strided_slice %95 {offsets = [0, 128], sizes = [8, 128], strides = [1, 1]} : vector<8x384xf32> to vector<8x128xf32>
    %99 = arith.mulf %98, %77 : vector<8x128xf32>
    %100 = vector.extract_strided_slice %95 {offsets = [0, 0], sizes = [8, 128], strides = [1, 1]} : vector<8x384xf32> to vector<8x128xf32>
    %101 = arith.mulf %100, %97 : vector<8x128xf32>
    %102 = arith.addf %99, %101 : vector<8x128xf32>
    %103 = vector.extract_strided_slice %95 {offsets = [0, 256], sizes = [8, 128], strides = [1, 1]} : vector<8x384xf32> to vector<8x128xf32>
    %104 = math.tanh %102 : vector<8x128xf32>
    %105 = arith.mulf %103, %104 : vector<8x128xf32>
    %c8_i32_38 = arith.constant 8 : i32
    %106 = arith.muli %c3_i32, %c8_i32_38 : i32
    %107 = tpu.assume_multiple %106, 8 : i32
    %108 = arith.index_cast %107 : i32 to index
    %c0_39 = arith.constant 0 : index
    %109 = vector.load %arg15[%108, %c0_39] : memref<64x128xf32, #tpu.memory_space<vmem>>, vector<8x128xf32>
    tpu.vector_store %arg15[%108, %c0_39], %105 {strides = array<i32>} : memref<64x128xf32, #tpu.memory_space<vmem>>, vector<8x128xf32>,
    %c4_i32 = arith.constant 4 : i32
    %c0_40 = arith.constant 0 : index
    %c0_41 = arith.constant 0 : index
    %110 = vector.load %arg17[%c0_40, %c0_41] : memref<64x512xf32, #tpu.memory_space<vmem>>, vector<8x512xf32>
    %111 = arith.truncf %105 : vector<8x128xf32> to vector<8x128xbf16>
    %c0_42 = arith.constant 0 : index
    %c0_43 = arith.constant 0 : index
    %112 = vector.load %arg3[%c0_42, %c0_43] : memref<128x512xbf16, #tpu.memory_space<vmem>>, vector<128x512xbf16>
    %cst_44 = arith.constant dense<0.000000e+00> : vector<8x512xf32>
    %113 = tpu.matmul %111, %112, %cst_44 {dimension_numbers = #tpu.dot_dimension_numbers<[1], [0], [0], [1], [0, 0, 1, 1], [], []>} : vector<8x128xbf16>, vector<128x512xbf16>, vector<8x512xf32> -> vector<8x512xf32>
    %114 = arith.addf %110, %113 : vector<8x512xf32>
    %115 = vector.extract_strided_slice %114 {offsets = [0, 0], sizes = [8, 384], strides = [1, 1]} : vector<8x512xf32> to vector<8x384xf32>
    %116 = arith.negf %115 : vector<8x384xf32>
    %117 = math.exp %116 : vector<8x384xf32>
    %cst_45 = arith.constant 1.000000e+00 : f32
    %118 = vector.broadcast %cst_45 : f32 to vector<8x384xf32>
    %119 = arith.addf %118, %117 : vector<8x384xf32>
    %120 = arith.divf %118, %119 : vector<8x384xf32>
    %121 = vector.extract_strided_slice %114 {offsets = [0, 384], sizes = [8, 128], strides = [1, 1]} : vector<8x512xf32> to vector<8x128xf32>
    %122 = math.tanh %121 : vector<8x128xf32>
    %123 = vector.extract_strided_slice %120 {offsets = [0, 128], sizes = [8, 128], strides = [1, 1]} : vector<8x384xf32> to vector<8x128xf32>
    %124 = arith.mulf %123, %102 : vector<8x128xf32>
    %125 = vector.extract_strided_slice %120 {offsets = [0, 0], sizes = [8, 128], strides = [1, 1]} : vector<8x384xf32> to vector<8x128xf32>
    %126 = arith.mulf %125, %122 : vector<8x128xf32>
    %127 = arith.addf %124, %126 : vector<8x128xf32>
    %128 = vector.extract_strided_slice %120 {offsets = [0, 256], sizes = [8, 128], strides = [1, 1]} : vector<8x384xf32> to vector<8x128xf32>
    %129 = math.tanh %127 : vector<8x128xf32>
    %130 = arith.mulf %128, %129 : vector<8x128xf32>
    %c8_i32_46 = arith.constant 8 : i32
    %131 = arith.muli %c4_i32, %c8_i32_46 : i32
    %132 = tpu.assume_multiple %131, 8 : i32
    %133 = arith.index_cast %132 : i32 to index
    %c0_47 = arith.constant 0 : index
    %134 = vector.load %arg15[%133, %c0_47] : memref<64x128xf32, #tpu.memory_space<vmem>>, vector<8x128xf32>
    tpu.vector_store %arg15[%133, %c0_47], %130 {strides = array<i32>} : memref<64x128xf32, #tpu.memory_space<vmem>>, vector<8x128xf32>,
    %c5_i32 = arith.constant 5 : i32
    %c0_48 = arith.constant 0 : index
    %c0_49 = arith.constant 0 : index
    %135 = vector.load %arg17[%c0_48, %c0_49] : memref<64x512xf32, #tpu.memory_space<vmem>>, vector<8x512xf32>
    %136 = arith.truncf %130 : vector<8x128xf32> to vector<8x128xbf16>
    %c0_50 = arith.constant 0 : index
    %c0_51 = arith.constant 0 : index
    %137 = vector.load %arg3[%c0_50, %c0_51] : memref<128x512xbf16, #tpu.memory_space<vmem>>, vector<128x512xbf16>
    %cst_52 = arith.constant dense<0.000000e+00> : vector<8x512xf32>
    %138 = tpu.matmul %136, %137, %cst_52 {dimension_numbers = #tpu.dot_dimension_numbers<[1], [0], [0], [1], [0, 0, 1, 1], [], []>} : vector<8x128xbf16>, vector<128x512xbf16>, vector<8x512xf32> -> vector<8x512xf32>
    %139 = arith.addf %135, %138 : vector<8x512xf32>
    %140 = vector.extract_strided_slice %139 {offsets = [0, 0], sizes = [8, 384], strides = [1, 1]} : vector<8x512xf32> to vector<8x384xf32>
    %141 = arith.negf %140 : vector<8x384xf32>
    %142 = math.exp %141 : vector<8x384xf32>
    %cst_53 = arith.constant 1.000000e+00 : f32
    %143 = vector.broadcast %cst_53 : f32 to vector<8x384xf32>
    %144 = arith.addf %143, %142 : vector<8x384xf32>
    %145 = arith.divf %143, %144 : vector<8x384xf32>
    %146 = vector.extract_strided_slice %139 {offsets = [0, 384], sizes = [8, 128], strides = [1, 1]} : vector<8x512xf32> to vector<8x128xf32>
    %147 = math.tanh %146 : vector<8x128xf32>
    %148 = vector.extract_strided_slice %145 {offsets = [0, 128], sizes = [8, 128], strides = [1, 1]} : vector<8x384xf32> to vector<8x128xf32>
    %149 = arith.mulf %148, %127 : vector<8x128xf32>
    %150 = vector.extract_strided_slice %145 {offsets = [0, 0], sizes = [8, 128], strides = [1, 1]} : vector<8x384xf32> to vector<8x128xf32>
    %151 = arith.mulf %150, %147 : vector<8x128xf32>
    %152 = arith.addf %149, %151 : vector<8x128xf32>
    %153 = vector.extract_strided_slice %145 {offsets = [0, 256], sizes = [8, 128], strides = [1, 1]} : vector<8x384xf32> to vector<8x128xf32>
    %154 = math.tanh %152 : vector<8x128xf32>
    %155 = arith.mulf %153, %154 : vector<8x128xf32>
    %c8_i32_54 = arith.constant 8 : i32
    %156 = arith.muli %c5_i32, %c8_i32_54 : i32
    %157 = tpu.assume_multiple %156, 8 : i32
    %158 = arith.index_cast %157 : i32 to index
    %c0_55 = arith.constant 0 : index
    %159 = vector.load %arg15[%158, %c0_55] : memref<64x128xf32, #tpu.memory_space<vmem>>, vector<8x128xf32>
    tpu.vector_store %arg15[%158, %c0_55], %155 {strides = array<i32>} : memref<64x128xf32, #tpu.memory_space<vmem>>, vector<8x128xf32>,
    %c6_i32 = arith.constant 6 : i32
    %c0_56 = arith.constant 0 : index
    %c0_57 = arith.constant 0 : index
    %160 = vector.load %arg17[%c0_56, %c0_57] : memref<64x512xf32, #tpu.memory_space<vmem>>, vector<8x512xf32>
    %161 = arith.truncf %155 : vector<8x128xf32> to vector<8x128xbf16>
    %c0_58 = arith.constant 0 : index
    %c0_59 = arith.constant 0 : index
    %162 = vector.load %arg3[%c0_58, %c0_59] : memref<128x512xbf16, #tpu.memory_space<vmem>>, vector<128x512xbf16>
    %cst_60 = arith.constant dense<0.000000e+00> : vector<8x512xf32>
    %163 = tpu.matmul %161, %162, %cst_60 {dimension_numbers = #tpu.dot_dimension_numbers<[1], [0], [0], [1], [0, 0, 1, 1], [], []>} : vector<8x128xbf16>, vector<128x512xbf16>, vector<8x512xf32> -> vector<8x512xf32>
    %164 = arith.addf %160, %163 : vector<8x512xf32>
    %165 = vector.extract_strided_slice %164 {offsets = [0, 0], sizes = [8, 384], strides = [1, 1]} : vector<8x512xf32> to vector<8x384xf32>
    %166 = arith.negf %165 : vector<8x384xf32>
    %167 = math.exp %166 : vector<8x384xf32>
    %cst_61 = arith.constant 1.000000e+00 : f32
    %168 = vector.broadcast %cst_61 : f32 to vector<8x384xf32>
    %169 = arith.addf %168, %167 : vector<8x384xf32>
    %170 = arith.divf %168, %169 : vector<8x384xf32>
    %171 = vector.extract_strided_slice %164 {offsets = [0, 384], sizes = [8, 128], strides = [1, 1]} : vector<8x512xf32> to vector<8x128xf32>
    %172 = math.tanh %171 : vector<8x128xf32>
    %173 = vector.extract_strided_slice %170 {offsets = [0, 128], sizes = [8, 128], strides = [1, 1]} : vector<8x384xf32> to vector<8x128xf32>
    %174 = arith.mulf %173, %152 : vector<8x128xf32>
    %175 = vector.extract_strided_slice %170 {offsets = [0, 0], sizes = [8, 128], strides = [1, 1]} : vector<8x384xf32> to vector<8x128xf32>
    %176 = arith.mulf %175, %172 : vector<8x128xf32>
    %177 = arith.addf %174, %176 : vector<8x128xf32>
    %178 = vector.extract_strided_slice %170 {offsets = [0, 256], sizes = [8, 128], strides = [1, 1]} : vector<8x384xf32> to vector<8x128xf32>
    %179 = math.tanh %177 : vector<8x128xf32>
    %180 = arith.mulf %178, %179 : vector<8x128xf32>
    %c8_i32_62 = arith.constant 8 : i32
    %181 = arith.muli %c6_i32, %c8_i32_62 : i32
    %182 = tpu.assume_multiple %181, 8 : i32
    %183 = arith.index_cast %182 : i32 to index
    %c0_63 = arith.constant 0 : index
    %184 = vector.load %arg15[%183, %c0_63] : memref<64x128xf32, #tpu.memory_space<vmem>>, vector<8x128xf32>
    tpu.vector_store %arg15[%183, %c0_63], %180 {strides = array<i32>} : memref<64x128xf32, #tpu.memory_space<vmem>>, vector<8x128xf32>,
    %c7_i32 = arith.constant 7 : i32
    %c0_64 = arith.constant 0 : index
    %c0_65 = arith.constant 0 : index
    %185 = vector.load %arg17[%c0_64, %c0_65] : memref<64x512xf32, #tpu.memory_space<vmem>>, vector<8x512xf32>
    %186 = arith.truncf %180 : vector<8x128xf32> to vector<8x128xbf16>
    %c0_66 = arith.constant 0 : index
    %c0_67 = arith.constant 0 : index
    %187 = vector.load %arg3[%c0_66, %c0_67] : memref<128x512xbf16, #tpu.memory_space<vmem>>, vector<128x512xbf16>
    %cst_68 = arith.constant dense<0.000000e+00> : vector<8x512xf32>
    %188 = tpu.matmul %186, %187, %cst_68 {dimension_numbers = #tpu.dot_dimension_numbers<[1], [0], [0], [1], [0, 0, 1, 1], [], []>} : vector<8x128xbf16>, vector<128x512xbf16>, vector<8x512xf32> -> vector<8x512xf32>
    %189 = arith.addf %185, %188 : vector<8x512xf32>
    %190 = vector.extract_strided_slice %189 {offsets = [0, 0], sizes = [8, 384], strides = [1, 1]} : vector<8x512xf32> to vector<8x384xf32>
    %191 = arith.negf %190 : vector<8x384xf32>
    %192 = math.exp %191 : vector<8x384xf32>
    %cst_69 = arith.constant 1.000000e+00 : f32
    %193 = vector.broadcast %cst_69 : f32 to vector<8x384xf32>
    %194 = arith.addf %193, %192 : vector<8x384xf32>
    %195 = arith.divf %193, %194 : vector<8x384xf32>
    %196 = vector.extract_strided_slice %189 {offsets = [0, 384], sizes = [8, 128], strides = [1, 1]} : vector<8x512xf32> to vector<8x128xf32>
    %197 = math.tanh %196 : vector<8x128xf32>
    %198 = vector.extract_strided_slice %195 {offsets = [0, 128], sizes = [8, 128], strides = [1, 1]} : vector<8x384xf32> to vector<8x128xf32>
    %199 = arith.mulf %198, %177 : vector<8x128xf32>
    %200 = vector.extract_strided_slice %195 {offsets = [0, 0], sizes = [8, 128], strides = [1, 1]} : vector<8x384xf32> to vector<8x128xf32>
    %201 = arith.mulf %200, %197 : vector<8x128xf32>
    %202 = arith.addf %199, %201 : vector<8x128xf32>
    %203 = vector.extract_strided_slice %195 {offsets = [0, 256], sizes = [8, 128], strides = [1, 1]} : vector<8x384xf32> to vector<8x128xf32>
    %204 = math.tanh %202 : vector<8x128xf32>
    %205 = arith.mulf %203, %204 : vector<8x128xf32>
    %c8_i32_70 = arith.constant 8 : i32
    %206 = arith.muli %c7_i32, %c8_i32_70 : i32
    %207 = tpu.assume_multiple %206, 8 : i32
    %208 = arith.index_cast %207 : i32 to index
    %c0_71 = arith.constant 0 : index
    %209 = vector.load %arg15[%208, %c0_71] : memref<64x128xf32, #tpu.memory_space<vmem>>, vector<8x128xf32>
    tpu.vector_store %arg15[%208, %c0_71], %205 {strides = array<i32>} : memref<64x128xf32, #tpu.memory_space<vmem>>, vector<8x128xf32>,
    %c8_i32_72 = arith.constant 8 : i32
    %c0_73 = arith.constant 0 : index
    %c0_74 = arith.constant 0 : index
    %210 = vector.load %arg15[%c0_73, %c0_74] : memref<64x128xf32, #tpu.memory_space<vmem>>, vector<64x128xf32>
    %211 = arith.truncf %210 : vector<64x128xf32> to vector<64x128xbf16>
    %c0_75 = arith.constant 0 : index
    %c0_76 = arith.constant 0 : index
    %212 = vector.load %arg5[%c0_75, %c0_76] : memref<128x512xbf16, #tpu.memory_space<vmem>>, vector<128x512xbf16>
    %cst_77 = arith.constant dense<0.000000e+00> : vector<64x512xf32>
    %213 = tpu.matmul %211, %212, %cst_77 {dimension_numbers = #tpu.dot_dimension_numbers<[1], [0], [0], [1], [0, 0, 1, 1], [], []>} : vector<64x128xbf16>, vector<128x512xbf16>, vector<64x512xf32> -> vector<64x512xf32>
    %c0_78 = arith.constant 0 : index
    %c0_79 = arith.constant 0 : index
    %214 = vector.load %arg7[%c0_78, %c0_79] : memref<1x512xf32, #tpu.memory_space<vmem>>, vector<1x512xf32>
    %215 = vector.broadcast %214 : vector<1x512xf32> to vector<64x512xf32>
    %216 = arith.addf %213, %215 : vector<64x512xf32>
    %c0_80 = arith.constant 0 : index
    %c0_81 = arith.constant 0 : index
    %217 = vector.load %arg17[%c0_80, %c0_81] : memref<64x512xf32, #tpu.memory_space<vmem>>, vector<64x512xf32>
    tpu.vector_store %arg17[%c0_80, %c0_81], %216 {strides = array<i32>} : memref<64x512xf32, #tpu.memory_space<vmem>>, vector<64x512xf32>,
    %cst_82 = arith.constant 0.000000e+00 : f32
    %218 = vector.broadcast %cst_82 : f32 to vector<8x128xf32>
    %cst_83 = arith.constant 0.000000e+00 : f32
    %219 = vector.broadcast %cst_83 : f32 to vector<8x128xf32>
    %c0_i32_84 = arith.constant 0 : i32
    %c8_i32_85 = arith.constant 8 : i32
    %220 = arith.muli %c0_i32_84, %c8_i32_85 : i32
    %221 = tpu.assume_multiple %220, 8 : i32
    %222 = arith.index_cast %221 : i32 to index
    %c0_86 = arith.constant 0 : index
    %223 = vector.load %arg17[%222, %c0_86] : memref<64x512xf32, #tpu.memory_space<vmem>>, vector<8x512xf32>
    %224 = arith.truncf %218 : vector<8x128xf32> to vector<8x128xbf16>
    %c0_87 = arith.constant 0 : index
    %c0_88 = arith.constant 0 : index
    %225 = vector.load %arg6[%c0_87, %c0_88] : memref<128x512xbf16, #tpu.memory_space<vmem>>, vector<128x512xbf16>
    %cst_89 = arith.constant dense<0.000000e+00> : vector<8x512xf32>
    %226 = tpu.matmul %224, %225, %cst_89 {dimension_numbers = #tpu.dot_dimension_numbers<[1], [0], [0], [1], [0, 0, 1, 1], [], []>} : vector<8x128xbf16>, vector<128x512xbf16>, vector<8x512xf32> -> vector<8x512xf32>
    %227 = arith.addf %223, %226 : vector<8x512xf32>
    %228 = vector.extract_strided_slice %227 {offsets = [0, 0], sizes = [8, 384], strides = [1, 1]} : vector<8x512xf32> to vector<8x384xf32>
    %229 = arith.negf %228 : vector<8x384xf32>
    %230 = math.exp %229 : vector<8x384xf32>
    %cst_90 = arith.constant 1.000000e+00 : f32
    %231 = vector.broadcast %cst_90 : f32 to vector<8x384xf32>
    %232 = arith.addf %231, %230 : vector<8x384xf32>
    %233 = arith.divf %231, %232 : vector<8x384xf32>
    %234 = vector.extract_strided_slice %227 {offsets = [0, 384], sizes = [8, 128], strides = [1, 1]} : vector<8x512xf32> to vector<8x128xf32>
    %235 = math.tanh %234 : vector<8x128xf32>
    %236 = vector.extract_strided_slice %233 {offsets = [0, 128], sizes = [8, 128], strides = [1, 1]} : vector<8x384xf32> to vector<8x128xf32>
    %237 = arith.mulf %236, %219 : vector<8x128xf32>
    %238 = vector.extract_strided_slice %233 {offsets = [0, 0], sizes = [8, 128], strides = [1, 1]} : vector<8x384xf32> to vector<8x128xf32>
    %239 = arith.mulf %238, %235 : vector<8x128xf32>
    %240 = arith.addf %237, %239 : vector<8x128xf32>
    %241 = vector.extract_strided_slice %233 {offsets = [0, 256], sizes = [8, 128], strides = [1, 1]} : vector<8x384xf32> to vector<8x128xf32>
    %242 = math.tanh %240 : vector<8x128xf32>
    %243 = arith.mulf %241, %242 : vector<8x128xf32>
    %c8_i32_91 = arith.constant 8 : i32
    %244 = arith.muli %c0_i32_84, %c8_i32_91 : i32
    %245 = tpu.assume_multiple %244, 8 : i32
    %246 = arith.index_cast %245 : i32 to index
    %c0_92 = arith.constant 0 : index
    %247 = vector.load %arg16[%246, %c0_92] : memref<64x128xf32, #tpu.memory_space<vmem>>, vector<8x128xf32>
    tpu.vector_store %arg16[%246, %c0_92], %243 {strides = array<i32>} : memref<64x128xf32, #tpu.memory_space<vmem>>, vector<8x128xf32>,
    %c1_i32_93 = arith.constant 1 : i32
    %c8_i32_94 = arith.constant 8 : i32
    %248 = arith.muli %c1_i32_93, %c8_i32_94 : i32
    %249 = tpu.assume_multiple %248, 8 : i32
    %250 = arith.index_cast %249 : i32 to index
    %c0_95 = arith.constant 0 : index
    %251 = vector.load %arg17[%250, %c0_95] : memref<64x512xf32, #tpu.memory_space<vmem>>, vector<8x512xf32>
    %252 = arith.truncf %243 : vector<8x128xf32> to vector<8x128xbf16>
    %c0_96 = arith.constant 0 : index
    %c0_97 = arith.constant 0 : index
    %253 = vector.load %arg6[%c0_96, %c0_97] : memref<128x512xbf16, #tpu.memory_space<vmem>>, vector<128x512xbf16>
    %cst_98 = arith.constant dense<0.000000e+00> : vector<8x512xf32>
    %254 = tpu.matmul %252, %253, %cst_98 {dimension_numbers = #tpu.dot_dimension_numbers<[1], [0], [0], [1], [0, 0, 1, 1], [], []>} : vector<8x128xbf16>, vector<128x512xbf16>, vector<8x512xf32> -> vector<8x512xf32>
    %255 = arith.addf %251, %254 : vector<8x512xf32>
    %256 = vector.extract_strided_slice %255 {offsets = [0, 0], sizes = [8, 384], strides = [1, 1]} : vector<8x512xf32> to vector<8x384xf32>
    %257 = arith.negf %256 : vector<8x384xf32>
    %258 = math.exp %257 : vector<8x384xf32>
    %cst_99 = arith.constant 1.000000e+00 : f32
    %259 = vector.broadcast %cst_99 : f32 to vector<8x384xf32>
    %260 = arith.addf %259, %258 : vector<8x384xf32>
    %261 = arith.divf %259, %260 : vector<8x384xf32>
    %262 = vector.extract_strided_slice %255 {offsets = [0, 384], sizes = [8, 128], strides = [1, 1]} : vector<8x512xf32> to vector<8x128xf32>
    %263 = math.tanh %262 : vector<8x128xf32>
    %264 = vector.extract_strided_slice %261 {offsets = [0, 128], sizes = [8, 128], strides = [1, 1]} : vector<8x384xf32> to vector<8x128xf32>
    %265 = arith.mulf %264, %240 : vector<8x128xf32>
    %266 = vector.extract_strided_slice %261 {offsets = [0, 0], sizes = [8, 128], strides = [1, 1]} : vector<8x384xf32> to vector<8x128xf32>
    %267 = arith.mulf %266, %263 : vector<8x128xf32>
    %268 = arith.addf %265, %267 : vector<8x128xf32>
    %269 = vector.extract_strided_slice %261 {offsets = [0, 256], sizes = [8, 128], strides = [1, 1]} : vector<8x384xf32> to vector<8x128xf32>
    %270 = math.tanh %268 : vector<8x128xf32>
    %271 = arith.mulf %269, %270 : vector<8x128xf32>
    %c8_i32_100 = arith.constant 8 : i32
    %272 = arith.muli %c1_i32_93, %c8_i32_100 : i32
    %273 = tpu.assume_multiple %272, 8 : i32
    %274 = arith.index_cast %273 : i32 to index
    %c0_101 = arith.constant 0 : index
    %275 = vector.load %arg16[%274, %c0_101] : memref<64x128xf32, #tpu.memory_space<vmem>>, vector<8x128xf32>
    tpu.vector_store %arg16[%274, %c0_101], %271 {strides = array<i32>} : memref<64x128xf32, #tpu.memory_space<vmem>>, vector<8x128xf32>,
    %c2_i32_102 = arith.constant 2 : i32
    %c8_i32_103 = arith.constant 8 : i32
    %276 = arith.muli %c2_i32_102, %c8_i32_103 : i32
    %277 = tpu.assume_multiple %276, 8 : i32
    %278 = arith.index_cast %277 : i32 to index
    %c0_104 = arith.constant 0 : index
    %279 = vector.load %arg17[%278, %c0_104] : memref<64x512xf32, #tpu.memory_space<vmem>>, vector<8x512xf32>
    %280 = arith.truncf %271 : vector<8x128xf32> to vector<8x128xbf16>
    %c0_105 = arith.constant 0 : index
    %c0_106 = arith.constant 0 : index
    %281 = vector.load %arg6[%c0_105, %c0_106] : memref<128x512xbf16, #tpu.memory_space<vmem>>, vector<128x512xbf16>
    %cst_107 = arith.constant dense<0.000000e+00> : vector<8x512xf32>
    %282 = tpu.matmul %280, %281, %cst_107 {dimension_numbers = #tpu.dot_dimension_numbers<[1], [0], [0], [1], [0, 0, 1, 1], [], []>} : vector<8x128xbf16>, vector<128x512xbf16>, vector<8x512xf32> -> vector<8x512xf32>
    %283 = arith.addf %279, %282 : vector<8x512xf32>
    %284 = vector.extract_strided_slice %283 {offsets = [0, 0], sizes = [8, 384], strides = [1, 1]} : vector<8x512xf32> to vector<8x384xf32>
    %285 = arith.negf %284 : vector<8x384xf32>
    %286 = math.exp %285 : vector<8x384xf32>
    %cst_108 = arith.constant 1.000000e+00 : f32
    %287 = vector.broadcast %cst_108 : f32 to vector<8x384xf32>
    %288 = arith.addf %287, %286 : vector<8x384xf32>
    %289 = arith.divf %287, %288 : vector<8x384xf32>
    %290 = vector.extract_strided_slice %283 {offsets = [0, 384], sizes = [8, 128], strides = [1, 1]} : vector<8x512xf32> to vector<8x128xf32>
    %291 = math.tanh %290 : vector<8x128xf32>
    %292 = vector.extract_strided_slice %289 {offsets = [0, 128], sizes = [8, 128], strides = [1, 1]} : vector<8x384xf32> to vector<8x128xf32>
    %293 = arith.mulf %292, %268 : vector<8x128xf32>
    %294 = vector.extract_strided_slice %289 {offsets = [0, 0], sizes = [8, 128], strides = [1, 1]} : vector<8x384xf32> to vector<8x128xf32>
    %295 = arith.mulf %294, %291 : vector<8x128xf32>
    %296 = arith.addf %293, %295 : vector<8x128xf32>
    %297 = vector.extract_strided_slice %289 {offsets = [0, 256], sizes = [8, 128], strides = [1, 1]} : vector<8x384xf32> to vector<8x128xf32>
    %298 = math.tanh %296 : vector<8x128xf32>
    %299 = arith.mulf %297, %298 : vector<8x128xf32>
    %c8_i32_109 = arith.constant 8 : i32
    %300 = arith.muli %c2_i32_102, %c8_i32_109 : i32
    %301 = tpu.assume_multiple %300, 8 : i32
    %302 = arith.index_cast %301 : i32 to index
    %c0_110 = arith.constant 0 : index
    %303 = vector.load %arg16[%302, %c0_110] : memref<64x128xf32, #tpu.memory_space<vmem>>, vector<8x128xf32>
    tpu.vector_store %arg16[%302, %c0_110], %299 {strides = array<i32>} : memref<64x128xf32, #tpu.memory_space<vmem>>, vector<8x128xf32>,
    %c3_i32_111 = arith.constant 3 : i32
    %c8_i32_112 = arith.constant 8 : i32
    %304 = arith.muli %c3_i32_111, %c8_i32_112 : i32
    %305 = tpu.assume_multiple %304, 8 : i32
    %306 = arith.index_cast %305 : i32 to index
    %c0_113 = arith.constant 0 : index
    %307 = vector.load %arg17[%306, %c0_113] : memref<64x512xf32, #tpu.memory_space<vmem>>, vector<8x512xf32>
    %308 = arith.truncf %299 : vector<8x128xf32> to vector<8x128xbf16>
    %c0_114 = arith.constant 0 : index
    %c0_115 = arith.constant 0 : index
    %309 = vector.load %arg6[%c0_114, %c0_115] : memref<128x512xbf16, #tpu.memory_space<vmem>>, vector<128x512xbf16>
    %cst_116 = arith.constant dense<0.000000e+00> : vector<8x512xf32>
    %310 = tpu.matmul %308, %309, %cst_116 {dimension_numbers = #tpu.dot_dimension_numbers<[1], [0], [0], [1], [0, 0, 1, 1], [], []>} : vector<8x128xbf16>, vector<128x512xbf16>, vector<8x512xf32> -> vector<8x512xf32>
    %311 = arith.addf %307, %310 : vector<8x512xf32>
    %312 = vector.extract_strided_slice %311 {offsets = [0, 0], sizes = [8, 384], strides = [1, 1]} : vector<8x512xf32> to vector<8x384xf32>
    %313 = arith.negf %312 : vector<8x384xf32>
    %314 = math.exp %313 : vector<8x384xf32>
    %cst_117 = arith.constant 1.000000e+00 : f32
    %315 = vector.broadcast %cst_117 : f32 to vector<8x384xf32>
    %316 = arith.addf %315, %314 : vector<8x384xf32>
    %317 = arith.divf %315, %316 : vector<8x384xf32>
    %318 = vector.extract_strided_slice %311 {offsets = [0, 384], sizes = [8, 128], strides = [1, 1]} : vector<8x512xf32> to vector<8x128xf32>
    %319 = math.tanh %318 : vector<8x128xf32>
    %320 = vector.extract_strided_slice %317 {offsets = [0, 128], sizes = [8, 128], strides = [1, 1]} : vector<8x384xf32> to vector<8x128xf32>
    %321 = arith.mulf %320, %296 : vector<8x128xf32>
    %322 = vector.extract_strided_slice %317 {offsets = [0, 0], sizes = [8, 128], strides = [1, 1]} : vector<8x384xf32> to vector<8x128xf32>
    %323 = arith.mulf %322, %319 : vector<8x128xf32>
    %324 = arith.addf %321, %323 : vector<8x128xf32>
    %325 = vector.extract_strided_slice %317 {offsets = [0, 256], sizes = [8, 128], strides = [1, 1]} : vector<8x384xf32> to vector<8x128xf32>
    %326 = math.tanh %324 : vector<8x128xf32>
    %327 = arith.mulf %325, %326 : vector<8x128xf32>
    %c8_i32_118 = arith.constant 8 : i32
    %328 = arith.muli %c3_i32_111, %c8_i32_118 : i32
    %329 = tpu.assume_multiple %328, 8 : i32
    %330 = arith.index_cast %329 : i32 to index
    %c0_119 = arith.constant 0 : index
    %331 = vector.load %arg16[%330, %c0_119] : memref<64x128xf32, #tpu.memory_space<vmem>>, vector<8x128xf32>
    tpu.vector_store %arg16[%330, %c0_119], %327 {strides = array<i32>} : memref<64x128xf32, #tpu.memory_space<vmem>>, vector<8x128xf32>,
    %c4_i32_120 = arith.constant 4 : i32
    %c8_i32_121 = arith.constant 8 : i32
    %332 = arith.muli %c4_i32_120, %c8_i32_121 : i32
    %333 = tpu.assume_multiple %332, 8 : i32
    %334 = arith.index_cast %333 : i32 to index
    %c0_122 = arith.constant 0 : index
    %335 = vector.load %arg17[%334, %c0_122] : memref<64x512xf32, #tpu.memory_space<vmem>>, vector<8x512xf32>
    %336 = arith.truncf %327 : vector<8x128xf32> to vector<8x128xbf16>
    %c0_123 = arith.constant 0 : index
    %c0_124 = arith.constant 0 : index
    %337 = vector.load %arg6[%c0_123, %c0_124] : memref<128x512xbf16, #tpu.memory_space<vmem>>, vector<128x512xbf16>
    %cst_125 = arith.constant dense<0.000000e+00> : vector<8x512xf32>
    %338 = tpu.matmul %336, %337, %cst_125 {dimension_numbers = #tpu.dot_dimension_numbers<[1], [0], [0], [1], [0, 0, 1, 1], [], []>} : vector<8x128xbf16>, vector<128x512xbf16>, vector<8x512xf32> -> vector<8x512xf32>
    %339 = arith.addf %335, %338 : vector<8x512xf32>
    %340 = vector.extract_strided_slice %339 {offsets = [0, 0], sizes = [8, 384], strides = [1, 1]} : vector<8x512xf32> to vector<8x384xf32>
    %341 = arith.negf %340 : vector<8x384xf32>
    %342 = math.exp %341 : vector<8x384xf32>
    %cst_126 = arith.constant 1.000000e+00 : f32
    %343 = vector.broadcast %cst_126 : f32 to vector<8x384xf32>
    %344 = arith.addf %343, %342 : vector<8x384xf32>
    %345 = arith.divf %343, %344 : vector<8x384xf32>
    %346 = vector.extract_strided_slice %339 {offsets = [0, 384], sizes = [8, 128], strides = [1, 1]} : vector<8x512xf32> to vector<8x128xf32>
    %347 = math.tanh %346 : vector<8x128xf32>
    %348 = vector.extract_strided_slice %345 {offsets = [0, 128], sizes = [8, 128], strides = [1, 1]} : vector<8x384xf32> to vector<8x128xf32>
    %349 = arith.mulf %348, %324 : vector<8x128xf32>
    %350 = vector.extract_strided_slice %345 {offsets = [0, 0], sizes = [8, 128], strides = [1, 1]} : vector<8x384xf32> to vector<8x128xf32>
    %351 = arith.mulf %350, %347 : vector<8x128xf32>
    %352 = arith.addf %349, %351 : vector<8x128xf32>
    %353 = vector.extract_strided_slice %345 {offsets = [0, 256], sizes = [8, 128], strides = [1, 1]} : vector<8x384xf32> to vector<8x128xf32>
    %354 = math.tanh %352 : vector<8x128xf32>
    %355 = arith.mulf %353, %354 : vector<8x128xf32>
    %c8_i32_127 = arith.constant 8 : i32
    %356 = arith.muli %c4_i32_120, %c8_i32_127 : i32
    %357 = tpu.assume_multiple %356, 8 : i32
    %358 = arith.index_cast %357 : i32 to index
    %c0_128 = arith.constant 0 : index
    %359 = vector.load %arg16[%358, %c0_128] : memref<64x128xf32, #tpu.memory_space<vmem>>, vector<8x128xf32>
    tpu.vector_store %arg16[%358, %c0_128], %355 {strides = array<i32>} : memref<64x128xf32, #tpu.memory_space<vmem>>, vector<8x128xf32>,
    %c5_i32_129 = arith.constant 5 : i32
    %c8_i32_130 = arith.constant 8 : i32
    %360 = arith.muli %c5_i32_129, %c8_i32_130 : i32
    %361 = tpu.assume_multiple %360, 8 : i32
    %362 = arith.index_cast %361 : i32 to index
    %c0_131 = arith.constant 0 : index
    %363 = vector.load %arg17[%362, %c0_131] : memref<64x512xf32, #tpu.memory_space<vmem>>, vector<8x512xf32>
    %364 = arith.truncf %355 : vector<8x128xf32> to vector<8x128xbf16>
    %c0_132 = arith.constant 0 : index
    %c0_133 = arith.constant 0 : index
    %365 = vector.load %arg6[%c0_132, %c0_133] : memref<128x512xbf16, #tpu.memory_space<vmem>>, vector<128x512xbf16>
    %cst_134 = arith.constant dense<0.000000e+00> : vector<8x512xf32>
    %366 = tpu.matmul %364, %365, %cst_134 {dimension_numbers = #tpu.dot_dimension_numbers<[1], [0], [0], [1], [0, 0, 1, 1], [], []>} : vector<8x128xbf16>, vector<128x512xbf16>, vector<8x512xf32> -> vector<8x512xf32>
    %367 = arith.addf %363, %366 : vector<8x512xf32>
    %368 = vector.extract_strided_slice %367 {offsets = [0, 0], sizes = [8, 384], strides = [1, 1]} : vector<8x512xf32> to vector<8x384xf32>
    %369 = arith.negf %368 : vector<8x384xf32>
    %370 = math.exp %369 : vector<8x384xf32>
    %cst_135 = arith.constant 1.000000e+00 : f32
    %371 = vector.broadcast %cst_135 : f32 to vector<8x384xf32>
    %372 = arith.addf %371, %370 : vector<8x384xf32>
    %373 = arith.divf %371, %372 : vector<8x384xf32>
    %374 = vector.extract_strided_slice %367 {offsets = [0, 384], sizes = [8, 128], strides = [1, 1]} : vector<8x512xf32> to vector<8x128xf32>
    %375 = math.tanh %374 : vector<8x128xf32>
    %376 = vector.extract_strided_slice %373 {offsets = [0, 128], sizes = [8, 128], strides = [1, 1]} : vector<8x384xf32> to vector<8x128xf32>
    %377 = arith.mulf %376, %352 : vector<8x128xf32>
    %378 = vector.extract_strided_slice %373 {offsets = [0, 0], sizes = [8, 128], strides = [1, 1]} : vector<8x384xf32> to vector<8x128xf32>
    %379 = arith.mulf %378, %375 : vector<8x128xf32>
    %380 = arith.addf %377, %379 : vector<8x128xf32>
    %381 = vector.extract_strided_slice %373 {offsets = [0, 256], sizes = [8, 128], strides = [1, 1]} : vector<8x384xf32> to vector<8x128xf32>
    %382 = math.tanh %380 : vector<8x128xf32>
    %383 = arith.mulf %381, %382 : vector<8x128xf32>
    %c8_i32_136 = arith.constant 8 : i32
    %384 = arith.muli %c5_i32_129, %c8_i32_136 : i32
    %385 = tpu.assume_multiple %384, 8 : i32
    %386 = arith.index_cast %385 : i32 to index
    %c0_137 = arith.constant 0 : index
    %387 = vector.load %arg16[%386, %c0_137] : memref<64x128xf32, #tpu.memory_space<vmem>>, vector<8x128xf32>
    tpu.vector_store %arg16[%386, %c0_137], %383 {strides = array<i32>} : memref<64x128xf32, #tpu.memory_space<vmem>>, vector<8x128xf32>,
    %c6_i32_138 = arith.constant 6 : i32
    %c8_i32_139 = arith.constant 8 : i32
    %388 = arith.muli %c6_i32_138, %c8_i32_139 : i32
    %389 = tpu.assume_multiple %388, 8 : i32
    %390 = arith.index_cast %389 : i32 to index
    %c0_140 = arith.constant 0 : index
    %391 = vector.load %arg17[%390, %c0_140] : memref<64x512xf32, #tpu.memory_space<vmem>>, vector<8x512xf32>
    %392 = arith.truncf %383 : vector<8x128xf32> to vector<8x128xbf16>
    %c0_141 = arith.constant 0 : index
    %c0_142 = arith.constant 0 : index
    %393 = vector.load %arg6[%c0_141, %c0_142] : memref<128x512xbf16, #tpu.memory_space<vmem>>, vector<128x512xbf16>
    %cst_143 = arith.constant dense<0.000000e+00> : vector<8x512xf32>
    %394 = tpu.matmul %392, %393, %cst_143 {dimension_numbers = #tpu.dot_dimension_numbers<[1], [0], [0], [1], [0, 0, 1, 1], [], []>} : vector<8x128xbf16>, vector<128x512xbf16>, vector<8x512xf32> -> vector<8x512xf32>
    %395 = arith.addf %391, %394 : vector<8x512xf32>
    %396 = vector.extract_strided_slice %395 {offsets = [0, 0], sizes = [8, 384], strides = [1, 1]} : vector<8x512xf32> to vector<8x384xf32>
    %397 = arith.negf %396 : vector<8x384xf32>
    %398 = math.exp %397 : vector<8x384xf32>
    %cst_144 = arith.constant 1.000000e+00 : f32
    %399 = vector.broadcast %cst_144 : f32 to vector<8x384xf32>
    %400 = arith.addf %399, %398 : vector<8x384xf32>
    %401 = arith.divf %399, %400 : vector<8x384xf32>
    %402 = vector.extract_strided_slice %395 {offsets = [0, 384], sizes = [8, 128], strides = [1, 1]} : vector<8x512xf32> to vector<8x128xf32>
    %403 = math.tanh %402 : vector<8x128xf32>
    %404 = vector.extract_strided_slice %401 {offsets = [0, 128], sizes = [8, 128], strides = [1, 1]} : vector<8x384xf32> to vector<8x128xf32>
    %405 = arith.mulf %404, %380 : vector<8x128xf32>
    %406 = vector.extract_strided_slice %401 {offsets = [0, 0], sizes = [8, 128], strides = [1, 1]} : vector<8x384xf32> to vector<8x128xf32>
    %407 = arith.mulf %406, %403 : vector<8x128xf32>
    %408 = arith.addf %405, %407 : vector<8x128xf32>
    %409 = vector.extract_strided_slice %401 {offsets = [0, 256], sizes = [8, 128], strides = [1, 1]} : vector<8x384xf32> to vector<8x128xf32>
    %410 = math.tanh %408 : vector<8x128xf32>
    %411 = arith.mulf %409, %410 : vector<8x128xf32>
    %c8_i32_145 = arith.constant 8 : i32
    %412 = arith.muli %c6_i32_138, %c8_i32_145 : i32
    %413 = tpu.assume_multiple %412, 8 : i32
    %414 = arith.index_cast %413 : i32 to index
    %c0_146 = arith.constant 0 : index
    %415 = vector.load %arg16[%414, %c0_146] : memref<64x128xf32, #tpu.memory_space<vmem>>, vector<8x128xf32>
    tpu.vector_store %arg16[%414, %c0_146], %411 {strides = array<i32>} : memref<64x128xf32, #tpu.memory_space<vmem>>, vector<8x128xf32>,
    %c7_i32_147 = arith.constant 7 : i32
    %c8_i32_148 = arith.constant 8 : i32
    %416 = arith.muli %c7_i32_147, %c8_i32_148 : i32
    %417 = tpu.assume_multiple %416, 8 : i32
    %418 = arith.index_cast %417 : i32 to index
    %c0_149 = arith.constant 0 : index
    %419 = vector.load %arg17[%418, %c0_149] : memref<64x512xf32, #tpu.memory_space<vmem>>, vector<8x512xf32>
    %420 = arith.truncf %411 : vector<8x128xf32> to vector<8x128xbf16>
    %c0_150 = arith.constant 0 : index
    %c0_151 = arith.constant 0 : index
    %421 = vector.load %arg6[%c0_150, %c0_151] : memref<128x512xbf16, #tpu.memory_space<vmem>>, vector<128x512xbf16>
    %cst_152 = arith.constant dense<0.000000e+00> : vector<8x512xf32>
    %422 = tpu.matmul %420, %421, %cst_152 {dimension_numbers = #tpu.dot_dimension_numbers<[1], [0], [0], [1], [0, 0, 1, 1], [], []>} : vector<8x128xbf16>, vector<128x512xbf16>, vector<8x512xf32> -> vector<8x512xf32>
    %423 = arith.addf %419, %422 : vector<8x512xf32>
    %424 = vector.extract_strided_slice %423 {offsets = [0, 0], sizes = [8, 384], strides = [1, 1]} : vector<8x512xf32> to vector<8x384xf32>
    %425 = arith.negf %424 : vector<8x384xf32>
    %426 = math.exp %425 : vector<8x384xf32>
    %cst_153 = arith.constant 1.000000e+00 : f32
    %427 = vector.broadcast %cst_153 : f32 to vector<8x384xf32>
    %428 = arith.addf %427, %426 : vector<8x384xf32>
    %429 = arith.divf %427, %428 : vector<8x384xf32>
    %430 = vector.extract_strided_slice %423 {offsets = [0, 384], sizes = [8, 128], strides = [1, 1]} : vector<8x512xf32> to vector<8x128xf32>
    %431 = math.tanh %430 : vector<8x128xf32>
    %432 = vector.extract_strided_slice %429 {offsets = [0, 128], sizes = [8, 128], strides = [1, 1]} : vector<8x384xf32> to vector<8x128xf32>
    %433 = arith.mulf %432, %408 : vector<8x128xf32>
    %434 = vector.extract_strided_slice %429 {offsets = [0, 0], sizes = [8, 128], strides = [1, 1]} : vector<8x384xf32> to vector<8x128xf32>
    %435 = arith.mulf %434, %431 : vector<8x128xf32>
    %436 = arith.addf %433, %435 : vector<8x128xf32>
    %437 = vector.extract_strided_slice %429 {offsets = [0, 256], sizes = [8, 128], strides = [1, 1]} : vector<8x384xf32> to vector<8x128xf32>
    %438 = math.tanh %436 : vector<8x128xf32>
    %439 = arith.mulf %437, %438 : vector<8x128xf32>
    %c8_i32_154 = arith.constant 8 : i32
    %440 = arith.muli %c7_i32_147, %c8_i32_154 : i32
    %441 = tpu.assume_multiple %440, 8 : i32
    %442 = arith.index_cast %441 : i32 to index
    %c0_155 = arith.constant 0 : index
    %443 = vector.load %arg16[%442, %c0_155] : memref<64x128xf32, #tpu.memory_space<vmem>>, vector<8x128xf32>
    tpu.vector_store %arg16[%442, %c0_155], %439 {strides = array<i32>} : memref<64x128xf32, #tpu.memory_space<vmem>>, vector<8x128xf32>,
    %c8_i32_156 = arith.constant 8 : i32
    %c0_157 = arith.constant 0 : index
    %c0_158 = arith.constant 0 : index
    %444 = vector.load %arg16[%c0_157, %c0_158] : memref<64x128xf32, #tpu.memory_space<vmem>>, vector<64x128xf32>
    %445 = arith.truncf %444 : vector<64x128xf32> to vector<64x128xbf16>
    %c0_159 = arith.constant 0 : index
    %c0_160 = arith.constant 0 : index
    %446 = vector.load %arg8[%c0_159, %c0_160] : memref<128x512xbf16, #tpu.memory_space<vmem>>, vector<128x512xbf16>
    %cst_161 = arith.constant dense<0.000000e+00> : vector<64x512xf32>
    %447 = tpu.matmul %445, %446, %cst_161 {dimension_numbers = #tpu.dot_dimension_numbers<[1], [0], [0], [1], [0, 0, 1, 1], [], []>} : vector<64x128xbf16>, vector<128x512xbf16>, vector<64x512xf32> -> vector<64x512xf32>
    %c0_162 = arith.constant 0 : index
    %c0_163 = arith.constant 0 : index
    %448 = vector.load %arg10[%c0_162, %c0_163] : memref<1x512xf32, #tpu.memory_space<vmem>>, vector<1x512xf32>
    %449 = vector.broadcast %448 : vector<1x512xf32> to vector<64x512xf32>
    %450 = arith.addf %447, %449 : vector<64x512xf32>
    %c0_164 = arith.constant 0 : index
    %c0_165 = arith.constant 0 : index
    %451 = vector.load %arg17[%c0_164, %c0_165] : memref<64x512xf32, #tpu.memory_space<vmem>>, vector<64x512xf32>
    tpu.vector_store %arg17[%c0_164, %c0_165], %450 {strides = array<i32>} : memref<64x512xf32, #tpu.memory_space<vmem>>, vector<64x512xf32>,
    %cst_166 = arith.constant 0.000000e+00 : f32
    %452 = vector.broadcast %cst_166 : f32 to vector<8x128xf32>
    %cst_167 = arith.constant 0.000000e+00 : f32
    %453 = vector.broadcast %cst_167 : f32 to vector<8x128xf32>
    %c0_i32_168 = arith.constant 0 : i32
    %c8_i32_169 = arith.constant 8 : i32
    %454 = arith.muli %c0_i32_168, %c8_i32_169 : i32
    %455 = tpu.assume_multiple %454, 8 : i32
    %456 = arith.index_cast %455 : i32 to index
    %c0_170 = arith.constant 0 : index
    %457 = vector.load %arg17[%456, %c0_170] : memref<64x512xf32, #tpu.memory_space<vmem>>, vector<8x512xf32>
    %458 = arith.truncf %452 : vector<8x128xf32> to vector<8x128xbf16>
    %c0_171 = arith.constant 0 : index
    %c0_172 = arith.constant 0 : index
    %459 = vector.load %arg9[%c0_171, %c0_172] : memref<128x512xbf16, #tpu.memory_space<vmem>>, vector<128x512xbf16>
    %cst_173 = arith.constant dense<0.000000e+00> : vector<8x512xf32>
    %460 = tpu.matmul %458, %459, %cst_173 {dimension_numbers = #tpu.dot_dimension_numbers<[1], [0], [0], [1], [0, 0, 1, 1], [], []>} : vector<8x128xbf16>, vector<128x512xbf16>, vector<8x512xf32> -> vector<8x512xf32>
    %461 = arith.addf %457, %460 : vector<8x512xf32>
    %462 = vector.extract_strided_slice %461 {offsets = [0, 0], sizes = [8, 384], strides = [1, 1]} : vector<8x512xf32> to vector<8x384xf32>
    %463 = arith.negf %462 : vector<8x384xf32>
    %464 = math.exp %463 : vector<8x384xf32>
    %cst_174 = arith.constant 1.000000e+00 : f32
    %465 = vector.broadcast %cst_174 : f32 to vector<8x384xf32>
    %466 = arith.addf %465, %464 : vector<8x384xf32>
    %467 = arith.divf %465, %466 : vector<8x384xf32>
    %468 = vector.extract_strided_slice %461 {offsets = [0, 384], sizes = [8, 128], strides = [1, 1]} : vector<8x512xf32> to vector<8x128xf32>
    %469 = math.tanh %468 : vector<8x128xf32>
    %470 = vector.extract_strided_slice %467 {offsets = [0, 128], sizes = [8, 128], strides = [1, 1]} : vector<8x384xf32> to vector<8x128xf32>
    %471 = arith.mulf %470, %453 : vector<8x128xf32>
    %472 = vector.extract_strided_slice %467 {offsets = [0, 0], sizes = [8, 128], strides = [1, 1]} : vector<8x384xf32> to vector<8x128xf32>
    %473 = arith.mulf %472, %469 : vector<8x128xf32>
    %474 = arith.addf %471, %473 : vector<8x128xf32>
    %475 = vector.extract_strided_slice %467 {offsets = [0, 256], sizes = [8, 128], strides = [1, 1]} : vector<8x384xf32> to vector<8x128xf32>
    %476 = math.tanh %474 : vector<8x128xf32>
    %477 = arith.mulf %475, %476 : vector<8x128xf32>
    %c8_i32_175 = arith.constant 8 : i32
    %478 = arith.muli %c0_i32_168, %c8_i32_175 : i32
    %479 = tpu.assume_multiple %478, 8 : i32
    %480 = arith.index_cast %479 : i32 to index
    %c0_176 = arith.constant 0 : index
    %481 = vector.load %arg15[%480, %c0_176] : memref<64x128xf32, #tpu.memory_space<vmem>>, vector<8x128xf32>
    tpu.vector_store %arg15[%480, %c0_176], %477 {strides = array<i32>} : memref<64x128xf32, #tpu.memory_space<vmem>>, vector<8x128xf32>,
    %c1_i32_177 = arith.constant 1 : i32
    %c8_i32_178 = arith.constant 8 : i32
    %482 = arith.muli %c1_i32_177, %c8_i32_178 : i32
    %483 = tpu.assume_multiple %482, 8 : i32
    %484 = arith.index_cast %483 : i32 to index
    %c0_179 = arith.constant 0 : index
    %485 = vector.load %arg17[%484, %c0_179] : memref<64x512xf32, #tpu.memory_space<vmem>>, vector<8x512xf32>
    %486 = arith.truncf %477 : vector<8x128xf32> to vector<8x128xbf16>
    %c0_180 = arith.constant 0 : index
    %c0_181 = arith.constant 0 : index
    %487 = vector.load %arg9[%c0_180, %c0_181] : memref<128x512xbf16, #tpu.memory_space<vmem>>, vector<128x512xbf16>
    %cst_182 = arith.constant dense<0.000000e+00> : vector<8x512xf32>
    %488 = tpu.matmul %486, %487, %cst_182 {dimension_numbers = #tpu.dot_dimension_numbers<[1], [0], [0], [1], [0, 0, 1, 1], [], []>} : vector<8x128xbf16>, vector<128x512xbf16>, vector<8x512xf32> -> vector<8x512xf32>
    %489 = arith.addf %485, %488 : vector<8x512xf32>
    %490 = vector.extract_strided_slice %489 {offsets = [0, 0], sizes = [8, 384], strides = [1, 1]} : vector<8x512xf32> to vector<8x384xf32>
    %491 = arith.negf %490 : vector<8x384xf32>
    %492 = math.exp %491 : vector<8x384xf32>
    %cst_183 = arith.constant 1.000000e+00 : f32
    %493 = vector.broadcast %cst_183 : f32 to vector<8x384xf32>
    %494 = arith.addf %493, %492 : vector<8x384xf32>
    %495 = arith.divf %493, %494 : vector<8x384xf32>
    %496 = vector.extract_strided_slice %489 {offsets = [0, 384], sizes = [8, 128], strides = [1, 1]} : vector<8x512xf32> to vector<8x128xf32>
    %497 = math.tanh %496 : vector<8x128xf32>
    %498 = vector.extract_strided_slice %495 {offsets = [0, 128], sizes = [8, 128], strides = [1, 1]} : vector<8x384xf32> to vector<8x128xf32>
    %499 = arith.mulf %498, %474 : vector<8x128xf32>
    %500 = vector.extract_strided_slice %495 {offsets = [0, 0], sizes = [8, 128], strides = [1, 1]} : vector<8x384xf32> to vector<8x128xf32>
    %501 = arith.mulf %500, %497 : vector<8x128xf32>
    %502 = arith.addf %499, %501 : vector<8x128xf32>
    %503 = vector.extract_strided_slice %495 {offsets = [0, 256], sizes = [8, 128], strides = [1, 1]} : vector<8x384xf32> to vector<8x128xf32>
    %504 = math.tanh %502 : vector<8x128xf32>
    %505 = arith.mulf %503, %504 : vector<8x128xf32>
    %c8_i32_184 = arith.constant 8 : i32
    %506 = arith.muli %c1_i32_177, %c8_i32_184 : i32
    %507 = tpu.assume_multiple %506, 8 : i32
    %508 = arith.index_cast %507 : i32 to index
    %c0_185 = arith.constant 0 : index
    %509 = vector.load %arg15[%508, %c0_185] : memref<64x128xf32, #tpu.memory_space<vmem>>, vector<8x128xf32>
    tpu.vector_store %arg15[%508, %c0_185], %505 {strides = array<i32>} : memref<64x128xf32, #tpu.memory_space<vmem>>, vector<8x128xf32>,
    %c2_i32_186 = arith.constant 2 : i32
    %c8_i32_187 = arith.constant 8 : i32
    %510 = arith.muli %c2_i32_186, %c8_i32_187 : i32
    %511 = tpu.assume_multiple %510, 8 : i32
    %512 = arith.index_cast %511 : i32 to index
    %c0_188 = arith.constant 0 : index
    %513 = vector.load %arg17[%512, %c0_188] : memref<64x512xf32, #tpu.memory_space<vmem>>, vector<8x512xf32>
    %514 = arith.truncf %505 : vector<8x128xf32> to vector<8x128xbf16>
    %c0_189 = arith.constant 0 : index
    %c0_190 = arith.constant 0 : index
    %515 = vector.load %arg9[%c0_189, %c0_190] : memref<128x512xbf16, #tpu.memory_space<vmem>>, vector<128x512xbf16>
    %cst_191 = arith.constant dense<0.000000e+00> : vector<8x512xf32>
    %516 = tpu.matmul %514, %515, %cst_191 {dimension_numbers = #tpu.dot_dimension_numbers<[1], [0], [0], [1], [0, 0, 1, 1], [], []>} : vector<8x128xbf16>, vector<128x512xbf16>, vector<8x512xf32> -> vector<8x512xf32>
    %517 = arith.addf %513, %516 : vector<8x512xf32>
    %518 = vector.extract_strided_slice %517 {offsets = [0, 0], sizes = [8, 384], strides = [1, 1]} : vector<8x512xf32> to vector<8x384xf32>
    %519 = arith.negf %518 : vector<8x384xf32>
    %520 = math.exp %519 : vector<8x384xf32>
    %cst_192 = arith.constant 1.000000e+00 : f32
    %521 = vector.broadcast %cst_192 : f32 to vector<8x384xf32>
    %522 = arith.addf %521, %520 : vector<8x384xf32>
    %523 = arith.divf %521, %522 : vector<8x384xf32>
    %524 = vector.extract_strided_slice %517 {offsets = [0, 384], sizes = [8, 128], strides = [1, 1]} : vector<8x512xf32> to vector<8x128xf32>
    %525 = math.tanh %524 : vector<8x128xf32>
    %526 = vector.extract_strided_slice %523 {offsets = [0, 128], sizes = [8, 128], strides = [1, 1]} : vector<8x384xf32> to vector<8x128xf32>
    %527 = arith.mulf %526, %502 : vector<8x128xf32>
    %528 = vector.extract_strided_slice %523 {offsets = [0, 0], sizes = [8, 128], strides = [1, 1]} : vector<8x384xf32> to vector<8x128xf32>
    %529 = arith.mulf %528, %525 : vector<8x128xf32>
    %530 = arith.addf %527, %529 : vector<8x128xf32>
    %531 = vector.extract_strided_slice %523 {offsets = [0, 256], sizes = [8, 128], strides = [1, 1]} : vector<8x384xf32> to vector<8x128xf32>
    %532 = math.tanh %530 : vector<8x128xf32>
    %533 = arith.mulf %531, %532 : vector<8x128xf32>
    %c8_i32_193 = arith.constant 8 : i32
    %534 = arith.muli %c2_i32_186, %c8_i32_193 : i32
    %535 = tpu.assume_multiple %534, 8 : i32
    %536 = arith.index_cast %535 : i32 to index
    %c0_194 = arith.constant 0 : index
    %537 = vector.load %arg15[%536, %c0_194] : memref<64x128xf32, #tpu.memory_space<vmem>>, vector<8x128xf32>
    tpu.vector_store %arg15[%536, %c0_194], %533 {strides = array<i32>} : memref<64x128xf32, #tpu.memory_space<vmem>>, vector<8x128xf32>,
    %c3_i32_195 = arith.constant 3 : i32
    %c8_i32_196 = arith.constant 8 : i32
    %538 = arith.muli %c3_i32_195, %c8_i32_196 : i32
    %539 = tpu.assume_multiple %538, 8 : i32
    %540 = arith.index_cast %539 : i32 to index
    %c0_197 = arith.constant 0 : index
    %541 = vector.load %arg17[%540, %c0_197] : memref<64x512xf32, #tpu.memory_space<vmem>>, vector<8x512xf32>
    %542 = arith.truncf %533 : vector<8x128xf32> to vector<8x128xbf16>
    %c0_198 = arith.constant 0 : index
    %c0_199 = arith.constant 0 : index
    %543 = vector.load %arg9[%c0_198, %c0_199] : memref<128x512xbf16, #tpu.memory_space<vmem>>, vector<128x512xbf16>
    %cst_200 = arith.constant dense<0.000000e+00> : vector<8x512xf32>
    %544 = tpu.matmul %542, %543, %cst_200 {dimension_numbers = #tpu.dot_dimension_numbers<[1], [0], [0], [1], [0, 0, 1, 1], [], []>} : vector<8x128xbf16>, vector<128x512xbf16>, vector<8x512xf32> -> vector<8x512xf32>
    %545 = arith.addf %541, %544 : vector<8x512xf32>
    %546 = vector.extract_strided_slice %545 {offsets = [0, 0], sizes = [8, 384], strides = [1, 1]} : vector<8x512xf32> to vector<8x384xf32>
    %547 = arith.negf %546 : vector<8x384xf32>
    %548 = math.exp %547 : vector<8x384xf32>
    %cst_201 = arith.constant 1.000000e+00 : f32
    %549 = vector.broadcast %cst_201 : f32 to vector<8x384xf32>
    %550 = arith.addf %549, %548 : vector<8x384xf32>
    %551 = arith.divf %549, %550 : vector<8x384xf32>
    %552 = vector.extract_strided_slice %545 {offsets = [0, 384], sizes = [8, 128], strides = [1, 1]} : vector<8x512xf32> to vector<8x128xf32>
    %553 = math.tanh %552 : vector<8x128xf32>
    %554 = vector.extract_strided_slice %551 {offsets = [0, 128], sizes = [8, 128], strides = [1, 1]} : vector<8x384xf32> to vector<8x128xf32>
    %555 = arith.mulf %554, %530 : vector<8x128xf32>
    %556 = vector.extract_strided_slice %551 {offsets = [0, 0], sizes = [8, 128], strides = [1, 1]} : vector<8x384xf32> to vector<8x128xf32>
    %557 = arith.mulf %556, %553 : vector<8x128xf32>
    %558 = arith.addf %555, %557 : vector<8x128xf32>
    %559 = vector.extract_strided_slice %551 {offsets = [0, 256], sizes = [8, 128], strides = [1, 1]} : vector<8x384xf32> to vector<8x128xf32>
    %560 = math.tanh %558 : vector<8x128xf32>
    %561 = arith.mulf %559, %560 : vector<8x128xf32>
    %c8_i32_202 = arith.constant 8 : i32
    %562 = arith.muli %c3_i32_195, %c8_i32_202 : i32
    %563 = tpu.assume_multiple %562, 8 : i32
    %564 = arith.index_cast %563 : i32 to index
    %c0_203 = arith.constant 0 : index
    %565 = vector.load %arg15[%564, %c0_203] : memref<64x128xf32, #tpu.memory_space<vmem>>, vector<8x128xf32>
    tpu.vector_store %arg15[%564, %c0_203], %561 {strides = array<i32>} : memref<64x128xf32, #tpu.memory_space<vmem>>, vector<8x128xf32>,
    %c4_i32_204 = arith.constant 4 : i32
    %c8_i32_205 = arith.constant 8 : i32
    %566 = arith.muli %c4_i32_204, %c8_i32_205 : i32
    %567 = tpu.assume_multiple %566, 8 : i32
    %568 = arith.index_cast %567 : i32 to index
    %c0_206 = arith.constant 0 : index
    %569 = vector.load %arg17[%568, %c0_206] : memref<64x512xf32, #tpu.memory_space<vmem>>, vector<8x512xf32>
    %570 = arith.truncf %561 : vector<8x128xf32> to vector<8x128xbf16>
    %c0_207 = arith.constant 0 : index
    %c0_208 = arith.constant 0 : index
    %571 = vector.load %arg9[%c0_207, %c0_208] : memref<128x512xbf16, #tpu.memory_space<vmem>>, vector<128x512xbf16>
    %cst_209 = arith.constant dense<0.000000e+00> : vector<8x512xf32>
    %572 = tpu.matmul %570, %571, %cst_209 {dimension_numbers = #tpu.dot_dimension_numbers<[1], [0], [0], [1], [0, 0, 1, 1], [], []>} : vector<8x128xbf16>, vector<128x512xbf16>, vector<8x512xf32> -> vector<8x512xf32>
    %573 = arith.addf %569, %572 : vector<8x512xf32>
    %574 = vector.extract_strided_slice %573 {offsets = [0, 0], sizes = [8, 384], strides = [1, 1]} : vector<8x512xf32> to vector<8x384xf32>
    %575 = arith.negf %574 : vector<8x384xf32>
    %576 = math.exp %575 : vector<8x384xf32>
    %cst_210 = arith.constant 1.000000e+00 : f32
    %577 = vector.broadcast %cst_210 : f32 to vector<8x384xf32>
    %578 = arith.addf %577, %576 : vector<8x384xf32>
    %579 = arith.divf %577, %578 : vector<8x384xf32>
    %580 = vector.extract_strided_slice %573 {offsets = [0, 384], sizes = [8, 128], strides = [1, 1]} : vector<8x512xf32> to vector<8x128xf32>
    %581 = math.tanh %580 : vector<8x128xf32>
    %582 = vector.extract_strided_slice %579 {offsets = [0, 128], sizes = [8, 128], strides = [1, 1]} : vector<8x384xf32> to vector<8x128xf32>
    %583 = arith.mulf %582, %558 : vector<8x128xf32>
    %584 = vector.extract_strided_slice %579 {offsets = [0, 0], sizes = [8, 128], strides = [1, 1]} : vector<8x384xf32> to vector<8x128xf32>
    %585 = arith.mulf %584, %581 : vector<8x128xf32>
    %586 = arith.addf %583, %585 : vector<8x128xf32>
    %587 = vector.extract_strided_slice %579 {offsets = [0, 256], sizes = [8, 128], strides = [1, 1]} : vector<8x384xf32> to vector<8x128xf32>
    %588 = math.tanh %586 : vector<8x128xf32>
    %589 = arith.mulf %587, %588 : vector<8x128xf32>
    %c8_i32_211 = arith.constant 8 : i32
    %590 = arith.muli %c4_i32_204, %c8_i32_211 : i32
    %591 = tpu.assume_multiple %590, 8 : i32
    %592 = arith.index_cast %591 : i32 to index
    %c0_212 = arith.constant 0 : index
    %593 = vector.load %arg15[%592, %c0_212] : memref<64x128xf32, #tpu.memory_space<vmem>>, vector<8x128xf32>
    tpu.vector_store %arg15[%592, %c0_212], %589 {strides = array<i32>} : memref<64x128xf32, #tpu.memory_space<vmem>>, vector<8x128xf32>,
    %c5_i32_213 = arith.constant 5 : i32
    %c8_i32_214 = arith.constant 8 : i32
    %594 = arith.muli %c5_i32_213, %c8_i32_214 : i32
    %595 = tpu.assume_multiple %594, 8 : i32
    %596 = arith.index_cast %595 : i32 to index
    %c0_215 = arith.constant 0 : index
    %597 = vector.load %arg17[%596, %c0_215] : memref<64x512xf32, #tpu.memory_space<vmem>>, vector<8x512xf32>
    %598 = arith.truncf %589 : vector<8x128xf32> to vector<8x128xbf16>
    %c0_216 = arith.constant 0 : index
    %c0_217 = arith.constant 0 : index
    %599 = vector.load %arg9[%c0_216, %c0_217] : memref<128x512xbf16, #tpu.memory_space<vmem>>, vector<128x512xbf16>
    %cst_218 = arith.constant dense<0.000000e+00> : vector<8x512xf32>
    %600 = tpu.matmul %598, %599, %cst_218 {dimension_numbers = #tpu.dot_dimension_numbers<[1], [0], [0], [1], [0, 0, 1, 1], [], []>} : vector<8x128xbf16>, vector<128x512xbf16>, vector<8x512xf32> -> vector<8x512xf32>
    %601 = arith.addf %597, %600 : vector<8x512xf32>
    %602 = vector.extract_strided_slice %601 {offsets = [0, 0], sizes = [8, 384], strides = [1, 1]} : vector<8x512xf32> to vector<8x384xf32>
    %603 = arith.negf %602 : vector<8x384xf32>
    %604 = math.exp %603 : vector<8x384xf32>
    %cst_219 = arith.constant 1.000000e+00 : f32
    %605 = vector.broadcast %cst_219 : f32 to vector<8x384xf32>
    %606 = arith.addf %605, %604 : vector<8x384xf32>
    %607 = arith.divf %605, %606 : vector<8x384xf32>
    %608 = vector.extract_strided_slice %601 {offsets = [0, 384], sizes = [8, 128], strides = [1, 1]} : vector<8x512xf32> to vector<8x128xf32>
    %609 = math.tanh %608 : vector<8x128xf32>
    %610 = vector.extract_strided_slice %607 {offsets = [0, 128], sizes = [8, 128], strides = [1, 1]} : vector<8x384xf32> to vector<8x128xf32>
    %611 = arith.mulf %610, %586 : vector<8x128xf32>
    %612 = vector.extract_strided_slice %607 {offsets = [0, 0], sizes = [8, 128], strides = [1, 1]} : vector<8x384xf32> to vector<8x128xf32>
    %613 = arith.mulf %612, %609 : vector<8x128xf32>
    %614 = arith.addf %611, %613 : vector<8x128xf32>
    %615 = vector.extract_strided_slice %607 {offsets = [0, 256], sizes = [8, 128], strides = [1, 1]} : vector<8x384xf32> to vector<8x128xf32>
    %616 = math.tanh %614 : vector<8x128xf32>
    %617 = arith.mulf %615, %616 : vector<8x128xf32>
    %c8_i32_220 = arith.constant 8 : i32
    %618 = arith.muli %c5_i32_213, %c8_i32_220 : i32
    %619 = tpu.assume_multiple %618, 8 : i32
    %620 = arith.index_cast %619 : i32 to index
    %c0_221 = arith.constant 0 : index
    %621 = vector.load %arg15[%620, %c0_221] : memref<64x128xf32, #tpu.memory_space<vmem>>, vector<8x128xf32>
    tpu.vector_store %arg15[%620, %c0_221], %617 {strides = array<i32>} : memref<64x128xf32, #tpu.memory_space<vmem>>, vector<8x128xf32>,
    %c6_i32_222 = arith.constant 6 : i32
    %c8_i32_223 = arith.constant 8 : i32
    %622 = arith.muli %c6_i32_222, %c8_i32_223 : i32
    %623 = tpu.assume_multiple %622, 8 : i32
    %624 = arith.index_cast %623 : i32 to index
    %c0_224 = arith.constant 0 : index
    %625 = vector.load %arg17[%624, %c0_224] : memref<64x512xf32, #tpu.memory_space<vmem>>, vector<8x512xf32>
    %626 = arith.truncf %617 : vector<8x128xf32> to vector<8x128xbf16>
    %c0_225 = arith.constant 0 : index
    %c0_226 = arith.constant 0 : index
    %627 = vector.load %arg9[%c0_225, %c0_226] : memref<128x512xbf16, #tpu.memory_space<vmem>>, vector<128x512xbf16>
    %cst_227 = arith.constant dense<0.000000e+00> : vector<8x512xf32>
    %628 = tpu.matmul %626, %627, %cst_227 {dimension_numbers = #tpu.dot_dimension_numbers<[1], [0], [0], [1], [0, 0, 1, 1], [], []>} : vector<8x128xbf16>, vector<128x512xbf16>, vector<8x512xf32> -> vector<8x512xf32>
    %629 = arith.addf %625, %628 : vector<8x512xf32>
    %630 = vector.extract_strided_slice %629 {offsets = [0, 0], sizes = [8, 384], strides = [1, 1]} : vector<8x512xf32> to vector<8x384xf32>
    %631 = arith.negf %630 : vector<8x384xf32>
    %632 = math.exp %631 : vector<8x384xf32>
    %cst_228 = arith.constant 1.000000e+00 : f32
    %633 = vector.broadcast %cst_228 : f32 to vector<8x384xf32>
    %634 = arith.addf %633, %632 : vector<8x384xf32>
    %635 = arith.divf %633, %634 : vector<8x384xf32>
    %636 = vector.extract_strided_slice %629 {offsets = [0, 384], sizes = [8, 128], strides = [1, 1]} : vector<8x512xf32> to vector<8x128xf32>
    %637 = math.tanh %636 : vector<8x128xf32>
    %638 = vector.extract_strided_slice %635 {offsets = [0, 128], sizes = [8, 128], strides = [1, 1]} : vector<8x384xf32> to vector<8x128xf32>
    %639 = arith.mulf %638, %614 : vector<8x128xf32>
    %640 = vector.extract_strided_slice %635 {offsets = [0, 0], sizes = [8, 128], strides = [1, 1]} : vector<8x384xf32> to vector<8x128xf32>
    %641 = arith.mulf %640, %637 : vector<8x128xf32>
    %642 = arith.addf %639, %641 : vector<8x128xf32>
    %643 = vector.extract_strided_slice %635 {offsets = [0, 256], sizes = [8, 128], strides = [1, 1]} : vector<8x384xf32> to vector<8x128xf32>
    %644 = math.tanh %642 : vector<8x128xf32>
    %645 = arith.mulf %643, %644 : vector<8x128xf32>
    %c8_i32_229 = arith.constant 8 : i32
    %646 = arith.muli %c6_i32_222, %c8_i32_229 : i32
    %647 = tpu.assume_multiple %646, 8 : i32
    %648 = arith.index_cast %647 : i32 to index
    %c0_230 = arith.constant 0 : index
    %649 = vector.load %arg15[%648, %c0_230] : memref<64x128xf32, #tpu.memory_space<vmem>>, vector<8x128xf32>
    tpu.vector_store %arg15[%648, %c0_230], %645 {strides = array<i32>} : memref<64x128xf32, #tpu.memory_space<vmem>>, vector<8x128xf32>,
    %c7_i32_231 = arith.constant 7 : i32
    %c8_i32_232 = arith.constant 8 : i32
    %650 = arith.muli %c7_i32_231, %c8_i32_232 : i32
    %651 = tpu.assume_multiple %650, 8 : i32
    %652 = arith.index_cast %651 : i32 to index
    %c0_233 = arith.constant 0 : index
    %653 = vector.load %arg17[%652, %c0_233] : memref<64x512xf32, #tpu.memory_space<vmem>>, vector<8x512xf32>
    %654 = arith.truncf %645 : vector<8x128xf32> to vector<8x128xbf16>
    %c0_234 = arith.constant 0 : index
    %c0_235 = arith.constant 0 : index
    %655 = vector.load %arg9[%c0_234, %c0_235] : memref<128x512xbf16, #tpu.memory_space<vmem>>, vector<128x512xbf16>
    %cst_236 = arith.constant dense<0.000000e+00> : vector<8x512xf32>
    %656 = tpu.matmul %654, %655, %cst_236 {dimension_numbers = #tpu.dot_dimension_numbers<[1], [0], [0], [1], [0, 0, 1, 1], [], []>} : vector<8x128xbf16>, vector<128x512xbf16>, vector<8x512xf32> -> vector<8x512xf32>
    %657 = arith.addf %653, %656 : vector<8x512xf32>
    %658 = vector.extract_strided_slice %657 {offsets = [0, 0], sizes = [8, 384], strides = [1, 1]} : vector<8x512xf32> to vector<8x384xf32>
    %659 = arith.negf %658 : vector<8x384xf32>
    %660 = math.exp %659 : vector<8x384xf32>
    %cst_237 = arith.constant 1.000000e+00 : f32
    %661 = vector.broadcast %cst_237 : f32 to vector<8x384xf32>
    %662 = arith.addf %661, %660 : vector<8x384xf32>
    %663 = arith.divf %661, %662 : vector<8x384xf32>
    %664 = vector.extract_strided_slice %657 {offsets = [0, 384], sizes = [8, 128], strides = [1, 1]} : vector<8x512xf32> to vector<8x128xf32>
    %665 = math.tanh %664 : vector<8x128xf32>
    %666 = vector.extract_strided_slice %663 {offsets = [0, 128], sizes = [8, 128], strides = [1, 1]} : vector<8x384xf32> to vector<8x128xf32>
    %667 = arith.mulf %666, %642 : vector<8x128xf32>
    %668 = vector.extract_strided_slice %663 {offsets = [0, 0], sizes = [8, 128], strides = [1, 1]} : vector<8x384xf32> to vector<8x128xf32>
    %669 = arith.mulf %668, %665 : vector<8x128xf32>
    %670 = arith.addf %667, %669 : vector<8x128xf32>
    %671 = vector.extract_strided_slice %663 {offsets = [0, 256], sizes = [8, 128], strides = [1, 1]} : vector<8x384xf32> to vector<8x128xf32>
    %672 = math.tanh %670 : vector<8x128xf32>
    %673 = arith.mulf %671, %672 : vector<8x128xf32>
    %c8_i32_238 = arith.constant 8 : i32
    %674 = arith.muli %c7_i32_231, %c8_i32_238 : i32
    %675 = tpu.assume_multiple %674, 8 : i32
    %676 = arith.index_cast %675 : i32 to index
    %c0_239 = arith.constant 0 : index
    %677 = vector.load %arg15[%676, %c0_239] : memref<64x128xf32, #tpu.memory_space<vmem>>, vector<8x128xf32>
    tpu.vector_store %arg15[%676, %c0_239], %673 {strides = array<i32>} : memref<64x128xf32, #tpu.memory_space<vmem>>, vector<8x128xf32>,
    %c8_i32_240 = arith.constant 8 : i32
    %c0_241 = arith.constant 0 : index
    %c0_242 = arith.constant 0 : index
    %678 = vector.load %arg15[%c0_241, %c0_242] : memref<64x128xf32, #tpu.memory_space<vmem>>, vector<64x128xf32>
    %679 = arith.truncf %678 : vector<64x128xf32> to vector<64x128xbf16>
    %c0_243 = arith.constant 0 : index
    %c0_244 = arith.constant 0 : index
    %680 = vector.load %arg11[%c0_243, %c0_244] : memref<128x512xbf16, #tpu.memory_space<vmem>>, vector<128x512xbf16>
    %cst_245 = arith.constant dense<0.000000e+00> : vector<64x512xf32>
    %681 = tpu.matmul %679, %680, %cst_245 {dimension_numbers = #tpu.dot_dimension_numbers<[1], [0], [0], [1], [0, 0, 1, 1], [], []>} : vector<64x128xbf16>, vector<128x512xbf16>, vector<64x512xf32> -> vector<64x512xf32>
    %c0_246 = arith.constant 0 : index
    %c0_247 = arith.constant 0 : index
    %682 = vector.load %arg13[%c0_246, %c0_247] : memref<1x512xf32, #tpu.memory_space<vmem>>, vector<1x512xf32>
    %683 = vector.broadcast %682 : vector<1x512xf32> to vector<64x512xf32>
    %684 = arith.addf %681, %683 : vector<64x512xf32>
    %c0_248 = arith.constant 0 : index
    %c0_249 = arith.constant 0 : index
    %685 = vector.load %arg17[%c0_248, %c0_249] : memref<64x512xf32, #tpu.memory_space<vmem>>, vector<64x512xf32>
    tpu.vector_store %arg17[%c0_248, %c0_249], %684 {strides = array<i32>} : memref<64x512xf32, #tpu.memory_space<vmem>>, vector<64x512xf32>,
    %cst_250 = arith.constant 0.000000e+00 : f32
    %686 = vector.broadcast %cst_250 : f32 to vector<8x128xf32>
    %cst_251 = arith.constant 0.000000e+00 : f32
    %687 = vector.broadcast %cst_251 : f32 to vector<8x128xf32>
    %c0_i32_252 = arith.constant 0 : i32
    %c8_i32_253 = arith.constant 8 : i32
    %688 = arith.muli %c0_i32_252, %c8_i32_253 : i32
    %689 = tpu.assume_multiple %688, 8 : i32
    %690 = arith.index_cast %689 : i32 to index
    %c0_254 = arith.constant 0 : index
    %691 = vector.load %arg17[%690, %c0_254] : memref<64x512xf32, #tpu.memory_space<vmem>>, vector<8x512xf32>
    %692 = arith.truncf %686 : vector<8x128xf32> to vector<8x128xbf16>
    %c0_255 = arith.constant 0 : index
    %c0_256 = arith.constant 0 : index
    %693 = vector.load %arg12[%c0_255, %c0_256] : memref<128x512xbf16, #tpu.memory_space<vmem>>, vector<128x512xbf16>
    %cst_257 = arith.constant dense<0.000000e+00> : vector<8x512xf32>
    %694 = tpu.matmul %692, %693, %cst_257 {dimension_numbers = #tpu.dot_dimension_numbers<[1], [0], [0], [1], [0, 0, 1, 1], [], []>} : vector<8x128xbf16>, vector<128x512xbf16>, vector<8x512xf32> -> vector<8x512xf32>
    %695 = arith.addf %691, %694 : vector<8x512xf32>
    %696 = vector.extract_strided_slice %695 {offsets = [0, 0], sizes = [8, 384], strides = [1, 1]} : vector<8x512xf32> to vector<8x384xf32>
    %697 = arith.negf %696 : vector<8x384xf32>
    %698 = math.exp %697 : vector<8x384xf32>
    %cst_258 = arith.constant 1.000000e+00 : f32
    %699 = vector.broadcast %cst_258 : f32 to vector<8x384xf32>
    %700 = arith.addf %699, %698 : vector<8x384xf32>
    %701 = arith.divf %699, %700 : vector<8x384xf32>
    %702 = vector.extract_strided_slice %695 {offsets = [0, 384], sizes = [8, 128], strides = [1, 1]} : vector<8x512xf32> to vector<8x128xf32>
    %703 = math.tanh %702 : vector<8x128xf32>
    %704 = vector.extract_strided_slice %701 {offsets = [0, 128], sizes = [8, 128], strides = [1, 1]} : vector<8x384xf32> to vector<8x128xf32>
    %705 = arith.mulf %704, %687 : vector<8x128xf32>
    %706 = vector.extract_strided_slice %701 {offsets = [0, 0], sizes = [8, 128], strides = [1, 1]} : vector<8x384xf32> to vector<8x128xf32>
    %707 = arith.mulf %706, %703 : vector<8x128xf32>
    %708 = arith.addf %705, %707 : vector<8x128xf32>
    %709 = vector.extract_strided_slice %701 {offsets = [0, 256], sizes = [8, 128], strides = [1, 1]} : vector<8x384xf32> to vector<8x128xf32>
    %710 = math.tanh %708 : vector<8x128xf32>
    %711 = arith.mulf %709, %710 : vector<8x128xf32>
    %712 = arith.index_cast %c0_i32_252 : i32 to index
    %c0_259 = arith.constant 0 : index
    %c0_260 = arith.constant 0 : index
    %713 = vector.load %arg14[%712, %c0_259, %c0_260] : memref<8x8x128xf32, #tpu.memory_space<vmem>>, vector<1x8x128xf32>
    %714 = vector.shape_cast %713 : vector<1x8x128xf32> to vector<8x128xf32>
    %715 = vector.shape_cast %711 : vector<8x128xf32> to vector<1x8x128xf32>
    tpu.vector_store %arg14[%712, %c0_259, %c0_260], %715 {strides = array<i32>} : memref<8x8x128xf32, #tpu.memory_space<vmem>>, vector<1x8x128xf32>,
    %c1_i32_261 = arith.constant 1 : i32
    %c8_i32_262 = arith.constant 8 : i32
    %716 = arith.muli %c1_i32_261, %c8_i32_262 : i32
    %717 = tpu.assume_multiple %716, 8 : i32
    %718 = arith.index_cast %717 : i32 to index
    %c0_263 = arith.constant 0 : index
    %719 = vector.load %arg17[%718, %c0_263] : memref<64x512xf32, #tpu.memory_space<vmem>>, vector<8x512xf32>
    %720 = arith.truncf %711 : vector<8x128xf32> to vector<8x128xbf16>
    %c0_264 = arith.constant 0 : index
    %c0_265 = arith.constant 0 : index
    %721 = vector.load %arg12[%c0_264, %c0_265] : memref<128x512xbf16, #tpu.memory_space<vmem>>, vector<128x512xbf16>
    %cst_266 = arith.constant dense<0.000000e+00> : vector<8x512xf32>
    %722 = tpu.matmul %720, %721, %cst_266 {dimension_numbers = #tpu.dot_dimension_numbers<[1], [0], [0], [1], [0, 0, 1, 1], [], []>} : vector<8x128xbf16>, vector<128x512xbf16>, vector<8x512xf32> -> vector<8x512xf32>
    %723 = arith.addf %719, %722 : vector<8x512xf32>
    %724 = vector.extract_strided_slice %723 {offsets = [0, 0], sizes = [8, 384], strides = [1, 1]} : vector<8x512xf32> to vector<8x384xf32>
    %725 = arith.negf %724 : vector<8x384xf32>
    %726 = math.exp %725 : vector<8x384xf32>
    %cst_267 = arith.constant 1.000000e+00 : f32
    %727 = vector.broadcast %cst_267 : f32 to vector<8x384xf32>
    %728 = arith.addf %727, %726 : vector<8x384xf32>
    %729 = arith.divf %727, %728 : vector<8x384xf32>
    %730 = vector.extract_strided_slice %723 {offsets = [0, 384], sizes = [8, 128], strides = [1, 1]} : vector<8x512xf32> to vector<8x128xf32>
    %731 = math.tanh %730 : vector<8x128xf32>
    %732 = vector.extract_strided_slice %729 {offsets = [0, 128], sizes = [8, 128], strides = [1, 1]} : vector<8x384xf32> to vector<8x128xf32>
    %733 = arith.mulf %732, %708 : vector<8x128xf32>
    %734 = vector.extract_strided_slice %729 {offsets = [0, 0], sizes = [8, 128], strides = [1, 1]} : vector<8x384xf32> to vector<8x128xf32>
    %735 = arith.mulf %734, %731 : vector<8x128xf32>
    %736 = arith.addf %733, %735 : vector<8x128xf32>
    %737 = vector.extract_strided_slice %729 {offsets = [0, 256], sizes = [8, 128], strides = [1, 1]} : vector<8x384xf32> to vector<8x128xf32>
    %738 = math.tanh %736 : vector<8x128xf32>
    %739 = arith.mulf %737, %738 : vector<8x128xf32>
    %740 = arith.index_cast %c1_i32_261 : i32 to index
    %c0_268 = arith.constant 0 : index
    %c0_269 = arith.constant 0 : index
    %741 = vector.load %arg14[%740, %c0_268, %c0_269] : memref<8x8x128xf32, #tpu.memory_space<vmem>>, vector<1x8x128xf32>
    %742 = vector.shape_cast %741 : vector<1x8x128xf32> to vector<8x128xf32>
    %743 = vector.shape_cast %739 : vector<8x128xf32> to vector<1x8x128xf32>
    tpu.vector_store %arg14[%740, %c0_268, %c0_269], %743 {strides = array<i32>} : memref<8x8x128xf32, #tpu.memory_space<vmem>>, vector<1x8x128xf32>,
    %c2_i32_270 = arith.constant 2 : i32
    %c8_i32_271 = arith.constant 8 : i32
    %744 = arith.muli %c2_i32_270, %c8_i32_271 : i32
    %745 = tpu.assume_multiple %744, 8 : i32
    %746 = arith.index_cast %745 : i32 to index
    %c0_272 = arith.constant 0 : index
    %747 = vector.load %arg17[%746, %c0_272] : memref<64x512xf32, #tpu.memory_space<vmem>>, vector<8x512xf32>
    %748 = arith.truncf %739 : vector<8x128xf32> to vector<8x128xbf16>
    %c0_273 = arith.constant 0 : index
    %c0_274 = arith.constant 0 : index
    %749 = vector.load %arg12[%c0_273, %c0_274] : memref<128x512xbf16, #tpu.memory_space<vmem>>, vector<128x512xbf16>
    %cst_275 = arith.constant dense<0.000000e+00> : vector<8x512xf32>
    %750 = tpu.matmul %748, %749, %cst_275 {dimension_numbers = #tpu.dot_dimension_numbers<[1], [0], [0], [1], [0, 0, 1, 1], [], []>} : vector<8x128xbf16>, vector<128x512xbf16>, vector<8x512xf32> -> vector<8x512xf32>
    %751 = arith.addf %747, %750 : vector<8x512xf32>
    %752 = vector.extract_strided_slice %751 {offsets = [0, 0], sizes = [8, 384], strides = [1, 1]} : vector<8x512xf32> to vector<8x384xf32>
    %753 = arith.negf %752 : vector<8x384xf32>
    %754 = math.exp %753 : vector<8x384xf32>
    %cst_276 = arith.constant 1.000000e+00 : f32
    %755 = vector.broadcast %cst_276 : f32 to vector<8x384xf32>
    %756 = arith.addf %755, %754 : vector<8x384xf32>
    %757 = arith.divf %755, %756 : vector<8x384xf32>
    %758 = vector.extract_strided_slice %751 {offsets = [0, 384], sizes = [8, 128], strides = [1, 1]} : vector<8x512xf32> to vector<8x128xf32>
    %759 = math.tanh %758 : vector<8x128xf32>
    %760 = vector.extract_strided_slice %757 {offsets = [0, 128], sizes = [8, 128], strides = [1, 1]} : vector<8x384xf32> to vector<8x128xf32>
    %761 = arith.mulf %760, %736 : vector<8x128xf32>
    %762 = vector.extract_strided_slice %757 {offsets = [0, 0], sizes = [8, 128], strides = [1, 1]} : vector<8x384xf32> to vector<8x128xf32>
    %763 = arith.mulf %762, %759 : vector<8x128xf32>
    %764 = arith.addf %761, %763 : vector<8x128xf32>
    %765 = vector.extract_strided_slice %757 {offsets = [0, 256], sizes = [8, 128], strides = [1, 1]} : vector<8x384xf32> to vector<8x128xf32>
    %766 = math.tanh %764 : vector<8x128xf32>
    %767 = arith.mulf %765, %766 : vector<8x128xf32>
    %768 = arith.index_cast %c2_i32_270 : i32 to index
    %c0_277 = arith.constant 0 : index
    %c0_278 = arith.constant 0 : index
    %769 = vector.load %arg14[%768, %c0_277, %c0_278] : memref<8x8x128xf32, #tpu.memory_space<vmem>>, vector<1x8x128xf32>
    %770 = vector.shape_cast %769 : vector<1x8x128xf32> to vector<8x128xf32>
    %771 = vector.shape_cast %767 : vector<8x128xf32> to vector<1x8x128xf32>
    tpu.vector_store %arg14[%768, %c0_277, %c0_278], %771 {strides = array<i32>} : memref<8x8x128xf32, #tpu.memory_space<vmem>>, vector<1x8x128xf32>,
    %c3_i32_279 = arith.constant 3 : i32
    %c8_i32_280 = arith.constant 8 : i32
    %772 = arith.muli %c3_i32_279, %c8_i32_280 : i32
    %773 = tpu.assume_multiple %772, 8 : i32
    %774 = arith.index_cast %773 : i32 to index
    %c0_281 = arith.constant 0 : index
    %775 = vector.load %arg17[%774, %c0_281] : memref<64x512xf32, #tpu.memory_space<vmem>>, vector<8x512xf32>
    %776 = arith.truncf %767 : vector<8x128xf32> to vector<8x128xbf16>
    %c0_282 = arith.constant 0 : index
    %c0_283 = arith.constant 0 : index
    %777 = vector.load %arg12[%c0_282, %c0_283] : memref<128x512xbf16, #tpu.memory_space<vmem>>, vector<128x512xbf16>
    %cst_284 = arith.constant dense<0.000000e+00> : vector<8x512xf32>
    %778 = tpu.matmul %776, %777, %cst_284 {dimension_numbers = #tpu.dot_dimension_numbers<[1], [0], [0], [1], [0, 0, 1, 1], [], []>} : vector<8x128xbf16>, vector<128x512xbf16>, vector<8x512xf32> -> vector<8x512xf32>
    %779 = arith.addf %775, %778 : vector<8x512xf32>
    %780 = vector.extract_strided_slice %779 {offsets = [0, 0], sizes = [8, 384], strides = [1, 1]} : vector<8x512xf32> to vector<8x384xf32>
    %781 = arith.negf %780 : vector<8x384xf32>
    %782 = math.exp %781 : vector<8x384xf32>
    %cst_285 = arith.constant 1.000000e+00 : f32
    %783 = vector.broadcast %cst_285 : f32 to vector<8x384xf32>
    %784 = arith.addf %783, %782 : vector<8x384xf32>
    %785 = arith.divf %783, %784 : vector<8x384xf32>
    %786 = vector.extract_strided_slice %779 {offsets = [0, 384], sizes = [8, 128], strides = [1, 1]} : vector<8x512xf32> to vector<8x128xf32>
    %787 = math.tanh %786 : vector<8x128xf32>
    %788 = vector.extract_strided_slice %785 {offsets = [0, 128], sizes = [8, 128], strides = [1, 1]} : vector<8x384xf32> to vector<8x128xf32>
    %789 = arith.mulf %788, %764 : vector<8x128xf32>
    %790 = vector.extract_strided_slice %785 {offsets = [0, 0], sizes = [8, 128], strides = [1, 1]} : vector<8x384xf32> to vector<8x128xf32>
    %791 = arith.mulf %790, %787 : vector<8x128xf32>
    %792 = arith.addf %789, %791 : vector<8x128xf32>
    %793 = vector.extract_strided_slice %785 {offsets = [0, 256], sizes = [8, 128], strides = [1, 1]} : vector<8x384xf32> to vector<8x128xf32>
    %794 = math.tanh %792 : vector<8x128xf32>
    %795 = arith.mulf %793, %794 : vector<8x128xf32>
    %796 = arith.index_cast %c3_i32_279 : i32 to index
    %c0_286 = arith.constant 0 : index
    %c0_287 = arith.constant 0 : index
    %797 = vector.load %arg14[%796, %c0_286, %c0_287] : memref<8x8x128xf32, #tpu.memory_space<vmem>>, vector<1x8x128xf32>
    %798 = vector.shape_cast %797 : vector<1x8x128xf32> to vector<8x128xf32>
    %799 = vector.shape_cast %795 : vector<8x128xf32> to vector<1x8x128xf32>
    tpu.vector_store %arg14[%796, %c0_286, %c0_287], %799 {strides = array<i32>} : memref<8x8x128xf32, #tpu.memory_space<vmem>>, vector<1x8x128xf32>,
    %c4_i32_288 = arith.constant 4 : i32
    %c8_i32_289 = arith.constant 8 : i32
    %800 = arith.muli %c4_i32_288, %c8_i32_289 : i32
    %801 = tpu.assume_multiple %800, 8 : i32
    %802 = arith.index_cast %801 : i32 to index
    %c0_290 = arith.constant 0 : index
    %803 = vector.load %arg17[%802, %c0_290] : memref<64x512xf32, #tpu.memory_space<vmem>>, vector<8x512xf32>
    %804 = arith.truncf %795 : vector<8x128xf32> to vector<8x128xbf16>
    %c0_291 = arith.constant 0 : index
    %c0_292 = arith.constant 0 : index
    %805 = vector.load %arg12[%c0_291, %c0_292] : memref<128x512xbf16, #tpu.memory_space<vmem>>, vector<128x512xbf16>
    %cst_293 = arith.constant dense<0.000000e+00> : vector<8x512xf32>
    %806 = tpu.matmul %804, %805, %cst_293 {dimension_numbers = #tpu.dot_dimension_numbers<[1], [0], [0], [1], [0, 0, 1, 1], [], []>} : vector<8x128xbf16>, vector<128x512xbf16>, vector<8x512xf32> -> vector<8x512xf32>
    %807 = arith.addf %803, %806 : vector<8x512xf32>
    %808 = vector.extract_strided_slice %807 {offsets = [0, 0], sizes = [8, 384], strides = [1, 1]} : vector<8x512xf32> to vector<8x384xf32>
    %809 = arith.negf %808 : vector<8x384xf32>
    %810 = math.exp %809 : vector<8x384xf32>
    %cst_294 = arith.constant 1.000000e+00 : f32
    %811 = vector.broadcast %cst_294 : f32 to vector<8x384xf32>
    %812 = arith.addf %811, %810 : vector<8x384xf32>
    %813 = arith.divf %811, %812 : vector<8x384xf32>
    %814 = vector.extract_strided_slice %807 {offsets = [0, 384], sizes = [8, 128], strides = [1, 1]} : vector<8x512xf32> to vector<8x128xf32>
    %815 = math.tanh %814 : vector<8x128xf32>
    %816 = vector.extract_strided_slice %813 {offsets = [0, 128], sizes = [8, 128], strides = [1, 1]} : vector<8x384xf32> to vector<8x128xf32>
    %817 = arith.mulf %816, %792 : vector<8x128xf32>
    %818 = vector.extract_strided_slice %813 {offsets = [0, 0], sizes = [8, 128], strides = [1, 1]} : vector<8x384xf32> to vector<8x128xf32>
    %819 = arith.mulf %818, %815 : vector<8x128xf32>
    %820 = arith.addf %817, %819 : vector<8x128xf32>
    %821 = vector.extract_strided_slice %813 {offsets = [0, 256], sizes = [8, 128], strides = [1, 1]} : vector<8x384xf32> to vector<8x128xf32>
    %822 = math.tanh %820 : vector<8x128xf32>
    %823 = arith.mulf %821, %822 : vector<8x128xf32>
    %824 = arith.index_cast %c4_i32_288 : i32 to index
    %c0_295 = arith.constant 0 : index
    %c0_296 = arith.constant 0 : index
    %825 = vector.load %arg14[%824, %c0_295, %c0_296] : memref<8x8x128xf32, #tpu.memory_space<vmem>>, vector<1x8x128xf32>
    %826 = vector.shape_cast %825 : vector<1x8x128xf32> to vector<8x128xf32>
    %827 = vector.shape_cast %823 : vector<8x128xf32> to vector<1x8x128xf32>
    tpu.vector_store %arg14[%824, %c0_295, %c0_296], %827 {strides = array<i32>} : memref<8x8x128xf32, #tpu.memory_space<vmem>>, vector<1x8x128xf32>,
    %c5_i32_297 = arith.constant 5 : i32
    %c8_i32_298 = arith.constant 8 : i32
    %828 = arith.muli %c5_i32_297, %c8_i32_298 : i32
    %829 = tpu.assume_multiple %828, 8 : i32
    %830 = arith.index_cast %829 : i32 to index
    %c0_299 = arith.constant 0 : index
    %831 = vector.load %arg17[%830, %c0_299] : memref<64x512xf32, #tpu.memory_space<vmem>>, vector<8x512xf32>
    %832 = arith.truncf %823 : vector<8x128xf32> to vector<8x128xbf16>
    %c0_300 = arith.constant 0 : index
    %c0_301 = arith.constant 0 : index
    %833 = vector.load %arg12[%c0_300, %c0_301] : memref<128x512xbf16, #tpu.memory_space<vmem>>, vector<128x512xbf16>
    %cst_302 = arith.constant dense<0.000000e+00> : vector<8x512xf32>
    %834 = tpu.matmul %832, %833, %cst_302 {dimension_numbers = #tpu.dot_dimension_numbers<[1], [0], [0], [1], [0, 0, 1, 1], [], []>} : vector<8x128xbf16>, vector<128x512xbf16>, vector<8x512xf32> -> vector<8x512xf32>
    %835 = arith.addf %831, %834 : vector<8x512xf32>
    %836 = vector.extract_strided_slice %835 {offsets = [0, 0], sizes = [8, 384], strides = [1, 1]} : vector<8x512xf32> to vector<8x384xf32>
    %837 = arith.negf %836 : vector<8x384xf32>
    %838 = math.exp %837 : vector<8x384xf32>
    %cst_303 = arith.constant 1.000000e+00 : f32
    %839 = vector.broadcast %cst_303 : f32 to vector<8x384xf32>
    %840 = arith.addf %839, %838 : vector<8x384xf32>
    %841 = arith.divf %839, %840 : vector<8x384xf32>
    %842 = vector.extract_strided_slice %835 {offsets = [0, 384], sizes = [8, 128], strides = [1, 1]} : vector<8x512xf32> to vector<8x128xf32>
    %843 = math.tanh %842 : vector<8x128xf32>
    %844 = vector.extract_strided_slice %841 {offsets = [0, 128], sizes = [8, 128], strides = [1, 1]} : vector<8x384xf32> to vector<8x128xf32>
    %845 = arith.mulf %844, %820 : vector<8x128xf32>
    %846 = vector.extract_strided_slice %841 {offsets = [0, 0], sizes = [8, 128], strides = [1, 1]} : vector<8x384xf32> to vector<8x128xf32>
    %847 = arith.mulf %846, %843 : vector<8x128xf32>
    %848 = arith.addf %845, %847 : vector<8x128xf32>
    %849 = vector.extract_strided_slice %841 {offsets = [0, 256], sizes = [8, 128], strides = [1, 1]} : vector<8x384xf32> to vector<8x128xf32>
    %850 = math.tanh %848 : vector<8x128xf32>
    %851 = arith.mulf %849, %850 : vector<8x128xf32>
    %852 = arith.index_cast %c5_i32_297 : i32 to index
    %c0_304 = arith.constant 0 : index
    %c0_305 = arith.constant 0 : index
    %853 = vector.load %arg14[%852, %c0_304, %c0_305] : memref<8x8x128xf32, #tpu.memory_space<vmem>>, vector<1x8x128xf32>
    %854 = vector.shape_cast %853 : vector<1x8x128xf32> to vector<8x128xf32>
    %855 = vector.shape_cast %851 : vector<8x128xf32> to vector<1x8x128xf32>
    tpu.vector_store %arg14[%852, %c0_304, %c0_305], %855 {strides = array<i32>} : memref<8x8x128xf32, #tpu.memory_space<vmem>>, vector<1x8x128xf32>,
    %c6_i32_306 = arith.constant 6 : i32
    %c8_i32_307 = arith.constant 8 : i32
    %856 = arith.muli %c6_i32_306, %c8_i32_307 : i32
    %857 = tpu.assume_multiple %856, 8 : i32
    %858 = arith.index_cast %857 : i32 to index
    %c0_308 = arith.constant 0 : index
    %859 = vector.load %arg17[%858, %c0_308] : memref<64x512xf32, #tpu.memory_space<vmem>>, vector<8x512xf32>
    %860 = arith.truncf %851 : vector<8x128xf32> to vector<8x128xbf16>
    %c0_309 = arith.constant 0 : index
    %c0_310 = arith.constant 0 : index
    %861 = vector.load %arg12[%c0_309, %c0_310] : memref<128x512xbf16, #tpu.memory_space<vmem>>, vector<128x512xbf16>
    %cst_311 = arith.constant dense<0.000000e+00> : vector<8x512xf32>
    %862 = tpu.matmul %860, %861, %cst_311 {dimension_numbers = #tpu.dot_dimension_numbers<[1], [0], [0], [1], [0, 0, 1, 1], [], []>} : vector<8x128xbf16>, vector<128x512xbf16>, vector<8x512xf32> -> vector<8x512xf32>
    %863 = arith.addf %859, %862 : vector<8x512xf32>
    %864 = vector.extract_strided_slice %863 {offsets = [0, 0], sizes = [8, 384], strides = [1, 1]} : vector<8x512xf32> to vector<8x384xf32>
    %865 = arith.negf %864 : vector<8x384xf32>
    %866 = math.exp %865 : vector<8x384xf32>
    %cst_312 = arith.constant 1.000000e+00 : f32
    %867 = vector.broadcast %cst_312 : f32 to vector<8x384xf32>
    %868 = arith.addf %867, %866 : vector<8x384xf32>
    %869 = arith.divf %867, %868 : vector<8x384xf32>
    %870 = vector.extract_strided_slice %863 {offsets = [0, 384], sizes = [8, 128], strides = [1, 1]} : vector<8x512xf32> to vector<8x128xf32>
    %871 = math.tanh %870 : vector<8x128xf32>
    %872 = vector.extract_strided_slice %869 {offsets = [0, 128], sizes = [8, 128], strides = [1, 1]} : vector<8x384xf32> to vector<8x128xf32>
    %873 = arith.mulf %872, %848 : vector<8x128xf32>
    %874 = vector.extract_strided_slice %869 {offsets = [0, 0], sizes = [8, 128], strides = [1, 1]} : vector<8x384xf32> to vector<8x128xf32>
    %875 = arith.mulf %874, %871 : vector<8x128xf32>
    %876 = arith.addf %873, %875 : vector<8x128xf32>
    %877 = vector.extract_strided_slice %869 {offsets = [0, 256], sizes = [8, 128], strides = [1, 1]} : vector<8x384xf32> to vector<8x128xf32>
    %878 = math.tanh %876 : vector<8x128xf32>
    %879 = arith.mulf %877, %878 : vector<8x128xf32>
    %880 = arith.index_cast %c6_i32_306 : i32 to index
    %c0_313 = arith.constant 0 : index
    %c0_314 = arith.constant 0 : index
    %881 = vector.load %arg14[%880, %c0_313, %c0_314] : memref<8x8x128xf32, #tpu.memory_space<vmem>>, vector<1x8x128xf32>
    %882 = vector.shape_cast %881 : vector<1x8x128xf32> to vector<8x128xf32>
    %883 = vector.shape_cast %879 : vector<8x128xf32> to vector<1x8x128xf32>
    tpu.vector_store %arg14[%880, %c0_313, %c0_314], %883 {strides = array<i32>} : memref<8x8x128xf32, #tpu.memory_space<vmem>>, vector<1x8x128xf32>,
    %c7_i32_315 = arith.constant 7 : i32
    %c8_i32_316 = arith.constant 8 : i32
    %884 = arith.muli %c7_i32_315, %c8_i32_316 : i32
    %885 = tpu.assume_multiple %884, 8 : i32
    %886 = arith.index_cast %885 : i32 to index
    %c0_317 = arith.constant 0 : index
    %887 = vector.load %arg17[%886, %c0_317] : memref<64x512xf32, #tpu.memory_space<vmem>>, vector<8x512xf32>
    %888 = arith.truncf %879 : vector<8x128xf32> to vector<8x128xbf16>
    %c0_318 = arith.constant 0 : index
    %c0_319 = arith.constant 0 : index
    %889 = vector.load %arg12[%c0_318, %c0_319] : memref<128x512xbf16, #tpu.memory_space<vmem>>, vector<128x512xbf16>
    %cst_320 = arith.constant dense<0.000000e+00> : vector<8x512xf32>
    %890 = tpu.matmul %888, %889, %cst_320 {dimension_numbers = #tpu.dot_dimension_numbers<[1], [0], [0], [1], [0, 0, 1, 1], [], []>} : vector<8x128xbf16>, vector<128x512xbf16>, vector<8x512xf32> -> vector<8x512xf32>
    %891 = arith.addf %887, %890 : vector<8x512xf32>
    %892 = vector.extract_strided_slice %891 {offsets = [0, 0], sizes = [8, 384], strides = [1, 1]} : vector<8x512xf32> to vector<8x384xf32>
    %893 = arith.negf %892 : vector<8x384xf32>
    %894 = math.exp %893 : vector<8x384xf32>
    %cst_321 = arith.constant 1.000000e+00 : f32
    %895 = vector.broadcast %cst_321 : f32 to vector<8x384xf32>
    %896 = arith.addf %895, %894 : vector<8x384xf32>
    %897 = arith.divf %895, %896 : vector<8x384xf32>
    %898 = vector.extract_strided_slice %891 {offsets = [0, 384], sizes = [8, 128], strides = [1, 1]} : vector<8x512xf32> to vector<8x128xf32>
    %899 = math.tanh %898 : vector<8x128xf32>
    %900 = vector.extract_strided_slice %897 {offsets = [0, 128], sizes = [8, 128], strides = [1, 1]} : vector<8x384xf32> to vector<8x128xf32>
    %901 = arith.mulf %900, %876 : vector<8x128xf32>
    %902 = vector.extract_strided_slice %897 {offsets = [0, 0], sizes = [8, 128], strides = [1, 1]} : vector<8x384xf32> to vector<8x128xf32>
    %903 = arith.mulf %902, %899 : vector<8x128xf32>
    %904 = arith.addf %901, %903 : vector<8x128xf32>
    %905 = vector.extract_strided_slice %897 {offsets = [0, 256], sizes = [8, 128], strides = [1, 1]} : vector<8x384xf32> to vector<8x128xf32>
    %906 = math.tanh %904 : vector<8x128xf32>
    %907 = arith.mulf %905, %906 : vector<8x128xf32>
    %908 = arith.index_cast %c7_i32_315 : i32 to index
    %c0_322 = arith.constant 0 : index
    %c0_323 = arith.constant 0 : index
    %909 = vector.load %arg14[%908, %c0_322, %c0_323] : memref<8x8x128xf32, #tpu.memory_space<vmem>>, vector<1x8x128xf32>
    %910 = vector.shape_cast %909 : vector<1x8x128xf32> to vector<8x128xf32>
    %911 = vector.shape_cast %907 : vector<8x128xf32> to vector<1x8x128xf32>
    tpu.vector_store %arg14[%908, %c0_322, %c0_323], %911 {strides = array<i32>} : memref<8x8x128xf32, #tpu.memory_space<vmem>>, vector<1x8x128xf32>,
    %c8_i32_324 = arith.constant 8 : i32
    return
  }
  func.func @transform_0(%arg0: i32) -> (i32, i32) {
    %c0_i32 = arith.constant 0 : i32
    %c0_i32_0 = arith.constant 0 : i32
    return %arg0, %c0_i32 : i32, i32
  }
  func.func @transform_1(%arg0: i32) -> (i32, i32) {
    %c0_i32 = arith.constant 0 : i32
    %c0_i32_0 = arith.constant 0 : i32
    %c0_i32_1 = arith.constant 0 : i32
    return %c0_i32, %c0_i32_0 : i32, i32
  }
  func.func @transform_2(%arg0: i32) -> (i32, i32) {
    %c0_i32 = arith.constant 0 : i32
    %c0_i32_0 = arith.constant 0 : i32
    %c0_i32_1 = arith.constant 0 : i32
    return %c0_i32, %c0_i32_0 : i32, i32
  }
  func.func @transform_3(%arg0: i32) -> (i32, i32) {
    %c0_i32 = arith.constant 0 : i32
    %c0_i32_0 = arith.constant 0 : i32
    %c0_i32_1 = arith.constant 0 : i32
    return %c0_i32, %c0_i32_0 : i32, i32
  }
  func.func @transform_4(%arg0: i32) -> (i32, i32) {
    %c0_i32 = arith.constant 0 : i32
    %c0_i32_0 = arith.constant 0 : i32
    %c0_i32_1 = arith.constant 0 : i32
    return %c0_i32, %c0_i32_0 : i32, i32
  }
  func.func @transform_5(%arg0: i32) -> (i32, i32) {
    %c0_i32 = arith.constant 0 : i32
    %c0_i32_0 = arith.constant 0 : i32
    %c0_i32_1 = arith.constant 0 : i32
    return %c0_i32, %c0_i32_0 : i32, i32
  }
  func.func @transform_6(%arg0: i32) -> (i32, i32) {
    %c0_i32 = arith.constant 0 : i32
    %c0_i32_0 = arith.constant 0 : i32
    %c0_i32_1 = arith.constant 0 : i32
    return %c0_i32, %c0_i32_0 : i32, i32
  }
  func.func @transform_7(%arg0: i32) -> (i32, i32) {
    %c0_i32 = arith.constant 0 : i32
    %c0_i32_0 = arith.constant 0 : i32
    %c0_i32_1 = arith.constant 0 : i32
    return %c0_i32, %c0_i32_0 : i32, i32
  }
  func.func @transform_8(%arg0: i32) -> (i32, i32) {
    %c0_i32 = arith.constant 0 : i32
    %c0_i32_0 = arith.constant 0 : i32
    %c0_i32_1 = arith.constant 0 : i32
    return %c0_i32, %c0_i32_0 : i32, i32
  }
  func.func @transform_9(%arg0: i32) -> (i32, i32) {
    %c0_i32 = arith.constant 0 : i32
    %c0_i32_0 = arith.constant 0 : i32
    %c0_i32_1 = arith.constant 0 : i32
    return %c0_i32, %c0_i32_0 : i32, i32
  }
  func.func @transform_10(%arg0: i32) -> (i32, i32) {
    %c0_i32 = arith.constant 0 : i32
    %c0_i32_0 = arith.constant 0 : i32
    %c0_i32_1 = arith.constant 0 : i32
    return %c0_i32, %c0_i32_0 : i32, i32
  }
  func.func @transform_11(%arg0: i32) -> (i32, i32) {
    %c0_i32 = arith.constant 0 : i32
    %c0_i32_0 = arith.constant 0 : i32
    %c0_i32_1 = arith.constant 0 : i32
    return %c0_i32, %c0_i32_0 : i32, i32
  }
  func.func @transform_12(%arg0: i32) -> (i32, i32) {
    %c0_i32 = arith.constant 0 : i32
    %c0_i32_0 = arith.constant 0 : i32
    %c0_i32_1 = arith.constant 0 : i32
    return %c0_i32, %c0_i32_0 : i32, i32
  }
  func.func @transform_13(%arg0: i32) -> (i32, i32, i32) {
    %c0_i32 = arith.constant 0 : i32
    %c0_i32_0 = arith.constant 0 : i32
    %c0_i32_1 = arith.constant 0 : i32
    return %c0_i32, %arg0, %c0_i32_0 : i32, i32, i32
  }
}

</mosaic_0001>

<llo_original>
// kernel: aernn_dec_forward.1
$region0: #{aernn_dec_forward.1}
  #allocation0 [shape = 'u32[]', space=smem, size = 0x4, offset = 0x4, fixed_abs, tag = 'smem constant byte address 0x4 - core index']
  #allocation1 [shape = 'u32[144,128]{1,0:T(1,128)}', space=vmem, size = 0x12000, scoped, tag = 'internal scratch']
  #allocation2 [shape = 'f32[64,128]{1,0:T(8,128)}', space=vmem, size = 0x8000, scoped, tag = 'scratch operand']
  #allocation3 [shape = 'f32[64,128]{1,0:T(8,128)}', space=vmem, size = 0x8000, scoped, tag = 'scratch operand']
  #allocation4 [shape = 'f32[64,512]{1,0:T(8,128)}', space=vmem, size = 0x20000, scoped, tag = 'scratch operand']
  %s0 = inlined_call_operand.vmem [shape: f32[8,128], index: 0, kind: input, shape index: {}]
  %s1 = inlined_call_operand.vmem [shape: bf16[128,512], index: 1, kind: input, shape index: {}]
  %s2 = inlined_call_operand.vmem [shape: bf16[128,512], index: 2, kind: input, shape index: {}]
  %s3 = inlined_call_operand.vmem [shape: f32[1,512], index: 3, kind: input, shape index: {}]
  %s4 = inlined_call_operand.vmem [shape: bf16[128,512], index: 4, kind: input, shape index: {}]
  %s5 = inlined_call_operand.vmem [shape: bf16[128,512], index: 5, kind: input, shape index: {}]
  %s6 = inlined_call_operand.vmem [shape: f32[1,512], index: 6, kind: input, shape index: {}]
  %s7 = inlined_call_operand.vmem [shape: bf16[128,512], index: 7, kind: input, shape index: {}]
  %s8 = inlined_call_operand.vmem [shape: bf16[128,512], index: 8, kind: input, shape index: {}]
  %s9 = inlined_call_operand.vmem [shape: f32[1,512], index: 9, kind: input, shape index: {}]
  %s10 = inlined_call_operand.vmem [shape: bf16[128,512], index: 10, kind: input, shape index: {}]
  %s11 = inlined_call_operand.vmem [shape: bf16[128,512], index: 11, kind: input, shape index: {}]
  %s12 = inlined_call_operand.vmem [shape: f32[1,512], index: 12, kind: input, shape index: {}]
  %s13 = inlined_call_operand.vmem [shape: f32[8,8,128], index: 13, kind: output, shape index: {}]
  %s14 = sld [smem:[#allocation0]]
  $region62: #{aernn_dec_forward.1} parent=0
    _
  %s16 = ssub.s32 1, %s14
  %s17 = scalar_select 0, %s16, %s14
  // Predicated region
  $region2: #{aernn_dec_forward.1} parent=0 // pred_check
    _
  $region3: #{aernn_dec_forward.1} parent=0 // pred_check_branch
    %19 = sbr.rel (0) target = $region5
  $region4: #{aernn_dec_forward.1} parent=0 // pred_region
    _
  $region5: #{aernn_dec_forward.1} parent=0 // pred_fallthru
    _
  // Predicated region
  $region6: #{aernn_dec_forward.1} parent=0 // pred_check
    _
  $region7: #{aernn_dec_forward.1} parent=0 // pred_check_branch
    %21 = sbr.rel (0) target = $region9
  $region8: #{aernn_dec_forward.1} parent=0 // pred_region
    _
  $region9: #{aernn_dec_forward.1} parent=0 // pred_fallthru
    _
  // Predicated region
  $region10: #{aernn_dec_forward.1} parent=0 // pred_check
    _
  $region11: #{aernn_dec_forward.1} parent=0 // pred_check_branch
    %23 = sbr.rel (0) target = $region13
  $region12: #{aernn_dec_forward.1} parent=0 // pred_region
    _
  $region13: #{aernn_dec_forward.1} parent=0 // pred_fallthru
    _
  // Predicated region
  $region14: #{aernn_dec_forward.1} parent=0 // pred_check
    _
  $region15: #{aernn_dec_forward.1} parent=0 // pred_check_branch
    %25 = sbr.rel (0) target = $region17
  $region16: #{aernn_dec_forward.1} parent=0 // pred_region
    _
  $region17: #{aernn_dec_forward.1} parent=0 // pred_fallthru
    _
  // Predicated region
  $region18: #{aernn_dec_forward.1} parent=0 // pred_check
    _
  $region19: #{aernn_dec_forward.1} parent=0 // pred_check_branch
    %27 = sbr.rel (0) target = $region21
  $region20: #{aernn_dec_forward.1} parent=0 // pred_region
    _
  $region21: #{aernn_dec_forward.1} parent=0 // pred_fallthru
    _
  // Predicated region
  $region22: #{aernn_dec_forward.1} parent=0 // pred_check
    _
  $region23: #{aernn_dec_forward.1} parent=0 // pred_check_branch
    %29 = sbr.rel (0) target = $region25
  $region24: #{aernn_dec_forward.1} parent=0 // pred_region
    _
  $region25: #{aernn_dec_forward.1} parent=0 // pred_fallthru
    _
  // Predicated region
  $region26: #{aernn_dec_forward.1} parent=0 // pred_check
    _
  $region27: #{aernn_dec_forward.1} parent=0 // pred_check_branch
    %31 = sbr.rel (0) target = $region29
  $region28: #{aernn_dec_forward.1} parent=0 // pred_region
    _
  $region29: #{aernn_dec_forward.1} parent=0 // pred_fallthru
    _
  // Predicated region
  $region30: #{aernn_dec_forward.1} parent=0 // pred_check
    _
  $region31: #{aernn_dec_forward.1} parent=0 // pred_check_branch
    %33 = sbr.rel (0) target = $region33
  $region32: #{aernn_dec_forward.1} parent=0 // pred_region
    _
  $region33: #{aernn_dec_forward.1} parent=0 // pred_fallthru
    _
  // Predicated region
  $region34: #{aernn_dec_forward.1} parent=0 // pred_check
    _
  $region35: #{aernn_dec_forward.1} parent=0 // pred_check_branch
    %35 = sbr.rel (0) target = $region37
  $region36: #{aernn_dec_forward.1} parent=0 // pred_region
    _
  $region37: #{aernn_dec_forward.1} parent=0 // pred_fallthru
    _
  // Predicated region
  $region38: #{aernn_dec_forward.1} parent=0 // pred_check
    _
  $region39: #{aernn_dec_forward.1} parent=0 // pred_check_branch
    %37 = sbr.rel (0) target = $region41
  $region40: #{aernn_dec_forward.1} parent=0 // pred_region
    _
  $region41: #{aernn_dec_forward.1} parent=0 // pred_fallthru
    _
  // Predicated region
  $region42: #{aernn_dec_forward.1} parent=0 // pred_check
    _
  $region43: #{aernn_dec_forward.1} parent=0 // pred_check_branch
    %39 = sbr.rel (0) target = $region45
  $region44: #{aernn_dec_forward.1} parent=0 // pred_region
    _
  $region45: #{aernn_dec_forward.1} parent=0 // pred_fallthru
    _
  // Predicated region
  $region46: #{aernn_dec_forward.1} parent=0 // pred_check
    _
  $region47: #{aernn_dec_forward.1} parent=0 // pred_check_branch
    %41 = sbr.rel (0) target = $region49
  $region48: #{aernn_dec_forward.1} parent=0 // pred_region
    _
  $region49: #{aernn_dec_forward.1} parent=0 // pred_fallthru
    _
  // Predicated region
  $region50: #{aernn_dec_forward.1} parent=0 // pred_check
    _
  $region51: #{aernn_dec_forward.1} parent=0 // pred_check_branch
    %43 = sbr.rel (0) target = $region53
  $region52: #{aernn_dec_forward.1} parent=0 // pred_region
    _
  $region53: #{aernn_dec_forward.1} parent=0 // pred_fallthru
    _
  %v45 = vld [vmem:[%s0] sm:$0xff]
  %v46 = vpack.c.bf16 %v45, %v45
  %v47 = vld [vmem:[%s1] sm:$0xff]
  %v48 = vld [vmem:[%s1 + $0x8] sm:$0xff]
  %v49 = vld [vmem:[%s1 + $0x10] sm:$0xff]
  %v50 = vld [vmem:[%s1 + $0x18] sm:$0xff]
  %v51 = vld [vmem:[%s1 + $0x20] sm:$0xff]
  %v52 = vld [vmem:[%s1 + $0x28] sm:$0xff]
  %v53 = vld [vmem:[%s1 + $0x30] sm:$0xff]
  %v54 = vld [vmem:[%s1 + $0x38] sm:$0xff]
  %v55 = vld [vmem:[%s1 + $0x40] sm:$0xff]
  %v56 = vld [vmem:[%s1 + $0x48] sm:$0xff]
  %v57 = vld [vmem:[%s1 + $0x50] sm:$0xff]
  %v58 = vld [vmem:[%s1 + $0x58] sm:$0xff]
  %v59 = vld [vmem:[%s1 + $0x60] sm:$0xff]
  %v60 = vld [vmem:[%s1 + $0x68] sm:$0xff]
  %v61 = vld [vmem:[%s1 + $0x70] sm:$0xff]
  %v62 = vld [vmem:[%s1 + $0x78] sm:$0xff]
  %v63 = vld [vmem:[%s1 + $0x80] sm:$0xff]
  %v64 = vld [vmem:[%s1 + $0x88] sm:$0xff]
  %v65 = vld [vmem:[%s1 + $0x90] sm:$0xff]
  %v66 = vld [vmem:[%s1 + $0x98] sm:$0xff]
  %v67 = vld [vmem:[%s1 + $0xa0] sm:$0xff]
  %v68 = vld [vmem:[%s1 + $0xa8] sm:$0xff]
  %v69 = vld [vmem:[%s1 + $0xb0] sm:$0xff]
  %v70 = vld [vmem:[%s1 + $0xb8] sm:$0xff]
  %v71 = vld [vmem:[%s1 + $0xc0] sm:$0xff]
  %v72 = vld [vmem:[%s1 + $0xc8] sm:$0xff]
  %v73 = vld [vmem:[%s1 + $0xd0] sm:$0xff]
  %v74 = vld [vmem:[%s1 + $0xd8] sm:$0xff]
  %v75 = vld [vmem:[%s1 + $0xe0] sm:$0xff]
  %v76 = vld [vmem:[%s1 + $0xe8] sm:$0xff]
  %v77 = vld [vmem:[%s1 + $0xf0] sm:$0xff]
  %v78 = vld [vmem:[%s1 + $0xf8] sm:$0xff]
  %v79 = vld [vmem:[%s3] sm:$0xf]
  %v81 = vlaneseq
  %v82 = vshrl.u32 %v81, 7
  %v83 = vsub.s32 0, %v82
  %v84 = vrot.slane %v79, %v83
  %v85 = vlaneseq
  %v86 = vshrl.u32 %v85, 7
  %v87 = vsub.s32 1, %v86
  %v88 = vrot.slane %v79, %v87
  %v89 = vlaneseq
  %v90 = vshrl.u32 %v89, 7
  %v91 = vsub.s32 2, %v90
  %v92 = vrot.slane %v79, %v91
  %v93 = vlaneseq
  %v94 = vshrl.u32 %v93, 7
  %v95 = vsub.s32 3, %v94
  %v96 = vrot.slane %v79, %v95
  %v133 = vunpack.c.l.b16 %v47
  %v134 = vunpack.c.h.b16 %v47
  %v135 = vunpack.c.l.b16 %v48
  %v136 = vunpack.c.h.b16 %v48
  %v137 = vunpack.c.l.b16 %v49
  %v138 = vunpack.c.h.b16 %v49
  %v139 = vunpack.c.l.b16 %v50
  %v140 = vunpack.c.h.b16 %v50
  %v141 = vunpack.c.l.b16 %v51
  %v142 = vunpack.c.h.b16 %v51
  %v143 = vunpack.c.l.b16 %v52
  %v144 = vunpack.c.h.b16 %v52
  %v145 = vunpack.c.l.b16 %v53
  %v146 = vunpack.c.h.b16 %v53
  %v147 = vunpack.c.l.b16 %v54
  %v148 = vunpack.c.h.b16 %v54
  %v149 = vunpack.c.l.b16 %v55
  %v150 = vunpack.c.h.b16 %v55
  %v151 = vunpack.c.l.b16 %v56
  %v152 = vunpack.c.h.b16 %v56
  %v153 = vunpack.c.l.b16 %v57
  %v154 = vunpack.c.h.b16 %v57
  %v155 = vunpack.c.l.b16 %v58
  %v156 = vunpack.c.h.b16 %v58
  %v157 = vunpack.c.l.b16 %v59
  %v158 = vunpack.c.h.b16 %v59
  %v159 = vunpack.c.l.b16 %v60
  %v160 = vunpack.c.h.b16 %v60
  %v161 = vunpack.c.l.b16 %v61
  %v162 = vunpack.c.h.b16 %v61
  %v163 = vunpack.c.l.b16 %v62
  %v164 = vunpack.c.h.b16 %v62
  %v165 = vunpack.c.l.b16 %v63
  %v166 = vunpack.c.h.b16 %v63
  %v167 = vunpack.c.l.b16 %v64
  %v168 = vunpack.c.h.b16 %v64
  %v169 = vunpack.c.l.b16 %v65
  %v170 = vunpack.c.h.b16 %v65
  %v171 = vunpack.c.l.b16 %v66
  %v172 = vunpack.c.h.b16 %v66
  %v173 = vunpack.c.l.b16 %v67
  %v174 = vunpack.c.h.b16 %v67
  %v175 = vunpack.c.l.b16 %v68
  %v176 = vunpack.c.h.b16 %v68
  %v177 = vunpack.c.l.b16 %v69
  %v178 = vunpack.c.h.b16 %v69
  %v179 = vunpack.c.l.b16 %v70
  %v180 = vunpack.c.h.b16 %v70
  %v181 = vunpack.c.l.b16 %v71
  %v182 = vunpack.c.h.b16 %v71
  %v183 = vunpack.c.l.b16 %v72
  %v184 = vunpack.c.h.b16 %v72
  %v185 = vunpack.c.l.b16 %v73
  %v186 = vunpack.c.h.b16 %v73
  %v187 = vunpack.c.l.b16 %v74
  %v188 = vunpack.c.h.b16 %v74
  %v189 = vunpack.c.l.b16 %v75
  %v190 = vunpack.c.h.b16 %v75
  %v191 = vunpack.c.l.b16 %v76
  %v192 = vunpack.c.h.b16 %v76
  %v193 = vunpack.c.l.b16 %v77
  %v194 = vunpack.c.h.b16 %v77
  %v195 = vunpack.c.l.b16 %v78
  %v196 = vunpack.c.h.b16 %v78
  %v197 = vpack.c.b16 %v137, %v133
  %v198 = vpack.c.b16 %v138, %v134
  %v199 = vpack.c.b16 %v139, %v135
  %v200 = vpack.c.b16 %v140, %v136
  %v201 = vpack.c.b16 %v145, %v141
  %v202 = vpack.c.b16 %v146, %v142
  %v203 = vpack.c.b16 %v147, %v143
  %v204 = vpack.c.b16 %v148, %v144
  %v205 = vpack.c.b16 %v153, %v149
  %v206 = vpack.c.b16 %v154, %v150
  %v207 = vpack.c.b16 %v155, %v151
  %v208 = vpack.c.b16 %v156, %v152
  %v209 = vpack.c.b16 %v161, %v157
  %v210 = vpack.c.b16 %v162, %v158
  %v211 = vpack.c.b16 %v163, %v159
  %v212 = vpack.c.b16 %v164, %v160
  %v213 = vpack.c.b16 %v169, %v165
  %v214 = vpack.c.b16 %v170, %v166
  %v215 = vpack.c.b16 %v171, %v167
  %v216 = vpack.c.b16 %v172, %v168
  %v217 = vpack.c.b16 %v177, %v173
  %v218 = vpack.c.b16 %v178, %v174
  %v219 = vpack.c.b16 %v179, %v175
  %v220 = vpack.c.b16 %v180, %v176
  %v221 = vpack.c.b16 %v185, %v181
  %v222 = vpack.c.b16 %v186, %v182
  %v223 = vpack.c.b16 %v187, %v183
  %v224 = vpack.c.b16 %v188, %v184
  %v225 = vpack.c.b16 %v193, %v189
  %v226 = vpack.c.b16 %v194, %v190
  %v227 = vpack.c.b16 %v195, %v191
  %v228 = vpack.c.b16 %v196, %v192
  %261 = vmatprep.subr.bf16.mxu0 %v226
  %262 = vmatpush1.bf16.msra.mxu0 %v225
  %263 = vmatprep.subr.bf16.mxu0 %v222
  %264 = vmatpush1.bf16.msra.mxu0 %v221
  %265 = vmatprep.subr.bf16.mxu0 %v218
  %266 = vmatpush1.bf16.msra.mxu0 %v217
  %267 = vmatprep.subr.bf16.mxu0 %v214
  %268 = vmatpush1.bf16.msra.mxu0 %v213
  %269 = vmatprep.subr.bf16.mxu0 %v210
  %270 = vmatpush1.bf16.msra.mxu0 %v209
  %271 = vmatprep.subr.bf16.mxu0 %v206
  %272 = vmatpush1.bf16.msra.mxu0 %v205
  %273 = vmatprep.subr.bf16.mxu0 %v202
  %274 = vmatpush1.bf16.msra.mxu0 %v201
  %275 = vmatprep.subr.bf16.mxu0 %v198
  %276 = vmatpush1.bf16.msra.mxu0 %v197
  %277 = vmatprep.subr.bf16.mxu0 0
  %278 = vmatpush2.bf16.msra.mxu0 0
  %279 = vmatprep.subr.bf16.mxu0 0
  %280 = vmatpush2.bf16.msra.mxu0 0
  %281 = vmatprep.subr.bf16.mxu0 0
  %282 = vmatpush2.bf16.msra.mxu0 0
  %283 = vmatprep.subr.bf16.mxu0 0
  %284 = vmatpush2.bf16.msra.mxu0 0
  %285 = vmatprep.subr.bf16.mxu0 0
  %286 = vmatpush2.bf16.msra.mxu0 0
  %287 = vmatprep.subr.bf16.mxu0 0
  %288 = vmatpush2.bf16.msra.mxu0 0
  %289 = vmatprep.subr.bf16.mxu0 0
  %290 = vmatpush2.bf16.msra.mxu0 0
  %291 = vmatprep.subr.bf16.mxu0 0
  %292 = vmatpush2.bf16.msra.mxu0 0
  %293 = vmatprep.mubr.bf16.mxu0 0
  %294 = vmatmul.mubr.bf16.gmra.mxu0 %v46
  %v295 = vpop.f32.mrf.mxu0
  %v296 = vadd.f32 %v84, %v295
  %v297 = vpop.f32.mrf.mxu0
  %v298 = vadd.f32 %v88, %v297
  %v299 = vpop.f32.mrf.mxu0
  %v300 = vpop.f32.mrf.mxu0
  %301 = vdwg.mxu0
  %302 = vmatprep.subr.bf16.mxu0 %v228
  %303 = vmatpush1.bf16.msra.mxu0 %v227
  %304 = vmatprep.subr.bf16.mxu0 %v224
  %305 = vmatpush1.bf16.msra.mxu0 %v223
  %306 = vmatprep.subr.bf16.mxu0 %v220
  %307 = vmatpush1.bf16.msra.mxu0 %v219
  %308 = vmatprep.subr.bf16.mxu0 %v216
  %309 = vmatpush1.bf16.msra.mxu0 %v215
  %310 = vmatprep.subr.bf16.mxu0 %v212
  %311 = vmatpush1.bf16.msra.mxu0 %v211
  %312 = vmatprep.subr.bf16.mxu0 %v208
  %313 = vmatpush1.bf16.msra.mxu0 %v207
  %314 = vmatprep.subr.bf16.mxu0 %v204
  %315 = vmatpush1.bf16.msra.mxu0 %v203
  %316 = vmatprep.subr.bf16.mxu0 %v200
  %317 = vmatpush1.bf16.msra.mxu0 %v199
  %318 = vmatprep.subr.bf16.mxu0 0
  %319 = vmatpush2.bf16.msra.mxu0 0
  %320 = vmatprep.subr.bf16.mxu0 0
  %321 = vmatpush2.bf16.msra.mxu0 0
  %322 = vmatprep.subr.bf16.mxu0 0
  %323 = vmatpush2.bf16.msra.mxu0 0
  %324 = vmatprep.subr.bf16.mxu0 0
  %325 = vmatpush2.bf16.msra.mxu0 0
  %326 = vmatprep.subr.bf16.mxu0 0
  %327 = vmatpush2.bf16.msra.mxu0 0
  %328 = vmatprep.subr.bf16.mxu0 0
  %329 = vmatpush2.bf16.msra.mxu0 0
  %330 = vmatprep.subr.bf16.mxu0 0
  %331 = vmatpush2.bf16.msra.mxu0 0
  %332 = vmatprep.subr.bf16.mxu0 0
  %333 = vmatpush2.bf16.msra.mxu0 0
  %334 = vmatprep.mubr.bf16.mxu0 0
  %335 = vmatmul.mubr.bf16.gmra.mxu0 %v46
  %v336 = vpop.f32.mrf.mxu0
  %v337 = vadd.f32 %v92, %v336
  %v338 = vpop.f32.mrf.mxu0
  %v339 = vadd.f32 %v96, %v338
  %v340 = vpop.f32.mrf.mxu0
  %v341 = vpop.f32.mrf.mxu0
  %342 = vdwg.mxu0
  %343 = vst [vmem:[#allocation4] sm:$0xff] %v296
  %344 = vst [vmem:[#allocation4 + $0x8] sm:$0xff] %v298
  %345 = vst [vmem:[#allocation4 + $0x10] sm:$0xff] %v337
  %346 = vst [vmem:[#allocation4 + $0x18] sm:$0xff] %v339
  %v347 = vld [vmem:[#allocation4] sm:$0xff]
  %v348 = vld [vmem:[#allocation4 + $0x8] sm:$0xff]
  %v349 = vld [vmem:[#allocation4 + $0x10] sm:$0xff]
  %v350 = vld [vmem:[#allocation4 + $0x18] sm:$0xff]
  %v351 = vld [vmem:[%s2] sm:$0xff]
  %v352 = vld [vmem:[%s2 + $0x8] sm:$0xff]
  %v353 = vld [vmem:[%s2 + $0x10] sm:$0xff]
  %v354 = vld [vmem:[%s2 + $0x18] sm:$0xff]
  %v355 = vld [vmem:[%s2 + $0x20] sm:$0xff]
  %v356 = vld [vmem:[%s2 + $0x28] sm:$0xff]
  %v357 = vld [vmem:[%s2 + $0x30] sm:$0xff]
  %v358 = vld [vmem:[%s2 + $0x38] sm:$0xff]
  %v359 = vld [vmem:[%s2 + $0x40] sm:$0xff]
  %v360 = vld [vmem:[%s2 + $0x48] sm:$0xff]
  %v361 = vld [vmem:[%s2 + $0x50] sm:$0xff]
  %v362 = vld [vmem:[%s2 + $0x58] sm:$0xff]
  %v363 = vld [vmem:[%s2 + $0x60] sm:$0xff]
  %v364 = vld [vmem:[%s2 + $0x68] sm:$0xff]
  %v365 = vld [vmem:[%s2 + $0x70] sm:$0xff]
  %v366 = vld [vmem:[%s2 + $0x78] sm:$0xff]
  %v367 = vld [vmem:[%s2 + $0x80] sm:$0xff]
  %v368 = vld [vmem:[%s2 + $0x88] sm:$0xff]
  %v369 = vld [vmem:[%s2 + $0x90] sm:$0xff]
  %v370 = vld [vmem:[%s2 + $0x98] sm:$0xff]
  %v371 = vld [vmem:[%s2 + $0xa0] sm:$0xff]
  %v372 = vld [vmem:[%s2 + $0xa8] sm:$0xff]
  %v373 = vld [vmem:[%s2 + $0xb0] sm:$0xff]
  %v374 = vld [vmem:[%s2 + $0xb8] sm:$0xff]
  %v375 = vld [vmem:[%s2 + $0xc0] sm:$0xff]
  %v376 = vld [vmem:[%s2 + $0xc8] sm:$0xff]
  %v377 = vld [vmem:[%s2 + $0xd0] sm:$0xff]
  %v378 = vld [vmem:[%s2 + $0xd8] sm:$0xff]
  %v379 = vld [vmem:[%s2 + $0xe0] sm:$0xff]
  %v380 = vld [vmem:[%s2 + $0xe8] sm:$0xff]
  %v381 = vld [vmem:[%s2 + $0xf0] sm:$0xff]
  %v382 = vld [vmem:[%s2 + $0xf8] sm:$0xff]
  %v415 = vunpack.c.l.b16 %v351
  %v416 = vunpack.c.h.b16 %v351
  %v417 = vunpack.c.l.b16 %v352
  %v418 = vunpack.c.h.b16 %v352
  %v419 = vunpack.c.l.b16 %v353
  %v420 = vunpack.c.h.b16 %v353
  %v421 = vunpack.c.l.b16 %v354
  %v422 = vunpack.c.h.b16 %v354
  %v423 = vunpack.c.l.b16 %v355
  %v424 = vunpack.c.h.b16 %v355
  %v425 = vunpack.c.l.b16 %v356
  %v426 = vunpack.c.h.b16 %v356
  %v427 = vunpack.c.l.b16 %v357
  %v428 = vunpack.c.h.b16 %v357
  %v429 = vunpack.c.l.b16 %v358
  %v430 = vunpack.c.h.b16 %v358
  %v431 = vunpack.c.l.b16 %v359
  %v432 = vunpack.c.h.b16 %v359
  %v433 = vunpack.c.l.b16 %v360
  %v434 = vunpack.c.h.b16 %v360
  %v435 = vunpack.c.l.b16 %v361
  %v436 = vunpack.c.h.b16 %v361
  %v437 = vunpack.c.l.b16 %v362
  %v438 = vunpack.c.h.b16 %v362
  %v439 = vunpack.c.l.b16 %v363
  %v440 = vunpack.c.h.b16 %v363
  %v441 = vunpack.c.l.b16 %v364
  %v442 = vunpack.c.h.b16 %v364
  %v443 = vunpack.c.l.b16 %v365
  %v444 = vunpack.c.h.b16 %v365
  %v445 = vunpack.c.l.b16 %v366
  %v446 = vunpack.c.h.b16 %v366
  %v447 = vunpack.c.l.b16 %v367
  %v448 = vunpack.c.h.b16 %v367
  %v449 = vunpack.c.l.b16 %v368
  %v450 = vunpack.c.h.b16 %v368
  %v451 = vunpack.c.l.b16 %v369
  %v452 = vunpack.c.h.b16 %v369
  %v453 = vunpack.c.l.b16 %v370
  %v454 = vunpack.c.h.b16 %v370
  %v455 = vunpack.c.l.b16 %v371
  %v456 = vunpack.c.h.b16 %v371
  %v457 = vunpack.c.l.b16 %v372
  %v458 = vunpack.c.h.b16 %v372
  %v459 = vunpack.c.l.b16 %v373
  %v460 = vunpack.c.h.b16 %v373
  %v461 = vunpack.c.l.b16 %v374
  %v462 = vunpack.c.h.b16 %v374
  %v463 = vunpack.c.l.b16 %v375
  %v464 = vunpack.c.h.b16 %v375
  %v465 = vunpack.c.l.b16 %v376
  %v466 = vunpack.c.h.b16 %v376
  %v467 = vunpack.c.l.b16 %v377
  %v468 = vunpack.c.h.b16 %v377
  %v469 = vunpack.c.l.b16 %v378
  %v470 = vunpack.c.h.b16 %v378
  %v471 = vunpack.c.l.b16 %v379
  %v472 = vunpack.c.h.b16 %v379
  %v473 = vunpack.c.l.b16 %v380
  %v474 = vunpack.c.h.b16 %v380
  %v475 = vunpack.c.l.b16 %v381
  %v476 = vunpack.c.h.b16 %v381
  %v477 = vunpack.c.l.b16 %v382
  %v478 = vunpack.c.h.b16 %v382
  %v479 = vpack.c.b16 %v419, %v415
  %v480 = vpack.c.b16 %v420, %v416
  %v481 = vpack.c.b16 %v421, %v417
  %v482 = vpack.c.b16 %v422, %v418
  %v483 = vpack.c.b16 %v427, %v423
  %v484 = vpack.c.b16 %v428, %v424
  %v485 = vpack.c.b16 %v429, %v425
  %v486 = vpack.c.b16 %v430, %v426
  %v487 = vpack.c.b16 %v435, %v431
  %v488 = vpack.c.b16 %v436, %v432
  %v489 = vpack.c.b16 %v437, %v433
  %v490 = vpack.c.b16 %v438, %v434
  %v491 = vpack.c.b16 %v443, %v439
  %v492 = vpack.c.b16 %v444, %v440
  %v493 = vpack.c.b16 %v445, %v441
  %v494 = vpack.c.b16 %v446, %v442
  %v495 = vpack.c.b16 %v451, %v447
  %v496 = vpack.c.b16 %v452, %v448
  %v497 = vpack.c.b16 %v453, %v449
  %v498 = vpack.c.b16 %v454, %v450
  %v499 = vpack.c.b16 %v459, %v455
  %v500 = vpack.c.b16 %v460, %v456
  %v501 = vpack.c.b16 %v461, %v457
  %v502 = vpack.c.b16 %v462, %v458
  %v503 = vpack.c.b16 %v467, %v463
  %v504 = vpack.c.b16 %v468, %v464
  %v505 = vpack.c.b16 %v469, %v465
  %v506 = vpack.c.b16 %v470, %v466
  %v507 = vpack.c.b16 %v475, %v471
  %v508 = vpack.c.b16 %v476, %v472
  %v509 = vpack.c.b16 %v477, %v473
  %v510 = vpack.c.b16 %v478, %v474
  %543 = vmatprep.subr.bf16.mxu0 %v508
  %544 = vmatpush1.bf16.msra.mxu0 %v507
  %545 = vmatprep.subr.bf16.mxu0 %v504
  %546 = vmatpush1.bf16.msra.mxu0 %v503
  %547 = vmatprep.subr.bf16.mxu0 %v500
  %548 = vmatpush1.bf16.msra.mxu0 %v499
  %549 = vmatprep.subr.bf16.mxu0 %v496
  %550 = vmatpush1.bf16.msra.mxu0 %v495
  %551 = vmatprep.subr.bf16.mxu0 %v492
  %552 = vmatpush1.bf16.msra.mxu0 %v491
  %553 = vmatprep.subr.bf16.mxu0 %v488
  %554 = vmatpush1.bf16.msra.mxu0 %v487
  %555 = vmatprep.subr.bf16.mxu0 %v484
  %556 = vmatpush1.bf16.msra.mxu0 %v483
  %557 = vmatprep.subr.bf16.mxu0 %v480
  %558 = vmatpush1.bf16.msra.mxu0 %v479
  %559 = vmatprep.subr.bf16.mxu0 0
  %560 = vmatpush2.bf16.msra.mxu0 0
  %561 = vmatprep.subr.bf16.mxu0 0
  %562 = vmatpush2.bf16.msra.mxu0 0
  %563 = vmatprep.subr.bf16.mxu0 0
  %564 = vmatpush2.bf16.msra.mxu0 0
  %565 = vmatprep.subr.bf16.mxu0 0
  %566 = vmatpush2.bf16.msra.mxu0 0
  %567 = vmatprep.subr.bf16.mxu0 0
  %568 = vmatpush2.bf16.msra.mxu0 0
  %569 = vmatprep.subr.bf16.mxu0 0
  %570 = vmatpush2.bf16.msra.mxu0 0
  %571 = vmatprep.subr.bf16.mxu0 0
  %572 = vmatpush2.bf16.msra.mxu0 0
  %573 = vmatprep.subr.bf16.mxu0 0
  %574 = vmatpush2.bf16.msra.mxu0 0
  %575 = vmatprep.mubr.bf16.mxu0 0
  %576 = vmatmul.mubr.bf16.gmra.mxu0 0
  %v577 = vpop.f32.mrf.mxu0
  %v578 = vadd.f32 0.0, %v577
  %v579 = vpop.f32.mrf.mxu0
  %v580 = vadd.f32 0.0, %v579
  %v581 = vpop.f32.mrf.mxu0
  %v582 = vpop.f32.mrf.mxu0
  %583 = vdwg.mxu0
  %584 = vmatprep.subr.bf16.mxu0 %v510
  %585 = vmatpush1.bf16.msra.mxu0 %v509
  %586 = vmatprep.subr.bf16.mxu0 %v506
  %587 = vmatpush1.bf16.msra.mxu0 %v505
  %588 = vmatprep.subr.bf16.mxu0 %v502
  %589 = vmatpush1.bf16.msra.mxu0 %v501
  %590 = vmatprep.subr.bf16.mxu0 %v498
  %591 = vmatpush1.bf16.msra.mxu0 %v497
  %592 = vmatprep.subr.bf16.mxu0 %v494
  %593 = vmatpush1.bf16.msra.mxu0 %v493
  %594 = vmatprep.subr.bf16.mxu0 %v490
  %595 = vmatpush1.bf16.msra.mxu0 %v489
  %596 = vmatprep.subr.bf16.mxu0 %v486
  %597 = vmatpush1.bf16.msra.mxu0 %v485
  %598 = vmatprep.subr.bf16.mxu0 %v482
  %599 = vmatpush1.bf16.msra.mxu0 %v481
  %600 = vmatprep.subr.bf16.mxu0 0
  %601 = vmatpush2.bf16.msra.mxu0 0
  %602 = vmatprep.subr.bf16.mxu0 0
  %603 = vmatpush2.bf16.msra.mxu0 0
  %604 = vmatprep.subr.bf16.mxu0 0
  %605 = vmatpush2.bf16.msra.mxu0 0
  %606 = vmatprep.subr.bf16.mxu0 0
  %607 = vmatpush2.bf16.msra.mxu0 0
  %608 = vmatprep.subr.bf16.mxu0 0
  %609 = vmatpush2.bf16.msra.mxu0 0
  %610 = vmatprep.subr.bf16.mxu0 0
  %611 = vmatpush2.bf16.msra.mxu0 0
  %612 = vmatprep.subr.bf16.mxu0 0
  %613 = vmatpush2.bf16.msra.mxu0 0
  %614 = vmatprep.subr.bf16.mxu0 0
  %615 = vmatpush2.bf16.msra.mxu0 0
  %616 = vmatprep.mubr.bf16.mxu0 0
  %617 = vmatmul.mubr.bf16.gmra.mxu0 0
  %v618 = vpop.f32.mrf.mxu0
  %v619 = vadd.f32 0.0, %v618
  %v620 = vpop.f32.mrf.mxu0
  %v621 = vadd.f32 0.0, %v620
  %v622 = vpop.f32.mrf.mxu0
  %v623 = vpop.f32.mrf.mxu0
  %624 = vdwg.mxu0
  %v625 = vadd.f32 %v347, %v578
  %v626 = vadd.f32 %v348, %v580
  %v627 = vadd.f32 %v349, %v619
  %v628 = vadd.f32 %v350, %v621
  %v629 = vxor.u32 %v625, 2147483648
  %v630 = vxor.u32 %v626, 2147483648
  %v631 = vxor.u32 %v627, 2147483648
  %v632 = vmul.f32 %v629, 1.442695
  %v633 = vpow.pop %v632
  %v634 = vmul.f32 %v630, 1.442695
  %v635 = vpow.pop %v634
  %v636 = vmul.f32 %v631, 1.442695
  %v637 = vpow.pop %v636
  %v638 = vadd.f32 %v633, 1.0
  %v639 = vadd.f32 %v635, 1.0
  %v640 = vadd.f32 %v637, 1.0
  %v641 = vrcp.pop %v638
  %v642 = vmul.f32 1.0, %v641
  %v643 = vrcp.pop %v639
  %v644 = vmul.f32 1.0, %v643
  %v645 = vrcp.pop %v640
  %v646 = vmul.f32 1.0, %v645
  %v647 = vtanh.pop %v628
  %v648 = vmul.f32 %v644, 0.0
  %v649 = vmul.f32 %v642, %v647
  %v650 = vadd.f32 %v648, %v649
  %v651 = vtanh.pop %v650
  %v652 = vmul.f32 %v646, %v651
  %653 = vst [vmem:[#allocation2] sm:$0xff] %v652
  %v654 = vld [vmem:[#allocation4] sm:$0xff]
  %v655 = vld [vmem:[#allocation4 + $0x8] sm:$0xff]
  %v656 = vld [vmem:[#allocation4 + $0x10] sm:$0xff]
  %v657 = vld [vmem:[#allocation4 + $0x18] sm:$0xff]
  %v658 = vpack.c.bf16 %v652, %v652
  %v659 = vld [vmem:[%s2] sm:$0xff]
  %v660 = vld [vmem:[%s2 + $0x8] sm:$0xff]
  %v661 = vld [vmem:[%s2 + $0x10] sm:$0xff]
  %v662 = vld [vmem:[%s2 + $0x18] sm:$0xff]
  %v663 = vld [vmem:[%s2 + $0x20] sm:$0xff]
  %v664 = vld [vmem:[%s2 + $0x28] sm:$0xff]
  %v665 = vld [vmem:[%s2 + $0x30] sm:$0xff]
  %v666 = vld [vmem:[%s2 + $0x38] sm:$0xff]
  %v667 = vld [vmem:[%s2 + $0x40] sm:$0xff]
  %v668 = vld [vmem:[%s2 + $0x48] sm:$0xff]
  %v669 = vld [vmem:[%s2 + $0x50] sm:$0xff]
  %v670 = vld [vmem:[%s2 + $0x58] sm:$0xff]
  %v671 = vld [vmem:[%s2 + $0x60] sm:$0xff]
  %v672 = vld [vmem:[%s2 + $0x68] sm:$0xff]
  %v673 = vld [vmem:[%s2 + $0x70] sm:$0xff]
  %v674 = vld [vmem:[%s2 + $0x78] sm:$0xff]
  %v675 = vld [vmem:[%s2 + $0x80] sm:$0xff]
  %v676 = vld [vmem:[%s2 + $0x88] sm:$0xff]
  %v677 = vld [vmem:[%s2 + $0x90] sm:$0xff]
  %v678 = vld [vmem:[%s2 + $0x98] sm:$0xff]
  %v679 = vld [vmem:[%s2 + $0xa0] sm:$0xff]
  %v680 = vld [vmem:[%s2 + $0xa8] sm:$0xff]
  %v681 = vld [vmem:[%s2 + $0xb0] sm:$0xff]
  %v682 = vld [vmem:[%s2 + $0xb8] sm:$0xff]
  %v683 = vld [vmem:[%s2 + $0xc0] sm:$0xff]
  %v684 = vld [vmem:[%s2 + $0xc8] sm:$0xff]
  %v685 = vld [vmem:[%s2 + $0xd0] sm:$0xff]
  %v686 = vld [vmem:[%s2 + $0xd8] sm:$0xff]
  %v687 = vld [vmem:[%s2 + $0xe0] sm:$0xff]
  %v688 = vld [vmem:[%s2 + $0xe8] sm:$0xff]
  %v689 = vld [vmem:[%s2 + $0xf0] sm:$0xff]
  %v690 = vld [vmem:[%s2 + $0xf8] sm:$0xff]
  %v723 = vunpack.c.l.b16 %v659
  %v724 = vunpack.c.h.b16 %v659
  %v725 = vunpack.c.l.b16 %v660
  %v726 = vunpack.c.h.b16 %v660
  %v727 = vunpack.c.l.b16 %v661
  %v728 = vunpack.c.h.b16 %v661
  %v729 = vunpack.c.l.b16 %v662
  %v730 = vunpack.c.h.b16 %v662
  %v731 = vunpack.c.l.b16 %v663
  %v732 = vunpack.c.h.b16 %v663
  %v733 = vunpack.c.l.b16 %v664
  %v734 = vunpack.c.h.b16 %v664
  %v735 = vunpack.c.l.b16 %v665
  %v736 = vunpack.c.h.b16 %v665
  %v737 = vunpack.c.l.b16 %v666
  %v738 = vunpack.c.h.b16 %v666
  %v739 = vunpack.c.l.b16 %v667
  %v740 = vunpack.c.h.b16 %v667
  %v741 = vunpack.c.l.b16 %v668
  %v742 = vunpack.c.h.b16 %v668
  %v743 = vunpack.c.l.b16 %v669
  %v744 = vunpack.c.h.b16 %v669
  %v745 = vunpack.c.l.b16 %v670
  %v746 = vunpack.c.h.b16 %v670
  %v747 = vunpack.c.l.b16 %v671
  %v748 = vunpack.c.h.b16 %v671
  %v749 = vunpack.c.l.b16 %v672
  %v750 = vunpack.c.h.b16 %v672
  %v751 = vunpack.c.l.b16 %v673
  %v752 = vunpack.c.h.b16 %v673
  %v753 = vunpack.c.l.b16 %v674
  %v754 = vunpack.c.h.b16 %v674
  %v755 = vunpack.c.l.b16 %v675
  %v756 = vunpack.c.h.b16 %v675
  %v757 = vunpack.c.l.b16 %v676
  %v758 = vunpack.c.h.b16 %v676
  %v759 = vunpack.c.l.b16 %v677
  %v760 = vunpack.c.h.b16 %v677
  %v761 = vunpack.c.l.b16 %v678
  %v762 = vunpack.c.h.b16 %v678
  %v763 = vunpack.c.l.b16 %v679
  %v764 = vunpack.c.h.b16 %v679
  %v765 = vunpack.c.l.b16 %v680
  %v766 = vunpack.c.h.b16 %v680
  %v767 = vunpack.c.l.b16 %v681
  %v768 = vunpack.c.h.b16 %v681
  %v769 = vunpack.c.l.b16 %v682
  %v770 = vunpack.c.h.b16 %v682
  %v771 = vunpack.c.l.b16 %v683
  %v772 = vunpack.c.h.b16 %v683
  %v773 = vunpack.c.l.b16 %v684
  %v774 = vunpack.c.h.b16 %v684
  %v775 = vunpack.c.l.b16 %v685
  %v776 = vunpack.c.h.b16 %v685
  %v777 = vunpack.c.l.b16 %v686
  %v778 = vunpack.c.h.b16 %v686
  %v779 = vunpack.c.l.b16 %v687
  %v780 = vunpack.c.h.b16 %v687
  %v781 = vunpack.c.l.b16 %v688
  %v782 = vunpack.c.h.b16 %v688
  %v783 = vunpack.c.l.b16 %v689
  %v784 = vunpack.c.h.b16 %v689
  %v785 = vunpack.c.l.b16 %v690
  %v786 = vunpack.c.h.b16 %v690
  %v787 = vpack.c.b16 %v727, %v723
  %v788 = vpack.c.b16 %v728, %v724
  %v789 = vpack.c.b16 %v729, %v725
  %v790 = vpack.c.b16 %v730, %v726
  %v791 = vpack.c.b16 %v735, %v731
  %v792 = vpack.c.b16 %v736, %v732
  %v793 = vpack.c.b16 %v737, %v733
  %v794 = vpack.c.b16 %v738, %v734
  %v795 = vpack.c.b16 %v743, %v739
  %v796 = vpack.c.b16 %v744, %v740
  %v797 = vpack.c.b16 %v745, %v741
  %v798 = vpack.c.b16 %v746, %v742
  %v799 = vpack.c.b16 %v751, %v747
  %v800 = vpack.c.b16 %v752, %v748
  %v801 = vpack.c.b16 %v753, %v749
  %v802 = vpack.c.b16 %v754, %v750
  %v803 = vpack.c.b16 %v759, %v755
  %v804 = vpack.c.b16 %v760, %v756
  %v805 = vpack.c.b16 %v761, %v757
  %v806 = vpack.c.b16 %v762, %v758
  %v807 = vpack.c.b16 %v767, %v763
  %v808 = vpack.c.b16 %v768, %v764
  %v809 = vpack.c.b16 %v769, %v765
  %v810 = vpack.c.b16 %v770, %v766
  %v811 = vpack.c.b16 %v775, %v771
  %v812 = vpack.c.b16 %v776, %v772
  %v813 = vpack.c.b16 %v777, %v773
  %v814 = vpack.c.b16 %v778, %v774
  %v815 = vpack.c.b16 %v783, %v779
  %v816 = vpack.c.b16 %v784, %v780
  %v817 = vpack.c.b16 %v785, %v781
  %v818 = vpack.c.b16 %v786, %v782
  %851 = vmatprep.subr.bf16.mxu0 %v816
  %852 = vmatpush1.bf16.msra.mxu0 %v815
  %853 = vmatprep.subr.bf16.mxu0 %v812
  %854 = vmatpush1.bf16.msra.mxu0 %v811
  %855 = vmatprep.subr.bf16.mxu0 %v808
  %856 = vmatpush1.bf16.msra.mxu0 %v807
  %857 = vmatprep.subr.bf16.mxu0 %v804
  %858 = vmatpush1.bf16.msra.mxu0 %v803
  %859 = vmatprep.subr.bf16.mxu0 %v800
  %860 = vmatpush1.bf16.msra.mxu0 %v799
  %861 = vmatprep.subr.bf16.mxu0 %v796
  %862 = vmatpush1.bf16.msra.mxu0 %v795
  %863 = vmatprep.subr.bf16.mxu0 %v792
  %864 = vmatpush1.bf16.msra.mxu0 %v791
  %865 = vmatprep.subr.bf16.mxu0 %v788
  %866 = vmatpush1.bf16.msra.mxu0 %v787
  %867 = vmatprep.subr.bf16.mxu0 0
  %868 = vmatpush2.bf16.msra.mxu0 0
  %869 = vmatprep.subr.bf16.mxu0 0
  %870 = vmatpush2.bf16.msra.mxu0 0
  %871 = vmatprep.subr.bf16.mxu0 0
  %872 = vmatpush2.bf16.msra.mxu0 0
  %873 = vmatprep.subr.bf16.mxu0 0
  %874 = vmatpush2.bf16.msra.mxu0 0
  %875 = vmatprep.subr.bf16.mxu0 0
  %876 = vmatpush2.bf16.msra.mxu0 0
  %877 = vmatprep.subr.bf16.mxu0 0
  %878 = vmatpush2.bf16.msra.mxu0 0
  %879 = vmatprep.subr.bf16.mxu0 0
  %880 = vmatpush2.bf16.msra.mxu0 0
  %881 = vmatprep.subr.bf16.mxu0 0
  %882 = vmatpush2.bf16.msra.mxu0 0
  %883 = vmatprep.mubr.bf16.mxu0 0
  %884 = vmatmul.mubr.bf16.gmra.mxu0 %v658
  %v885 = vpop.f32.mrf.mxu0
  %v886 = vadd.f32 0.0, %v885
  %v887 = vpop.f32.mrf.mxu0
  %v888 = vadd.f32 0.0, %v887
  %v889 = vpop.f32.mrf.mxu0
  %v890 = vpop.f32.mrf.mxu0
  %891 = vdwg.mxu0
  %892 = vmatprep.subr.bf16.mxu0 %v818
  %893 = vmatpush1.bf16.msra.mxu0 %v817
  %894 = vmatprep.subr.bf16.mxu0 %v814
  %895 = vmatpush1.bf16.msra.mxu0 %v813
  %896 = vmatprep.subr.bf16.mxu0 %v810
  %897 = vmatpush1.bf16.msra.mxu0 %v809
  %898 = vmatprep.subr.bf16.mxu0 %v806
  %899 = vmatpush1.bf16.msra.mxu0 %v805
  %900 = vmatprep.subr.bf16.mxu0 %v802
  %901 = vmatpush1.bf16.msra.mxu0 %v801
  %902 = vmatprep.subr.bf16.mxu0 %v798
  %903 = vmatpush1.bf16.msra.mxu0 %v797
  %904 = vmatprep.subr.bf16.mxu0 %v794
  %905 = vmatpush1.bf16.msra.mxu0 %v793
  %906 = vmatprep.subr.bf16.mxu0 %v790
  %907 = vmatpush1.bf16.msra.mxu0 %v789
  %908 = vmatprep.subr.bf16.mxu0 0
  %909 = vmatpush2.bf16.msra.mxu0 0
  %910 = vmatprep.subr.bf16.mxu0 0
  %911 = vmatpush2.bf16.msra.mxu0 0
  %912 = vmatprep.subr.bf16.mxu0 0
  %913 = vmatpush2.bf16.msra.mxu0 0
  %914 = vmatprep.subr.bf16.mxu0 0
  %915 = vmatpush2.bf16.msra.mxu0 0
  %916 = vmatprep.subr.bf16.mxu0 0
  %917 = vmatpush2.bf16.msra.mxu0 0
  %918 = vmatprep.subr.bf16.mxu0 0
  %919 = vmatpush2.bf16.msra.mxu0 0
  %920 = vmatprep.subr.bf16.mxu0 0
  %921 = vmatpush2.bf16.msra.mxu0 0
  %922 = vmatprep.subr.bf16.mxu0 0
  %923 = vmatpush2.bf16.msra.mxu0 0
  %924 = vmatprep.mubr.bf16.mxu0 0
  %925 = vmatmul.mubr.bf16.gmra.mxu0 %v658
  %v926 = vpop.f32.mrf.mxu0
  %v927 = vadd.f32 0.0, %v926
  %v928 = vpop.f32.mrf.mxu0
  %v929 = vadd.f32 0.0, %v928
  %v930 = vpop.f32.mrf.mxu0
  %v931 = vpop.f32.mrf.mxu0
  %932 = vdwg.mxu0
  %v933 = vadd.f32 %v654, %v886
  %v934 = vadd.f32 %v655, %v888
  %v935 = vadd.f32 %v656, %v927
  %v936 = vadd.f32 %v657, %v929
  %v937 = vxor.u32 %v933, 2147483648
  %v938 = vxor.u32 %v934, 2147483648
  %v939 = vxor.u32 %v935, 2147483648
  %v940 = vmul.f32 %v937, 1.442695
  %v941 = vpow.pop %v940
  %v942 = vmul.f32 %v938, 1.442695
  %v943 = vpow.pop %v942
  %v944 = vmul.f32 %v939, 1.442695
  %v945 = vpow.pop %v944
  %v946 = vadd.f32 %v941, 1.0
  %v947 = vadd.f32 %v943, 1.0
  %v948 = vadd.f32 %v945, 1.0
  %v949 = vrcp.pop %v946
  %v950 = vmul.f32 1.0, %v949
  %v951 = vrcp.pop %v947
  %v952 = vmul.f32 1.0, %v951
  %v953 = vrcp.pop %v948
  %v954 = vmul.f32 1.0, %v953
  %v955 = vtanh.pop %v936
  %v956 = vmul.f32 %v952, %v650
  %v957 = vmul.f32 %v950, %v955
  %v958 = vadd.f32 %v956, %v957
  %v959 = vtanh.pop %v958
  %v960 = vmul.f32 %v954, %v959
  %s961 = scalar_lea.vmem [#allocation2], 8
  %962 = vst [vmem:[%s961] sm:$0xff] %v960
  %v963 = vld [vmem:[#allocation4] sm:$0xff]
  %v964 = vld [vmem:[#allocation4 + $0x8] sm:$0xff]
  %v965 = vld [vmem:[#allocation4 + $0x10] sm:$0xff]
  %v966 = vld [vmem:[#allocation4 + $0x18] sm:$0xff]
  %v967 = vpack.c.bf16 %v960, %v960
  %v968 = vld [vmem:[%s2] sm:$0xff]
  %v969 = vld [vmem:[%s2 + $0x8] sm:$0xff]
  %v970 = vld [vmem:[%s2 + $0x10] sm:$0xff]
  %v971 = vld [vmem:[%s2 + $0x18] sm:$0xff]
  %v972 = vld [vmem:[%s2 + $0x20] sm:$0xff]
  %v973 = vld [vmem:[%s2 + $0x28] sm:$0xff]
  %v974 = vld [vmem:[%s2 + $0x30] sm:$0xff]
  %v975 = vld [vmem:[%s2 + $0x38] sm:$0xff]
  %v976 = vld [vmem:[%s2 + $0x40] sm:$0xff]
  %v977 = vld [vmem:[%s2 + $0x48] sm:$0xff]
  %v978 = vld [vmem:[%s2 + $0x50] sm:$0xff]
  %v979 = vld [vmem:[%s2 + $0x58] sm:$0xff]
  %v980 = vld [vmem:[%s2 + $0x60] sm:$0xff]
  %v981 = vld [vmem:[%s2 + $0x68] sm:$0xff]
  %v982 = vld [vmem:[%s2 + $0x70] sm:$0xff]
  %v983 = vld [vmem:[%s2 + $0x78] sm:$0xff]
  %v984 = vld [vmem:[%s2 + $0x80] sm:$0xff]
  %v985 = vld [vmem:[%s2 + $0x88] sm:$0xff]
  %v986 = vld [vmem:[%s2 + $0x90] sm:$0xff]
  %v987 = vld [vmem:[%s2 + $0x98] sm:$0xff]
  %v988 = vld [vmem:[%s2 + $0xa0] sm:$0xff]
  %v989 = vld [vmem:[%s2 + $0xa8] sm:$0xff]
  %v990 = vld [vmem:[%s2 + $0xb0] sm:$0xff]
  %v991 = vld [vmem:[%s2 + $0xb8] sm:$0xff]
  %v992 = vld [vmem:[%s2 + $0xc0] sm:$0xff]
  %v993 = vld [vmem:[%s2 + $0xc8] sm:$0xff]
  %v994 = vld [vmem:[%s2 + $0xd0] sm:$0xff]
  %v995 = vld [vmem:[%s2 + $0xd8] sm:$0xff]
  %v996 = vld [vmem:[%s2 + $0xe0] sm:$0xff]
  %v997 = vld [vmem:[%s2 + $0xe8] sm:$0xff]
  %v998 = vld [vmem:[%s2 + $0xf0] sm:$0xff]
  %v999 = vld [vmem:[%s2 + $0xf8] sm:$0xff]
  %v1032 = vunpack.c.l.b16 %v968
  %v1033 = vunpack.c.h.b16 %v968
  %v1034 = vunpack.c.l.b16 %v969
  %v1035 = vunpack.c.h.b16 %v969
  %v1036 = vunpack.c.l.b16 %v970
  %v1037 = vunpack.c.h.b16 %v970
  %v1038 = vunpack.c.l.b16 %v971
  %v1039 = vunpack.c.h.b16 %v971
  %v1040 = vunpack.c.l.b16 %v972
  %v1041 = vunpack.c.h.b16 %v972
  %v1042 = vunpack.c.l.b16 %v973
  %v1043 = vunpack.c.h.b16 %v973
  %v1044 = vunpack.c.l.b16 %v974
  %v1045 = vunpack.c.h.b16 %v974
  %v1046 = vunpack.c.l.b16 %v975
  %v1047 = vunpack.c.h.b16 %v975
  %v1048 = vunpack.c.l.b16 %v976
  %v1049 = vunpack.c.h.b16 %v976
  %v1050 = vunpack.c.l.b16 %v977
  %v1051 = vunpack.c.h.b16 %v977
  %v1052 = vunpack.c.l.b16 %v978
  %v1053 = vunpack.c.h.b16 %v978
  %v1054 = vunpack.c.l.b16 %v979
  %v1055 = vunpack.c.h.b16 %v979
  %v1056 = vunpack.c.l.b16 %v980
  %v1057 = vunpack.c.h.b16 %v980
  %v1058 = vunpack.c.l.b16 %v981
  %v1059 = vunpack.c.h.b16 %v981
  %v1060 = vunpack.c.l.b16 %v982
  %v1061 = vunpack.c.h.b16 %v982
  %v1062 = vunpack.c.l.b16 %v983
  %v1063 = vunpack.c.h.b16 %v983
  %v1064 = vunpack.c.l.b16 %v984
  %v1065 = vunpack.c.h.b16 %v984
  %v1066 = vunpack.c.l.b16 %v985
  %v1067 = vunpack.c.h.b16 %v985
  %v1068 = vunpack.c.l.b16 %v986
  %v1069 = vunpack.c.h.b16 %v986
  %v1070 = vunpack.c.l.b16 %v987
  %v1071 = vunpack.c.h.b16 %v987
  %v1072 = vunpack.c.l.b16 %v988
  %v1073 = vunpack.c.h.b16 %v988
  %v1074 = vunpack.c.l.b16 %v989
  %v1075 = vunpack.c.h.b16 %v989
  %v1076 = vunpack.c.l.b16 %v990
  %v1077 = vunpack.c.h.b16 %v990
  %v1078 = vunpack.c.l.b16 %v991
  %v1079 = vunpack.c.h.b16 %v991
  %v1080 = vunpack.c.l.b16 %v992
  %v1081 = vunpack.c.h.b16 %v992
  %v1082 = vunpack.c.l.b16 %v993
  %v1083 = vunpack.c.h.b16 %v993
  %v1084 = vunpack.c.l.b16 %v994
  %v1085 = vunpack.c.h.b16 %v994
  %v1086 = vunpack.c.l.b16 %v995
  %v1087 = vunpack.c.h.b16 %v995
  %v1088 = vunpack.c.l.b16 %v996
  %v1089 = vunpack.c.h.b16 %v996
  %v1090 = vunpack.c.l.b16 %v997
  %v1091 = vunpack.c.h.b16 %v997
  %v1092 = vunpack.c.l.b16 %v998
  %v1093 = vunpack.c.h.b16 %v998
  %v1094 = vunpack.c.l.b16 %v999
  %v1095 = vunpack.c.h.b16 %v999
  %v1096 = vpack.c.b16 %v1036, %v1032
  %v1097 = vpack.c.b16 %v1037, %v1033
  %v1098 = vpack.c.b16 %v1038, %v1034
  %v1099 = vpack.c.b16 %v1039, %v1035
  %v1100 = vpack.c.b16 %v1044, %v1040
  %v1101 = vpack.c.b16 %v1045, %v1041
  %v1102 = vpack.c.b16 %v1046, %v1042
  %v1103 = vpack.c.b16 %v1047, %v1043
  %v1104 = vpack.c.b16 %v1052, %v1048
  %v1105 = vpack.c.b16 %v1053, %v1049
  %v1106 = vpack.c.b16 %v1054, %v1050
  %v1107 = vpack.c.b16 %v1055, %v1051
  %v1108 = vpack.c.b16 %v1060, %v1056
  %v1109 = vpack.c.b16 %v1061, %v1057
  %v1110 = vpack.c.b16 %v1062, %v1058
  %v1111 = vpack.c.b16 %v1063, %v1059
  %v1112 = vpack.c.b16 %v1068, %v1064
  %v1113 = vpack.c.b16 %v1069, %v1065
  %v1114 = vpack.c.b16 %v1070, %v1066
  %v1115 = vpack.c.b16 %v1071, %v1067
  %v1116 = vpack.c.b16 %v1076, %v1072
  %v1117 = vpack.c.b16 %v1077, %v1073
  %v1118 = vpack.c.b16 %v1078, %v1074
  %v1119 = vpack.c.b16 %v1079, %v1075
  %v1120 = vpack.c.b16 %v1084, %v1080
  %v1121 = vpack.c.b16 %v1085, %v1081
  %v1122 = vpack.c.b16 %v1086, %v1082
  %v1123 = vpack.c.b16 %v1087, %v1083
  %v1124 = vpack.c.b16 %v1092, %v1088
  %v1125 = vpack.c.b16 %v1093, %v1089
  %v1126 = vpack.c.b16 %v1094, %v1090
  %v1127 = vpack.c.b16 %v1095, %v1091
  %1160 = vmatprep.subr.bf16.mxu0 %v1125
  %1161 = vmatpush1.bf16.msra.mxu0 %v1124
  %1162 = vmatprep.subr.bf16.mxu0 %v1121
  %1163 = vmatpush1.bf16.msra.mxu0 %v1120
  %1164 = vmatprep.subr.bf16.mxu0 %v1117
  %1165 = vmatpush1.bf16.msra.mxu0 %v1116
  %1166 = vmatprep.subr.bf16.mxu0 %v1113
  %1167 = vmatpush1.bf16.msra.mxu0 %v1112
  %1168 = vmatprep.subr.bf16.mxu0 %v1109
  %1169 = vmatpush1.bf16.msra.mxu0 %v1108
  %1170 = vmatprep.subr.bf16.mxu0 %v1105
  %1171 = vmatpush1.bf16.msra.mxu0 %v1104
  %1172 = vmatprep.subr.bf16.mxu0 %v1101
  %1173 = vmatpush1.bf16.msra.mxu0 %v1100
  %1174 = vmatprep.subr.bf16.mxu0 %v1097
  %1175 = vmatpush1.bf16.msra.mxu0 %v1096
  %1176 = vmatprep.subr.bf16.mxu0 0
  %1177 = vmatpush2.bf16.msra.mxu0 0
  %1178 = vmatprep.subr.bf16.mxu0 0
  %1179 = vmatpush2.bf16.msra.mxu0 0
  %1180 = vmatprep.subr.bf16.mxu0 0
  %1181 = vmatpush2.bf16.msra.mxu0 0
  %1182 = vmatprep.subr.bf16.mxu0 0
  %1183 = vmatpush2.bf16.msra.mxu0 0
  %1184 = vmatprep.subr.bf16.mxu0 0
  %1185 = vmatpush2.bf16.msra.mxu0 0
  %1186 = vmatprep.subr.bf16.mxu0 0
  %1187 = vmatpush2.bf16.msra.mxu0 0
  %1188 = vmatprep.subr.bf16.mxu0 0
  %1189 = vmatpush2.bf16.msra.mxu0 0
  %1190 = vmatprep.subr.bf16.mxu0 0
  %1191 = vmatpush2.bf16.msra.mxu0 0
  %1192 = vmatprep.mubr.bf16.mxu0 0
  %1193 = vmatmul.mubr.bf16.gmra.mxu0 %v967
  %v1194 = vpop.f32.mrf.mxu0
  %v1195 = vadd.f32 0.0, %v1194
  %v1196 = vpop.f32.mrf.mxu0
  %v1197 = vadd.f32 0.0, %v1196
  %v1198 = vpop.f32.mrf.mxu0
  %v1199 = vpop.f32.mrf.mxu0
  %1200 = vdwg.mxu0
  %1201 = vmatprep.subr.bf16.mxu0 %v1127
  %1202 = vmatpush1.bf16.msra.mxu0 %v1126
  %1203 = vmatprep.subr.bf16.mxu0 %v1123
  %1204 = vmatpush1.bf16.msra.mxu0 %v1122
  %1205 = vmatprep.subr.bf16.mxu0 %v1119
  %1206 = vmatpush1.bf16.msra.mxu0 %v1118
  %1207 = vmatprep.subr.bf16.mxu0 %v1115
  %1208 = vmatpush1.bf16.msra.mxu0 %v1114
  %1209 = vmatprep.subr.bf16.mxu0 %v1111
  %1210 = vmatpush1.bf16.msra.mxu0 %v1110
  %1211 = vmatprep.subr.bf16.mxu0 %v1107
  %1212 = vmatpush1.bf16.msra.mxu0 %v1106
  %1213 = vmatprep.subr.bf16.mxu0 %v1103
  %1214 = vmatpush1.bf16.msra.mxu0 %v1102
  %1215 = vmatprep.subr.bf16.mxu0 %v1099
  %1216 = vmatpush1.bf16.msra.mxu0 %v1098
  %1217 = vmatprep.subr.bf16.mxu0 0
  %1218 = vmatpush2.bf16.msra.mxu0 0
  %1219 = vmatprep.subr.bf16.mxu0 0
  %1220 = vmatpush2.bf16.msra.mxu0 0
  %1221 = vmatprep.subr.bf16.mxu0 0
  %1222 = vmatpush2.bf16.msra.mxu0 0
  %1223 = vmatprep.subr.bf16.mxu0 0
  %1224 = vmatpush2.bf16.msra.mxu0 0
  %1225 = vmatprep.subr.bf16.mxu0 0
  %1226 = vmatpush2.bf16.msra.mxu0 0
  %1227 = vmatprep.subr.bf16.mxu0 0
  %1228 = vmatpush2.bf16.msra.mxu0 0
  %1229 = vmatprep.subr.bf16.mxu0 0
  %1230 = vmatpush2.bf16.msra.mxu0 0
  %1231 = vmatprep.subr.bf16.mxu0 0
  %1232 = vmatpush2.bf16.msra.mxu0 0
  %1233 = vmatprep.mubr.bf16.mxu0 0
  %1234 = vmatmul.mubr.bf16.gmra.mxu0 %v967
  %v1235 = vpop.f32.mrf.mxu0
  %v1236 = vadd.f32 0.0, %v1235
  %v1237 = vpop.f32.mrf.mxu0
  %v1238 = vadd.f32 0.0, %v1237
  %v1239 = vpop.f32.mrf.mxu0
  %v1240 = vpop.f32.mrf.mxu0
  %1241 = vdwg.mxu0
  %v1242 = vadd.f32 %v963, %v1195
  %v1243 = vadd.f32 %v964, %v1197
  %v1244 = vadd.f32 %v965, %v1236
  %v1245 = vadd.f32 %v966, %v1238
  %v1246 = vxor.u32 %v1242, 2147483648
  %v1247 = vxor.u32 %v1243, 2147483648
  %v1248 = vxor.u32 %v1244, 2147483648
  %v1249 = vmul.f32 %v1246, 1.442695
  %v1250 = vpow.pop %v1249
  %v1251 = vmul.f32 %v1247, 1.442695
  %v1252 = vpow.pop %v1251
  %v1253 = vmul.f32 %v1248, 1.442695
  %v1254 = vpow.pop %v1253
  %v1255 = vadd.f32 %v1250, 1.0
  %v1256 = vadd.f32 %v1252, 1.0
  %v1257 = vadd.f32 %v1254, 1.0
  %v1258 = vrcp.pop %v1255
  %v1259 = vmul.f32 1.0, %v1258
  %v1260 = vrcp.pop %v1256
  %v1261 = vmul.f32 1.0, %v1260
  %v1262 = vrcp.pop %v1257
  %v1263 = vmul.f32 1.0, %v1262
  %v1264 = vtanh.pop %v1245
  %v1265 = vmul.f32 %v1261, %v958
  %v1266 = vmul.f32 %v1259, %v1264
  %v1267 = vadd.f32 %v1265, %v1266
  %v1268 = vtanh.pop %v1267
  %v1269 = vmul.f32 %v1263, %v1268
  %s1270 = scalar_lea.vmem [#allocation2], 16
  %1271 = vst [vmem:[%s1270] sm:$0xff] %v1269
  %v1272 = vld [vmem:[#allocation4] sm:$0xff]
  %v1273 = vld [vmem:[#allocation4 + $0x8] sm:$0xff]
  %v1274 = vld [vmem:[#allocation4 + $0x10] sm:$0xff]
  %v1275 = vld [vmem:[#allocation4 + $0x18] sm:$0xff]
  %v1276 = vpack.c.bf16 %v1269, %v1269
  %v1277 = vld [vmem:[%s2] sm:$0xff]
  %v1278 = vld [vmem:[%s2 + $0x8] sm:$0xff]
  %v1279 = vld [vmem:[%s2 + $0x10] sm:$0xff]
  %v1280 = vld [vmem:[%s2 + $0x18] sm:$0xff]
  %v1281 = vld [vmem:[%s2 + $0x20] sm:$0xff]
  %v1282 = vld [vmem:[%s2 + $0x28] sm:$0xff]
  %v1283 = vld [vmem:[%s2 + $0x30] sm:$0xff]
  %v1284 = vld [vmem:[%s2 + $0x38] sm:$0xff]
  %v1285 = vld [vmem:[%s2 + $0x40] sm:$0xff]
  %v1286 = vld [vmem:[%s2 + $0x48] sm:$0xff]
  %v1287 = vld [vmem:[%s2 + $0x50] sm:$0xff]
  %v1288 = vld [vmem:[%s2 + $0x58] sm:$0xff]
  %v1289 = vld [vmem:[%s2 + $0x60] sm:$0xff]
  %v1290 = vld [vmem:[%s2 + $0x68] sm:$0xff]
  %v1291 = vld [vmem:[%s2 + $0x70] sm:$0xff]
  %v1292 = vld [vmem:[%s2 + $0x78] sm:$0xff]
  %v1293 = vld [vmem:[%s2 + $0x80] sm:$0xff]
  %v1294 = vld [vmem:[%s2 + $0x88] sm:$0xff]
  %v1295 = vld [vmem:[%s2 + $0x90] sm:$0xff]
  %v1296 = vld [vmem:[%s2 + $0x98] sm:$0xff]
  %v1297 = vld [vmem:[%s2 + $0xa0] sm:$0xff]
  %v1298 = vld [vmem:[%s2 + $0xa8] sm:$0xff]
  %v1299 = vld [vmem:[%s2 + $0xb0] sm:$0xff]
  %v1300 = vld [vmem:[%s2 + $0xb8] sm:$0xff]
  %v1301 = vld [vmem:[%s2 + $0xc0] sm:$0xff]
  %v1302 = vld [vmem:[%s2 + $0xc8] sm:$0xff]
  %v1303 = vld [vmem:[%s2 + $0xd0] sm:$0xff]
  %v1304 = vld [vmem:[%s2 + $0xd8] sm:$0xff]
  %v1305 = vld [vmem:[%s2 + $0xe0] sm:$0xff]
  %v1306 = vld [vmem:[%s2 + $0xe8] sm:$0xff]
  %v1307 = vld [vmem:[%s2 + $0xf0] sm:$0xff]
  %v1308 = vld [vmem:[%s2 + $0xf8] sm:$0xff]
  %v1341 = vunpack.c.l.b16 %v1277
  %v1342 = vunpack.c.h.b16 %v1277
  %v1343 = vunpack.c.l.b16 %v1278
  %v1344 = vunpack.c.h.b16 %v1278
  %v1345 = vunpack.c.l.b16 %v1279
  %v1346 = vunpack.c.h.b16 %v1279
  %v1347 = vunpack.c.l.b16 %v1280
  %v1348 = vunpack.c.h.b16 %v1280
  %v1349 = vunpack.c.l.b16 %v1281
  %v1350 = vunpack.c.h.b16 %v1281
  %v1351 = vunpack.c.l.b16 %v1282
  %v1352 = vunpack.c.h.b16 %v1282
  %v1353 = vunpack.c.l.b16 %v1283
  %v1354 = vunpack.c.h.b16 %v1283
  %v1355 = vunpack.c.l.b16 %v1284
  %v1356 = vunpack.c.h.b16 %v1284
  %v1357 = vunpack.c.l.b16 %v1285
  %v1358 = vunpack.c.h.b16 %v1285
  %v1359 = vunpack.c.l.b16 %v1286
  %v1360 = vunpack.c.h.b16 %v1286
  %v1361 = vunpack.c.l.b16 %v1287
  %v1362 = vunpack.c.h.b16 %v1287
  %v1363 = vunpack.c.l.b16 %v1288
  %v1364 = vunpack.c.h.b16 %v1288
  %v1365 = vunpack.c.l.b16 %v1289
  %v1366 = vunpack.c.h.b16 %v1289
  %v1367 = vunpack.c.l.b16 %v1290
  %v1368 = vunpack.c.h.b16 %v1290
  %v1369 = vunpack.c.l.b16 %v1291
  %v1370 = vunpack.c.h.b16 %v1291
  %v1371 = vunpack.c.l.b16 %v1292
  %v1372 = vunpack.c.h.b16 %v1292
  %v1373 = vunpack.c.l.b16 %v1293
  %v1374 = vunpack.c.h.b16 %v1293
  %v1375 = vunpack.c.l.b16 %v1294
  %v1376 = vunpack.c.h.b16 %v1294
  %v1377 = vunpack.c.l.b16 %v1295
  %v1378 = vunpack.c.h.b16 %v1295
  %v1379 = vunpack.c.l.b16 %v1296
  %v1380 = vunpack.c.h.b16 %v1296
  %v1381 = vunpack.c.l.b16 %v1297
  %v1382 = vunpack.c.h.b16 %v1297
  %v1383 = vunpack.c.l.b16 %v1298
  %v1384 = vunpack.c.h.b16 %v1298
  %v1385 = vunpack.c.l.b16 %v1299
  %v1386 = vunpack.c.h.b16 %v1299
  %v1387 = vunpack.c.l.b16 %v1300
  %v1388 = vunpack.c.h.b16 %v1300
  %v1389 = vunpack.c.l.b16 %v1301
  %v1390 = vunpack.c.h.b16 %v1301
  %v1391 = vunpack.c.l.b16 %v1302
  %v1392 = vunpack.c.h.b16 %v1302
  %v1393 = vunpack.c.l.b16 %v1303
  %v1394 = vunpack.c.h.b16 %v1303
  %v1395 = vunpack.c.l.b16 %v1304
  %v1396 = vunpack.c.h.b16 %v1304
  %v1397 = vunpack.c.l.b16 %v1305
  %v1398 = vunpack.c.h.b16 %v1305
  %v1399 = vunpack.c.l.b16 %v1306
  %v1400 = vunpack.c.h.b16 %v1306
  %v1401 = vunpack.c.l.b16 %v1307
  %v1402 = vunpack.c.h.b16 %v1307
  %v1403 = vunpack.c.l.b16 %v1308
  %v1404 = vunpack.c.h.b16 %v1308
  %v1405 = vpack.c.b16 %v1345, %v1341
  %v1406 = vpack.c.b16 %v1346, %v1342
  %v1407 = vpack.c.b16 %v1347, %v1343
  %v1408 = vpack.c.b16 %v1348, %v1344
  %v1409 = vpack.c.b16 %v1353, %v1349
  %v1410 = vpack.c.b16 %v1354, %v1350
  %v1411 = vpack.c.b16 %v1355, %v1351
  %v1412 = vpack.c.b16 %v1356, %v1352
  %v1413 = vpack.c.b16 %v1361, %v1357
  %v1414 = vpack.c.b16 %v1362, %v1358
  %v1415 = vpack.c.b16 %v1363, %v1359
  %v1416 = vpack.c.b16 %v1364, %v1360
  %v1417 = vpack.c.b16 %v1369, %v1365
  %v1418 = vpack.c.b16 %v1370, %v1366
  %v1419 = vpack.c.b16 %v1371, %v1367
  %v1420 = vpack.c.b16 %v1372, %v1368
  %v1421 = vpack.c.b16 %v1377, %v1373
  %v1422 = vpack.c.b16 %v1378, %v1374
  %v1423 = vpack.c.b16 %v1379, %v1375
  %v1424 = vpack.c.b16 %v1380, %v1376
  %v1425 = vpack.c.b16 %v1385, %v1381
  %v1426 = vpack.c.b16 %v1386, %v1382
  %v1427 = vpack.c.b16 %v1387, %v1383
  %v1428 = vpack.c.b16 %v1388, %v1384
  %v1429 = vpack.c.b16 %v1393, %v1389
  %v1430 = vpack.c.b16 %v1394, %v1390
  %v1431 = vpack.c.b16 %v1395, %v1391
  %v1432 = vpack.c.b16 %v1396, %v1392
  %v1433 = vpack.c.b16 %v1401, %v1397
  %v1434 = vpack.c.b16 %v1402, %v1398
  %v1435 = vpack.c.b16 %v1403, %v1399
  %v1436 = vpack.c.b16 %v1404, %v1400
  %1469 = vmatprep.subr.bf16.mxu0 %v1434
  %1470 = vmatpush1.bf16.msra.mxu0 %v1433
  %1471 = vmatprep.subr.bf16.mxu0 %v1430
  %1472 = vmatpush1.bf16.msra.mxu0 %v1429
  %1473 = vmatprep.subr.bf16.mxu0 %v1426
  %1474 = vmatpush1.bf16.msra.mxu0 %v1425
  %1475 = vmatprep.subr.bf16.mxu0 %v1422
  %1476 = vmatpush1.bf16.msra.mxu0 %v1421
  %1477 = vmatprep.subr.bf16.mxu0 %v1418
  %1478 = vmatpush1.bf16.msra.mxu0 %v1417
  %1479 = vmatprep.subr.bf16.mxu0 %v1414
  %1480 = vmatpush1.bf16.msra.mxu0 %v1413
  %1481 = vmatprep.subr.bf16.mxu0 %v1410
  %1482 = vmatpush1.bf16.msra.mxu0 %v1409
  %1483 = vmatprep.subr.bf16.mxu0 %v1406
  %1484 = vmatpush1.bf16.msra.mxu0 %v1405
  %1485 = vmatprep.subr.bf16.mxu0 0
  %1486 = vmatpush2.bf16.msra.mxu0 0
  %1487 = vmatprep.subr.bf16.mxu0 0
  %1488 = vmatpush2.bf16.msra.mxu0 0
  %1489 = vmatprep.subr.bf16.mxu0 0
  %1490 = vmatpush2.bf16.msra.mxu0 0
  %1491 = vmatprep.subr.bf16.mxu0 0
  %1492 = vmatpush2.bf16.msra.mxu0 0
  %1493 = vmatprep.subr.bf16.mxu0 0
  %1494 = vmatpush2.bf16.msra.mxu0 0
  %1495 = vmatprep.subr.bf16.mxu0 0
  %1496 = vmatpush2.bf16.msra.mxu0 0
  %1497 = vmatprep.subr.bf16.mxu0 0
  %1498 = vmatpush2.bf16.msra.mxu0 0
  %1499 = vmatprep.subr.bf16.mxu0 0
  %1500 = vmatpush2.bf16.msra.mxu0 0
  %1501 = vmatprep.mubr.bf16.mxu0 0
  %1502 = vmatmul.mubr.bf16.gmra.mxu0 %v1276
  %v1503 = vpop.f32.mrf.mxu0
  %v1504 = vadd.f32 0.0, %v1503
  %v1505 = vpop.f32.mrf.mxu0
  %v1506 = vadd.f32 0.0, %v1505
  %v1507 = vpop.f32.mrf.mxu0
  %v1508 = vpop.f32.mrf.mxu0
  %1509 = vdwg.mxu0
  %1510 = vmatprep.subr.bf16.mxu0 %v1436
  %1511 = vmatpush1.bf16.msra.mxu0 %v1435
  %1512 = vmatprep.subr.bf16.mxu0 %v1432
  %1513 = vmatpush1.bf16.msra.mxu0 %v1431
  %1514 = vmatprep.subr.bf16.mxu0 %v1428
  %1515 = vmatpush1.bf16.msra.mxu0 %v1427
  %1516 = vmatprep.subr.bf16.mxu0 %v1424
  %1517 = vmatpush1.bf16.msra.mxu0 %v1423
  %1518 = vmatprep.subr.bf16.mxu0 %v1420
  %1519 = vmatpush1.bf16.msra.mxu0 %v1419
  %1520 = vmatprep.subr.bf16.mxu0 %v1416
  %1521 = vmatpush1.bf16.msra.mxu0 %v1415
  %1522 = vmatprep.subr.bf16.mxu0 %v1412
  %1523 = vmatpush1.bf16.msra.mxu0 %v1411
  %1524 = vmatprep.subr.bf16.mxu0 %v1408
  %1525 = vmatpush1.bf16.msra.mxu0 %v1407
  %1526 = vmatprep.subr.bf16.mxu0 0
  %1527 = vmatpush2.bf16.msra.mxu0 0
  %1528 = vmatprep.subr.bf16.mxu0 0
  %1529 = vmatpush2.bf16.msra.mxu0 0
  %1530 = vmatprep.subr.bf16.mxu0 0
  %1531 = vmatpush2.bf16.msra.mxu0 0
  %1532 = vmatprep.subr.bf16.mxu0 0
  %1533 = vmatpush2.bf16.msra.mxu0 0
  %1534 = vmatprep.subr.bf16.mxu0 0
  %1535 = vmatpush2.bf16.msra.mxu0 0
  %1536 = vmatprep.subr.bf16.mxu0 0
  %1537 = vmatpush2.bf16.msra.mxu0 0
  %1538 = vmatprep.subr.bf16.mxu0 0
  %1539 = vmatpush2.bf16.msra.mxu0 0
  %1540 = vmatprep.subr.bf16.mxu0 0
  %1541 = vmatpush2.bf16.msra.mxu0 0
  %1542 = vmatprep.mubr.bf16.mxu0 0
  %1543 = vmatmul.mubr.bf16.gmra.mxu0 %v1276
  %v1544 = vpop.f32.mrf.mxu0
  %v1545 = vadd.f32 0.0, %v1544
  %v1546 = vpop.f32.mrf.mxu0
  %v1547 = vadd.f32 0.0, %v1546
  %v1548 = vpop.f32.mrf.mxu0
  %v1549 = vpop.f32.mrf.mxu0
  %1550 = vdwg.mxu0
  %v1551 = vadd.f32 %v1272, %v1504
  %v1552 = vadd.f32 %v1273, %v1506
  %v1553 = vadd.f32 %v1274, %v1545
  %v1554 = vadd.f32 %v1275, %v1547
  %v1555 = vxor.u32 %v1551, 2147483648
  %v1556 = vxor.u32 %v1552, 2147483648
  %v1557 = vxor.u32 %v1553, 2147483648
  %v1558 = vmul.f32 %v1555, 1.442695
  %v1559 = vpow.pop %v1558
  %v1560 = vmul.f32 %v1556, 1.442695
  %v1561 = vpow.pop %v1560
  %v1562 = vmul.f32 %v1557, 1.442695
  %v1563 = vpow.pop %v1562
  %v1564 = vadd.f32 %v1559, 1.0
  %v1565 = vadd.f32 %v1561, 1.0
  %v1566 = vadd.f32 %v1563, 1.0
  %v1567 = vrcp.pop %v1564
  %v1568 = vmul.f32 1.0, %v1567
  %v1569 = vrcp.pop %v1565
  %v1570 = vmul.f32 1.0, %v1569
  %v1571 = vrcp.pop %v1566
  %v1572 = vmul.f32 1.0, %v1571
  %v1573 = vtanh.pop %v1554
  %v1574 = vmul.f32 %v1570, %v1267
  %v1575 = vmul.f32 %v1568, %v1573
  %v1576 = vadd.f32 %v1574, %v1575
  %v1577 = vtanh.pop %v1576
  %v1578 = vmul.f32 %v1572, %v1577
  %s1579 = scalar_lea.vmem [#allocation2], 24
  %1580 = vst [vmem:[%s1579] sm:$0xff] %v1578
  %v1581 = vld [vmem:[#allocation4] sm:$0xff]
  %v1582 = vld [vmem:[#allocation4 + $0x8] sm:$0xff]
  %v1583 = vld [vmem:[#allocation4 + $0x10] sm:$0xff]
  %v1584 = vld [vmem:[#allocation4 + $0x18] sm:$0xff]
  %v1585 = vpack.c.bf16 %v1578, %v1578
  %v1586 = vld [vmem:[%s2] sm:$0xff]
  %v1587 = vld [vmem:[%s2 + $0x8] sm:$0xff]
  %v1588 = vld [vmem:[%s2 + $0x10] sm:$0xff]
  %v1589 = vld [vmem:[%s2 + $0x18] sm:$0xff]
  %v1590 = vld [vmem:[%s2 + $0x20] sm:$0xff]
  %v1591 = vld [vmem:[%s2 + $0x28] sm:$0xff]
  %v1592 = vld [vmem:[%s2 + $0x30] sm:$0xff]
  %v1593 = vld [vmem:[%s2 + $0x38] sm:$0xff]
  %v1594 = vld [vmem:[%s2 + $0x40] sm:$0xff]
  %v1595 = vld [vmem:[%s2 + $0x48] sm:$0xff]
  %v1596 = vld [vmem:[%s2 + $0x50] sm:$0xff]
  %v1597 = vld [vmem:[%s2 + $0x58] sm:$0xff]
  %v1598 = vld [vmem:[%s2 + $0x60] sm:$0xff]
  %v1599 = vld [vmem:[%s2 + $0x68] sm:$0xff]
  %v1600 = vld [vmem:[%s2 + $0x70] sm:$0xff]
  %v1601 = vld [vmem:[%s2 + $0x78] sm:$0xff]
  %v1602 = vld [vmem:[%s2 + $0x80] sm:$0xff]
  %v1603 = vld [vmem:[%s2 + $0x88] sm:$0xff]
  %v1604 = vld [vmem:[%s2 + $0x90] sm:$0xff]
  %v1605 = vld [vmem:[%s2 + $0x98] sm:$0xff]
  %v1606 = vld [vmem:[%s2 + $0xa0] sm:$0xff]
  %v1607 = vld [vmem:[%s2 + $0xa8] sm:$0xff]
  %v1608 = vld [vmem:[%s2 + $0xb0] sm:$0xff]
  %v1609 = vld [vmem:[%s2 + $0xb8] sm:$0xff]
  %v1610 = vld [vmem:[%s2 + $0xc0] sm:$0xff]
  %v1611 = vld [vmem:[%s2 + $0xc8] sm:$0xff]
  %v1612 = vld [vmem:[%s2 + $0xd0] sm:$0xff]
  %v1613 = vld [vmem:[%s2 + $0xd8] sm:$0xff]
  %v1614 = vld [vmem:[%s2 + $0xe0] sm:$0xff]
  %v1615 = vld [vmem:[%s2 + $0xe8] sm:$0xff]
  %v1616 = vld [vmem:[%s2 + $0xf0] sm:$0xff]
  %v1617 = vld [vmem:[%s2 + $0xf8] sm:$0xff]
  %v1650 = vunpack.c.l.b16 %v1586
  %v1651 = vunpack.c.h.b16 %v1586
  %v1652 = vunpack.c.l.b16 %v1587
  %v1653 = vunpack.c.h.b16 %v1587
  %v1654 = vunpack.c.l.b16 %v1588
  %v1655 = vunpack.c.h.b16 %v1588
  %v1656 = vunpack.c.l.b16 %v1589
  %v1657 = vunpack.c.h.b16 %v1589
  %v1658 = vunpack.c.l.b16 %v1590
  %v1659 = vunpack.c.h.b16 %v1590
  %v1660 = vunpack.c.l.b16 %v1591
  %v1661 = vunpack.c.h.b16 %v1591
  %v1662 = vunpack.c.l.b16 %v1592
  %v1663 = vunpack.c.h.b16 %v1592
  %v1664 = vunpack.c.l.b16 %v1593
  %v1665 = vunpack.c.h.b16 %v1593
  %v1666 = vunpack.c.l.b16 %v1594
  %v1667 = vunpack.c.h.b16 %v1594
  %v1668 = vunpack.c.l.b16 %v1595
  %v1669 = vunpack.c.h.b16 %v1595
  %v1670 = vunpack.c.l.b16 %v1596
  %v1671 = vunpack.c.h.b16 %v1596
  %v1672 = vunpack.c.l.b16 %v1597
  %v1673 = vunpack.c.h.b16 %v1597
  %v1674 = vunpack.c.l.b16 %v1598
  %v1675 = vunpack.c.h.b16 %v1598
  %v1676 = vunpack.c.l.b16 %v1599
  %v1677 = vunpack.c.h.b16 %v1599
  %v1678 = vunpack.c.l.b16 %v1600
  %v1679 = vunpack.c.h.b16 %v1600
  %v1680 = vunpack.c.l.b16 %v1601
  %v1681 = vunpack.c.h.b16 %v1601
  %v1682 = vunpack.c.l.b16 %v1602
  %v1683 = vunpack.c.h.b16 %v1602
  %v1684 = vunpack.c.l.b16 %v1603
  %v1685 = vunpack.c.h.b16 %v1603
  %v1686 = vunpack.c.l.b16 %v1604
  %v1687 = vunpack.c.h.b16 %v1604
  %v1688 = vunpack.c.l.b16 %v1605
  %v1689 = vunpack.c.h.b16 %v1605
  %v1690 = vunpack.c.l.b16 %v1606
  %v1691 = vunpack.c.h.b16 %v1606
  %v1692 = vunpack.c.l.b16 %v1607
  %v1693 = vunpack.c.h.b16 %v1607
  %v1694 = vunpack.c.l.b16 %v1608
  %v1695 = vunpack.c.h.b16 %v1608
  %v1696 = vunpack.c.l.b16 %v1609
  %v1697 = vunpack.c.h.b16 %v1609
  %v1698 = vunpack.c.l.b16 %v1610
  %v1699 = vunpack.c.h.b16 %v1610
  %v1700 = vunpack.c.l.b16 %v1611
  %v1701 = vunpack.c.h.b16 %v1611
  %v1702 = vunpack.c.l.b16 %v1612
  %v1703 = vunpack.c.h.b16 %v1612
  %v1704 = vunpack.c.l.b16 %v1613
  %v1705 = vunpack.c.h.b16 %v1613
  %v1706 = vunpack.c.l.b16 %v1614
  %v1707 = vunpack.c.h.b16 %v1614
  %v1708 = vunpack.c.l.b16 %v1615
  %v1709 = vunpack.c.h.b16 %v1615
  %v1710 = vunpack.c.l.b16 %v1616
  %v1711 = vunpack.c.h.b16 %v1616
  %v1712 = vunpack.c.l.b16 %v1617
  %v1713 = vunpack.c.h.b16 %v1617
  %v1714 = vpack.c.b16 %v1654, %v1650
  %v1715 = vpack.c.b16 %v1655, %v1651
  %v1716 = vpack.c.b16 %v1656, %v1652
  %v1717 = vpack.c.b16 %v1657, %v1653
  %v1718 = vpack.c.b16 %v1662, %v1658
  %v1719 = vpack.c.b16 %v1663, %v1659
  %v1720 = vpack.c.b16 %v1664, %v1660
  %v1721 = vpack.c.b16 %v1665, %v1661
  %v1722 = vpack.c.b16 %v1670, %v1666
  %v1723 = vpack.c.b16 %v1671, %v1667
  %v1724 = vpack.c.b16 %v1672, %v1668
  %v1725 = vpack.c.b16 %v1673, %v1669
  %v1726 = vpack.c.b16 %v1678, %v1674
  %v1727 = vpack.c.b16 %v1679, %v1675
  %v1728 = vpack.c.b16 %v1680, %v1676
  %v1729 = vpack.c.b16 %v1681, %v1677
  %v1730 = vpack.c.b16 %v1686, %v1682
  %v1731 = vpack.c.b16 %v1687, %v1683
  %v1732 = vpack.c.b16 %v1688, %v1684
  %v1733 = vpack.c.b16 %v1689, %v1685
  %v1734 = vpack.c.b16 %v1694, %v1690
  %v1735 = vpack.c.b16 %v1695, %v1691
  %v1736 = vpack.c.b16 %v1696, %v1692
  %v1737 = vpack.c.b16 %v1697, %v1693
  %v1738 = vpack.c.b16 %v1702, %v1698
  %v1739 = vpack.c.b16 %v1703, %v1699
  %v1740 = vpack.c.b16 %v1704, %v1700
  %v1741 = vpack.c.b16 %v1705, %v1701
  %v1742 = vpack.c.b16 %v1710, %v1706
  %v1743 = vpack.c.b16 %v1711, %v1707
  %v1744 = vpack.c.b16 %v1712, %v1708
  %v1745 = vpack.c.b16 %v1713, %v1709
  %1778 = vmatprep.subr.bf16.mxu0 %v1743
  %1779 = vmatpush1.bf16.msra.mxu0 %v1742
  %1780 = vmatprep.subr.bf16.mxu0 %v1739
  %1781 = vmatpush1.bf16.msra.mxu0 %v1738
  %1782 = vmatprep.subr.bf16.mxu0 %v1735
  %1783 = vmatpush1.bf16.msra.mxu0 %v1734
  %1784 = vmatprep.subr.bf16.mxu0 %v1731
  %1785 = vmatpush1.bf16.msra.mxu0 %v1730
  %1786 = vmatprep.subr.bf16.mxu0 %v1727
  %1787 = vmatpush1.bf16.msra.mxu0 %v1726
  %1788 = vmatprep.subr.bf16.mxu0 %v1723
  %1789 = vmatpush1.bf16.msra.mxu0 %v1722
  %1790 = vmatprep.subr.bf16.mxu0 %v1719
  %1791 = vmatpush1.bf16.msra.mxu0 %v1718
  %1792 = vmatprep.subr.bf16.mxu0 %v1715
  %1793 = vmatpush1.bf16.msra.mxu0 %v1714
  %1794 = vmatprep.subr.bf16.mxu0 0
  %1795 = vmatpush2.bf16.msra.mxu0 0
  %1796 = vmatprep.subr.bf16.mxu0 0
  %1797 = vmatpush2.bf16.msra.mxu0 0
  %1798 = vmatprep.subr.bf16.mxu0 0
  %1799 = vmatpush2.bf16.msra.mxu0 0
  %1800 = vmatprep.subr.bf16.mxu0 0
  %1801 = vmatpush2.bf16.msra.mxu0 0
  %1802 = vmatprep.subr.bf16.mxu0 0
  %1803 = vmatpush2.bf16.msra.mxu0 0
  %1804 = vmatprep.subr.bf16.mxu0 0
  %1805 = vmatpush2.bf16.msra.mxu0 0
  %1806 = vmatprep.subr.bf16.mxu0 0
  %1807 = vmatpush2.bf16.msra.mxu0 0
  %1808 = vmatprep.subr.bf16.mxu0 0
  %1809 = vmatpush2.bf16.msra.mxu0 0
  %1810 = vmatprep.mubr.bf16.mxu0 0
  %1811 = vmatmul.mubr.bf16.gmra.mxu0 %v1585
  %v1812 = vpop.f32.mrf.mxu0
  %v1813 = vadd.f32 0.0, %v1812
  %v1814 = vpop.f32.mrf.mxu0
  %v1815 = vadd.f32 0.0, %v1814
  %v1816 = vpop.f32.mrf.mxu0
  %v1817 = vpop.f32.mrf.mxu0
  %1818 = vdwg.mxu0
  %1819 = vmatprep.subr.bf16.mxu0 %v1745
  %1820 = vmatpush1.bf16.msra.mxu0 %v1744
  %1821 = vmatprep.subr.bf16.mxu0 %v1741
  %1822 = vmatpush1.bf16.msra.mxu0 %v1740
  %1823 = vmatprep.subr.bf16.mxu0 %v1737
  %1824 = vmatpush1.bf16.msra.mxu0 %v1736
  %1825 = vmatprep.subr.bf16.mxu0 %v1733
  %1826 = vmatpush1.bf16.msra.mxu0 %v1732
  %1827 = vmatprep.subr.bf16.mxu0 %v1729
  %1828 = vmatpush1.bf16.msra.mxu0 %v1728
  %1829 = vmatprep.subr.bf16.mxu0 %v1725
  %1830 = vmatpush1.bf16.msra.mxu0 %v1724
  %1831 = vmatprep.subr.bf16.mxu0 %v1721
  %1832 = vmatpush1.bf16.msra.mxu0 %v1720
  %1833 = vmatprep.subr.bf16.mxu0 %v1717
  %1834 = vmatpush1.bf16.msra.mxu0 %v1716
  %1835 = vmatprep.subr.bf16.mxu0 0
  %1836 = vmatpush2.bf16.msra.mxu0 0
  %1837 = vmatprep.subr.bf16.mxu0 0
  %1838 = vmatpush2.bf16.msra.mxu0 0
  %1839 = vmatprep.subr.bf16.mxu0 0
  %1840 = vmatpush2.bf16.msra.mxu0 0
  %1841 = vmatprep.subr.bf16.mxu0 0
  %1842 = vmatpush2.bf16.msra.mxu0 0
  %1843 = vmatprep.subr.bf16.mxu0 0
  %1844 = vmatpush2.bf16.msra.mxu0 0
  %1845 = vmatprep.subr.bf16.mxu0 0
  %1846 = vmatpush2.bf16.msra.mxu0 0
  %1847 = vmatprep.subr.bf16.mxu0 0
  %1848 = vmatpush2.bf16.msra.mxu0 0
  %1849 = vmatprep.subr.bf16.mxu0 0
  %1850 = vmatpush2.bf16.msra.mxu0 0
  %1851 = vmatprep.mubr.bf16.mxu0 0
  %1852 = vmatmul.mubr.bf16.gmra.mxu0 %v1585
  %v1853 = vpop.f32.mrf.mxu0
  %v1854 = vadd.f32 0.0, %v1853
  %v1855 = vpop.f32.mrf.mxu0
  %v1856 = vadd.f32 0.0, %v1855
  %v1857 = vpop.f32.mrf.mxu0
  %v1858 = vpop.f32.mrf.mxu0
  %1859 = vdwg.mxu0
  %v1860 = vadd.f32 %v1581, %v1813
  %v1861 = vadd.f32 %v1582, %v1815
  %v1862 = vadd.f32 %v1583, %v1854
  %v1863 = vadd.f32 %v1584, %v1856
  %v1864 = vxor.u32 %v1860, 2147483648
  %v1865 = vxor.u32 %v1861, 2147483648
  %v1866 = vxor.u32 %v1862, 2147483648
  %v1867 = vmul.f32 %v1864, 1.442695
  %v1868 = vpow.pop %v1867
  %v1869 = vmul.f32 %v1865, 1.442695
  %v1870 = vpow.pop %v1869
  %v1871 = vmul.f32 %v1866, 1.442695
  %v1872 = vpow.pop %v1871
  %v1873 = vadd.f32 %v1868, 1.0
  %v1874 = vadd.f32 %v1870, 1.0
  %v1875 = vadd.f32 %v1872, 1.0
  %v1876 = vrcp.pop %v1873
  %v1877 = vmul.f32 1.0, %v1876
  %v1878 = vrcp.pop %v1874
  %v1879 = vmul.f32 1.0, %v1878
  %v1880 = vrcp.pop %v1875
  %v1881 = vmul.f32 1.0, %v1880
  %v1882 = vtanh.pop %v1863
  %v1883 = vmul.f32 %v1879, %v1576
  %v1884 = vmul.f32 %v1877, %v1882
  %v1885 = vadd.f32 %v1883, %v1884
  %v1886 = vtanh.pop %v1885
  %v1887 = vmul.f32 %v1881, %v1886
  %s1888 = scalar_lea.vmem [#allocation2], 32
  %1889 = vst [vmem:[%s1888] sm:$0xff] %v1887
  %v1890 = vld [vmem:[#allocation4] sm:$0xff]
  %v1891 = vld [vmem:[#allocation4 + $0x8] sm:$0xff]
  %v1892 = vld [vmem:[#allocation4 + $0x10] sm:$0xff]
  %v1893 = vld [vmem:[#allocation4 + $0x18] sm:$0xff]
  %v1894 = vpack.c.bf16 %v1887, %v1887
  %v1895 = vld [vmem:[%s2] sm:$0xff]
  %v1896 = vld [vmem:[%s2 + $0x8] sm:$0xff]
  %v1897 = vld [vmem:[%s2 + $0x10] sm:$0xff]
  %v1898 = vld [vmem:[%s2 + $0x18] sm:$0xff]
  %v1899 = vld [vmem:[%s2 + $0x20] sm:$0xff]
  %v1900 = vld [vmem:[%s2 + $0x28] sm:$0xff]
  %v1901 = vld [vmem:[%s2 + $0x30] sm:$0xff]
  %v1902 = vld [vmem:[%s2 + $0x38] sm:$0xff]
  %v1903 = vld [vmem:[%s2 + $0x40] sm:$0xff]
  %v1904 = vld [vmem:[%s2 + $0x48] sm:$0xff]
  %v1905 = vld [vmem:[%s2 + $0x50] sm:$0xff]
  %v1906 = vld [vmem:[%s2 + $0x58] sm:$0xff]
  %v1907 = vld [vmem:[%s2 + $0x60] sm:$0xff]
  %v1908 = vld [vmem:[%s2 + $0x68] sm:$0xff]
  %v1909 = vld [vmem:[%s2 + $0x70] sm:$0xff]
  %v1910 = vld [vmem:[%s2 + $0x78] sm:$0xff]
  %v1911 = vld [vmem:[%s2 + $0x80] sm:$0xff]
  %v1912 = vld [vmem:[%s2 + $0x88] sm:$0xff]
  %v1913 = vld [vmem:[%s2 + $0x90] sm:$0xff]
  %v1914 = vld [vmem:[%s2 + $0x98] sm:$0xff]
  %v1915 = vld [vmem:[%s2 + $0xa0] sm:$0xff]
  %v1916 = vld [vmem:[%s2 + $0xa8] sm:$0xff]
  %v1917 = vld [vmem:[%s2 + $0xb0] sm:$0xff]
  %v1918 = vld [vmem:[%s2 + $0xb8] sm:$0xff]
  %v1919 = vld [vmem:[%s2 + $0xc0] sm:$0xff]
  %v1920 = vld [vmem:[%s2 + $0xc8] sm:$0xff]
  %v1921 = vld [vmem:[%s2 + $0xd0] sm:$0xff]
  %v1922 = vld [vmem:[%s2 + $0xd8] sm:$0xff]
  %v1923 = vld [vmem:[%s2 + $0xe0] sm:$0xff]
  %v1924 = vld [vmem:[%s2 + $0xe8] sm:$0xff]
  %v1925 = vld [vmem:[%s2 + $0xf0] sm:$0xff]
  %v1926 = vld [vmem:[%s2 + $0xf8] sm:$0xff]
  %v1959 = vunpack.c.l.b16 %v1895
  %v1960 = vunpack.c.h.b16 %v1895
  %v1961 = vunpack.c.l.b16 %v1896
  %v1962 = vunpack.c.h.b16 %v1896
  %v1963 = vunpack.c.l.b16 %v1897
  %v1964 = vunpack.c.h.b16 %v1897
  %v1965 = vunpack.c.l.b16 %v1898
  %v1966 = vunpack.c.h.b16 %v1898
  %v1967 = vunpack.c.l.b16 %v1899
  %v1968 = vunpack.c.h.b16 %v1899
  %v1969 = vunpack.c.l.b16 %v1900
  %v1970 = vunpack.c.h.b16 %v1900
  %v1971 = vunpack.c.l.b16 %v1901
  %v1972 = vunpack.c.h.b16 %v1901
  %v1973 = vunpack.c.l.b16 %v1902
  %v1974 = vunpack.c.h.b16 %v1902
  %v1975 = vunpack.c.l.b16 %v1903
  %v1976 = vunpack.c.h.b16 %v1903
  %v1977 = vunpack.c.l.b16 %v1904
  %v1978 = vunpack.c.h.b16 %v1904
  %v1979 = vunpack.c.l.b16 %v1905
  %v1980 = vunpack.c.h.b16 %v1905
  %v1981 = vunpack.c.l.b16 %v1906
  %v1982 = vunpack.c.h.b16 %v1906
  %v1983 = vunpack.c.l.b16 %v1907
  %v1984 = vunpack.c.h.b16 %v1907
  %v1985 = vunpack.c.l.b16 %v1908
  %v1986 = vunpack.c.h.b16 %v1908
  %v1987 = vunpack.c.l.b16 %v1909
  %v1988 = vunpack.c.h.b16 %v1909
  %v1989 = vunpack.c.l.b16 %v1910
  %v1990 = vunpack.c.h.b16 %v1910
  %v1991 = vunpack.c.l.b16 %v1911
  %v1992 = vunpack.c.h.b16 %v1911
  %v1993 = vunpack.c.l.b16 %v1912
  %v1994 = vunpack.c.h.b16 %v1912
  %v1995 = vunpack.c.l.b16 %v1913
  %v1996 = vunpack.c.h.b16 %v1913
  %v1997 = vunpack.c.l.b16 %v1914
  %v1998 = vunpack.c.h.b16 %v1914
  %v1999 = vunpack.c.l.b16 %v1915
  %v2000 = vunpack.c.h.b16 %v1915
  %v2001 = vunpack.c.l.b16 %v1916
  %v2002 = vunpack.c.h.b16 %v1916
  %v2003 = vunpack.c.l.b16 %v1917
  %v2004 = vunpack.c.h.b16 %v1917
  %v2005 = vunpack.c.l.b16 %v1918
  %v2006 = vunpack.c.h.b16 %v1918
  %v2007 = vunpack.c.l.b16 %v1919
  %v2008 = vunpack.c.h.b16 %v1919
  %v2009 = vunpack.c.l.b16 %v1920
  %v2010 = vunpack.c.h.b16 %v1920
  %v2011 = vunpack.c.l.b16 %v1921
  %v2012 = vunpack.c.h.b16 %v1921
  %v2013 = vunpack.c.l.b16 %v1922
  %v2014 = vunpack.c.h.b16 %v1922
  %v2015 = vunpack.c.l.b16 %v1923
  %v2016 = vunpack.c.h.b16 %v1923
  %v2017 = vunpack.c.l.b16 %v1924
  %v2018 = vunpack.c.h.b16 %v1924
  %v2019 = vunpack.c.l.b16 %v1925
  %v2020 = vunpack.c.h.b16 %v1925
  %v2021 = vunpack.c.l.b16 %v1926
  %v2022 = vunpack.c.h.b16 %v1926
  %v2023 = vpack.c.b16 %v1963, %v1959
  %v2024 = vpack.c.b16 %v1964, %v1960
  %v2025 = vpack.c.b16 %v1965, %v1961
  %v2026 = vpack.c.b16 %v1966, %v1962
  %v2027 = vpack.c.b16 %v1971, %v1967
  %v2028 = vpack.c.b16 %v1972, %v1968
  %v2029 = vpack.c.b16 %v1973, %v1969
  %v2030 = vpack.c.b16 %v1974, %v1970
  %v2031 = vpack.c.b16 %v1979, %v1975
  %v2032 = vpack.c.b16 %v1980, %v1976
  %v2033 = vpack.c.b16 %v1981, %v1977
  %v2034 = vpack.c.b16 %v1982, %v1978
  %v2035 = vpack.c.b16 %v1987, %v1983
  %v2036 = vpack.c.b16 %v1988, %v1984
  %v2037 = vpack.c.b16 %v1989, %v1985
  %v2038 = vpack.c.b16 %v1990, %v1986
  %v2039 = vpack.c.b16 %v1995, %v1991
  %v2040 = vpack.c.b16 %v1996, %v1992
  %v2041 = vpack.c.b16 %v1997, %v1993
  %v2042 = vpack.c.b16 %v1998, %v1994
  %v2043 = vpack.c.b16 %v2003, %v1999
  %v2044 = vpack.c.b16 %v2004, %v2000
  %v2045 = vpack.c.b16 %v2005, %v2001
  %v2046 = vpack.c.b16 %v2006, %v2002
  %v2047 = vpack.c.b16 %v2011, %v2007
  %v2048 = vpack.c.b16 %v2012, %v2008
  %v2049 = vpack.c.b16 %v2013, %v2009
  %v2050 = vpack.c.b16 %v2014, %v2010
  %v2051 = vpack.c.b16 %v2019, %v2015
  %v2052 = vpack.c.b16 %v2020, %v2016
  %v2053 = vpack.c.b16 %v2021, %v2017
  %v2054 = vpack.c.b16 %v2022, %v2018
  %2087 = vmatprep.subr.bf16.mxu0 %v2052
  %2088 = vmatpush1.bf16.msra.mxu0 %v2051
  %2089 = vmatprep.subr.bf16.mxu0 %v2048
  %2090 = vmatpush1.bf16.msra.mxu0 %v2047
  %2091 = vmatprep.subr.bf16.mxu0 %v2044
  %2092 = vmatpush1.bf16.msra.mxu0 %v2043
  %2093 = vmatprep.subr.bf16.mxu0 %v2040
  %2094 = vmatpush1.bf16.msra.mxu0 %v2039
  %2095 = vmatprep.subr.bf16.mxu0 %v2036
  %2096 = vmatpush1.bf16.msra.mxu0 %v2035
  %2097 = vmatprep.subr.bf16.mxu0 %v2032
  %2098 = vmatpush1.bf16.msra.mxu0 %v2031
  %2099 = vmatprep.subr.bf16.mxu0 %v2028
  %2100 = vmatpush1.bf16.msra.mxu0 %v2027
  %2101 = vmatprep.subr.bf16.mxu0 %v2024
  %2102 = vmatpush1.bf16.msra.mxu0 %v2023
  %2103 = vmatprep.subr.bf16.mxu0 0
  %2104 = vmatpush2.bf16.msra.mxu0 0
  %2105 = vmatprep.subr.bf16.mxu0 0
  %2106 = vmatpush2.bf16.msra.mxu0 0
  %2107 = vmatprep.subr.bf16.mxu0 0
  %2108 = vmatpush2.bf16.msra.mxu0 0
  %2109 = vmatprep.subr.bf16.mxu0 0
  %2110 = vmatpush2.bf16.msra.mxu0 0
  %2111 = vmatprep.subr.bf16.mxu0 0
  %2112 = vmatpush2.bf16.msra.mxu0 0
  %2113 = vmatprep.subr.bf16.mxu0 0
  %2114 = vmatpush2.bf16.msra.mxu0 0
  %2115 = vmatprep.subr.bf16.mxu0 0
  %2116 = vmatpush2.bf16.msra.mxu0 0
  %2117 = vmatprep.subr.bf16.mxu0 0
  %2118 = vmatpush2.bf16.msra.mxu0 0
  %2119 = vmatprep.mubr.bf16.mxu0 0
  %2120 = vmatmul.mubr.bf16.gmra.mxu0 %v1894
  %v2121 = vpop.f32.mrf.mxu0
  %v2122 = vadd.f32 0.0, %v2121
  %v2123 = vpop.f32.mrf.mxu0
  %v2124 = vadd.f32 0.0, %v2123
  %v2125 = vpop.f32.mrf.mxu0
  %v2126 = vpop.f32.mrf.mxu0
  %2127 = vdwg.mxu0
  %2128 = vmatprep.subr.bf16.mxu0 %v2054
  %2129 = vmatpush1.bf16.msra.mxu0 %v2053
  %2130 = vmatprep.subr.bf16.mxu0 %v2050
  %2131 = vmatpush1.bf16.msra.mxu0 %v2049
  %2132 = vmatprep.subr.bf16.mxu0 %v2046
  %2133 = vmatpush1.bf16.msra.mxu0 %v2045
  %2134 = vmatprep.subr.bf16.mxu0 %v2042
  %2135 = vmatpush1.bf16.msra.mxu0 %v2041
  %2136 = vmatprep.subr.bf16.mxu0 %v2038
  %2137 = vmatpush1.bf16.msra.mxu0 %v2037
  %2138 = vmatprep.subr.bf16.mxu0 %v2034
  %2139 = vmatpush1.bf16.msra.mxu0 %v2033
  %2140 = vmatprep.subr.bf16.mxu0 %v2030
  %2141 = vmatpush1.bf16.msra.mxu0 %v2029
  %2142 = vmatprep.subr.bf16.mxu0 %v2026
  %2143 = vmatpush1.bf16.msra.mxu0 %v2025
  %2144 = vmatprep.subr.bf16.mxu0 0
  %2145 = vmatpush2.bf16.msra.mxu0 0
  %2146 = vmatprep.subr.bf16.mxu0 0
  %2147 = vmatpush2.bf16.msra.mxu0 0
  %2148 = vmatprep.subr.bf16.mxu0 0
  %2149 = vmatpush2.bf16.msra.mxu0 0
  %2150 = vmatprep.subr.bf16.mxu0 0
  %2151 = vmatpush2.bf16.msra.mxu0 0
  %2152 = vmatprep.subr.bf16.mxu0 0
  %2153 = vmatpush2.bf16.msra.mxu0 0
  %2154 = vmatprep.subr.bf16.mxu0 0
  %2155 = vmatpush2.bf16.msra.mxu0 0
  %2156 = vmatprep.subr.bf16.mxu0 0
  %2157 = vmatpush2.bf16.msra.mxu0 0
  %2158 = vmatprep.subr.bf16.mxu0 0
  %2159 = vmatpush2.bf16.msra.mxu0 0
  %2160 = vmatprep.mubr.bf16.mxu0 0
  %2161 = vmatmul.mubr.bf16.gmra.mxu0 %v1894
  %v2162 = vpop.f32.mrf.mxu0
  %v2163 = vadd.f32 0.0, %v2162
  %v2164 = vpop.f32.mrf.mxu0
  %v2165 = vadd.f32 0.0, %v2164
  %v2166 = vpop.f32.mrf.mxu0
  %v2167 = vpop.f32.mrf.mxu0
  %2168 = vdwg.mxu0
  %v2169 = vadd.f32 %v1890, %v2122
  %v2170 = vadd.f32 %v1891, %v2124
  %v2171 = vadd.f32 %v1892, %v2163
  %v2172 = vadd.f32 %v1893, %v2165
  %v2173 = vxor.u32 %v2169, 2147483648
  %v2174 = vxor.u32 %v2170, 2147483648
  %v2175 = vxor.u32 %v2171, 2147483648
  %v2176 = vmul.f32 %v2173, 1.442695
  %v2177 = vpow.pop %v2176
  %v2178 = vmul.f32 %v2174, 1.442695
  %v2179 = vpow.pop %v2178
  %v2180 = vmul.f32 %v2175, 1.442695
  %v2181 = vpow.pop %v2180
  %v2182 = vadd.f32 %v2177, 1.0
  %v2183 = vadd.f32 %v2179, 1.0
  %v2184 = vadd.f32 %v2181, 1.0
  %v2185 = vrcp.pop %v2182
  %v2186 = vmul.f32 1.0, %v2185
  %v2187 = vrcp.pop %v2183
  %v2188 = vmul.f32 1.0, %v2187
  %v2189 = vrcp.pop %v2184
  %v2190 = vmul.f32 1.0, %v2189
  %v2191 = vtanh.pop %v2172
  %v2192 = vmul.f32 %v2188, %v1885
  %v2193 = vmul.f32 %v2186, %v2191
  %v2194 = vadd.f32 %v2192, %v2193
  %v2195 = vtanh.pop %v2194
  %v2196 = vmul.f32 %v2190, %v2195
  %s2197 = scalar_lea.vmem [#allocation2], 40
  %2198 = vst [vmem:[%s2197] sm:$0xff] %v2196
  %v2199 = vld [vmem:[#allocation4] sm:$0xff]
  %v2200 = vld [vmem:[#allocation4 + $0x8] sm:$0xff]
  %v2201 = vld [vmem:[#allocation4 + $0x10] sm:$0xff]
  %v2202 = vld [vmem:[#allocation4 + $0x18] sm:$0xff]
  %v2203 = vpack.c.bf16 %v2196, %v2196
  %v2204 = vld [vmem:[%s2] sm:$0xff]
  %v2205 = vld [vmem:[%s2 + $0x8] sm:$0xff]
  %v2206 = vld [vmem:[%s2 + $0x10] sm:$0xff]
  %v2207 = vld [vmem:[%s2 + $0x18] sm:$0xff]
  %v2208 = vld [vmem:[%s2 + $0x20] sm:$0xff]
  %v2209 = vld [vmem:[%s2 + $0x28] sm:$0xff]
  %v2210 = vld [vmem:[%s2 + $0x30] sm:$0xff]
  %v2211 = vld [vmem:[%s2 + $0x38] sm:$0xff]
  %v2212 = vld [vmem:[%s2 + $0x40] sm:$0xff]
  %v2213 = vld [vmem:[%s2 + $0x48] sm:$0xff]
  %v2214 = vld [vmem:[%s2 + $0x50] sm:$0xff]
  %v2215 = vld [vmem:[%s2 + $0x58] sm:$0xff]
  %v2216 = vld [vmem:[%s2 + $0x60] sm:$0xff]
  %v2217 = vld [vmem:[%s2 + $0x68] sm:$0xff]
  %v2218 = vld [vmem:[%s2 + $0x70] sm:$0xff]
  %v2219 = vld [vmem:[%s2 + $0x78] sm:$0xff]
  %v2220 = vld [vmem:[%s2 + $0x80] sm:$0xff]
  %v2221 = vld [vmem:[%s2 + $0x88] sm:$0xff]
  %v2222 = vld [vmem:[%s2 + $0x90] sm:$0xff]
  %v2223 = vld [vmem:[%s2 + $0x98] sm:$0xff]
  %v2224 = vld [vmem:[%s2 + $0xa0] sm:$0xff]
  %v2225 = vld [vmem:[%s2 + $0xa8] sm:$0xff]
  %v2226 = vld [vmem:[%s2 + $0xb0] sm:$0xff]
  %v2227 = vld [vmem:[%s2 + $0xb8] sm:$0xff]
  %v2228 = vld [vmem:[%s2 + $0xc0] sm:$0xff]
  %v2229 = vld [vmem:[%s2 + $0xc8] sm:$0xff]
  %v2230 = vld [vmem:[%s2 + $0xd0] sm:$0xff]
  %v2231 = vld [vmem:[%s2 + $0xd8] sm:$0xff]
  %v2232 = vld [vmem:[%s2 + $0xe0] sm:$0xff]
  %v2233 = vld [vmem:[%s2 + $0xe8] sm:$0xff]
  %v2234 = vld [vmem:[%s2 + $0xf0] sm:$0xff]
  %v2235 = vld [vmem:[%s2 + $0xf8] sm:$0xff]
  %v2268 = vunpack.c.l.b16 %v2204
  %v2269 = vunpack.c.h.b16 %v2204
  %v2270 = vunpack.c.l.b16 %v2205
  %v2271 = vunpack.c.h.b16 %v2205
  %v2272 = vunpack.c.l.b16 %v2206
  %v2273 = vunpack.c.h.b16 %v2206
  %v2274 = vunpack.c.l.b16 %v2207
  %v2275 = vunpack.c.h.b16 %v2207
  %v2276 = vunpack.c.l.b16 %v2208
  %v2277 = vunpack.c.h.b16 %v2208
  %v2278 = vunpack.c.l.b16 %v2209
  %v2279 = vunpack.c.h.b16 %v2209
  %v2280 = vunpack.c.l.b16 %v2210
  %v2281 = vunpack.c.h.b16 %v2210
  %v2282 = vunpack.c.l.b16 %v2211
  %v2283 = vunpack.c.h.b16 %v2211
  %v2284 = vunpack.c.l.b16 %v2212
  %v2285 = vunpack.c.h.b16 %v2212
  %v2286 = vunpack.c.l.b16 %v2213
  %v2287 = vunpack.c.h.b16 %v2213
  %v2288 = vunpack.c.l.b16 %v2214
  %v2289 = vunpack.c.h.b16 %v2214
  %v2290 = vunpack.c.l.b16 %v2215
  %v2291 = vunpack.c.h.b16 %v2215
  %v2292 = vunpack.c.l.b16 %v2216
  %v2293 = vunpack.c.h.b16 %v2216
  %v2294 = vunpack.c.l.b16 %v2217
  %v2295 = vunpack.c.h.b16 %v2217
  %v2296 = vunpack.c.l.b16 %v2218
  %v2297 = vunpack.c.h.b16 %v2218
  %v2298 = vunpack.c.l.b16 %v2219
  %v2299 = vunpack.c.h.b16 %v2219
  %v2300 = vunpack.c.l.b16 %v2220
  %v2301 = vunpack.c.h.b16 %v2220
  %v2302 = vunpack.c.l.b16 %v2221
  %v2303 = vunpack.c.h.b16 %v2221
  %v2304 = vunpack.c.l.b16 %v2222
  %v2305 = vunpack.c.h.b16 %v2222
  %v2306 = vunpack.c.l.b16 %v2223
  %v2307 = vunpack.c.h.b16 %v2223
  %v2308 = vunpack.c.l.b16 %v2224
  %v2309 = vunpack.c.h.b16 %v2224
  %v2310 = vunpack.c.l.b16 %v2225
  %v2311 = vunpack.c.h.b16 %v2225
  %v2312 = vunpack.c.l.b16 %v2226
  %v2313 = vunpack.c.h.b16 %v2226
  %v2314 = vunpack.c.l.b16 %v2227
  %v2315 = vunpack.c.h.b16 %v2227
  %v2316 = vunpack.c.l.b16 %v2228
  %v2317 = vunpack.c.h.b16 %v2228
  %v2318 = vunpack.c.l.b16 %v2229
  %v2319 = vunpack.c.h.b16 %v2229
  %v2320 = vunpack.c.l.b16 %v2230
  %v2321 = vunpack.c.h.b16 %v2230
  %v2322 = vunpack.c.l.b16 %v2231
  %v2323 = vunpack.c.h.b16 %v2231
  %v2324 = vunpack.c.l.b16 %v2232
  %v2325 = vunpack.c.h.b16 %v2232
  %v2326 = vunpack.c.l.b16 %v2233
  %v2327 = vunpack.c.h.b16 %v2233
  %v2328 = vunpack.c.l.b16 %v2234
  %v2329 = vunpack.c.h.b16 %v2234
  %v2330 = vunpack.c.l.b16 %v2235
  %v2331 = vunpack.c.h.b16 %v2235
  %v2332 = vpack.c.b16 %v2272, %v2268
  %v2333 = vpack.c.b16 %v2273, %v2269
  %v2334 = vpack.c.b16 %v2274, %v2270
  %v2335 = vpack.c.b16 %v2275, %v2271
  %v2336 = vpack.c.b16 %v2280, %v2276
  %v2337 = vpack.c.b16 %v2281, %v2277
  %v2338 = vpack.c.b16 %v2282, %v2278
  %v2339 = vpack.c.b16 %v2283, %v2279
  %v2340 = vpack.c.b16 %v2288, %v2284
  %v2341 = vpack.c.b16 %v2289, %v2285
  %v2342 = vpack.c.b16 %v2290, %v2286
  %v2343 = vpack.c.b16 %v2291, %v2287
  %v2344 = vpack.c.b16 %v2296, %v2292
  %v2345 = vpack.c.b16 %v2297, %v2293
  %v2346 = vpack.c.b16 %v2298, %v2294
  %v2347 = vpack.c.b16 %v2299, %v2295
  %v2348 = vpack.c.b16 %v2304, %v2300
  %v2349 = vpack.c.b16 %v2305, %v2301
  %v2350 = vpack.c.b16 %v2306, %v2302
  %v2351 = vpack.c.b16 %v2307, %v2303
  %v2352 = vpack.c.b16 %v2312, %v2308
  %v2353 = vpack.c.b16 %v2313, %v2309
  %v2354 = vpack.c.b16 %v2314, %v2310
  %v2355 = vpack.c.b16 %v2315, %v2311
  %v2356 = vpack.c.b16 %v2320, %v2316
  %v2357 = vpack.c.b16 %v2321, %v2317
  %v2358 = vpack.c.b16 %v2322, %v2318
  %v2359 = vpack.c.b16 %v2323, %v2319
  %v2360 = vpack.c.b16 %v2328, %v2324
  %v2361 = vpack.c.b16 %v2329, %v2325
  %v2362 = vpack.c.b16 %v2330, %v2326
  %v2363 = vpack.c.b16 %v2331, %v2327
  %2396 = vmatprep.subr.bf16.mxu0 %v2361
  %2397 = vmatpush1.bf16.msra.mxu0 %v2360
  %2398 = vmatprep.subr.bf16.mxu0 %v2357
  %2399 = vmatpush1.bf16.msra.mxu0 %v2356
  %2400 = vmatprep.subr.bf16.mxu0 %v2353
  %2401 = vmatpush1.bf16.msra.mxu0 %v2352
  %2402 = vmatprep.subr.bf16.mxu0 %v2349
  %2403 = vmatpush1.bf16.msra.mxu0 %v2348
  %2404 = vmatprep.subr.bf16.mxu0 %v2345
  %2405 = vmatpush1.bf16.msra.mxu0 %v2344
  %2406 = vmatprep.subr.bf16.mxu0 %v2341
  %2407 = vmatpush1.bf16.msra.mxu0 %v2340
  %2408 = vmatprep.subr.bf16.mxu0 %v2337
  %2409 = vmatpush1.bf16.msra.mxu0 %v2336
  %2410 = vmatprep.subr.bf16.mxu0 %v2333
  %2411 = vmatpush1.bf16.msra.mxu0 %v2332
  %2412 = vmatprep.subr.bf16.mxu0 0
  %2413 = vmatpush2.bf16.msra.mxu0 0
  %2414 = vmatprep.subr.bf16.mxu0 0
  %2415 = vmatpush2.bf16.msra.mxu0 0
  %2416 = vmatprep.subr.bf16.mxu0 0
  %2417 = vmatpush2.bf16.msra.mxu0 0
  %2418 = vmatprep.subr.bf16.mxu0 0
  %2419 = vmatpush2.bf16.msra.mxu0 0
  %2420 = vmatprep.subr.bf16.mxu0 0
  %2421 = vmatpush2.bf16.msra.mxu0 0
  %2422 = vmatprep.subr.bf16.mxu0 0
  %2423 = vmatpush2.bf16.msra.mxu0 0
  %2424 = vmatprep.subr.bf16.mxu0 0
  %2425 = vmatpush2.bf16.msra.mxu0 0
  %2426 = vmatprep.subr.bf16.mxu0 0
  %2427 = vmatpush2.bf16.msra.mxu0 0
  %2428 = vmatprep.mubr.bf16.mxu0 0
  %2429 = vmatmul.mubr.bf16.gmra.mxu0 %v2203
  %v2430 = vpop.f32.mrf.mxu0
  %v2431 = vadd.f32 0.0, %v2430
  %v2432 = vpop.f32.mrf.mxu0
  %v2433 = vadd.f32 0.0, %v2432
  %v2434 = vpop.f32.mrf.mxu0
  %v2435 = vpop.f32.mrf.mxu0
  %2436 = vdwg.mxu0
  %2437 = vmatprep.subr.bf16.mxu0 %v2363
  %2438 = vmatpush1.bf16.msra.mxu0 %v2362
  %2439 = vmatprep.subr.bf16.mxu0 %v2359
  %2440 = vmatpush1.bf16.msra.mxu0 %v2358
  %2441 = vmatprep.subr.bf16.mxu0 %v2355
  %2442 = vmatpush1.bf16.msra.mxu0 %v2354
  %2443 = vmatprep.subr.bf16.mxu0 %v2351
  %2444 = vmatpush1.bf16.msra.mxu0 %v2350
  %2445 = vmatprep.subr.bf16.mxu0 %v2347
  %2446 = vmatpush1.bf16.msra.mxu0 %v2346
  %2447 = vmatprep.subr.bf16.mxu0 %v2343
  %2448 = vmatpush1.bf16.msra.mxu0 %v2342
  %2449 = vmatprep.subr.bf16.mxu0 %v2339
  %2450 = vmatpush1.bf16.msra.mxu0 %v2338
  %2451 = vmatprep.subr.bf16.mxu0 %v2335
  %2452 = vmatpush1.bf16.msra.mxu0 %v2334
  %2453 = vmatprep.subr.bf16.mxu0 0
  %2454 = vmatpush2.bf16.msra.mxu0 0
  %2455 = vmatprep.subr.bf16.mxu0 0
  %2456 = vmatpush2.bf16.msra.mxu0 0
  %2457 = vmatprep.subr.bf16.mxu0 0
  %2458 = vmatpush2.bf16.msra.mxu0 0
  %2459 = vmatprep.subr.bf16.mxu0 0
  %2460 = vmatpush2.bf16.msra.mxu0 0
  %2461 = vmatprep.subr.bf16.mxu0 0
  %2462 = vmatpush2.bf16.msra.mxu0 0
  %2463 = vmatprep.subr.bf16.mxu0 0
  %2464 = vmatpush2.bf16.msra.mxu0 0
  %2465 = vmatprep.subr.bf16.mxu0 0
  %2466 = vmatpush2.bf16.msra.mxu0 0
  %2467 = vmatprep.subr.bf16.mxu0 0
  %2468 = vmatpush2.bf16.msra.mxu0 0
  %2469 = vmatprep.mubr.bf16.mxu0 0
  %2470 = vmatmul.mubr.bf16.gmra.mxu0 %v2203
  %v2471 = vpop.f32.mrf.mxu0
  %v2472 = vadd.f32 0.0, %v2471
  %v2473 = vpop.f32.mrf.mxu0
  %v2474 = vadd.f32 0.0, %v2473
  %v2475 = vpop.f32.mrf.mxu0
  %v2476 = vpop.f32.mrf.mxu0
  %2477 = vdwg.mxu0
  %v2478 = vadd.f32 %v2199, %v2431
  %v2479 = vadd.f32 %v2200, %v2433
  %v2480 = vadd.f32 %v2201, %v2472
  %v2481 = vadd.f32 %v2202, %v2474
  %v2482 = vxor.u32 %v2478, 2147483648
  %v2483 = vxor.u32 %v2479, 2147483648
  %v2484 = vxor.u32 %v2480, 2147483648
  %v2485 = vmul.f32 %v2482, 1.442695
  %v2486 = vpow.pop %v2485
  %v2487 = vmul.f32 %v2483, 1.442695
  %v2488 = vpow.pop %v2487
  %v2489 = vmul.f32 %v2484, 1.442695
  %v2490 = vpow.pop %v2489
  %v2491 = vadd.f32 %v2486, 1.0
  %v2492 = vadd.f32 %v2488, 1.0
  %v2493 = vadd.f32 %v2490, 1.0
  %v2494 = vrcp.pop %v2491
  %v2495 = vmul.f32 1.0, %v2494
  %v2496 = vrcp.pop %v2492
  %v2497 = vmul.f32 1.0, %v2496
  %v2498 = vrcp.pop %v2493
  %v2499 = vmul.f32 1.0, %v2498
  %v2500 = vtanh.pop %v2481
  %v2501 = vmul.f32 %v2497, %v2194
  %v2502 = vmul.f32 %v2495, %v2500
  %v2503 = vadd.f32 %v2501, %v2502
  %v2504 = vtanh.pop %v2503
  %v2505 = vmul.f32 %v2499, %v2504
  %s2506 = scalar_lea.vmem [#allocation2], 48
  %2507 = vst [vmem:[%s2506] sm:$0xff] %v2505
  %v2508 = vld [vmem:[#allocation4] sm:$0xff]
  %v2509 = vld [vmem:[#allocation4 + $0x8] sm:$0xff]
  %v2510 = vld [vmem:[#allocation4 + $0x10] sm:$0xff]
  %v2511 = vld [vmem:[#allocation4 + $0x18] sm:$0xff]
  %v2512 = vpack.c.bf16 %v2505, %v2505
  %v2513 = vld [vmem:[%s2] sm:$0xff]
  %v2514 = vld [vmem:[%s2 + $0x8] sm:$0xff]
  %v2515 = vld [vmem:[%s2 + $0x10] sm:$0xff]
  %v2516 = vld [vmem:[%s2 + $0x18] sm:$0xff]
  %v2517 = vld [vmem:[%s2 + $0x20] sm:$0xff]
  %v2518 = vld [vmem:[%s2 + $0x28] sm:$0xff]
  %v2519 = vld [vmem:[%s2 + $0x30] sm:$0xff]
  %v2520 = vld [vmem:[%s2 + $0x38] sm:$0xff]
  %v2521 = vld [vmem:[%s2 + $0x40] sm:$0xff]
  %v2522 = vld [vmem:[%s2 + $0x48] sm:$0xff]
  %v2523 = vld [vmem:[%s2 + $0x50] sm:$0xff]
  %v2524 = vld [vmem:[%s2 + $0x58] sm:$0xff]
  %v2525 = vld [vmem:[%s2 + $0x60] sm:$0xff]
  %v2526 = vld [vmem:[%s2 + $0x68] sm:$0xff]
  %v2527 = vld [vmem:[%s2 + $0x70] sm:$0xff]
  %v2528 = vld [vmem:[%s2 + $0x78] sm:$0xff]
  %v2529 = vld [vmem:[%s2 + $0x80] sm:$0xff]
  %v2530 = vld [vmem:[%s2 + $0x88] sm:$0xff]
  %v2531 = vld [vmem:[%s2 + $0x90] sm:$0xff]
  %v2532 = vld [vmem:[%s2 + $0x98] sm:$0xff]
  %v2533 = vld [vmem:[%s2 + $0xa0] sm:$0xff]
  %v2534 = vld [vmem:[%s2 + $0xa8] sm:$0xff]
  %v2535 = vld [vmem:[%s2 + $0xb0] sm:$0xff]
  %v2536 = vld [vmem:[%s2 + $0xb8] sm:$0xff]
  %v2537 = vld [vmem:[%s2 + $0xc0] sm:$0xff]
  %v2538 = vld [vmem:[%s2 + $0xc8] sm:$0xff]
  %v2539 = vld [vmem:[%s2 + $0xd0] sm:$0xff]
  %v2540 = vld [vmem:[%s2 + $0xd8] sm:$0xff]
  %v2541 = vld [vmem:[%s2 + $0xe0] sm:$0xff]
  %v2542 = vld [vmem:[%s2 + $0xe8] sm:$0xff]
  %v2543 = vld [vmem:[%s2 + $0xf0] sm:$0xff]
  %v2544 = vld [vmem:[%s2 + $0xf8] sm:$0xff]
  %v2577 = vunpack.c.l.b16 %v2513
  %v2578 = vunpack.c.h.b16 %v2513
  %v2579 = vunpack.c.l.b16 %v2514
  %v2580 = vunpack.c.h.b16 %v2514
  %v2581 = vunpack.c.l.b16 %v2515
  %v2582 = vunpack.c.h.b16 %v2515
  %v2583 = vunpack.c.l.b16 %v2516
  %v2584 = vunpack.c.h.b16 %v2516
  %v2585 = vunpack.c.l.b16 %v2517
  %v2586 = vunpack.c.h.b16 %v2517
  %v2587 = vunpack.c.l.b16 %v2518
  %v2588 = vunpack.c.h.b16 %v2518
  %v2589 = vunpack.c.l.b16 %v2519
  %v2590 = vunpack.c.h.b16 %v2519
  %v2591 = vunpack.c.l.b16 %v2520
  %v2592 = vunpack.c.h.b16 %v2520
  %v2593 = vunpack.c.l.b16 %v2521
  %v2594 = vunpack.c.h.b16 %v2521
  %v2595 = vunpack.c.l.b16 %v2522
  %v2596 = vunpack.c.h.b16 %v2522
  %v2597 = vunpack.c.l.b16 %v2523
  %v2598 = vunpack.c.h.b16 %v2523
  %v2599 = vunpack.c.l.b16 %v2524
  %v2600 = vunpack.c.h.b16 %v2524
  %v2601 = vunpack.c.l.b16 %v2525
  %v2602 = vunpack.c.h.b16 %v2525
  %v2603 = vunpack.c.l.b16 %v2526
  %v2604 = vunpack.c.h.b16 %v2526
  %v2605 = vunpack.c.l.b16 %v2527
  %v2606 = vunpack.c.h.b16 %v2527
  %v2607 = vunpack.c.l.b16 %v2528
  %v2608 = vunpack.c.h.b16 %v2528
  %v2609 = vunpack.c.l.b16 %v2529
  %v2610 = vunpack.c.h.b16 %v2529
  %v2611 = vunpack.c.l.b16 %v2530
  %v2612 = vunpack.c.h.b16 %v2530
  %v2613 = vunpack.c.l.b16 %v2531
  %v2614 = vunpack.c.h.b16 %v2531
  %v2615 = vunpack.c.l.b16 %v2532
  %v2616 = vunpack.c.h.b16 %v2532
  %v2617 = vunpack.c.l.b16 %v2533
  %v2618 = vunpack.c.h.b16 %v2533
  %v2619 = vunpack.c.l.b16 %v2534
  %v2620 = vunpack.c.h.b16 %v2534
  %v2621 = vunpack.c.l.b16 %v2535
  %v2622 = vunpack.c.h.b16 %v2535
  %v2623 = vunpack.c.l.b16 %v2536
  %v2624 = vunpack.c.h.b16 %v2536
  %v2625 = vunpack.c.l.b16 %v2537
  %v2626 = vunpack.c.h.b16 %v2537
  %v2627 = vunpack.c.l.b16 %v2538
  %v2628 = vunpack.c.h.b16 %v2538
  %v2629 = vunpack.c.l.b16 %v2539
  %v2630 = vunpack.c.h.b16 %v2539
  %v2631 = vunpack.c.l.b16 %v2540
  %v2632 = vunpack.c.h.b16 %v2540
  %v2633 = vunpack.c.l.b16 %v2541
  %v2634 = vunpack.c.h.b16 %v2541
  %v2635 = vunpack.c.l.b16 %v2542
  %v2636 = vunpack.c.h.b16 %v2542
  %v2637 = vunpack.c.l.b16 %v2543
  %v2638 = vunpack.c.h.b16 %v2543
  %v2639 = vunpack.c.l.b16 %v2544
  %v2640 = vunpack.c.h.b16 %v2544
  %v2641 = vpack.c.b16 %v2581, %v2577
  %v2642 = vpack.c.b16 %v2582, %v2578
  %v2643 = vpack.c.b16 %v2583, %v2579
  %v2644 = vpack.c.b16 %v2584, %v2580
  %v2645 = vpack.c.b16 %v2589, %v2585
  %v2646 = vpack.c.b16 %v2590, %v2586
  %v2647 = vpack.c.b16 %v2591, %v2587
  %v2648 = vpack.c.b16 %v2592, %v2588
  %v2649 = vpack.c.b16 %v2597, %v2593
  %v2650 = vpack.c.b16 %v2598, %v2594
  %v2651 = vpack.c.b16 %v2599, %v2595
  %v2652 = vpack.c.b16 %v2600, %v2596
  %v2653 = vpack.c.b16 %v2605, %v2601
  %v2654 = vpack.c.b16 %v2606, %v2602
  %v2655 = vpack.c.b16 %v2607, %v2603
  %v2656 = vpack.c.b16 %v2608, %v2604
  %v2657 = vpack.c.b16 %v2613, %v2609
  %v2658 = vpack.c.b16 %v2614, %v2610
  %v2659 = vpack.c.b16 %v2615, %v2611
  %v2660 = vpack.c.b16 %v2616, %v2612
  %v2661 = vpack.c.b16 %v2621, %v2617
  %v2662 = vpack.c.b16 %v2622, %v2618
  %v2663 = vpack.c.b16 %v2623, %v2619
  %v2664 = vpack.c.b16 %v2624, %v2620
  %v2665 = vpack.c.b16 %v2629, %v2625
  %v2666 = vpack.c.b16 %v2630, %v2626
  %v2667 = vpack.c.b16 %v2631, %v2627
  %v2668 = vpack.c.b16 %v2632, %v2628
  %v2669 = vpack.c.b16 %v2637, %v2633
  %v2670 = vpack.c.b16 %v2638, %v2634
  %v2671 = vpack.c.b16 %v2639, %v2635
  %v2672 = vpack.c.b16 %v2640, %v2636
  %2705 = vmatprep.subr.bf16.mxu0 %v2670
  %2706 = vmatpush1.bf16.msra.mxu0 %v2669
  %2707 = vmatprep.subr.bf16.mxu0 %v2666
  %2708 = vmatpush1.bf16.msra.mxu0 %v2665
  %2709 = vmatprep.subr.bf16.mxu0 %v2662
  %2710 = vmatpush1.bf16.msra.mxu0 %v2661
  %2711 = vmatprep.subr.bf16.mxu0 %v2658
  %2712 = vmatpush1.bf16.msra.mxu0 %v2657
  %2713 = vmatprep.subr.bf16.mxu0 %v2654
  %2714 = vmatpush1.bf16.msra.mxu0 %v2653
  %2715 = vmatprep.subr.bf16.mxu0 %v2650
  %2716 = vmatpush1.bf16.msra.mxu0 %v2649
  %2717 = vmatprep.subr.bf16.mxu0 %v2646
  %2718 = vmatpush1.bf16.msra.mxu0 %v2645
  %2719 = vmatprep.subr.bf16.mxu0 %v2642
  %2720 = vmatpush1.bf16.msra.mxu0 %v2641
  %2721 = vmatprep.subr.bf16.mxu0 0
  %2722 = vmatpush2.bf16.msra.mxu0 0
  %2723 = vmatprep.subr.bf16.mxu0 0
  %2724 = vmatpush2.bf16.msra.mxu0 0
  %2725 = vmatprep.subr.bf16.mxu0 0
  %2726 = vmatpush2.bf16.msra.mxu0 0
  %2727 = vmatprep.subr.bf16.mxu0 0
  %2728 = vmatpush2.bf16.msra.mxu0 0
  %2729 = vmatprep.subr.bf16.mxu0 0
  %2730 = vmatpush2.bf16.msra.mxu0 0
  %2731 = vmatprep.subr.bf16.mxu0 0
  %2732 = vmatpush2.bf16.msra.mxu0 0
  %2733 = vmatprep.subr.bf16.mxu0 0
  %2734 = vmatpush2.bf16.msra.mxu0 0
  %2735 = vmatprep.subr.bf16.mxu0 0
  %2736 = vmatpush2.bf16.msra.mxu0 0
  %2737 = vmatprep.mubr.bf16.mxu0 0
  %2738 = vmatmul.mubr.bf16.gmra.mxu0 %v2512
  %v2739 = vpop.f32.mrf.mxu0
  %v2740 = vadd.f32 0.0, %v2739
  %v2741 = vpop.f32.mrf.mxu0
  %v2742 = vadd.f32 0.0, %v2741
  %v2743 = vpop.f32.mrf.mxu0
  %v2744 = vpop.f32.mrf.mxu0
  %2745 = vdwg.mxu0
  %2746 = vmatprep.subr.bf16.mxu0 %v2672
  %2747 = vmatpush1.bf16.msra.mxu0 %v2671
  %2748 = vmatprep.subr.bf16.mxu0 %v2668
  %2749 = vmatpush1.bf16.msra.mxu0 %v2667
  %2750 = vmatprep.subr.bf16.mxu0 %v2664
  %2751 = vmatpush1.bf16.msra.mxu0 %v2663
  %2752 = vmatprep.subr.bf16.mxu0 %v2660
  %2753 = vmatpush1.bf16.msra.mxu0 %v2659
  %2754 = vmatprep.subr.bf16.mxu0 %v2656
  %2755 = vmatpush1.bf16.msra.mxu0 %v2655
  %2756 = vmatprep.subr.bf16.mxu0 %v2652
  %2757 = vmatpush1.bf16.msra.mxu0 %v2651
  %2758 = vmatprep.subr.bf16.mxu0 %v2648
  %2759 = vmatpush1.bf16.msra.mxu0 %v2647
  %2760 = vmatprep.subr.bf16.mxu0 %v2644
  %2761 = vmatpush1.bf16.msra.mxu0 %v2643
  %2762 = vmatprep.subr.bf16.mxu0 0
  %2763 = vmatpush2.bf16.msra.mxu0 0
  %2764 = vmatprep.subr.bf16.mxu0 0
  %2765 = vmatpush2.bf16.msra.mxu0 0
  %2766 = vmatprep.subr.bf16.mxu0 0
  %2767 = vmatpush2.bf16.msra.mxu0 0
  %2768 = vmatprep.subr.bf16.mxu0 0
  %2769 = vmatpush2.bf16.msra.mxu0 0
  %2770 = vmatprep.subr.bf16.mxu0 0
  %2771 = vmatpush2.bf16.msra.mxu0 0
  %2772 = vmatprep.subr.bf16.mxu0 0
  %2773 = vmatpush2.bf16.msra.mxu0 0
  %2774 = vmatprep.subr.bf16.mxu0 0
  %2775 = vmatpush2.bf16.msra.mxu0 0
  %2776 = vmatprep.subr.bf16.mxu0 0
  %2777 = vmatpush2.bf16.msra.mxu0 0
  %2778 = vmatprep.mubr.bf16.mxu0 0
  %2779 = vmatmul.mubr.bf16.gmra.mxu0 %v2512
  %v2780 = vpop.f32.mrf.mxu0
  %v2781 = vadd.f32 0.0, %v2780
  %v2782 = vpop.f32.mrf.mxu0
  %v2783 = vadd.f32 0.0, %v2782
  %v2784 = vpop.f32.mrf.mxu0
  %v2785 = vpop.f32.mrf.mxu0
  %2786 = vdwg.mxu0
  %v2787 = vadd.f32 %v2508, %v2740
  %v2788 = vadd.f32 %v2509, %v2742
  %v2789 = vadd.f32 %v2510, %v2781
  %v2790 = vadd.f32 %v2511, %v2783
  %v2791 = vxor.u32 %v2787, 2147483648
  %v2792 = vxor.u32 %v2788, 2147483648
  %v2793 = vxor.u32 %v2789, 2147483648
  %v2794 = vmul.f32 %v2791, 1.442695
  %v2795 = vpow.pop %v2794
  %v2796 = vmul.f32 %v2792, 1.442695
  %v2797 = vpow.pop %v2796
  %v2798 = vmul.f32 %v2793, 1.442695
  %v2799 = vpow.pop %v2798
  %v2800 = vadd.f32 %v2795, 1.0
  %v2801 = vadd.f32 %v2797, 1.0
  %v2802 = vadd.f32 %v2799, 1.0
  %v2803 = vrcp.pop %v2800
  %v2804 = vmul.f32 1.0, %v2803
  %v2805 = vrcp.pop %v2801
  %v2806 = vmul.f32 1.0, %v2805
  %v2807 = vrcp.pop %v2802
  %v2808 = vmul.f32 1.0, %v2807
  %v2809 = vtanh.pop %v2790
  %v2810 = vmul.f32 %v2806, %v2503
  %v2811 = vmul.f32 %v2804, %v2809
  %v2812 = vadd.f32 %v2810, %v2811
  %v2813 = vtanh.pop %v2812
  %v2814 = vmul.f32 %v2808, %v2813
  %s2815 = scalar_lea.vmem [#allocation2], 56
  %2816 = vst [vmem:[%s2815] sm:$0xff] %v2814
  %v2817 = vld [vmem:[#allocation2] sm:$0xff]
  %v2818 = vld [vmem:[#allocation2 + $0x8] sm:$0xff]
  %v2819 = vld [vmem:[#allocation2 + $0x10] sm:$0xff]
  %v2820 = vld [vmem:[#allocation2 + $0x18] sm:$0xff]
  %v2821 = vld [vmem:[#allocation2 + $0x20] sm:$0xff]
  %v2822 = vld [vmem:[#allocation2 + $0x28] sm:$0xff]
  %v2823 = vld [vmem:[#allocation2 + $0x30] sm:$0xff]
  %v2824 = vld [vmem:[#allocation2 + $0x38] sm:$0xff]
  %v2825 = vpack.c.bf16 %v2818, %v2817
  %v2826 = vpack.c.bf16 %v2820, %v2819
  %v2827 = vpack.c.bf16 %v2822, %v2821
  %v2828 = vpack.c.bf16 %v2824, %v2823
  %v2829 = vld [vmem:[%s4] sm:$0xff]
  %v2830 = vld [vmem:[%s4 + $0x8] sm:$0xff]
  %v2831 = vld [vmem:[%s4 + $0x10] sm:$0xff]
  %v2832 = vld [vmem:[%s4 + $0x18] sm:$0xff]
  %v2833 = vld [vmem:[%s4 + $0x20] sm:$0xff]
  %v2834 = vld [vmem:[%s4 + $0x28] sm:$0xff]
  %v2835 = vld [vmem:[%s4 + $0x30] sm:$0xff]
  %v2836 = vld [vmem:[%s4 + $0x38] sm:$0xff]
  %v2837 = vld [vmem:[%s4 + $0x40] sm:$0xff]
  %v2838 = vld [vmem:[%s4 + $0x48] sm:$0xff]
  %v2839 = vld [vmem:[%s4 + $0x50] sm:$0xff]
  %v2840 = vld [vmem:[%s4 + $0x58] sm:$0xff]
  %v2841 = vld [vmem:[%s4 + $0x60] sm:$0xff]
  %v2842 = vld [vmem:[%s4 + $0x68] sm:$0xff]
  %v2843 = vld [vmem:[%s4 + $0x70] sm:$0xff]
  %v2844 = vld [vmem:[%s4 + $0x78] sm:$0xff]
  %v2845 = vld [vmem:[%s4 + $0x80] sm:$0xff]
  %v2846 = vld [vmem:[%s4 + $0x88] sm:$0xff]
  %v2847 = vld [vmem:[%s4 + $0x90] sm:$0xff]
  %v2848 = vld [vmem:[%s4 + $0x98] sm:$0xff]
  %v2849 = vld [vmem:[%s4 + $0xa0] sm:$0xff]
  %v2850 = vld [vmem:[%s4 + $0xa8] sm:$0xff]
  %v2851 = vld [vmem:[%s4 + $0xb0] sm:$0xff]
  %v2852 = vld [vmem:[%s4 + $0xb8] sm:$0xff]
  %v2853 = vld [vmem:[%s4 + $0xc0] sm:$0xff]
  %v2854 = vld [vmem:[%s4 + $0xc8] sm:$0xff]
  %v2855 = vld [vmem:[%s4 + $0xd0] sm:$0xff]
  %v2856 = vld [vmem:[%s4 + $0xd8] sm:$0xff]
  %v2857 = vld [vmem:[%s4 + $0xe0] sm:$0xff]
  %v2858 = vld [vmem:[%s4 + $0xe8] sm:$0xff]
  %v2859 = vld [vmem:[%s4 + $0xf0] sm:$0xff]
  %v2860 = vld [vmem:[%s4 + $0xf8] sm:$0xff]
  %v2861 = vld [vmem:[%s6] sm:$0xf]
  %v2863 = vlaneseq
  %v2864 = vshrl.u32 %v2863, 7
  %v2865 = vsub.s32 0, %v2864
  %v2866 = vrot.slane %v2861, %v2865
  %v2867 = vlaneseq
  %v2868 = vshrl.u32 %v2867, 7
  %v2869 = vsub.s32 1, %v2868
  %v2870 = vrot.slane %v2861, %v2869
  %v2871 = vlaneseq
  %v2872 = vshrl.u32 %v2871, 7
  %v2873 = vsub.s32 2, %v2872
  %v2874 = vrot.slane %v2861, %v2873
  %v2875 = vlaneseq
  %v2876 = vshrl.u32 %v2875, 7
  %v2877 = vsub.s32 3, %v2876
  %v2878 = vrot.slane %v2861, %v2877
  %v2915 = vunpack.c.l.b16 %v2829
  %v2916 = vunpack.c.h.b16 %v2829
  %v2917 = vunpack.c.l.b16 %v2830
  %v2918 = vunpack.c.h.b16 %v2830
  %v2919 = vunpack.c.l.b16 %v2831
  %v2920 = vunpack.c.h.b16 %v2831
  %v2921 = vunpack.c.l.b16 %v2832
  %v2922 = vunpack.c.h.b16 %v2832
  %v2923 = vunpack.c.l.b16 %v2833
  %v2924 = vunpack.c.h.b16 %v2833
  %v2925 = vunpack.c.l.b16 %v2834
  %v2926 = vunpack.c.h.b16 %v2834
  %v2927 = vunpack.c.l.b16 %v2835
  %v2928 = vunpack.c.h.b16 %v2835
  %v2929 = vunpack.c.l.b16 %v2836
  %v2930 = vunpack.c.h.b16 %v2836
  %v2931 = vunpack.c.l.b16 %v2837
  %v2932 = vunpack.c.h.b16 %v2837
  %v2933 = vunpack.c.l.b16 %v2838
  %v2934 = vunpack.c.h.b16 %v2838
  %v2935 = vunpack.c.l.b16 %v2839
  %v2936 = vunpack.c.h.b16 %v2839
  %v2937 = vunpack.c.l.b16 %v2840
  %v2938 = vunpack.c.h.b16 %v2840
  %v2939 = vunpack.c.l.b16 %v2841
  %v2940 = vunpack.c.h.b16 %v2841
  %v2941 = vunpack.c.l.b16 %v2842
  %v2942 = vunpack.c.h.b16 %v2842
  %v2943 = vunpack.c.l.b16 %v2843
  %v2944 = vunpack.c.h.b16 %v2843
  %v2945 = vunpack.c.l.b16 %v2844
  %v2946 = vunpack.c.h.b16 %v2844
  %v2947 = vunpack.c.l.b16 %v2845
  %v2948 = vunpack.c.h.b16 %v2845
  %v2949 = vunpack.c.l.b16 %v2846
  %v2950 = vunpack.c.h.b16 %v2846
  %v2951 = vunpack.c.l.b16 %v2847
  %v2952 = vunpack.c.h.b16 %v2847
  %v2953 = vunpack.c.l.b16 %v2848
  %v2954 = vunpack.c.h.b16 %v2848
  %v2955 = vunpack.c.l.b16 %v2849
  %v2956 = vunpack.c.h.b16 %v2849
  %v2957 = vunpack.c.l.b16 %v2850
  %v2958 = vunpack.c.h.b16 %v2850
  %v2959 = vunpack.c.l.b16 %v2851
  %v2960 = vunpack.c.h.b16 %v2851
  %v2961 = vunpack.c.l.b16 %v2852
  %v2962 = vunpack.c.h.b16 %v2852
  %v2963 = vunpack.c.l.b16 %v2853
  %v2964 = vunpack.c.h.b16 %v2853
  %v2965 = vunpack.c.l.b16 %v2854
  %v2966 = vunpack.c.h.b16 %v2854
  %v2967 = vunpack.c.l.b16 %v2855
  %v2968 = vunpack.c.h.b16 %v2855
  %v2969 = vunpack.c.l.b16 %v2856
  %v2970 = vunpack.c.h.b16 %v2856
  %v2971 = vunpack.c.l.b16 %v2857
  %v2972 = vunpack.c.h.b16 %v2857
  %v2973 = vunpack.c.l.b16 %v2858
  %v2974 = vunpack.c.h.b16 %v2858
  %v2975 = vunpack.c.l.b16 %v2859
  %v2976 = vunpack.c.h.b16 %v2859
  %v2977 = vunpack.c.l.b16 %v2860
  %v2978 = vunpack.c.h.b16 %v2860
  %v2979 = vpack.c.b16 %v2919, %v2915
  %v2980 = vpack.c.b16 %v2920, %v2916
  %v2981 = vpack.c.b16 %v2921, %v2917
  %v2982 = vpack.c.b16 %v2922, %v2918
  %v2983 = vpack.c.b16 %v2927, %v2923
  %v2984 = vpack.c.b16 %v2928, %v2924
  %v2985 = vpack.c.b16 %v2929, %v2925
  %v2986 = vpack.c.b16 %v2930, %v2926
  %v2987 = vpack.c.b16 %v2935, %v2931
  %v2988 = vpack.c.b16 %v2936, %v2932
  %v2989 = vpack.c.b16 %v2937, %v2933
  %v2990 = vpack.c.b16 %v2938, %v2934
  %v2991 = vpack.c.b16 %v2943, %v2939
  %v2992 = vpack.c.b16 %v2944, %v2940
  %v2993 = vpack.c.b16 %v2945, %v2941
  %v2994 = vpack.c.b16 %v2946, %v2942
  %v2995 = vpack.c.b16 %v2951, %v2947
  %v2996 = vpack.c.b16 %v2952, %v2948
  %v2997 = vpack.c.b16 %v2953, %v2949
  %v2998 = vpack.c.b16 %v2954, %v2950
  %v2999 = vpack.c.b16 %v2959, %v2955
  %v3000 = vpack.c.b16 %v2960, %v2956
  %v3001 = vpack.c.b16 %v2961, %v2957
  %v3002 = vpack.c.b16 %v2962, %v2958
  %v3003 = vpack.c.b16 %v2967, %v2963
  %v3004 = vpack.c.b16 %v2968, %v2964
  %v3005 = vpack.c.b16 %v2969, %v2965
  %v3006 = vpack.c.b16 %v2970, %v2966
  %v3007 = vpack.c.b16 %v2975, %v2971
  %v3008 = vpack.c.b16 %v2976, %v2972
  %v3009 = vpack.c.b16 %v2977, %v2973
  %v3010 = vpack.c.b16 %v2978, %v2974
  %3043 = vmatprep.subr.bf16.mxu0 %v3008
  %3044 = vmatpush1.bf16.msra.mxu0 %v3007
  %3045 = vmatprep.subr.bf16.mxu0 %v3004
  %3046 = vmatpush1.bf16.msra.mxu0 %v3003
  %3047 = vmatprep.subr.bf16.mxu0 %v3000
  %3048 = vmatpush1.bf16.msra.mxu0 %v2999
  %3049 = vmatprep.subr.bf16.mxu0 %v2996
  %3050 = vmatpush1.bf16.msra.mxu0 %v2995
  %3051 = vmatprep.subr.bf16.mxu0 %v2992
  %3052 = vmatpush1.bf16.msra.mxu0 %v2991
  %3053 = vmatprep.subr.bf16.mxu0 %v2988
  %3054 = vmatpush1.bf16.msra.mxu0 %v2987
  %3055 = vmatprep.subr.bf16.mxu0 %v2984
  %3056 = vmatpush1.bf16.msra.mxu0 %v2983
  %3057 = vmatprep.subr.bf16.mxu0 %v2980
  %3058 = vmatpush1.bf16.msra.mxu0 %v2979
  %3059 = vmatprep.subr.bf16.mxu0 0
  %3060 = vmatpush2.bf16.msra.mxu0 0
  %3061 = vmatprep.subr.bf16.mxu0 0
  %3062 = vmatpush2.bf16.msra.mxu0 0
  %3063 = vmatprep.subr.bf16.mxu0 0
  %3064 = vmatpush2.bf16.msra.mxu0 0
  %3065 = vmatprep.subr.bf16.mxu0 0
  %3066 = vmatpush2.bf16.msra.mxu0 0
  %3067 = vmatprep.subr.bf16.mxu0 0
  %3068 = vmatpush2.bf16.msra.mxu0 0
  %3069 = vmatprep.subr.bf16.mxu0 0
  %3070 = vmatpush2.bf16.msra.mxu0 0
  %3071 = vmatprep.subr.bf16.mxu0 0
  %3072 = vmatpush2.bf16.msra.mxu0 0
  %3073 = vmatprep.subr.bf16.mxu0 0
  %3074 = vmatpush2.bf16.msra.mxu0 0
  %3075 = vmatprep.mubr.bf16.mxu0 0
  %3076 = vmatmul.mubr.bf16.gmra.mxu0 %v2825
  %v3077 = vpop.f32.mrf.mxu0
  %v3078 = vadd.f32 %v2866, %v3077
  %v3079 = vpop.f32.mrf.mxu0
  %v3080 = vadd.f32 %v2870, %v3079
  %v3081 = vpop.f32.mrf.mxu0
  %v3082 = vadd.f32 %v2866, %v3081
  %v3083 = vpop.f32.mrf.mxu0
  %v3084 = vadd.f32 %v2870, %v3083
  %3085 = vmatprep.mubr.bf16.mxu0 0
  %3086 = vmatmul.mubr.bf16.gmra.mxu0 %v2826
  %v3087 = vpop.f32.mrf.mxu0
  %v3088 = vadd.f32 %v2866, %v3087
  %v3089 = vpop.f32.mrf.mxu0
  %v3090 = vadd.f32 %v2870, %v3089
  %v3091 = vpop.f32.mrf.mxu0
  %v3092 = vadd.f32 %v2866, %v3091
  %v3093 = vpop.f32.mrf.mxu0
  %v3094 = vadd.f32 %v2870, %v3093
  %3095 = vmatprep.mubr.bf16.mxu0 0
  %3096 = vmatmul.mubr.bf16.gmra.mxu0 %v2827
  %v3097 = vpop.f32.mrf.mxu0
  %v3098 = vadd.f32 %v2866, %v3097
  %v3099 = vpop.f32.mrf.mxu0
  %v3100 = vadd.f32 %v2870, %v3099
  %v3101 = vpop.f32.mrf.mxu0
  %v3102 = vadd.f32 %v2866, %v3101
  %v3103 = vpop.f32.mrf.mxu0
  %v3104 = vadd.f32 %v2870, %v3103
  %3105 = vmatprep.mubr.bf16.mxu0 0
  %3106 = vmatmul.mubr.bf16.gmra.mxu0 %v2828
  %v3107 = vpop.f32.mrf.mxu0
  %v3108 = vadd.f32 %v2866, %v3107
  %v3109 = vpop.f32.mrf.mxu0
  %v3110 = vadd.f32 %v2870, %v3109
  %v3111 = vpop.f32.mrf.mxu0
  %v3112 = vadd.f32 %v2866, %v3111
  %v3113 = vpop.f32.mrf.mxu0
  %v3114 = vadd.f32 %v2870, %v3113
  %3115 = vdwg.mxu0
  %3116 = vmatprep.subr.bf16.mxu0 %v3010
  %3117 = vmatpush1.bf16.msra.mxu0 %v3009
  %3118 = vmatprep.subr.bf16.mxu0 %v3006
  %3119 = vmatpush1.bf16.msra.mxu0 %v3005
  %3120 = vmatprep.subr.bf16.mxu0 %v3002
  %3121 = vmatpush1.bf16.msra.mxu0 %v3001
  %3122 = vmatprep.subr.bf16.mxu0 %v2998
  %3123 = vmatpush1.bf16.msra.mxu0 %v2997
  %3124 = vmatprep.subr.bf16.mxu0 %v2994
  %3125 = vmatpush1.bf16.msra.mxu0 %v2993
  %3126 = vmatprep.subr.bf16.mxu0 %v2990
  %3127 = vmatpush1.bf16.msra.mxu0 %v2989
  %3128 = vmatprep.subr.bf16.mxu0 %v2986
  %3129 = vmatpush1.bf16.msra.mxu0 %v2985
  %3130 = vmatprep.subr.bf16.mxu0 %v2982
  %3131 = vmatpush1.bf16.msra.mxu0 %v2981
  %3132 = vmatprep.subr.bf16.mxu0 0
  %3133 = vmatpush2.bf16.msra.mxu0 0
  %3134 = vmatprep.subr.bf16.mxu0 0
  %3135 = vmatpush2.bf16.msra.mxu0 0
  %3136 = vmatprep.subr.bf16.mxu0 0
  %3137 = vmatpush2.bf16.msra.mxu0 0
  %3138 = vmatprep.subr.bf16.mxu0 0
  %3139 = vmatpush2.bf16.msra.mxu0 0
  %3140 = vmatprep.subr.bf16.mxu0 0
  %3141 = vmatpush2.bf16.msra.mxu0 0
  %3142 = vmatprep.subr.bf16.mxu0 0
  %3143 = vmatpush2.bf16.msra.mxu0 0
  %3144 = vmatprep.subr.bf16.mxu0 0
  %3145 = vmatpush2.bf16.msra.mxu0 0
  %3146 = vmatprep.subr.bf16.mxu0 0
  %3147 = vmatpush2.bf16.msra.mxu0 0
  %3148 = vmatprep.mubr.bf16.mxu0 0
  %3149 = vmatmul.mubr.bf16.gmra.mxu0 %v2825
  %v3150 = vpop.f32.mrf.mxu0
  %v3151 = vadd.f32 %v2874, %v3150
  %v3152 = vpop.f32.mrf.mxu0
  %v3153 = vadd.f32 %v2878, %v3152
  %v3154 = vpop.f32.mrf.mxu0
  %v3155 = vadd.f32 %v2874, %v3154
  %v3156 = vpop.f32.mrf.mxu0
  %v3157 = vadd.f32 %v2878, %v3156
  %3158 = vmatprep.mubr.bf16.mxu0 0
  %3159 = vmatmul.mubr.bf16.gmra.mxu0 %v2826
  %v3160 = vpop.f32.mrf.mxu0
  %v3161 = vadd.f32 %v2874, %v3160
  %v3162 = vpop.f32.mrf.mxu0
  %v3163 = vadd.f32 %v2878, %v3162
  %v3164 = vpop.f32.mrf.mxu0
  %v3165 = vadd.f32 %v2874, %v3164
  %v3166 = vpop.f32.mrf.mxu0
  %v3167 = vadd.f32 %v2878, %v3166
  %3168 = vmatprep.mubr.bf16.mxu0 0
  %3169 = vmatmul.mubr.bf16.gmra.mxu0 %v2827
  %v3170 = vpop.f32.mrf.mxu0
  %v3171 = vadd.f32 %v2874, %v3170
  %v3172 = vpop.f32.mrf.mxu0
  %v3173 = vadd.f32 %v2878, %v3172
  %v3174 = vpop.f32.mrf.mxu0
  %v3175 = vadd.f32 %v2874, %v3174
  %v3176 = vpop.f32.mrf.mxu0
  %v3177 = vadd.f32 %v2878, %v3176
  %3178 = vmatprep.mubr.bf16.mxu0 0
  %3179 = vmatmul.mubr.bf16.gmra.mxu0 %v2828
  %v3180 = vpop.f32.mrf.mxu0
  %v3181 = vadd.f32 %v2874, %v3180
  %v3182 = vpop.f32.mrf.mxu0
  %v3183 = vadd.f32 %v2878, %v3182
  %v3184 = vpop.f32.mrf.mxu0
  %v3185 = vadd.f32 %v2874, %v3184
  %v3186 = vpop.f32.mrf.mxu0
  %v3187 = vadd.f32 %v2878, %v3186
  %3188 = vdwg.mxu0
  %3189 = vst [vmem:[#allocation4] sm:$0xff] %v3078
  %3190 = vst [vmem:[#allocation4 + $0x8] sm:$0xff] %v3080
  %3191 = vst [vmem:[#allocation4 + $0x10] sm:$0xff] %v3151
  %3192 = vst [vmem:[#allocation4 + $0x18] sm:$0xff] %v3153
  %3193 = vst [vmem:[#allocation4 + $0x20] sm:$0xff] %v3082
  %3194 = vst [vmem:[#allocation4 + $0x28] sm:$0xff] %v3084
  %3195 = vst [vmem:[#allocation4 + $0x30] sm:$0xff] %v3155
  %3196 = vst [vmem:[#allocation4 + $0x38] sm:$0xff] %v3157
  %3197 = vst [vmem:[#allocation4 + $0x40] sm:$0xff] %v3088
  %3198 = vst [vmem:[#allocation4 + $0x48] sm:$0xff] %v3090
  %3199 = vst [vmem:[#allocation4 + $0x50] sm:$0xff] %v3161
  %3200 = vst [vmem:[#allocation4 + $0x58] sm:$0xff] %v3163
  %3201 = vst [vmem:[#allocation4 + $0x60] sm:$0xff] %v3092
  %3202 = vst [vmem:[#allocation4 + $0x68] sm:$0xff] %v3094
  %3203 = vst [vmem:[#allocation4 + $0x70] sm:$0xff] %v3165
  %3204 = vst [vmem:[#allocation4 + $0x78] sm:$0xff] %v3167
  %3205 = vst [vmem:[#allocation4 + $0x80] sm:$0xff] %v3098
  %3206 = vst [vmem:[#allocation4 + $0x88] sm:$0xff] %v3100
  %3207 = vst [vmem:[#allocation4 + $0x90] sm:$0xff] %v3171
  %3208 = vst [vmem:[#allocation4 + $0x98] sm:$0xff] %v3173
  %3209 = vst [vmem:[#allocation4 + $0xa0] sm:$0xff] %v3102
  %3210 = vst [vmem:[#allocation4 + $0xa8] sm:$0xff] %v3104
  %3211 = vst [vmem:[#allocation4 + $0xb0] sm:$0xff] %v3175
  %3212 = vst [vmem:[#allocation4 + $0xb8] sm:$0xff] %v3177
  %3213 = vst [vmem:[#allocation4 + $0xc0] sm:$0xff] %v3108
  %3214 = vst [vmem:[#allocation4 + $0xc8] sm:$0xff] %v3110
  %3215 = vst [vmem:[#allocation4 + $0xd0] sm:$0xff] %v3181
  %3216 = vst [vmem:[#allocation4 + $0xd8] sm:$0xff] %v3183
  %3217 = vst [vmem:[#allocation4 + $0xe0] sm:$0xff] %v3112
  %3218 = vst [vmem:[#allocation4 + $0xe8] sm:$0xff] %v3114
  %3219 = vst [vmem:[#allocation4 + $0xf0] sm:$0xff] %v3185
  %3220 = vst [vmem:[#allocation4 + $0xf8] sm:$0xff] %v3187
  %s3221 = smul.u32 0, 4
  %s3222 = smul.addr %s3221, 8
  %s3223 = scalar_lea.vmem [#allocation4], %s3222
  %v3224 = vld [vmem:[%s3223] sm:$0xff]
  %v3225 = vld [vmem:[%s3223 + $0x8] sm:$0xff]
  %v3226 = vld [vmem:[%s3223 + $0x10] sm:$0xff]
  %v3227 = vld [vmem:[%s3223 + $0x18] sm:$0xff]
  %v3228 = vld [vmem:[%s5] sm:$0xff]
  %v3229 = vld [vmem:[%s5 + $0x8] sm:$0xff]
  %v3230 = vld [vmem:[%s5 + $0x10] sm:$0xff]
  %v3231 = vld [vmem:[%s5 + $0x18] sm:$0xff]
  %v3232 = vld [vmem:[%s5 + $0x20] sm:$0xff]
  %v3233 = vld [vmem:[%s5 + $0x28] sm:$0xff]
  %v3234 = vld [vmem:[%s5 + $0x30] sm:$0xff]
  %v3235 = vld [vmem:[%s5 + $0x38] sm:$0xff]
  %v3236 = vld [vmem:[%s5 + $0x40] sm:$0xff]
  %v3237 = vld [vmem:[%s5 + $0x48] sm:$0xff]
  %v3238 = vld [vmem:[%s5 + $0x50] sm:$0xff]
  %v3239 = vld [vmem:[%s5 + $0x58] sm:$0xff]
  %v3240 = vld [vmem:[%s5 + $0x60] sm:$0xff]
  %v3241 = vld [vmem:[%s5 + $0x68] sm:$0xff]
  %v3242 = vld [vmem:[%s5 + $0x70] sm:$0xff]
  %v3243 = vld [vmem:[%s5 + $0x78] sm:$0xff]
  %v3244 = vld [vmem:[%s5 + $0x80] sm:$0xff]
  %v3245 = vld [vmem:[%s5 + $0x88] sm:$0xff]
  %v3246 = vld [vmem:[%s5 + $0x90] sm:$0xff]
  %v3247 = vld [vmem:[%s5 + $0x98] sm:$0xff]
  %v3248 = vld [vmem:[%s5 + $0xa0] sm:$0xff]
  %v3249 = vld [vmem:[%s5 + $0xa8] sm:$0xff]
  %v3250 = vld [vmem:[%s5 + $0xb0] sm:$0xff]
  %v3251 = vld [vmem:[%s5 + $0xb8] sm:$0xff]
  %v3252 = vld [vmem:[%s5 + $0xc0] sm:$0xff]
  %v3253 = vld [vmem:[%s5 + $0xc8] sm:$0xff]
  %v3254 = vld [vmem:[%s5 + $0xd0] sm:$0xff]
  %v3255 = vld [vmem:[%s5 + $0xd8] sm:$0xff]
  %v3256 = vld [vmem:[%s5 + $0xe0] sm:$0xff]
  %v3257 = vld [vmem:[%s5 + $0xe8] sm:$0xff]
  %v3258 = vld [vmem:[%s5 + $0xf0] sm:$0xff]
  %v3259 = vld [vmem:[%s5 + $0xf8] sm:$0xff]
  %v3292 = vunpack.c.l.b16 %v3228
  %v3293 = vunpack.c.h.b16 %v3228
  %v3294 = vunpack.c.l.b16 %v3229
  %v3295 = vunpack.c.h.b16 %v3229
  %v3296 = vunpack.c.l.b16 %v3230
  %v3297 = vunpack.c.h.b16 %v3230
  %v3298 = vunpack.c.l.b16 %v3231
  %v3299 = vunpack.c.h.b16 %v3231
  %v3300 = vunpack.c.l.b16 %v3232
  %v3301 = vunpack.c.h.b16 %v3232
  %v3302 = vunpack.c.l.b16 %v3233
  %v3303 = vunpack.c.h.b16 %v3233
  %v3304 = vunpack.c.l.b16 %v3234
  %v3305 = vunpack.c.h.b16 %v3234
  %v3306 = vunpack.c.l.b16 %v3235
  %v3307 = vunpack.c.h.b16 %v3235
  %v3308 = vunpack.c.l.b16 %v3236
  %v3309 = vunpack.c.h.b16 %v3236
  %v3310 = vunpack.c.l.b16 %v3237
  %v3311 = vunpack.c.h.b16 %v3237
  %v3312 = vunpack.c.l.b16 %v3238
  %v3313 = vunpack.c.h.b16 %v3238
  %v3314 = vunpack.c.l.b16 %v3239
  %v3315 = vunpack.c.h.b16 %v3239
  %v3316 = vunpack.c.l.b16 %v3240
  %v3317 = vunpack.c.h.b16 %v3240
  %v3318 = vunpack.c.l.b16 %v3241
  %v3319 = vunpack.c.h.b16 %v3241
  %v3320 = vunpack.c.l.b16 %v3242
  %v3321 = vunpack.c.h.b16 %v3242
  %v3322 = vunpack.c.l.b16 %v3243
  %v3323 = vunpack.c.h.b16 %v3243
  %v3324 = vunpack.c.l.b16 %v3244
  %v3325 = vunpack.c.h.b16 %v3244
  %v3326 = vunpack.c.l.b16 %v3245
  %v3327 = vunpack.c.h.b16 %v3245
  %v3328 = vunpack.c.l.b16 %v3246
  %v3329 = vunpack.c.h.b16 %v3246
  %v3330 = vunpack.c.l.b16 %v3247
  %v3331 = vunpack.c.h.b16 %v3247
  %v3332 = vunpack.c.l.b16 %v3248
  %v3333 = vunpack.c.h.b16 %v3248
  %v3334 = vunpack.c.l.b16 %v3249
  %v3335 = vunpack.c.h.b16 %v3249
  %v3336 = vunpack.c.l.b16 %v3250
  %v3337 = vunpack.c.h.b16 %v3250
  %v3338 = vunpack.c.l.b16 %v3251
  %v3339 = vunpack.c.h.b16 %v3251
  %v3340 = vunpack.c.l.b16 %v3252
  %v3341 = vunpack.c.h.b16 %v3252
  %v3342 = vunpack.c.l.b16 %v3253
  %v3343 = vunpack.c.h.b16 %v3253
  %v3344 = vunpack.c.l.b16 %v3254
  %v3345 = vunpack.c.h.b16 %v3254
  %v3346 = vunpack.c.l.b16 %v3255
  %v3347 = vunpack.c.h.b16 %v3255
  %v3348 = vunpack.c.l.b16 %v3256
  %v3349 = vunpack.c.h.b16 %v3256
  %v3350 = vunpack.c.l.b16 %v3257
  %v3351 = vunpack.c.h.b16 %v3257
  %v3352 = vunpack.c.l.b16 %v3258
  %v3353 = vunpack.c.h.b16 %v3258
  %v3354 = vunpack.c.l.b16 %v3259
  %v3355 = vunpack.c.h.b16 %v3259
  %v3356 = vpack.c.b16 %v3296, %v3292
  %v3357 = vpack.c.b16 %v3297, %v3293
  %v3358 = vpack.c.b16 %v3298, %v3294
  %v3359 = vpack.c.b16 %v3299, %v3295
  %v3360 = vpack.c.b16 %v3304, %v3300
  %v3361 = vpack.c.b16 %v3305, %v3301
  %v3362 = vpack.c.b16 %v3306, %v3302
  %v3363 = vpack.c.b16 %v3307, %v3303
  %v3364 = vpack.c.b16 %v3312, %v3308
  %v3365 = vpack.c.b16 %v3313, %v3309
  %v3366 = vpack.c.b16 %v3314, %v3310
  %v3367 = vpack.c.b16 %v3315, %v3311
  %v3368 = vpack.c.b16 %v3320, %v3316
  %v3369 = vpack.c.b16 %v3321, %v3317
  %v3370 = vpack.c.b16 %v3322, %v3318
  %v3371 = vpack.c.b16 %v3323, %v3319
  %v3372 = vpack.c.b16 %v3328, %v3324
  %v3373 = vpack.c.b16 %v3329, %v3325
  %v3374 = vpack.c.b16 %v3330, %v3326
  %v3375 = vpack.c.b16 %v3331, %v3327
  %v3376 = vpack.c.b16 %v3336, %v3332
  %v3377 = vpack.c.b16 %v3337, %v3333
  %v3378 = vpack.c.b16 %v3338, %v3334
  %v3379 = vpack.c.b16 %v3339, %v3335
  %v3380 = vpack.c.b16 %v3344, %v3340
  %v3381 = vpack.c.b16 %v3345, %v3341
  %v3382 = vpack.c.b16 %v3346, %v3342
  %v3383 = vpack.c.b16 %v3347, %v3343
  %v3384 = vpack.c.b16 %v3352, %v3348
  %v3385 = vpack.c.b16 %v3353, %v3349
  %v3386 = vpack.c.b16 %v3354, %v3350
  %v3387 = vpack.c.b16 %v3355, %v3351
  %3420 = vmatprep.subr.bf16.mxu0 %v3385
  %3421 = vmatpush1.bf16.msra.mxu0 %v3384
  %3422 = vmatprep.subr.bf16.mxu0 %v3381
  %3423 = vmatpush1.bf16.msra.mxu0 %v3380
  %3424 = vmatprep.subr.bf16.mxu0 %v3377
  %3425 = vmatpush1.bf16.msra.mxu0 %v3376
  %3426 = vmatprep.subr.bf16.mxu0 %v3373
  %3427 = vmatpush1.bf16.msra.mxu0 %v3372
  %3428 = vmatprep.subr.bf16.mxu0 %v3369
  %3429 = vmatpush1.bf16.msra.mxu0 %v3368
  %3430 = vmatprep.subr.bf16.mxu0 %v3365
  %3431 = vmatpush1.bf16.msra.mxu0 %v3364
  %3432 = vmatprep.subr.bf16.mxu0 %v3361
  %3433 = vmatpush1.bf16.msra.mxu0 %v3360
  %3434 = vmatprep.subr.bf16.mxu0 %v3357
  %3435 = vmatpush1.bf16.msra.mxu0 %v3356
  %3436 = vmatprep.subr.bf16.mxu0 0
  %3437 = vmatpush2.bf16.msra.mxu0 0
  %3438 = vmatprep.subr.bf16.mxu0 0
  %3439 = vmatpush2.bf16.msra.mxu0 0
  %3440 = vmatprep.subr.bf16.mxu0 0
  %3441 = vmatpush2.bf16.msra.mxu0 0
  %3442 = vmatprep.subr.bf16.mxu0 0
  %3443 = vmatpush2.bf16.msra.mxu0 0
  %3444 = vmatprep.subr.bf16.mxu0 0
  %3445 = vmatpush2.bf16.msra.mxu0 0
  %3446 = vmatprep.subr.bf16.mxu0 0
  %3447 = vmatpush2.bf16.msra.mxu0 0
  %3448 = vmatprep.subr.bf16.mxu0 0
  %3449 = vmatpush2.bf16.msra.mxu0 0
  %3450 = vmatprep.subr.bf16.mxu0 0
  %3451 = vmatpush2.bf16.msra.mxu0 0
  %3452 = vmatprep.mubr.bf16.mxu0 0
  %3453 = vmatmul.mubr.bf16.gmra.mxu0 0
  %v3454 = vpop.f32.mrf.mxu0
  %v3455 = vadd.f32 0.0, %v3454
  %v3456 = vpop.f32.mrf.mxu0
  %v3457 = vadd.f32 0.0, %v3456
  %v3458 = vpop.f32.mrf.mxu0
  %v3459 = vpop.f32.mrf.mxu0
  %3460 = vdwg.mxu0
  %3461 = vmatprep.subr.bf16.mxu0 %v3387
  %3462 = vmatpush1.bf16.msra.mxu0 %v3386
  %3463 = vmatprep.subr.bf16.mxu0 %v3383
  %3464 = vmatpush1.bf16.msra.mxu0 %v3382
  %3465 = vmatprep.subr.bf16.mxu0 %v3379
  %3466 = vmatpush1.bf16.msra.mxu0 %v3378
  %3467 = vmatprep.subr.bf16.mxu0 %v3375
  %3468 = vmatpush1.bf16.msra.mxu0 %v3374
  %3469 = vmatprep.subr.bf16.mxu0 %v3371
  %3470 = vmatpush1.bf16.msra.mxu0 %v3370
  %3471 = vmatprep.subr.bf16.mxu0 %v3367
  %3472 = vmatpush1.bf16.msra.mxu0 %v3366
  %3473 = vmatprep.subr.bf16.mxu0 %v3363
  %3474 = vmatpush1.bf16.msra.mxu0 %v3362
  %3475 = vmatprep.subr.bf16.mxu0 %v3359
  %3476 = vmatpush1.bf16.msra.mxu0 %v3358
  %3477 = vmatprep.subr.bf16.mxu0 0
  %3478 = vmatpush2.bf16.msra.mxu0 0
  %3479 = vmatprep.subr.bf16.mxu0 0
  %3480 = vmatpush2.bf16.msra.mxu0 0
  %3481 = vmatprep.subr.bf16.mxu0 0
  %3482 = vmatpush2.bf16.msra.mxu0 0
  %3483 = vmatprep.subr.bf16.mxu0 0
  %3484 = vmatpush2.bf16.msra.mxu0 0
  %3485 = vmatprep.subr.bf16.mxu0 0
  %3486 = vmatpush2.bf16.msra.mxu0 0
  %3487 = vmatprep.subr.bf16.mxu0 0
  %3488 = vmatpush2.bf16.msra.mxu0 0
  %3489 = vmatprep.subr.bf16.mxu0 0
  %3490 = vmatpush2.bf16.msra.mxu0 0
  %3491 = vmatprep.subr.bf16.mxu0 0
  %3492 = vmatpush2.bf16.msra.mxu0 0
  %3493 = vmatprep.mubr.bf16.mxu0 0
  %3494 = vmatmul.mubr.bf16.gmra.mxu0 0
  %v3495 = vpop.f32.mrf.mxu0
  %v3496 = vadd.f32 0.0, %v3495
  %v3497 = vpop.f32.mrf.mxu0
  %v3498 = vadd.f32 0.0, %v3497
  %v3499 = vpop.f32.mrf.mxu0
  %v3500 = vpop.f32.mrf.mxu0
  %3501 = vdwg.mxu0
  %v3502 = vadd.f32 %v3224, %v3455
  %v3503 = vadd.f32 %v3225, %v3457
  %v3504 = vadd.f32 %v3226, %v3496
  %v3505 = vadd.f32 %v3227, %v3498
  %v3506 = vxor.u32 %v3502, 2147483648
  %v3507 = vxor.u32 %v3503, 2147483648
  %v3508 = vxor.u32 %v3504, 2147483648
  %v3509 = vmul.f32 %v3506, 1.442695
  %v3510 = vpow.pop %v3509
  %v3511 = vmul.f32 %v3507, 1.442695
  %v3512 = vpow.pop %v3511
  %v3513 = vmul.f32 %v3508, 1.442695
  %v3514 = vpow.pop %v3513
  %v3515 = vadd.f32 %v3510, 1.0
  %v3516 = vadd.f32 %v3512, 1.0
  %v3517 = vadd.f32 %v3514, 1.0
  %v3518 = vrcp.pop %v3515
  %v3519 = vmul.f32 1.0, %v3518
  %v3520 = vrcp.pop %v3516
  %v3521 = vmul.f32 1.0, %v3520
  %v3522 = vrcp.pop %v3517
  %v3523 = vmul.f32 1.0, %v3522
  %v3524 = vtanh.pop %v3505
  %v3525 = vmul.f32 %v3521, 0.0
  %v3526 = vmul.f32 %v3519, %v3524
  %v3527 = vadd.f32 %v3525, %v3526
  %v3528 = vtanh.pop %v3527
  %v3529 = vmul.f32 %v3523, %v3528
  %3530 = vst [vmem:[#allocation3] sm:$0xff] %v3529
  %s3531 = smul.u32 1, 4
  %s3532 = smul.addr %s3531, 8
  %s3533 = scalar_lea.vmem [#allocation4], %s3532
  %v3534 = vld [vmem:[%s3533] sm:$0xff]
  %v3535 = vld [vmem:[%s3533 + $0x8] sm:$0xff]
  %v3536 = vld [vmem:[%s3533 + $0x10] sm:$0xff]
  %v3537 = vld [vmem:[%s3533 + $0x18] sm:$0xff]
  %v3538 = vpack.c.bf16 %v3529, %v3529
  %v3539 = vld [vmem:[%s5] sm:$0xff]
  %v3540 = vld [vmem:[%s5 + $0x8] sm:$0xff]
  %v3541 = vld [vmem:[%s5 + $0x10] sm:$0xff]
  %v3542 = vld [vmem:[%s5 + $0x18] sm:$0xff]
  %v3543 = vld [vmem:[%s5 + $0x20] sm:$0xff]
  %v3544 = vld [vmem:[%s5 + $0x28] sm:$0xff]
  %v3545 = vld [vmem:[%s5 + $0x30] sm:$0xff]
  %v3546 = vld [vmem:[%s5 + $0x38] sm:$0xff]
  %v3547 = vld [vmem:[%s5 + $0x40] sm:$0xff]
  %v3548 = vld [vmem:[%s5 + $0x48] sm:$0xff]
  %v3549 = vld [vmem:[%s5 + $0x50] sm:$0xff]
  %v3550 = vld [vmem:[%s5 + $0x58] sm:$0xff]
  %v3551 = vld [vmem:[%s5 + $0x60] sm:$0xff]
  %v3552 = vld [vmem:[%s5 + $0x68] sm:$0xff]
  %v3553 = vld [vmem:[%s5 + $0x70] sm:$0xff]
  %v3554 = vld [vmem:[%s5 + $0x78] sm:$0xff]
  %v3555 = vld [vmem:[%s5 + $0x80] sm:$0xff]
  %v3556 = vld [vmem:[%s5 + $0x88] sm:$0xff]
  %v3557 = vld [vmem:[%s5 + $0x90] sm:$0xff]
  %v3558 = vld [vmem:[%s5 + $0x98] sm:$0xff]
  %v3559 = vld [vmem:[%s5 + $0xa0] sm:$0xff]
  %v3560 = vld [vmem:[%s5 + $0xa8] sm:$0xff]
  %v3561 = vld [vmem:[%s5 + $0xb0] sm:$0xff]
  %v3562 = vld [vmem:[%s5 + $0xb8] sm:$0xff]
  %v3563 = vld [vmem:[%s5 + $0xc0] sm:$0xff]
  %v3564 = vld [vmem:[%s5 + $0xc8] sm:$0xff]
  %v3565 = vld [vmem:[%s5 + $0xd0] sm:$0xff]
  %v3566 = vld [vmem:[%s5 + $0xd8] sm:$0xff]
  %v3567 = vld [vmem:[%s5 + $0xe0] sm:$0xff]
  %v3568 = vld [vmem:[%s5 + $0xe8] sm:$0xff]
  %v3569 = vld [vmem:[%s5 + $0xf0] sm:$0xff]
  %v3570 = vld [vmem:[%s5 + $0xf8] sm:$0xff]
  %v3603 = vunpack.c.l.b16 %v3539
  %v3604 = vunpack.c.h.b16 %v3539
  %v3605 = vunpack.c.l.b16 %v3540
  %v3606 = vunpack.c.h.b16 %v3540
  %v3607 = vunpack.c.l.b16 %v3541
  %v3608 = vunpack.c.h.b16 %v3541
  %v3609 = vunpack.c.l.b16 %v3542
  %v3610 = vunpack.c.h.b16 %v3542
  %v3611 = vunpack.c.l.b16 %v3543
  %v3612 = vunpack.c.h.b16 %v3543
  %v3613 = vunpack.c.l.b16 %v3544
  %v3614 = vunpack.c.h.b16 %v3544
  %v3615 = vunpack.c.l.b16 %v3545
  %v3616 = vunpack.c.h.b16 %v3545
  %v3617 = vunpack.c.l.b16 %v3546
  %v3618 = vunpack.c.h.b16 %v3546
  %v3619 = vunpack.c.l.b16 %v3547
  %v3620 = vunpack.c.h.b16 %v3547
  %v3621 = vunpack.c.l.b16 %v3548
  %v3622 = vunpack.c.h.b16 %v3548
  %v3623 = vunpack.c.l.b16 %v3549
  %v3624 = vunpack.c.h.b16 %v3549
  %v3625 = vunpack.c.l.b16 %v3550
  %v3626 = vunpack.c.h.b16 %v3550
  %v3627 = vunpack.c.l.b16 %v3551
  %v3628 = vunpack.c.h.b16 %v3551
  %v3629 = vunpack.c.l.b16 %v3552
  %v3630 = vunpack.c.h.b16 %v3552
  %v3631 = vunpack.c.l.b16 %v3553
  %v3632 = vunpack.c.h.b16 %v3553
  %v3633 = vunpack.c.l.b16 %v3554
  %v3634 = vunpack.c.h.b16 %v3554
  %v3635 = vunpack.c.l.b16 %v3555
  %v3636 = vunpack.c.h.b16 %v3555
  %v3637 = vunpack.c.l.b16 %v3556
  %v3638 = vunpack.c.h.b16 %v3556
  %v3639 = vunpack.c.l.b16 %v3557
  %v3640 = vunpack.c.h.b16 %v3557
  %v3641 = vunpack.c.l.b16 %v3558
  %v3642 = vunpack.c.h.b16 %v3558
  %v3643 = vunpack.c.l.b16 %v3559
  %v3644 = vunpack.c.h.b16 %v3559
  %v3645 = vunpack.c.l.b16 %v3560
  %v3646 = vunpack.c.h.b16 %v3560
  %v3647 = vunpack.c.l.b16 %v3561
  %v3648 = vunpack.c.h.b16 %v3561
  %v3649 = vunpack.c.l.b16 %v3562
  %v3650 = vunpack.c.h.b16 %v3562
  %v3651 = vunpack.c.l.b16 %v3563
  %v3652 = vunpack.c.h.b16 %v3563
  %v3653 = vunpack.c.l.b16 %v3564
  %v3654 = vunpack.c.h.b16 %v3564
  %v3655 = vunpack.c.l.b16 %v3565
  %v3656 = vunpack.c.h.b16 %v3565
  %v3657 = vunpack.c.l.b16 %v3566
  %v3658 = vunpack.c.h.b16 %v3566
  %v3659 = vunpack.c.l.b16 %v3567
  %v3660 = vunpack.c.h.b16 %v3567
  %v3661 = vunpack.c.l.b16 %v3568
  %v3662 = vunpack.c.h.b16 %v3568
  %v3663 = vunpack.c.l.b16 %v3569
  %v3664 = vunpack.c.h.b16 %v3569
  %v3665 = vunpack.c.l.b16 %v3570
  %v3666 = vunpack.c.h.b16 %v3570
  %v3667 = vpack.c.b16 %v3607, %v3603
  %v3668 = vpack.c.b16 %v3608, %v3604
  %v3669 = vpack.c.b16 %v3609, %v3605
  %v3670 = vpack.c.b16 %v3610, %v3606
  %v3671 = vpack.c.b16 %v3615, %v3611
  %v3672 = vpack.c.b16 %v3616, %v3612
  %v3673 = vpack.c.b16 %v3617, %v3613
  %v3674 = vpack.c.b16 %v3618, %v3614
  %v3675 = vpack.c.b16 %v3623, %v3619
  %v3676 = vpack.c.b16 %v3624, %v3620
  %v3677 = vpack.c.b16 %v3625, %v3621
  %v3678 = vpack.c.b16 %v3626, %v3622
  %v3679 = vpack.c.b16 %v3631, %v3627
  %v3680 = vpack.c.b16 %v3632, %v3628
  %v3681 = vpack.c.b16 %v3633, %v3629
  %v3682 = vpack.c.b16 %v3634, %v3630
  %v3683 = vpack.c.b16 %v3639, %v3635
  %v3684 = vpack.c.b16 %v3640, %v3636
  %v3685 = vpack.c.b16 %v3641, %v3637
  %v3686 = vpack.c.b16 %v3642, %v3638
  %v3687 = vpack.c.b16 %v3647, %v3643
  %v3688 = vpack.c.b16 %v3648, %v3644
  %v3689 = vpack.c.b16 %v3649, %v3645
  %v3690 = vpack.c.b16 %v3650, %v3646
  %v3691 = vpack.c.b16 %v3655, %v3651
  %v3692 = vpack.c.b16 %v3656, %v3652
  %v3693 = vpack.c.b16 %v3657, %v3653
  %v3694 = vpack.c.b16 %v3658, %v3654
  %v3695 = vpack.c.b16 %v3663, %v3659
  %v3696 = vpack.c.b16 %v3664, %v3660
  %v3697 = vpack.c.b16 %v3665, %v3661
  %v3698 = vpack.c.b16 %v3666, %v3662
  %3731 = vmatprep.subr.bf16.mxu0 %v3696
  %3732 = vmatpush1.bf16.msra.mxu0 %v3695
  %3733 = vmatprep.subr.bf16.mxu0 %v3692
  %3734 = vmatpush1.bf16.msra.mxu0 %v3691
  %3735 = vmatprep.subr.bf16.mxu0 %v3688
  %3736 = vmatpush1.bf16.msra.mxu0 %v3687
  %3737 = vmatprep.subr.bf16.mxu0 %v3684
  %3738 = vmatpush1.bf16.msra.mxu0 %v3683
  %3739 = vmatprep.subr.bf16.mxu0 %v3680
  %3740 = vmatpush1.bf16.msra.mxu0 %v3679
  %3741 = vmatprep.subr.bf16.mxu0 %v3676
  %3742 = vmatpush1.bf16.msra.mxu0 %v3675
  %3743 = vmatprep.subr.bf16.mxu0 %v3672
  %3744 = vmatpush1.bf16.msra.mxu0 %v3671
  %3745 = vmatprep.subr.bf16.mxu0 %v3668
  %3746 = vmatpush1.bf16.msra.mxu0 %v3667
  %3747 = vmatprep.subr.bf16.mxu0 0
  %3748 = vmatpush2.bf16.msra.mxu0 0
  %3749 = vmatprep.subr.bf16.mxu0 0
  %3750 = vmatpush2.bf16.msra.mxu0 0
  %3751 = vmatprep.subr.bf16.mxu0 0
  %3752 = vmatpush2.bf16.msra.mxu0 0
  %3753 = vmatprep.subr.bf16.mxu0 0
  %3754 = vmatpush2.bf16.msra.mxu0 0
  %3755 = vmatprep.subr.bf16.mxu0 0
  %3756 = vmatpush2.bf16.msra.mxu0 0
  %3757 = vmatprep.subr.bf16.mxu0 0
  %3758 = vmatpush2.bf16.msra.mxu0 0
  %3759 = vmatprep.subr.bf16.mxu0 0
  %3760 = vmatpush2.bf16.msra.mxu0 0
  %3761 = vmatprep.subr.bf16.mxu0 0
  %3762 = vmatpush2.bf16.msra.mxu0 0
  %3763 = vmatprep.mubr.bf16.mxu0 0
  %3764 = vmatmul.mubr.bf16.gmra.mxu0 %v3538
  %v3765 = vpop.f32.mrf.mxu0
  %v3766 = vadd.f32 0.0, %v3765
  %v3767 = vpop.f32.mrf.mxu0
  %v3768 = vadd.f32 0.0, %v3767
  %v3769 = vpop.f32.mrf.mxu0
  %v3770 = vpop.f32.mrf.mxu0
  %3771 = vdwg.mxu0
  %3772 = vmatprep.subr.bf16.mxu0 %v3698
  %3773 = vmatpush1.bf16.msra.mxu0 %v3697
  %3774 = vmatprep.subr.bf16.mxu0 %v3694
  %3775 = vmatpush1.bf16.msra.mxu0 %v3693
  %3776 = vmatprep.subr.bf16.mxu0 %v3690
  %3777 = vmatpush1.bf16.msra.mxu0 %v3689
  %3778 = vmatprep.subr.bf16.mxu0 %v3686
  %3779 = vmatpush1.bf16.msra.mxu0 %v3685
  %3780 = vmatprep.subr.bf16.mxu0 %v3682
  %3781 = vmatpush1.bf16.msra.mxu0 %v3681
  %3782 = vmatprep.subr.bf16.mxu0 %v3678
  %3783 = vmatpush1.bf16.msra.mxu0 %v3677
  %3784 = vmatprep.subr.bf16.mxu0 %v3674
  %3785 = vmatpush1.bf16.msra.mxu0 %v3673
  %3786 = vmatprep.subr.bf16.mxu0 %v3670
  %3787 = vmatpush1.bf16.msra.mxu0 %v3669
  %3788 = vmatprep.subr.bf16.mxu0 0
  %3789 = vmatpush2.bf16.msra.mxu0 0
  %3790 = vmatprep.subr.bf16.mxu0 0
  %3791 = vmatpush2.bf16.msra.mxu0 0
  %3792 = vmatprep.subr.bf16.mxu0 0
  %3793 = vmatpush2.bf16.msra.mxu0 0
  %3794 = vmatprep.subr.bf16.mxu0 0
  %3795 = vmatpush2.bf16.msra.mxu0 0
  %3796 = vmatprep.subr.bf16.mxu0 0
  %3797 = vmatpush2.bf16.msra.mxu0 0
  %3798 = vmatprep.subr.bf16.mxu0 0
  %3799 = vmatpush2.bf16.msra.mxu0 0
  %3800 = vmatprep.subr.bf16.mxu0 0
  %3801 = vmatpush2.bf16.msra.mxu0 0
  %3802 = vmatprep.subr.bf16.mxu0 0
  %3803 = vmatpush2.bf16.msra.mxu0 0
  %3804 = vmatprep.mubr.bf16.mxu0 0
  %3805 = vmatmul.mubr.bf16.gmra.mxu0 %v3538
  %v3806 = vpop.f32.mrf.mxu0
  %v3807 = vadd.f32 0.0, %v3806
  %v3808 = vpop.f32.mrf.mxu0
  %v3809 = vadd.f32 0.0, %v3808
  %v3810 = vpop.f32.mrf.mxu0
  %v3811 = vpop.f32.mrf.mxu0
  %3812 = vdwg.mxu0
  %v3813 = vadd.f32 %v3534, %v3766
  %v3814 = vadd.f32 %v3535, %v3768
  %v3815 = vadd.f32 %v3536, %v3807
  %v3816 = vadd.f32 %v3537, %v3809
  %v3817 = vxor.u32 %v3813, 2147483648
  %v3818 = vxor.u32 %v3814, 2147483648
  %v3819 = vxor.u32 %v3815, 2147483648
  %v3820 = vmul.f32 %v3817, 1.442695
  %v3821 = vpow.pop %v3820
  %v3822 = vmul.f32 %v3818, 1.442695
  %v3823 = vpow.pop %v3822
  %v3824 = vmul.f32 %v3819, 1.442695
  %v3825 = vpow.pop %v3824
  %v3826 = vadd.f32 %v3821, 1.0
  %v3827 = vadd.f32 %v3823, 1.0
  %v3828 = vadd.f32 %v3825, 1.0
  %v3829 = vrcp.pop %v3826
  %v3830 = vmul.f32 1.0, %v3829
  %v3831 = vrcp.pop %v3827
  %v3832 = vmul.f32 1.0, %v3831
  %v3833 = vrcp.pop %v3828
  %v3834 = vmul.f32 1.0, %v3833
  %v3835 = vtanh.pop %v3816
  %v3836 = vmul.f32 %v3832, %v3527
  %v3837 = vmul.f32 %v3830, %v3835
  %v3838 = vadd.f32 %v3836, %v3837
  %v3839 = vtanh.pop %v3838
  %v3840 = vmul.f32 %v3834, %v3839
  %s3841 = scalar_lea.vmem [#allocation3], 8
  %3842 = vst [vmem:[%s3841] sm:$0xff] %v3840
  %s3843 = smul.u32 2, 4
  %s3844 = smul.addr %s3843, 8
  %s3845 = scalar_lea.vmem [#allocation4], %s3844
  %v3846 = vld [vmem:[%s3845] sm:$0xff]
  %v3847 = vld [vmem:[%s3845 + $0x8] sm:$0xff]
  %v3848 = vld [vmem:[%s3845 + $0x10] sm:$0xff]
  %v3849 = vld [vmem:[%s3845 + $0x18] sm:$0xff]
  %v3850 = vpack.c.bf16 %v3840, %v3840
  %v3851 = vld [vmem:[%s5] sm:$0xff]
  %v3852 = vld [vmem:[%s5 + $0x8] sm:$0xff]
  %v3853 = vld [vmem:[%s5 + $0x10] sm:$0xff]
  %v3854 = vld [vmem:[%s5 + $0x18] sm:$0xff]
  %v3855 = vld [vmem:[%s5 + $0x20] sm:$0xff]
  %v3856 = vld [vmem:[%s5 + $0x28] sm:$0xff]
  %v3857 = vld [vmem:[%s5 + $0x30] sm:$0xff]
  %v3858 = vld [vmem:[%s5 + $0x38] sm:$0xff]
  %v3859 = vld [vmem:[%s5 + $0x40] sm:$0xff]
  %v3860 = vld [vmem:[%s5 + $0x48] sm:$0xff]
  %v3861 = vld [vmem:[%s5 + $0x50] sm:$0xff]
  %v3862 = vld [vmem:[%s5 + $0x58] sm:$0xff]
  %v3863 = vld [vmem:[%s5 + $0x60] sm:$0xff]
  %v3864 = vld [vmem:[%s5 + $0x68] sm:$0xff]
  %v3865 = vld [vmem:[%s5 + $0x70] sm:$0xff]
  %v3866 = vld [vmem:[%s5 + $0x78] sm:$0xff]
  %v3867 = vld [vmem:[%s5 + $0x80] sm:$0xff]
  %v3868 = vld [vmem:[%s5 + $0x88] sm:$0xff]
  %v3869 = vld [vmem:[%s5 + $0x90] sm:$0xff]
  %v3870 = vld [vmem:[%s5 + $0x98] sm:$0xff]
  %v3871 = vld [vmem:[%s5 + $0xa0] sm:$0xff]
  %v3872 = vld [vmem:[%s5 + $0xa8] sm:$0xff]
  %v3873 = vld [vmem:[%s5 + $0xb0] sm:$0xff]
  %v3874 = vld [vmem:[%s5 + $0xb8] sm:$0xff]
  %v3875 = vld [vmem:[%s5 + $0xc0] sm:$0xff]
  %v3876 = vld [vmem:[%s5 + $0xc8] sm:$0xff]
  %v3877 = vld [vmem:[%s5 + $0xd0] sm:$0xff]
  %v3878 = vld [vmem:[%s5 + $0xd8] sm:$0xff]
  %v3879 = vld [vmem:[%s5 + $0xe0] sm:$0xff]
  %v3880 = vld [vmem:[%s5 + $0xe8] sm:$0xff]
  %v3881 = vld [vmem:[%s5 + $0xf0] sm:$0xff]
  %v3882 = vld [vmem:[%s5 + $0xf8] sm:$0xff]
  %v3915 = vunpack.c.l.b16 %v3851
  %v3916 = vunpack.c.h.b16 %v3851
  %v3917 = vunpack.c.l.b16 %v3852
  %v3918 = vunpack.c.h.b16 %v3852
  %v3919 = vunpack.c.l.b16 %v3853
  %v3920 = vunpack.c.h.b16 %v3853
  %v3921 = vunpack.c.l.b16 %v3854
  %v3922 = vunpack.c.h.b16 %v3854
  %v3923 = vunpack.c.l.b16 %v3855
  %v3924 = vunpack.c.h.b16 %v3855
  %v3925 = vunpack.c.l.b16 %v3856
  %v3926 = vunpack.c.h.b16 %v3856
  %v3927 = vunpack.c.l.b16 %v3857
  %v3928 = vunpack.c.h.b16 %v3857
  %v3929 = vunpack.c.l.b16 %v3858
  %v3930 = vunpack.c.h.b16 %v3858
  %v3931 = vunpack.c.l.b16 %v3859
  %v3932 = vunpack.c.h.b16 %v3859
  %v3933 = vunpack.c.l.b16 %v3860
  %v3934 = vunpack.c.h.b16 %v3860
  %v3935 = vunpack.c.l.b16 %v3861
  %v3936 = vunpack.c.h.b16 %v3861
  %v3937 = vunpack.c.l.b16 %v3862
  %v3938 = vunpack.c.h.b16 %v3862
  %v3939 = vunpack.c.l.b16 %v3863
  %v3940 = vunpack.c.h.b16 %v3863
  %v3941 = vunpack.c.l.b16 %v3864
  %v3942 = vunpack.c.h.b16 %v3864
  %v3943 = vunpack.c.l.b16 %v3865
  %v3944 = vunpack.c.h.b16 %v3865
  %v3945 = vunpack.c.l.b16 %v3866
  %v3946 = vunpack.c.h.b16 %v3866
  %v3947 = vunpack.c.l.b16 %v3867
  %v3948 = vunpack.c.h.b16 %v3867
  %v3949 = vunpack.c.l.b16 %v3868
  %v3950 = vunpack.c.h.b16 %v3868
  %v3951 = vunpack.c.l.b16 %v3869
  %v3952 = vunpack.c.h.b16 %v3869
  %v3953 = vunpack.c.l.b16 %v3870
  %v3954 = vunpack.c.h.b16 %v3870
  %v3955 = vunpack.c.l.b16 %v3871
  %v3956 = vunpack.c.h.b16 %v3871
  %v3957 = vunpack.c.l.b16 %v3872
  %v3958 = vunpack.c.h.b16 %v3872
  %v3959 = vunpack.c.l.b16 %v3873
  %v3960 = vunpack.c.h.b16 %v3873
  %v3961 = vunpack.c.l.b16 %v3874
  %v3962 = vunpack.c.h.b16 %v3874
  %v3963 = vunpack.c.l.b16 %v3875
  %v3964 = vunpack.c.h.b16 %v3875
  %v3965 = vunpack.c.l.b16 %v3876
  %v3966 = vunpack.c.h.b16 %v3876
  %v3967 = vunpack.c.l.b16 %v3877
  %v3968 = vunpack.c.h.b16 %v3877
  %v3969 = vunpack.c.l.b16 %v3878
  %v3970 = vunpack.c.h.b16 %v3878
  %v3971 = vunpack.c.l.b16 %v3879
  %v3972 = vunpack.c.h.b16 %v3879
  %v3973 = vunpack.c.l.b16 %v3880
  %v3974 = vunpack.c.h.b16 %v3880
  %v3975 = vunpack.c.l.b16 %v3881
  %v3976 = vunpack.c.h.b16 %v3881
  %v3977 = vunpack.c.l.b16 %v3882
  %v3978 = vunpack.c.h.b16 %v3882
  %v3979 = vpack.c.b16 %v3919, %v3915
  %v3980 = vpack.c.b16 %v3920, %v3916
  %v3981 = vpack.c.b16 %v3921, %v3917
  %v3982 = vpack.c.b16 %v3922, %v3918
  %v3983 = vpack.c.b16 %v3927, %v3923
  %v3984 = vpack.c.b16 %v3928, %v3924
  %v3985 = vpack.c.b16 %v3929, %v3925
  %v3986 = vpack.c.b16 %v3930, %v3926
  %v3987 = vpack.c.b16 %v3935, %v3931
  %v3988 = vpack.c.b16 %v3936, %v3932
  %v3989 = vpack.c.b16 %v3937, %v3933
  %v3990 = vpack.c.b16 %v3938, %v3934
  %v3991 = vpack.c.b16 %v3943, %v3939
  %v3992 = vpack.c.b16 %v3944, %v3940
  %v3993 = vpack.c.b16 %v3945, %v3941
  %v3994 = vpack.c.b16 %v3946, %v3942
  %v3995 = vpack.c.b16 %v3951, %v3947
  %v3996 = vpack.c.b16 %v3952, %v3948
  %v3997 = vpack.c.b16 %v3953, %v3949
  %v3998 = vpack.c.b16 %v3954, %v3950
  %v3999 = vpack.c.b16 %v3959, %v3955
  %v4000 = vpack.c.b16 %v3960, %v3956
  %v4001 = vpack.c.b16 %v3961, %v3957
  %v4002 = vpack.c.b16 %v3962, %v3958
  %v4003 = vpack.c.b16 %v3967, %v3963
  %v4004 = vpack.c.b16 %v3968, %v3964
  %v4005 = vpack.c.b16 %v3969, %v3965
  %v4006 = vpack.c.b16 %v3970, %v3966
  %v4007 = vpack.c.b16 %v3975, %v3971
  %v4008 = vpack.c.b16 %v3976, %v3972
  %v4009 = vpack.c.b16 %v3977, %v3973
  %v4010 = vpack.c.b16 %v3978, %v3974
  %4043 = vmatprep.subr.bf16.mxu0 %v4008
  %4044 = vmatpush1.bf16.msra.mxu0 %v4007
  %4045 = vmatprep.subr.bf16.mxu0 %v4004
  %4046 = vmatpush1.bf16.msra.mxu0 %v4003
  %4047 = vmatprep.subr.bf16.mxu0 %v4000
  %4048 = vmatpush1.bf16.msra.mxu0 %v3999
  %4049 = vmatprep.subr.bf16.mxu0 %v3996
  %4050 = vmatpush1.bf16.msra.mxu0 %v3995
  %4051 = vmatprep.subr.bf16.mxu0 %v3992
  %4052 = vmatpush1.bf16.msra.mxu0 %v3991
  %4053 = vmatprep.subr.bf16.mxu0 %v3988
  %4054 = vmatpush1.bf16.msra.mxu0 %v3987
  %4055 = vmatprep.subr.bf16.mxu0 %v3984
  %4056 = vmatpush1.bf16.msra.mxu0 %v3983
  %4057 = vmatprep.subr.bf16.mxu0 %v3980
  %4058 = vmatpush1.bf16.msra.mxu0 %v3979
  %4059 = vmatprep.subr.bf16.mxu0 0
  %4060 = vmatpush2.bf16.msra.mxu0 0
  %4061 = vmatprep.subr.bf16.mxu0 0
  %4062 = vmatpush2.bf16.msra.mxu0 0
  %4063 = vmatprep.subr.bf16.mxu0 0
  %4064 = vmatpush2.bf16.msra.mxu0 0
  %4065 = vmatprep.subr.bf16.mxu0 0
  %4066 = vmatpush2.bf16.msra.mxu0 0
  %4067 = vmatprep.subr.bf16.mxu0 0
  %4068 = vmatpush2.bf16.msra.mxu0 0
  %4069 = vmatprep.subr.bf16.mxu0 0
  %4070 = vmatpush2.bf16.msra.mxu0 0
  %4071 = vmatprep.subr.bf16.mxu0 0
  %4072 = vmatpush2.bf16.msra.mxu0 0
  %4073 = vmatprep.subr.bf16.mxu0 0
  %4074 = vmatpush2.bf16.msra.mxu0 0
  %4075 = vmatprep.mubr.bf16.mxu0 0
  %4076 = vmatmul.mubr.bf16.gmra.mxu0 %v3850
  %v4077 = vpop.f32.mrf.mxu0
  %v4078 = vadd.f32 0.0, %v4077
  %v4079 = vpop.f32.mrf.mxu0
  %v4080 = vadd.f32 0.0, %v4079
  %v4081 = vpop.f32.mrf.mxu0
  %v4082 = vpop.f32.mrf.mxu0
  %4083 = vdwg.mxu0
  %4084 = vmatprep.subr.bf16.mxu0 %v4010
  %4085 = vmatpush1.bf16.msra.mxu0 %v4009
  %4086 = vmatprep.subr.bf16.mxu0 %v4006
  %4087 = vmatpush1.bf16.msra.mxu0 %v4005
  %4088 = vmatprep.subr.bf16.mxu0 %v4002
  %4089 = vmatpush1.bf16.msra.mxu0 %v4001
  %4090 = vmatprep.subr.bf16.mxu0 %v3998
  %4091 = vmatpush1.bf16.msra.mxu0 %v3997
  %4092 = vmatprep.subr.bf16.mxu0 %v3994
  %4093 = vmatpush1.bf16.msra.mxu0 %v3993
  %4094 = vmatprep.subr.bf16.mxu0 %v3990
  %4095 = vmatpush1.bf16.msra.mxu0 %v3989
  %4096 = vmatprep.subr.bf16.mxu0 %v3986
  %4097 = vmatpush1.bf16.msra.mxu0 %v3985
  %4098 = vmatprep.subr.bf16.mxu0 %v3982
  %4099 = vmatpush1.bf16.msra.mxu0 %v3981
  %4100 = vmatprep.subr.bf16.mxu0 0
  %4101 = vmatpush2.bf16.msra.mxu0 0
  %4102 = vmatprep.subr.bf16.mxu0 0
  %4103 = vmatpush2.bf16.msra.mxu0 0
  %4104 = vmatprep.subr.bf16.mxu0 0
  %4105 = vmatpush2.bf16.msra.mxu0 0
  %4106 = vmatprep.subr.bf16.mxu0 0
  %4107 = vmatpush2.bf16.msra.mxu0 0
  %4108 = vmatprep.subr.bf16.mxu0 0
  %4109 = vmatpush2.bf16.msra.mxu0 0
  %4110 = vmatprep.subr.bf16.mxu0 0
  %4111 = vmatpush2.bf16.msra.mxu0 0
  %4112 = vmatprep.subr.bf16.mxu0 0
  %4113 = vmatpush2.bf16.msra.mxu0 0
  %4114 = vmatprep.subr.bf16.mxu0 0
  %4115 = vmatpush2.bf16.msra.mxu0 0
  %4116 = vmatprep.mubr.bf16.mxu0 0
  %4117 = vmatmul.mubr.bf16.gmra.mxu0 %v3850
  %v4118 = vpop.f32.mrf.mxu0
  %v4119 = vadd.f32 0.0, %v4118
  %v4120 = vpop.f32.mrf.mxu0
  %v4121 = vadd.f32 0.0, %v4120
  %v4122 = vpop.f32.mrf.mxu0
  %v4123 = vpop.f32.mrf.mxu0
  %4124 = vdwg.mxu0
  %v4125 = vadd.f32 %v3846, %v4078
  %v4126 = vadd.f32 %v3847, %v4080
  %v4127 = vadd.f32 %v3848, %v4119
  %v4128 = vadd.f32 %v3849, %v4121
  %v4129 = vxor.u32 %v4125, 2147483648
  %v4130 = vxor.u32 %v4126, 2147483648
  %v4131 = vxor.u32 %v4127, 2147483648
  %v4132 = vmul.f32 %v4129, 1.442695
  %v4133 = vpow.pop %v4132
  %v4134 = vmul.f32 %v4130, 1.442695
  %v4135 = vpow.pop %v4134
  %v4136 = vmul.f32 %v4131, 1.442695
  %v4137 = vpow.pop %v4136
  %v4138 = vadd.f32 %v4133, 1.0
  %v4139 = vadd.f32 %v4135, 1.0
  %v4140 = vadd.f32 %v4137, 1.0
  %v4141 = vrcp.pop %v4138
  %v4142 = vmul.f32 1.0, %v4141
  %v4143 = vrcp.pop %v4139
  %v4144 = vmul.f32 1.0, %v4143
  %v4145 = vrcp.pop %v4140
  %v4146 = vmul.f32 1.0, %v4145
  %v4147 = vtanh.pop %v4128
  %v4148 = vmul.f32 %v4144, %v3838
  %v4149 = vmul.f32 %v4142, %v4147
  %v4150 = vadd.f32 %v4148, %v4149
  %v4151 = vtanh.pop %v4150
  %v4152 = vmul.f32 %v4146, %v4151
  %s4153 = scalar_lea.vmem [#allocation3], 16
  %4154 = vst [vmem:[%s4153] sm:$0xff] %v4152
  %s4155 = smul.u32 3, 4
  %s4156 = smul.addr %s4155, 8
  %s4157 = scalar_lea.vmem [#allocation4], %s4156
  %v4158 = vld [vmem:[%s4157] sm:$0xff]
  %v4159 = vld [vmem:[%s4157 + $0x8] sm:$0xff]
  %v4160 = vld [vmem:[%s4157 + $0x10] sm:$0xff]
  %v4161 = vld [vmem:[%s4157 + $0x18] sm:$0xff]
  %v4162 = vpack.c.bf16 %v4152, %v4152
  %v4163 = vld [vmem:[%s5] sm:$0xff]
  %v4164 = vld [vmem:[%s5 + $0x8] sm:$0xff]
  %v4165 = vld [vmem:[%s5 + $0x10] sm:$0xff]
  %v4166 = vld [vmem:[%s5 + $0x18] sm:$0xff]
  %v4167 = vld [vmem:[%s5 + $0x20] sm:$0xff]
  %v4168 = vld [vmem:[%s5 + $0x28] sm:$0xff]
  %v4169 = vld [vmem:[%s5 + $0x30] sm:$0xff]
  %v4170 = vld [vmem:[%s5 + $0x38] sm:$0xff]
  %v4171 = vld [vmem:[%s5 + $0x40] sm:$0xff]
  %v4172 = vld [vmem:[%s5 + $0x48] sm:$0xff]
  %v4173 = vld [vmem:[%s5 + $0x50] sm:$0xff]
  %v4174 = vld [vmem:[%s5 + $0x58] sm:$0xff]
  %v4175 = vld [vmem:[%s5 + $0x60] sm:$0xff]
  %v4176 = vld [vmem:[%s5 + $0x68] sm:$0xff]
  %v4177 = vld [vmem:[%s5 + $0x70] sm:$0xff]
  %v4178 = vld [vmem:[%s5 + $0x78] sm:$0xff]
  %v4179 = vld [vmem:[%s5 + $0x80] sm:$0xff]
  %v4180 = vld [vmem:[%s5 + $0x88] sm:$0xff]
  %v4181 = vld [vmem:[%s5 + $0x90] sm:$0xff]
  %v4182 = vld [vmem:[%s5 + $0x98] sm:$0xff]
  %v4183 = vld [vmem:[%s5 + $0xa0] sm:$0xff]
  %v4184 = vld [vmem:[%s5 + $0xa8] sm:$0xff]
  %v4185 = vld [vmem:[%s5 + $0xb0] sm:$0xff]
  %v4186 = vld [vmem:[%s5 + $0xb8] sm:$0xff]
  %v4187 = vld [vmem:[%s5 + $0xc0] sm:$0xff]
  %v4188 = vld [vmem:[%s5 + $0xc8] sm:$0xff]
  %v4189 = vld [vmem:[%s5 + $0xd0] sm:$0xff]
  %v4190 = vld [vmem:[%s5 + $0xd8] sm:$0xff]
  %v4191 = vld [vmem:[%s5 + $0xe0] sm:$0xff]
  %v4192 = vld [vmem:[%s5 + $0xe8] sm:$0xff]
  %v4193 = vld [vmem:[%s5 + $0xf0] sm:$0xff]
  %v4194 = vld [vmem:[%s5 + $0xf8] sm:$0xff]
  %v4227 = vunpack.c.l.b16 %v4163
  %v4228 = vunpack.c.h.b16 %v4163
  %v4229 = vunpack.c.l.b16 %v4164
  %v4230 = vunpack.c.h.b16 %v4164
  %v4231 = vunpack.c.l.b16 %v4165
  %v4232 = vunpack.c.h.b16 %v4165
  %v4233 = vunpack.c.l.b16 %v4166
  %v4234 = vunpack.c.h.b16 %v4166
  %v4235 = vunpack.c.l.b16 %v4167
  %v4236 = vunpack.c.h.b16 %v4167
  %v4237 = vunpack.c.l.b16 %v4168
  %v4238 = vunpack.c.h.b16 %v4168
  %v4239 = vunpack.c.l.b16 %v4169
  %v4240 = vunpack.c.h.b16 %v4169
  %v4241 = vunpack.c.l.b16 %v4170
  %v4242 = vunpack.c.h.b16 %v4170
  %v4243 = vunpack.c.l.b16 %v4171
  %v4244 = vunpack.c.h.b16 %v4171
  %v4245 = vunpack.c.l.b16 %v4172
  %v4246 = vunpack.c.h.b16 %v4172
  %v4247 = vunpack.c.l.b16 %v4173
  %v4248 = vunpack.c.h.b16 %v4173
  %v4249 = vunpack.c.l.b16 %v4174
  %v4250 = vunpack.c.h.b16 %v4174
  %v4251 = vunpack.c.l.b16 %v4175
  %v4252 = vunpack.c.h.b16 %v4175
  %v4253 = vunpack.c.l.b16 %v4176
  %v4254 = vunpack.c.h.b16 %v4176
  %v4255 = vunpack.c.l.b16 %v4177
  %v4256 = vunpack.c.h.b16 %v4177
  %v4257 = vunpack.c.l.b16 %v4178
  %v4258 = vunpack.c.h.b16 %v4178
  %v4259 = vunpack.c.l.b16 %v4179
  %v4260 = vunpack.c.h.b16 %v4179
  %v4261 = vunpack.c.l.b16 %v4180
  %v4262 = vunpack.c.h.b16 %v4180
  %v4263 = vunpack.c.l.b16 %v4181
  %v4264 = vunpack.c.h.b16 %v4181
  %v4265 = vunpack.c.l.b16 %v4182
  %v4266 = vunpack.c.h.b16 %v4182
  %v4267 = vunpack.c.l.b16 %v4183
  %v4268 = vunpack.c.h.b16 %v4183
  %v4269 = vunpack.c.l.b16 %v4184
  %v4270 = vunpack.c.h.b16 %v4184
  %v4271 = vunpack.c.l.b16 %v4185
  %v4272 = vunpack.c.h.b16 %v4185
  %v4273 = vunpack.c.l.b16 %v4186
  %v4274 = vunpack.c.h.b16 %v4186
  %v4275 = vunpack.c.l.b16 %v4187
  %v4276 = vunpack.c.h.b16 %v4187
  %v4277 = vunpack.c.l.b16 %v4188
  %v4278 = vunpack.c.h.b16 %v4188
  %v4279 = vunpack.c.l.b16 %v4189
  %v4280 = vunpack.c.h.b16 %v4189
  %v4281 = vunpack.c.l.b16 %v4190
  %v4282 = vunpack.c.h.b16 %v4190
  %v4283 = vunpack.c.l.b16 %v4191
  %v4284 = vunpack.c.h.b16 %v4191
  %v4285 = vunpack.c.l.b16 %v4192
  %v4286 = vunpack.c.h.b16 %v4192
  %v4287 = vunpack.c.l.b16 %v4193
  %v4288 = vunpack.c.h.b16 %v4193
  %v4289 = vunpack.c.l.b16 %v4194
  %v4290 = vunpack.c.h.b16 %v4194
  %v4291 = vpack.c.b16 %v4231, %v4227
  %v4292 = vpack.c.b16 %v4232, %v4228
  %v4293 = vpack.c.b16 %v4233, %v4229
  %v4294 = vpack.c.b16 %v4234, %v4230
  %v4295 = vpack.c.b16 %v4239, %v4235
  %v4296 = vpack.c.b16 %v4240, %v4236
  %v4297 = vpack.c.b16 %v4241, %v4237
  %v4298 = vpack.c.b16 %v4242, %v4238
  %v4299 = vpack.c.b16 %v4247, %v4243
  %v4300 = vpack.c.b16 %v4248, %v4244
  %v4301 = vpack.c.b16 %v4249, %v4245
  %v4302 = vpack.c.b16 %v4250, %v4246
  %v4303 = vpack.c.b16 %v4255, %v4251
  %v4304 = vpack.c.b16 %v4256, %v4252
  %v4305 = vpack.c.b16 %v4257, %v4253
  %v4306 = vpack.c.b16 %v4258, %v4254
  %v4307 = vpack.c.b16 %v4263, %v4259
  %v4308 = vpack.c.b16 %v4264, %v4260
  %v4309 = vpack.c.b16 %v4265, %v4261
  %v4310 = vpack.c.b16 %v4266, %v4262
  %v4311 = vpack.c.b16 %v4271, %v4267
  %v4312 = vpack.c.b16 %v4272, %v4268
  %v4313 = vpack.c.b16 %v4273, %v4269
  %v4314 = vpack.c.b16 %v4274, %v4270
  %v4315 = vpack.c.b16 %v4279, %v4275
  %v4316 = vpack.c.b16 %v4280, %v4276
  %v4317 = vpack.c.b16 %v4281, %v4277
  %v4318 = vpack.c.b16 %v4282, %v4278
  %v4319 = vpack.c.b16 %v4287, %v4283
  %v4320 = vpack.c.b16 %v4288, %v4284
  %v4321 = vpack.c.b16 %v4289, %v4285
  %v4322 = vpack.c.b16 %v4290, %v4286
  %4355 = vmatprep.subr.bf16.mxu0 %v4320
  %4356 = vmatpush1.bf16.msra.mxu0 %v4319
  %4357 = vmatprep.subr.bf16.mxu0 %v4316
  %4358 = vmatpush1.bf16.msra.mxu0 %v4315
  %4359 = vmatprep.subr.bf16.mxu0 %v4312
  %4360 = vmatpush1.bf16.msra.mxu0 %v4311
  %4361 = vmatprep.subr.bf16.mxu0 %v4308
  %4362 = vmatpush1.bf16.msra.mxu0 %v4307
  %4363 = vmatprep.subr.bf16.mxu0 %v4304
  %4364 = vmatpush1.bf16.msra.mxu0 %v4303
  %4365 = vmatprep.subr.bf16.mxu0 %v4300
  %4366 = vmatpush1.bf16.msra.mxu0 %v4299
  %4367 = vmatprep.subr.bf16.mxu0 %v4296
  %4368 = vmatpush1.bf16.msra.mxu0 %v4295
  %4369 = vmatprep.subr.bf16.mxu0 %v4292
  %4370 = vmatpush1.bf16.msra.mxu0 %v4291
  %4371 = vmatprep.subr.bf16.mxu0 0
  %4372 = vmatpush2.bf16.msra.mxu0 0
  %4373 = vmatprep.subr.bf16.mxu0 0
  %4374 = vmatpush2.bf16.msra.mxu0 0
  %4375 = vmatprep.subr.bf16.mxu0 0
  %4376 = vmatpush2.bf16.msra.mxu0 0
  %4377 = vmatprep.subr.bf16.mxu0 0
  %4378 = vmatpush2.bf16.msra.mxu0 0
  %4379 = vmatprep.subr.bf16.mxu0 0
  %4380 = vmatpush2.bf16.msra.mxu0 0
  %4381 = vmatprep.subr.bf16.mxu0 0
  %4382 = vmatpush2.bf16.msra.mxu0 0
  %4383 = vmatprep.subr.bf16.mxu0 0
  %4384 = vmatpush2.bf16.msra.mxu0 0
  %4385 = vmatprep.subr.bf16.mxu0 0
  %4386 = vmatpush2.bf16.msra.mxu0 0
  %4387 = vmatprep.mubr.bf16.mxu0 0
  %4388 = vmatmul.mubr.bf16.gmra.mxu0 %v4162
  %v4389 = vpop.f32.mrf.mxu0
  %v4390 = vadd.f32 0.0, %v4389
  %v4391 = vpop.f32.mrf.mxu0
  %v4392 = vadd.f32 0.0, %v4391
  %v4393 = vpop.f32.mrf.mxu0
  %v4394 = vpop.f32.mrf.mxu0
  %4395 = vdwg.mxu0
  %4396 = vmatprep.subr.bf16.mxu0 %v4322
  %4397 = vmatpush1.bf16.msra.mxu0 %v4321
  %4398 = vmatprep.subr.bf16.mxu0 %v4318
  %4399 = vmatpush1.bf16.msra.mxu0 %v4317
  %4400 = vmatprep.subr.bf16.mxu0 %v4314
  %4401 = vmatpush1.bf16.msra.mxu0 %v4313
  %4402 = vmatprep.subr.bf16.mxu0 %v4310
  %4403 = vmatpush1.bf16.msra.mxu0 %v4309
  %4404 = vmatprep.subr.bf16.mxu0 %v4306
  %4405 = vmatpush1.bf16.msra.mxu0 %v4305
  %4406 = vmatprep.subr.bf16.mxu0 %v4302
  %4407 = vmatpush1.bf16.msra.mxu0 %v4301
  %4408 = vmatprep.subr.bf16.mxu0 %v4298
  %4409 = vmatpush1.bf16.msra.mxu0 %v4297
  %4410 = vmatprep.subr.bf16.mxu0 %v4294
  %4411 = vmatpush1.bf16.msra.mxu0 %v4293
  %4412 = vmatprep.subr.bf16.mxu0 0
  %4413 = vmatpush2.bf16.msra.mxu0 0
  %4414 = vmatprep.subr.bf16.mxu0 0
  %4415 = vmatpush2.bf16.msra.mxu0 0
  %4416 = vmatprep.subr.bf16.mxu0 0
  %4417 = vmatpush2.bf16.msra.mxu0 0
  %4418 = vmatprep.subr.bf16.mxu0 0
  %4419 = vmatpush2.bf16.msra.mxu0 0
  %4420 = vmatprep.subr.bf16.mxu0 0
  %4421 = vmatpush2.bf16.msra.mxu0 0
  %4422 = vmatprep.subr.bf16.mxu0 0
  %4423 = vmatpush2.bf16.msra.mxu0 0
  %4424 = vmatprep.subr.bf16.mxu0 0
  %4425 = vmatpush2.bf16.msra.mxu0 0
  %4426 = vmatprep.subr.bf16.mxu0 0
  %4427 = vmatpush2.bf16.msra.mxu0 0
  %4428 = vmatprep.mubr.bf16.mxu0 0
  %4429 = vmatmul.mubr.bf16.gmra.mxu0 %v4162
  %v4430 = vpop.f32.mrf.mxu0
  %v4431 = vadd.f32 0.0, %v4430
  %v4432 = vpop.f32.mrf.mxu0
  %v4433 = vadd.f32 0.0, %v4432
  %v4434 = vpop.f32.mrf.mxu0
  %v4435 = vpop.f32.mrf.mxu0
  %4436 = vdwg.mxu0
  %v4437 = vadd.f32 %v4158, %v4390
  %v4438 = vadd.f32 %v4159, %v4392
  %v4439 = vadd.f32 %v4160, %v4431
  %v4440 = vadd.f32 %v4161, %v4433
  %v4441 = vxor.u32 %v4437, 2147483648
  %v4442 = vxor.u32 %v4438, 2147483648
  %v4443 = vxor.u32 %v4439, 2147483648
  %v4444 = vmul.f32 %v4441, 1.442695
  %v4445 = vpow.pop %v4444
  %v4446 = vmul.f32 %v4442, 1.442695
  %v4447 = vpow.pop %v4446
  %v4448 = vmul.f32 %v4443, 1.442695
  %v4449 = vpow.pop %v4448
  %v4450 = vadd.f32 %v4445, 1.0
  %v4451 = vadd.f32 %v4447, 1.0
  %v4452 = vadd.f32 %v4449, 1.0
  %v4453 = vrcp.pop %v4450
  %v4454 = vmul.f32 1.0, %v4453
  %v4455 = vrcp.pop %v4451
  %v4456 = vmul.f32 1.0, %v4455
  %v4457 = vrcp.pop %v4452
  %v4458 = vmul.f32 1.0, %v4457
  %v4459 = vtanh.pop %v4440
  %v4460 = vmul.f32 %v4456, %v4150
  %v4461 = vmul.f32 %v4454, %v4459
  %v4462 = vadd.f32 %v4460, %v4461
  %v4463 = vtanh.pop %v4462
  %v4464 = vmul.f32 %v4458, %v4463
  %s4465 = scalar_lea.vmem [#allocation3], 24
  %4466 = vst [vmem:[%s4465] sm:$0xff] %v4464
  %s4467 = smul.u32 4, 4
  %s4468 = smul.addr %s4467, 8
  %s4469 = scalar_lea.vmem [#allocation4], %s4468
  %v4470 = vld [vmem:[%s4469] sm:$0xff]
  %v4471 = vld [vmem:[%s4469 + $0x8] sm:$0xff]
  %v4472 = vld [vmem:[%s4469 + $0x10] sm:$0xff]
  %v4473 = vld [vmem:[%s4469 + $0x18] sm:$0xff]
  %v4474 = vpack.c.bf16 %v4464, %v4464
  %v4475 = vld [vmem:[%s5] sm:$0xff]
  %v4476 = vld [vmem:[%s5 + $0x8] sm:$0xff]
  %v4477 = vld [vmem:[%s5 + $0x10] sm:$0xff]
  %v4478 = vld [vmem:[%s5 + $0x18] sm:$0xff]
  %v4479 = vld [vmem:[%s5 + $0x20] sm:$0xff]
  %v4480 = vld [vmem:[%s5 + $0x28] sm:$0xff]
  %v4481 = vld [vmem:[%s5 + $0x30] sm:$0xff]
  %v4482 = vld [vmem:[%s5 + $0x38] sm:$0xff]
  %v4483 = vld [vmem:[%s5 + $0x40] sm:$0xff]
  %v4484 = vld [vmem:[%s5 + $0x48] sm:$0xff]
  %v4485 = vld [vmem:[%s5 + $0x50] sm:$0xff]
  %v4486 = vld [vmem:[%s5 + $0x58] sm:$0xff]
  %v4487 = vld [vmem:[%s5 + $0x60] sm:$0xff]
  %v4488 = vld [vmem:[%s5 + $0x68] sm:$0xff]
  %v4489 = vld [vmem:[%s5 + $0x70] sm:$0xff]
  %v4490 = vld [vmem:[%s5 + $0x78] sm:$0xff]
  %v4491 = vld [vmem:[%s5 + $0x80] sm:$0xff]
  %v4492 = vld [vmem:[%s5 + $0x88] sm:$0xff]
  %v4493 = vld [vmem:[%s5 + $0x90] sm:$0xff]
  %v4494 = vld [vmem:[%s5 + $0x98] sm:$0xff]
  %v4495 = vld [vmem:[%s5 + $0xa0] sm:$0xff]
  %v4496 = vld [vmem:[%s5 + $0xa8] sm:$0xff]
  %v4497 = vld [vmem:[%s5 + $0xb0] sm:$0xff]
  %v4498 = vld [vmem:[%s5 + $0xb8] sm:$0xff]
  %v4499 = vld [vmem:[%s5 + $0xc0] sm:$0xff]
  %v4500 = vld [vmem:[%s5 + $0xc8] sm:$0xff]
  %v4501 = vld [vmem:[%s5 + $0xd0] sm:$0xff]
  %v4502 = vld [vmem:[%s5 + $0xd8] sm:$0xff]
  %v4503 = vld [vmem:[%s5 + $0xe0] sm:$0xff]
  %v4504 = vld [vmem:[%s5 + $0xe8] sm:$0xff]
  %v4505 = vld [vmem:[%s5 + $0xf0] sm:$0xff]
  %v4506 = vld [vmem:[%s5 + $0xf8] sm:$0xff]
  %v4539 = vunpack.c.l.b16 %v4475
  %v4540 = vunpack.c.h.b16 %v4475
  %v4541 = vunpack.c.l.b16 %v4476
  %v4542 = vunpack.c.h.b16 %v4476
  %v4543 = vunpack.c.l.b16 %v4477
  %v4544 = vunpack.c.h.b16 %v4477
  %v4545 = vunpack.c.l.b16 %v4478
  %v4546 = vunpack.c.h.b16 %v4478
  %v4547 = vunpack.c.l.b16 %v4479
  %v4548 = vunpack.c.h.b16 %v4479
  %v4549 = vunpack.c.l.b16 %v4480
  %v4550 = vunpack.c.h.b16 %v4480
  %v4551 = vunpack.c.l.b16 %v4481
  %v4552 = vunpack.c.h.b16 %v4481
  %v4553 = vunpack.c.l.b16 %v4482
  %v4554 = vunpack.c.h.b16 %v4482
  %v4555 = vunpack.c.l.b16 %v4483
  %v4556 = vunpack.c.h.b16 %v4483
  %v4557 = vunpack.c.l.b16 %v4484
  %v4558 = vunpack.c.h.b16 %v4484
  %v4559 = vunpack.c.l.b16 %v4485
  %v4560 = vunpack.c.h.b16 %v4485
  %v4561 = vunpack.c.l.b16 %v4486
  %v4562 = vunpack.c.h.b16 %v4486
  %v4563 = vunpack.c.l.b16 %v4487
  %v4564 = vunpack.c.h.b16 %v4487
  %v4565 = vunpack.c.l.b16 %v4488
  %v4566 = vunpack.c.h.b16 %v4488
  %v4567 = vunpack.c.l.b16 %v4489
  %v4568 = vunpack.c.h.b16 %v4489
  %v4569 = vunpack.c.l.b16 %v4490
  %v4570 = vunpack.c.h.b16 %v4490
  %v4571 = vunpack.c.l.b16 %v4491
  %v4572 = vunpack.c.h.b16 %v4491
  %v4573 = vunpack.c.l.b16 %v4492
  %v4574 = vunpack.c.h.b16 %v4492
  %v4575 = vunpack.c.l.b16 %v4493
  %v4576 = vunpack.c.h.b16 %v4493
  %v4577 = vunpack.c.l.b16 %v4494
  %v4578 = vunpack.c.h.b16 %v4494
  %v4579 = vunpack.c.l.b16 %v4495
  %v4580 = vunpack.c.h.b16 %v4495
  %v4581 = vunpack.c.l.b16 %v4496
  %v4582 = vunpack.c.h.b16 %v4496
  %v4583 = vunpack.c.l.b16 %v4497
  %v4584 = vunpack.c.h.b16 %v4497
  %v4585 = vunpack.c.l.b16 %v4498
  %v4586 = vunpack.c.h.b16 %v4498
  %v4587 = vunpack.c.l.b16 %v4499
  %v4588 = vunpack.c.h.b16 %v4499
  %v4589 = vunpack.c.l.b16 %v4500
  %v4590 = vunpack.c.h.b16 %v4500
  %v4591 = vunpack.c.l.b16 %v4501
  %v4592 = vunpack.c.h.b16 %v4501
  %v4593 = vunpack.c.l.b16 %v4502
  %v4594 = vunpack.c.h.b16 %v4502
  %v4595 = vunpack.c.l.b16 %v4503
  %v4596 = vunpack.c.h.b16 %v4503
  %v4597 = vunpack.c.l.b16 %v4504
  %v4598 = vunpack.c.h.b16 %v4504
  %v4599 = vunpack.c.l.b16 %v4505
  %v4600 = vunpack.c.h.b16 %v4505
  %v4601 = vunpack.c.l.b16 %v4506
  %v4602 = vunpack.c.h.b16 %v4506
  %v4603 = vpack.c.b16 %v4543, %v4539
  %v4604 = vpack.c.b16 %v4544, %v4540
  %v4605 = vpack.c.b16 %v4545, %v4541
  %v4606 = vpack.c.b16 %v4546, %v4542
  %v4607 = vpack.c.b16 %v4551, %v4547
  %v4608 = vpack.c.b16 %v4552, %v4548
  %v4609 = vpack.c.b16 %v4553, %v4549
  %v4610 = vpack.c.b16 %v4554, %v4550
  %v4611 = vpack.c.b16 %v4559, %v4555
  %v4612 = vpack.c.b16 %v4560, %v4556
  %v4613 = vpack.c.b16 %v4561, %v4557
  %v4614 = vpack.c.b16 %v4562, %v4558
  %v4615 = vpack.c.b16 %v4567, %v4563
  %v4616 = vpack.c.b16 %v4568, %v4564
  %v4617 = vpack.c.b16 %v4569, %v4565
  %v4618 = vpack.c.b16 %v4570, %v4566
  %v4619 = vpack.c.b16 %v4575, %v4571
  %v4620 = vpack.c.b16 %v4576, %v4572
  %v4621 = vpack.c.b16 %v4577, %v4573
  %v4622 = vpack.c.b16 %v4578, %v4574
  %v4623 = vpack.c.b16 %v4583, %v4579
  %v4624 = vpack.c.b16 %v4584, %v4580
  %v4625 = vpack.c.b16 %v4585, %v4581
  %v4626 = vpack.c.b16 %v4586, %v4582
  %v4627 = vpack.c.b16 %v4591, %v4587
  %v4628 = vpack.c.b16 %v4592, %v4588
  %v4629 = vpack.c.b16 %v4593, %v4589
  %v4630 = vpack.c.b16 %v4594, %v4590
  %v4631 = vpack.c.b16 %v4599, %v4595
  %v4632 = vpack.c.b16 %v4600, %v4596
  %v4633 = vpack.c.b16 %v4601, %v4597
  %v4634 = vpack.c.b16 %v4602, %v4598
  %4667 = vmatprep.subr.bf16.mxu0 %v4632
  %4668 = vmatpush1.bf16.msra.mxu0 %v4631
  %4669 = vmatprep.subr.bf16.mxu0 %v4628
  %4670 = vmatpush1.bf16.msra.mxu0 %v4627
  %4671 = vmatprep.subr.bf16.mxu0 %v4624
  %4672 = vmatpush1.bf16.msra.mxu0 %v4623
  %4673 = vmatprep.subr.bf16.mxu0 %v4620
  %4674 = vmatpush1.bf16.msra.mxu0 %v4619
  %4675 = vmatprep.subr.bf16.mxu0 %v4616
  %4676 = vmatpush1.bf16.msra.mxu0 %v4615
  %4677 = vmatprep.subr.bf16.mxu0 %v4612
  %4678 = vmatpush1.bf16.msra.mxu0 %v4611
  %4679 = vmatprep.subr.bf16.mxu0 %v4608
  %4680 = vmatpush1.bf16.msra.mxu0 %v4607
  %4681 = vmatprep.subr.bf16.mxu0 %v4604
  %4682 = vmatpush1.bf16.msra.mxu0 %v4603
  %4683 = vmatprep.subr.bf16.mxu0 0
  %4684 = vmatpush2.bf16.msra.mxu0 0
  %4685 = vmatprep.subr.bf16.mxu0 0
  %4686 = vmatpush2.bf16.msra.mxu0 0
  %4687 = vmatprep.subr.bf16.mxu0 0
  %4688 = vmatpush2.bf16.msra.mxu0 0
  %4689 = vmatprep.subr.bf16.mxu0 0
  %4690 = vmatpush2.bf16.msra.mxu0 0
  %4691 = vmatprep.subr.bf16.mxu0 0
  %4692 = vmatpush2.bf16.msra.mxu0 0
  %4693 = vmatprep.subr.bf16.mxu0 0
  %4694 = vmatpush2.bf16.msra.mxu0 0
  %4695 = vmatprep.subr.bf16.mxu0 0
  %4696 = vmatpush2.bf16.msra.mxu0 0
  %4697 = vmatprep.subr.bf16.mxu0 0
  %4698 = vmatpush2.bf16.msra.mxu0 0
  %4699 = vmatprep.mubr.bf16.mxu0 0
  %4700 = vmatmul.mubr.bf16.gmra.mxu0 %v4474
  %v4701 = vpop.f32.mrf.mxu0
  %v4702 = vadd.f32 0.0, %v4701
  %v4703 = vpop.f32.mrf.mxu0
  %v4704 = vadd.f32 0.0, %v4703
  %v4705 = vpop.f32.mrf.mxu0
  %v4706 = vpop.f32.mrf.mxu0
  %4707 = vdwg.mxu0
  %4708 = vmatprep.subr.bf16.mxu0 %v4634
  %4709 = vmatpush1.bf16.msra.mxu0 %v4633
  %4710 = vmatprep.subr.bf16.mxu0 %v4630
  %4711 = vmatpush1.bf16.msra.mxu0 %v4629
  %4712 = vmatprep.subr.bf16.mxu0 %v4626
  %4713 = vmatpush1.bf16.msra.mxu0 %v4625
  %4714 = vmatprep.subr.bf16.mxu0 %v4622
  %4715 = vmatpush1.bf16.msra.mxu0 %v4621
  %4716 = vmatprep.subr.bf16.mxu0 %v4618
  %4717 = vmatpush1.bf16.msra.mxu0 %v4617
  %4718 = vmatprep.subr.bf16.mxu0 %v4614
  %4719 = vmatpush1.bf16.msra.mxu0 %v4613
  %4720 = vmatprep.subr.bf16.mxu0 %v4610
  %4721 = vmatpush1.bf16.msra.mxu0 %v4609
  %4722 = vmatprep.subr.bf16.mxu0 %v4606
  %4723 = vmatpush1.bf16.msra.mxu0 %v4605
  %4724 = vmatprep.subr.bf16.mxu0 0
  %4725 = vmatpush2.bf16.msra.mxu0 0
  %4726 = vmatprep.subr.bf16.mxu0 0
  %4727 = vmatpush2.bf16.msra.mxu0 0
  %4728 = vmatprep.subr.bf16.mxu0 0
  %4729 = vmatpush2.bf16.msra.mxu0 0
  %4730 = vmatprep.subr.bf16.mxu0 0
  %4731 = vmatpush2.bf16.msra.mxu0 0
  %4732 = vmatprep.subr.bf16.mxu0 0
  %4733 = vmatpush2.bf16.msra.mxu0 0
  %4734 = vmatprep.subr.bf16.mxu0 0
  %4735 = vmatpush2.bf16.msra.mxu0 0
  %4736 = vmatprep.subr.bf16.mxu0 0
  %4737 = vmatpush2.bf16.msra.mxu0 0
  %4738 = vmatprep.subr.bf16.mxu0 0
  %4739 = vmatpush2.bf16.msra.mxu0 0
  %4740 = vmatprep.mubr.bf16.mxu0 0
  %4741 = vmatmul.mubr.bf16.gmra.mxu0 %v4474
  %v4742 = vpop.f32.mrf.mxu0
  %v4743 = vadd.f32 0.0, %v4742
  %v4744 = vpop.f32.mrf.mxu0
  %v4745 = vadd.f32 0.0, %v4744
  %v4746 = vpop.f32.mrf.mxu0
  %v4747 = vpop.f32.mrf.mxu0
  %4748 = vdwg.mxu0
  %v4749 = vadd.f32 %v4470, %v4702
  %v4750 = vadd.f32 %v4471, %v4704
  %v4751 = vadd.f32 %v4472, %v4743
  %v4752 = vadd.f32 %v4473, %v4745
  %v4753 = vxor.u32 %v4749, 2147483648
  %v4754 = vxor.u32 %v4750, 2147483648
  %v4755 = vxor.u32 %v4751, 2147483648
  %v4756 = vmul.f32 %v4753, 1.442695
  %v4757 = vpow.pop %v4756
  %v4758 = vmul.f32 %v4754, 1.442695
  %v4759 = vpow.pop %v4758
  %v4760 = vmul.f32 %v4755, 1.442695
  %v4761 = vpow.pop %v4760
  %v4762 = vadd.f32 %v4757, 1.0
  %v4763 = vadd.f32 %v4759, 1.0
  %v4764 = vadd.f32 %v4761, 1.0
  %v4765 = vrcp.pop %v4762
  %v4766 = vmul.f32 1.0, %v4765
  %v4767 = vrcp.pop %v4763
  %v4768 = vmul.f32 1.0, %v4767
  %v4769 = vrcp.pop %v4764
  %v4770 = vmul.f32 1.0, %v4769
  %v4771 = vtanh.pop %v4752
  %v4772 = vmul.f32 %v4768, %v4462
  %v4773 = vmul.f32 %v4766, %v4771
  %v4774 = vadd.f32 %v4772, %v4773
  %v4775 = vtanh.pop %v4774
  %v4776 = vmul.f32 %v4770, %v4775
  %s4777 = scalar_lea.vmem [#allocation3], 32
  %4778 = vst [vmem:[%s4777] sm:$0xff] %v4776
  %s4779 = smul.u32 5, 4
  %s4780 = smul.addr %s4779, 8
  %s4781 = scalar_lea.vmem [#allocation4], %s4780
  %v4782 = vld [vmem:[%s4781] sm:$0xff]
  %v4783 = vld [vmem:[%s4781 + $0x8] sm:$0xff]
  %v4784 = vld [vmem:[%s4781 + $0x10] sm:$0xff]
  %v4785 = vld [vmem:[%s4781 + $0x18] sm:$0xff]
  %v4786 = vpack.c.bf16 %v4776, %v4776
  %v4787 = vld [vmem:[%s5] sm:$0xff]
  %v4788 = vld [vmem:[%s5 + $0x8] sm:$0xff]
  %v4789 = vld [vmem:[%s5 + $0x10] sm:$0xff]
  %v4790 = vld [vmem:[%s5 + $0x18] sm:$0xff]
  %v4791 = vld [vmem:[%s5 + $0x20] sm:$0xff]
  %v4792 = vld [vmem:[%s5 + $0x28] sm:$0xff]
  %v4793 = vld [vmem:[%s5 + $0x30] sm:$0xff]
  %v4794 = vld [vmem:[%s5 + $0x38] sm:$0xff]
  %v4795 = vld [vmem:[%s5 + $0x40] sm:$0xff]
  %v4796 = vld [vmem:[%s5 + $0x48] sm:$0xff]
  %v4797 = vld [vmem:[%s5 + $0x50] sm:$0xff]
  %v4798 = vld [vmem:[%s5 + $0x58] sm:$0xff]
  %v4799 = vld [vmem:[%s5 + $0x60] sm:$0xff]
  %v4800 = vld [vmem:[%s5 + $0x68] sm:$0xff]
  %v4801 = vld [vmem:[%s5 + $0x70] sm:$0xff]
  %v4802 = vld [vmem:[%s5 + $0x78] sm:$0xff]
  %v4803 = vld [vmem:[%s5 + $0x80] sm:$0xff]
  %v4804 = vld [vmem:[%s5 + $0x88] sm:$0xff]
  %v4805 = vld [vmem:[%s5 + $0x90] sm:$0xff]
  %v4806 = vld [vmem:[%s5 + $0x98] sm:$0xff]
  %v4807 = vld [vmem:[%s5 + $0xa0] sm:$0xff]
  %v4808 = vld [vmem:[%s5 + $0xa8] sm:$0xff]
  %v4809 = vld [vmem:[%s5 + $0xb0] sm:$0xff]
  %v4810 = vld [vmem:[%s5 + $0xb8] sm:$0xff]
  %v4811 = vld [vmem:[%s5 + $0xc0] sm:$0xff]
  %v4812 = vld [vmem:[%s5 + $0xc8] sm:$0xff]
  %v4813 = vld [vmem:[%s5 + $0xd0] sm:$0xff]
  %v4814 = vld [vmem:[%s5 + $0xd8] sm:$0xff]
  %v4815 = vld [vmem:[%s5 + $0xe0] sm:$0xff]
  %v4816 = vld [vmem:[%s5 + $0xe8] sm:$0xff]
  %v4817 = vld [vmem:[%s5 + $0xf0] sm:$0xff]
  %v4818 = vld [vmem:[%s5 + $0xf8] sm:$0xff]
  %v4851 = vunpack.c.l.b16 %v4787
  %v4852 = vunpack.c.h.b16 %v4787
  %v4853 = vunpack.c.l.b16 %v4788
  %v4854 = vunpack.c.h.b16 %v4788
  %v4855 = vunpack.c.l.b16 %v4789
  %v4856 = vunpack.c.h.b16 %v4789
  %v4857 = vunpack.c.l.b16 %v4790
  %v4858 = vunpack.c.h.b16 %v4790
  %v4859 = vunpack.c.l.b16 %v4791
  %v4860 = vunpack.c.h.b16 %v4791
  %v4861 = vunpack.c.l.b16 %v4792
  %v4862 = vunpack.c.h.b16 %v4792
  %v4863 = vunpack.c.l.b16 %v4793
  %v4864 = vunpack.c.h.b16 %v4793
  %v4865 = vunpack.c.l.b16 %v4794
  %v4866 = vunpack.c.h.b16 %v4794
  %v4867 = vunpack.c.l.b16 %v4795
  %v4868 = vunpack.c.h.b16 %v4795
  %v4869 = vunpack.c.l.b16 %v4796
  %v4870 = vunpack.c.h.b16 %v4796
  %v4871 = vunpack.c.l.b16 %v4797
  %v4872 = vunpack.c.h.b16 %v4797
  %v4873 = vunpack.c.l.b16 %v4798
  %v4874 = vunpack.c.h.b16 %v4798
  %v4875 = vunpack.c.l.b16 %v4799
  %v4876 = vunpack.c.h.b16 %v4799
  %v4877 = vunpack.c.l.b16 %v4800
  %v4878 = vunpack.c.h.b16 %v4800
  %v4879 = vunpack.c.l.b16 %v4801
  %v4880 = vunpack.c.h.b16 %v4801
  %v4881 = vunpack.c.l.b16 %v4802
  %v4882 = vunpack.c.h.b16 %v4802
  %v4883 = vunpack.c.l.b16 %v4803
  %v4884 = vunpack.c.h.b16 %v4803
  %v4885 = vunpack.c.l.b16 %v4804
  %v4886 = vunpack.c.h.b16 %v4804
  %v4887 = vunpack.c.l.b16 %v4805
  %v4888 = vunpack.c.h.b16 %v4805
  %v4889 = vunpack.c.l.b16 %v4806
  %v4890 = vunpack.c.h.b16 %v4806
  %v4891 = vunpack.c.l.b16 %v4807
  %v4892 = vunpack.c.h.b16 %v4807
  %v4893 = vunpack.c.l.b16 %v4808
  %v4894 = vunpack.c.h.b16 %v4808
  %v4895 = vunpack.c.l.b16 %v4809
  %v4896 = vunpack.c.h.b16 %v4809
  %v4897 = vunpack.c.l.b16 %v4810
  %v4898 = vunpack.c.h.b16 %v4810
  %v4899 = vunpack.c.l.b16 %v4811
  %v4900 = vunpack.c.h.b16 %v4811
  %v4901 = vunpack.c.l.b16 %v4812
  %v4902 = vunpack.c.h.b16 %v4812
  %v4903 = vunpack.c.l.b16 %v4813
  %v4904 = vunpack.c.h.b16 %v4813
  %v4905 = vunpack.c.l.b16 %v4814
  %v4906 = vunpack.c.h.b16 %v4814
  %v4907 = vunpack.c.l.b16 %v4815
  %v4908 = vunpack.c.h.b16 %v4815
  %v4909 = vunpack.c.l.b16 %v4816
  %v4910 = vunpack.c.h.b16 %v4816
  %v4911 = vunpack.c.l.b16 %v4817
  %v4912 = vunpack.c.h.b16 %v4817
  %v4913 = vunpack.c.l.b16 %v4818
  %v4914 = vunpack.c.h.b16 %v4818
  %v4915 = vpack.c.b16 %v4855, %v4851
  %v4916 = vpack.c.b16 %v4856, %v4852
  %v4917 = vpack.c.b16 %v4857, %v4853
  %v4918 = vpack.c.b16 %v4858, %v4854
  %v4919 = vpack.c.b16 %v4863, %v4859
  %v4920 = vpack.c.b16 %v4864, %v4860
  %v4921 = vpack.c.b16 %v4865, %v4861
  %v4922 = vpack.c.b16 %v4866, %v4862
  %v4923 = vpack.c.b16 %v4871, %v4867
  %v4924 = vpack.c.b16 %v4872, %v4868
  %v4925 = vpack.c.b16 %v4873, %v4869
  %v4926 = vpack.c.b16 %v4874, %v4870
  %v4927 = vpack.c.b16 %v4879, %v4875
  %v4928 = vpack.c.b16 %v4880, %v4876
  %v4929 = vpack.c.b16 %v4881, %v4877
  %v4930 = vpack.c.b16 %v4882, %v4878
  %v4931 = vpack.c.b16 %v4887, %v4883
  %v4932 = vpack.c.b16 %v4888, %v4884
  %v4933 = vpack.c.b16 %v4889, %v4885
  %v4934 = vpack.c.b16 %v4890, %v4886
  %v4935 = vpack.c.b16 %v4895, %v4891
  %v4936 = vpack.c.b16 %v4896, %v4892
  %v4937 = vpack.c.b16 %v4897, %v4893
  %v4938 = vpack.c.b16 %v4898, %v4894
  %v4939 = vpack.c.b16 %v4903, %v4899
  %v4940 = vpack.c.b16 %v4904, %v4900
  %v4941 = vpack.c.b16 %v4905, %v4901
  %v4942 = vpack.c.b16 %v4906, %v4902
  %v4943 = vpack.c.b16 %v4911, %v4907
  %v4944 = vpack.c.b16 %v4912, %v4908
  %v4945 = vpack.c.b16 %v4913, %v4909
  %v4946 = vpack.c.b16 %v4914, %v4910
  %4979 = vmatprep.subr.bf16.mxu0 %v4944
  %4980 = vmatpush1.bf16.msra.mxu0 %v4943
  %4981 = vmatprep.subr.bf16.mxu0 %v4940
  %4982 = vmatpush1.bf16.msra.mxu0 %v4939
  %4983 = vmatprep.subr.bf16.mxu0 %v4936
  %4984 = vmatpush1.bf16.msra.mxu0 %v4935
  %4985 = vmatprep.subr.bf16.mxu0 %v4932
  %4986 = vmatpush1.bf16.msra.mxu0 %v4931
  %4987 = vmatprep.subr.bf16.mxu0 %v4928
  %4988 = vmatpush1.bf16.msra.mxu0 %v4927
  %4989 = vmatprep.subr.bf16.mxu0 %v4924
  %4990 = vmatpush1.bf16.msra.mxu0 %v4923
  %4991 = vmatprep.subr.bf16.mxu0 %v4920
  %4992 = vmatpush1.bf16.msra.mxu0 %v4919
  %4993 = vmatprep.subr.bf16.mxu0 %v4916
  %4994 = vmatpush1.bf16.msra.mxu0 %v4915
  %4995 = vmatprep.subr.bf16.mxu0 0
  %4996 = vmatpush2.bf16.msra.mxu0 0
  %4997 = vmatprep.subr.bf16.mxu0 0
  %4998 = vmatpush2.bf16.msra.mxu0 0
  %4999 = vmatprep.subr.bf16.mxu0 0
  %5000 = vmatpush2.bf16.msra.mxu0 0
  %5001 = vmatprep.subr.bf16.mxu0 0
  %5002 = vmatpush2.bf16.msra.mxu0 0
  %5003 = vmatprep.subr.bf16.mxu0 0
  %5004 = vmatpush2.bf16.msra.mxu0 0
  %5005 = vmatprep.subr.bf16.mxu0 0
  %5006 = vmatpush2.bf16.msra.mxu0 0
  %5007 = vmatprep.subr.bf16.mxu0 0
  %5008 = vmatpush2.bf16.msra.mxu0 0
  %5009 = vmatprep.subr.bf16.mxu0 0
  %5010 = vmatpush2.bf16.msra.mxu0 0
  %5011 = vmatprep.mubr.bf16.mxu0 0
  %5012 = vmatmul.mubr.bf16.gmra.mxu0 %v4786
  %v5013 = vpop.f32.mrf.mxu0
  %v5014 = vadd.f32 0.0, %v5013
  %v5015 = vpop.f32.mrf.mxu0
  %v5016 = vadd.f32 0.0, %v5015
  %v5017 = vpop.f32.mrf.mxu0
  %v5018 = vpop.f32.mrf.mxu0
  %5019 = vdwg.mxu0
  %5020 = vmatprep.subr.bf16.mxu0 %v4946
  %5021 = vmatpush1.bf16.msra.mxu0 %v4945
  %5022 = vmatprep.subr.bf16.mxu0 %v4942
  %5023 = vmatpush1.bf16.msra.mxu0 %v4941
  %5024 = vmatprep.subr.bf16.mxu0 %v4938
  %5025 = vmatpush1.bf16.msra.mxu0 %v4937
  %5026 = vmatprep.subr.bf16.mxu0 %v4934
  %5027 = vmatpush1.bf16.msra.mxu0 %v4933
  %5028 = vmatprep.subr.bf16.mxu0 %v4930
  %5029 = vmatpush1.bf16.msra.mxu0 %v4929
  %5030 = vmatprep.subr.bf16.mxu0 %v4926
  %5031 = vmatpush1.bf16.msra.mxu0 %v4925
  %5032 = vmatprep.subr.bf16.mxu0 %v4922
  %5033 = vmatpush1.bf16.msra.mxu0 %v4921
  %5034 = vmatprep.subr.bf16.mxu0 %v4918
  %5035 = vmatpush1.bf16.msra.mxu0 %v4917
  %5036 = vmatprep.subr.bf16.mxu0 0
  %5037 = vmatpush2.bf16.msra.mxu0 0
  %5038 = vmatprep.subr.bf16.mxu0 0
  %5039 = vmatpush2.bf16.msra.mxu0 0
  %5040 = vmatprep.subr.bf16.mxu0 0
  %5041 = vmatpush2.bf16.msra.mxu0 0
  %5042 = vmatprep.subr.bf16.mxu0 0
  %5043 = vmatpush2.bf16.msra.mxu0 0
  %5044 = vmatprep.subr.bf16.mxu0 0
  %5045 = vmatpush2.bf16.msra.mxu0 0
  %5046 = vmatprep.subr.bf16.mxu0 0
  %5047 = vmatpush2.bf16.msra.mxu0 0
  %5048 = vmatprep.subr.bf16.mxu0 0
  %5049 = vmatpush2.bf16.msra.mxu0 0
  %5050 = vmatprep.subr.bf16.mxu0 0
  %5051 = vmatpush2.bf16.msra.mxu0 0
  %5052 = vmatprep.mubr.bf16.mxu0 0
  %5053 = vmatmul.mubr.bf16.gmra.mxu0 %v4786
  %v5054 = vpop.f32.mrf.mxu0
  %v5055 = vadd.f32 0.0, %v5054
  %v5056 = vpop.f32.mrf.mxu0
  %v5057 = vadd.f32 0.0, %v5056
  %v5058 = vpop.f32.mrf.mxu0
  %v5059 = vpop.f32.mrf.mxu0
  %5060 = vdwg.mxu0
  %v5061 = vadd.f32 %v4782, %v5014
  %v5062 = vadd.f32 %v4783, %v5016
  %v5063 = vadd.f32 %v4784, %v5055
  %v5064 = vadd.f32 %v4785, %v5057
  %v5065 = vxor.u32 %v5061, 2147483648
  %v5066 = vxor.u32 %v5062, 2147483648
  %v5067 = vxor.u32 %v5063, 2147483648
  %v5068 = vmul.f32 %v5065, 1.442695
  %v5069 = vpow.pop %v5068
  %v5070 = vmul.f32 %v5066, 1.442695
  %v5071 = vpow.pop %v5070
  %v5072 = vmul.f32 %v5067, 1.442695
  %v5073 = vpow.pop %v5072
  %v5074 = vadd.f32 %v5069, 1.0
  %v5075 = vadd.f32 %v5071, 1.0
  %v5076 = vadd.f32 %v5073, 1.0
  %v5077 = vrcp.pop %v5074
  %v5078 = vmul.f32 1.0, %v5077
  %v5079 = vrcp.pop %v5075
  %v5080 = vmul.f32 1.0, %v5079
  %v5081 = vrcp.pop %v5076
  %v5082 = vmul.f32 1.0, %v5081
  %v5083 = vtanh.pop %v5064
  %v5084 = vmul.f32 %v5080, %v4774
  %v5085 = vmul.f32 %v5078, %v5083
  %v5086 = vadd.f32 %v5084, %v5085
  %v5087 = vtanh.pop %v5086
  %v5088 = vmul.f32 %v5082, %v5087
  %s5089 = scalar_lea.vmem [#allocation3], 40
  %5090 = vst [vmem:[%s5089] sm:$0xff] %v5088
  %s5091 = smul.u32 6, 4
  %s5092 = smul.addr %s5091, 8
  %s5093 = scalar_lea.vmem [#allocation4], %s5092
  %v5094 = vld [vmem:[%s5093] sm:$0xff]
  %v5095 = vld [vmem:[%s5093 + $0x8] sm:$0xff]
  %v5096 = vld [vmem:[%s5093 + $0x10] sm:$0xff]
  %v5097 = vld [vmem:[%s5093 + $0x18] sm:$0xff]
  %v5098 = vpack.c.bf16 %v5088, %v5088
  %v5099 = vld [vmem:[%s5] sm:$0xff]
  %v5100 = vld [vmem:[%s5 + $0x8] sm:$0xff]
  %v5101 = vld [vmem:[%s5 + $0x10] sm:$0xff]
  %v5102 = vld [vmem:[%s5 + $0x18] sm:$0xff]
  %v5103 = vld [vmem:[%s5 + $0x20] sm:$0xff]
  %v5104 = vld [vmem:[%s5 + $0x28] sm:$0xff]
  %v5105 = vld [vmem:[%s5 + $0x30] sm:$0xff]
  %v5106 = vld [vmem:[%s5 + $0x38] sm:$0xff]
  %v5107 = vld [vmem:[%s5 + $0x40] sm:$0xff]
  %v5108 = vld [vmem:[%s5 + $0x48] sm:$0xff]
  %v5109 = vld [vmem:[%s5 + $0x50] sm:$0xff]
  %v5110 = vld [vmem:[%s5 + $0x58] sm:$0xff]
  %v5111 = vld [vmem:[%s5 + $0x60] sm:$0xff]
  %v5112 = vld [vmem:[%s5 + $0x68] sm:$0xff]
  %v5113 = vld [vmem:[%s5 + $0x70] sm:$0xff]
  %v5114 = vld [vmem:[%s5 + $0x78] sm:$0xff]
  %v5115 = vld [vmem:[%s5 + $0x80] sm:$0xff]
  %v5116 = vld [vmem:[%s5 + $0x88] sm:$0xff]
  %v5117 = vld [vmem:[%s5 + $0x90] sm:$0xff]
  %v5118 = vld [vmem:[%s5 + $0x98] sm:$0xff]
  %v5119 = vld [vmem:[%s5 + $0xa0] sm:$0xff]
  %v5120 = vld [vmem:[%s5 + $0xa8] sm:$0xff]
  %v5121 = vld [vmem:[%s5 + $0xb0] sm:$0xff]
  %v5122 = vld [vmem:[%s5 + $0xb8] sm:$0xff]
  %v5123 = vld [vmem:[%s5 + $0xc0] sm:$0xff]
  %v5124 = vld [vmem:[%s5 + $0xc8] sm:$0xff]
  %v5125 = vld [vmem:[%s5 + $0xd0] sm:$0xff]
  %v5126 = vld [vmem:[%s5 + $0xd8] sm:$0xff]
  %v5127 = vld [vmem:[%s5 + $0xe0] sm:$0xff]
  %v5128 = vld [vmem:[%s5 + $0xe8] sm:$0xff]
  %v5129 = vld [vmem:[%s5 + $0xf0] sm:$0xff]
  %v5130 = vld [vmem:[%s5 + $0xf8] sm:$0xff]
  %v5163 = vunpack.c.l.b16 %v5099
  %v5164 = vunpack.c.h.b16 %v5099
  %v5165 = vunpack.c.l.b16 %v5100
  %v5166 = vunpack.c.h.b16 %v5100
  %v5167 = vunpack.c.l.b16 %v5101
  %v5168 = vunpack.c.h.b16 %v5101
  %v5169 = vunpack.c.l.b16 %v5102
  %v5170 = vunpack.c.h.b16 %v5102
  %v5171 = vunpack.c.l.b16 %v5103
  %v5172 = vunpack.c.h.b16 %v5103
  %v5173 = vunpack.c.l.b16 %v5104
  %v5174 = vunpack.c.h.b16 %v5104
  %v5175 = vunpack.c.l.b16 %v5105
  %v5176 = vunpack.c.h.b16 %v5105
  %v5177 = vunpack.c.l.b16 %v5106
  %v5178 = vunpack.c.h.b16 %v5106
  %v5179 = vunpack.c.l.b16 %v5107
  %v5180 = vunpack.c.h.b16 %v5107
  %v5181 = vunpack.c.l.b16 %v5108
  %v5182 = vunpack.c.h.b16 %v5108
  %v5183 = vunpack.c.l.b16 %v5109
  %v5184 = vunpack.c.h.b16 %v5109
  %v5185 = vunpack.c.l.b16 %v5110
  %v5186 = vunpack.c.h.b16 %v5110
  %v5187 = vunpack.c.l.b16 %v5111
  %v5188 = vunpack.c.h.b16 %v5111
  %v5189 = vunpack.c.l.b16 %v5112
  %v5190 = vunpack.c.h.b16 %v5112
  %v5191 = vunpack.c.l.b16 %v5113
  %v5192 = vunpack.c.h.b16 %v5113
  %v5193 = vunpack.c.l.b16 %v5114
  %v5194 = vunpack.c.h.b16 %v5114
  %v5195 = vunpack.c.l.b16 %v5115
  %v5196 = vunpack.c.h.b16 %v5115
  %v5197 = vunpack.c.l.b16 %v5116
  %v5198 = vunpack.c.h.b16 %v5116
  %v5199 = vunpack.c.l.b16 %v5117
  %v5200 = vunpack.c.h.b16 %v5117
  %v5201 = vunpack.c.l.b16 %v5118
  %v5202 = vunpack.c.h.b16 %v5118
  %v5203 = vunpack.c.l.b16 %v5119
  %v5204 = vunpack.c.h.b16 %v5119
  %v5205 = vunpack.c.l.b16 %v5120
  %v5206 = vunpack.c.h.b16 %v5120
  %v5207 = vunpack.c.l.b16 %v5121
  %v5208 = vunpack.c.h.b16 %v5121
  %v5209 = vunpack.c.l.b16 %v5122
  %v5210 = vunpack.c.h.b16 %v5122
  %v5211 = vunpack.c.l.b16 %v5123
  %v5212 = vunpack.c.h.b16 %v5123
  %v5213 = vunpack.c.l.b16 %v5124
  %v5214 = vunpack.c.h.b16 %v5124
  %v5215 = vunpack.c.l.b16 %v5125
  %v5216 = vunpack.c.h.b16 %v5125
  %v5217 = vunpack.c.l.b16 %v5126
  %v5218 = vunpack.c.h.b16 %v5126
  %v5219 = vunpack.c.l.b16 %v5127
  %v5220 = vunpack.c.h.b16 %v5127
  %v5221 = vunpack.c.l.b16 %v5128
  %v5222 = vunpack.c.h.b16 %v5128
  %v5223 = vunpack.c.l.b16 %v5129
  %v5224 = vunpack.c.h.b16 %v5129
  %v5225 = vunpack.c.l.b16 %v5130
  %v5226 = vunpack.c.h.b16 %v5130
  %v5227 = vpack.c.b16 %v5167, %v5163
  %v5228 = vpack.c.b16 %v5168, %v5164
  %v5229 = vpack.c.b16 %v5169, %v5165
  %v5230 = vpack.c.b16 %v5170, %v5166
  %v5231 = vpack.c.b16 %v5175, %v5171
  %v5232 = vpack.c.b16 %v5176, %v5172
  %v5233 = vpack.c.b16 %v5177, %v5173
  %v5234 = vpack.c.b16 %v5178, %v5174
  %v5235 = vpack.c.b16 %v5183, %v5179
  %v5236 = vpack.c.b16 %v5184, %v5180
  %v5237 = vpack.c.b16 %v5185, %v5181
  %v5238 = vpack.c.b16 %v5186, %v5182
  %v5239 = vpack.c.b16 %v5191, %v5187
  %v5240 = vpack.c.b16 %v5192, %v5188
  %v5241 = vpack.c.b16 %v5193, %v5189
  %v5242 = vpack.c.b16 %v5194, %v5190
  %v5243 = vpack.c.b16 %v5199, %v5195
  %v5244 = vpack.c.b16 %v5200, %v5196
  %v5245 = vpack.c.b16 %v5201, %v5197
  %v5246 = vpack.c.b16 %v5202, %v5198
  %v5247 = vpack.c.b16 %v5207, %v5203
  %v5248 = vpack.c.b16 %v5208, %v5204
  %v5249 = vpack.c.b16 %v5209, %v5205
  %v5250 = vpack.c.b16 %v5210, %v5206
  %v5251 = vpack.c.b16 %v5215, %v5211
  %v5252 = vpack.c.b16 %v5216, %v5212
  %v5253 = vpack.c.b16 %v5217, %v5213
  %v5254 = vpack.c.b16 %v5218, %v5214
  %v5255 = vpack.c.b16 %v5223, %v5219
  %v5256 = vpack.c.b16 %v5224, %v5220
  %v5257 = vpack.c.b16 %v5225, %v5221
  %v5258 = vpack.c.b16 %v5226, %v5222
  %5291 = vmatprep.subr.bf16.mxu0 %v5256
  %5292 = vmatpush1.bf16.msra.mxu0 %v5255
  %5293 = vmatprep.subr.bf16.mxu0 %v5252
  %5294 = vmatpush1.bf16.msra.mxu0 %v5251
  %5295 = vmatprep.subr.bf16.mxu0 %v5248
  %5296 = vmatpush1.bf16.msra.mxu0 %v5247
  %5297 = vmatprep.subr.bf16.mxu0 %v5244
  %5298 = vmatpush1.bf16.msra.mxu0 %v5243
  %5299 = vmatprep.subr.bf16.mxu0 %v5240
  %5300 = vmatpush1.bf16.msra.mxu0 %v5239
  %5301 = vmatprep.subr.bf16.mxu0 %v5236
  %5302 = vmatpush1.bf16.msra.mxu0 %v5235
  %5303 = vmatprep.subr.bf16.mxu0 %v5232
  %5304 = vmatpush1.bf16.msra.mxu0 %v5231
  %5305 = vmatprep.subr.bf16.mxu0 %v5228
  %5306 = vmatpush1.bf16.msra.mxu0 %v5227
  %5307 = vmatprep.subr.bf16.mxu0 0
  %5308 = vmatpush2.bf16.msra.mxu0 0
  %5309 = vmatprep.subr.bf16.mxu0 0
  %5310 = vmatpush2.bf16.msra.mxu0 0
  %5311 = vmatprep.subr.bf16.mxu0 0
  %5312 = vmatpush2.bf16.msra.mxu0 0
  %5313 = vmatprep.subr.bf16.mxu0 0
  %5314 = vmatpush2.bf16.msra.mxu0 0
  %5315 = vmatprep.subr.bf16.mxu0 0
  %5316 = vmatpush2.bf16.msra.mxu0 0
  %5317 = vmatprep.subr.bf16.mxu0 0
  %5318 = vmatpush2.bf16.msra.mxu0 0
  %5319 = vmatprep.subr.bf16.mxu0 0
  %5320 = vmatpush2.bf16.msra.mxu0 0
  %5321 = vmatprep.subr.bf16.mxu0 0
  %5322 = vmatpush2.bf16.msra.mxu0 0
  %5323 = vmatprep.mubr.bf16.mxu0 0
  %5324 = vmatmul.mubr.bf16.gmra.mxu0 %v5098
  %v5325 = vpop.f32.mrf.mxu0
  %v5326 = vadd.f32 0.0, %v5325
  %v5327 = vpop.f32.mrf.mxu0
  %v5328 = vadd.f32 0.0, %v5327
  %v5329 = vpop.f32.mrf.mxu0
  %v5330 = vpop.f32.mrf.mxu0
  %5331 = vdwg.mxu0
  %5332 = vmatprep.subr.bf16.mxu0 %v5258
  %5333 = vmatpush1.bf16.msra.mxu0 %v5257
  %5334 = vmatprep.subr.bf16.mxu0 %v5254
  %5335 = vmatpush1.bf16.msra.mxu0 %v5253
  %5336 = vmatprep.subr.bf16.mxu0 %v5250
  %5337 = vmatpush1.bf16.msra.mxu0 %v5249
  %5338 = vmatprep.subr.bf16.mxu0 %v5246
  %5339 = vmatpush1.bf16.msra.mxu0 %v5245
  %5340 = vmatprep.subr.bf16.mxu0 %v5242
  %5341 = vmatpush1.bf16.msra.mxu0 %v5241
  %5342 = vmatprep.subr.bf16.mxu0 %v5238
  %5343 = vmatpush1.bf16.msra.mxu0 %v5237
  %5344 = vmatprep.subr.bf16.mxu0 %v5234
  %5345 = vmatpush1.bf16.msra.mxu0 %v5233
  %5346 = vmatprep.subr.bf16.mxu0 %v5230
  %5347 = vmatpush1.bf16.msra.mxu0 %v5229
  %5348 = vmatprep.subr.bf16.mxu0 0
  %5349 = vmatpush2.bf16.msra.mxu0 0
  %5350 = vmatprep.subr.bf16.mxu0 0
  %5351 = vmatpush2.bf16.msra.mxu0 0
  %5352 = vmatprep.subr.bf16.mxu0 0
  %5353 = vmatpush2.bf16.msra.mxu0 0
  %5354 = vmatprep.subr.bf16.mxu0 0
  %5355 = vmatpush2.bf16.msra.mxu0 0
  %5356 = vmatprep.subr.bf16.mxu0 0
  %5357 = vmatpush2.bf16.msra.mxu0 0
  %5358 = vmatprep.subr.bf16.mxu0 0
  %5359 = vmatpush2.bf16.msra.mxu0 0
  %5360 = vmatprep.subr.bf16.mxu0 0
  %5361 = vmatpush2.bf16.msra.mxu0 0
  %5362 = vmatprep.subr.bf16.mxu0 0
  %5363 = vmatpush2.bf16.msra.mxu0 0
  %5364 = vmatprep.mubr.bf16.mxu0 0
  %5365 = vmatmul.mubr.bf16.gmra.mxu0 %v5098
  %v5366 = vpop.f32.mrf.mxu0
  %v5367 = vadd.f32 0.0, %v5366
  %v5368 = vpop.f32.mrf.mxu0
  %v5369 = vadd.f32 0.0, %v5368
  %v5370 = vpop.f32.mrf.mxu0
  %v5371 = vpop.f32.mrf.mxu0
  %5372 = vdwg.mxu0
  %v5373 = vadd.f32 %v5094, %v5326
  %v5374 = vadd.f32 %v5095, %v5328
  %v5375 = vadd.f32 %v5096, %v5367
  %v5376 = vadd.f32 %v5097, %v5369
  %v5377 = vxor.u32 %v5373, 2147483648
  %v5378 = vxor.u32 %v5374, 2147483648
  %v5379 = vxor.u32 %v5375, 2147483648
  %v5380 = vmul.f32 %v5377, 1.442695
  %v5381 = vpow.pop %v5380
  %v5382 = vmul.f32 %v5378, 1.442695
  %v5383 = vpow.pop %v5382
  %v5384 = vmul.f32 %v5379, 1.442695
  %v5385 = vpow.pop %v5384
  %v5386 = vadd.f32 %v5381, 1.0
  %v5387 = vadd.f32 %v5383, 1.0
  %v5388 = vadd.f32 %v5385, 1.0
  %v5389 = vrcp.pop %v5386
  %v5390 = vmul.f32 1.0, %v5389
  %v5391 = vrcp.pop %v5387
  %v5392 = vmul.f32 1.0, %v5391
  %v5393 = vrcp.pop %v5388
  %v5394 = vmul.f32 1.0, %v5393
  %v5395 = vtanh.pop %v5376
  %v5396 = vmul.f32 %v5392, %v5086
  %v5397 = vmul.f32 %v5390, %v5395
  %v5398 = vadd.f32 %v5396, %v5397
  %v5399 = vtanh.pop %v5398
  %v5400 = vmul.f32 %v5394, %v5399
  %s5401 = scalar_lea.vmem [#allocation3], 48
  %5402 = vst [vmem:[%s5401] sm:$0xff] %v5400
  %s5403 = smul.u32 7, 4
  %s5404 = smul.addr %s5403, 8
  %s5405 = scalar_lea.vmem [#allocation4], %s5404
  %v5406 = vld [vmem:[%s5405] sm:$0xff]
  %v5407 = vld [vmem:[%s5405 + $0x8] sm:$0xff]
  %v5408 = vld [vmem:[%s5405 + $0x10] sm:$0xff]
  %v5409 = vld [vmem:[%s5405 + $0x18] sm:$0xff]
  %v5410 = vpack.c.bf16 %v5400, %v5400
  %v5411 = vld [vmem:[%s5] sm:$0xff]
  %v5412 = vld [vmem:[%s5 + $0x8] sm:$0xff]
  %v5413 = vld [vmem:[%s5 + $0x10] sm:$0xff]
  %v5414 = vld [vmem:[%s5 + $0x18] sm:$0xff]
  %v5415 = vld [vmem:[%s5 + $0x20] sm:$0xff]
  %v5416 = vld [vmem:[%s5 + $0x28] sm:$0xff]
  %v5417 = vld [vmem:[%s5 + $0x30] sm:$0xff]
  %v5418 = vld [vmem:[%s5 + $0x38] sm:$0xff]
  %v5419 = vld [vmem:[%s5 + $0x40] sm:$0xff]
  %v5420 = vld [vmem:[%s5 + $0x48] sm:$0xff]
  %v5421 = vld [vmem:[%s5 + $0x50] sm:$0xff]
  %v5422 = vld [vmem:[%s5 + $0x58] sm:$0xff]
  %v5423 = vld [vmem:[%s5 + $0x60] sm:$0xff]
  %v5424 = vld [vmem:[%s5 + $0x68] sm:$0xff]
  %v5425 = vld [vmem:[%s5 + $0x70] sm:$0xff]
  %v5426 = vld [vmem:[%s5 + $0x78] sm:$0xff]
  %v5427 = vld [vmem:[%s5 + $0x80] sm:$0xff]
  %v5428 = vld [vmem:[%s5 + $0x88] sm:$0xff]
  %v5429 = vld [vmem:[%s5 + $0x90] sm:$0xff]
  %v5430 = vld [vmem:[%s5 + $0x98] sm:$0xff]
  %v5431 = vld [vmem:[%s5 + $0xa0] sm:$0xff]
  %v5432 = vld [vmem:[%s5 + $0xa8] sm:$0xff]
  %v5433 = vld [vmem:[%s5 + $0xb0] sm:$0xff]
  %v5434 = vld [vmem:[%s5 + $0xb8] sm:$0xff]
  %v5435 = vld [vmem:[%s5 + $0xc0] sm:$0xff]
  %v5436 = vld [vmem:[%s5 + $0xc8] sm:$0xff]
  %v5437 = vld [vmem:[%s5 + $0xd0] sm:$0xff]
  %v5438 = vld [vmem:[%s5 + $0xd8] sm:$0xff]
  %v5439 = vld [vmem:[%s5 + $0xe0] sm:$0xff]
  %v5440 = vld [vmem:[%s5 + $0xe8] sm:$0xff]
  %v5441 = vld [vmem:[%s5 + $0xf0] sm:$0xff]
  %v5442 = vld [vmem:[%s5 + $0xf8] sm:$0xff]
  %v5475 = vunpack.c.l.b16 %v5411
  %v5476 = vunpack.c.h.b16 %v5411
  %v5477 = vunpack.c.l.b16 %v5412
  %v5478 = vunpack.c.h.b16 %v5412
  %v5479 = vunpack.c.l.b16 %v5413
  %v5480 = vunpack.c.h.b16 %v5413
  %v5481 = vunpack.c.l.b16 %v5414
  %v5482 = vunpack.c.h.b16 %v5414
  %v5483 = vunpack.c.l.b16 %v5415
  %v5484 = vunpack.c.h.b16 %v5415
  %v5485 = vunpack.c.l.b16 %v5416
  %v5486 = vunpack.c.h.b16 %v5416
  %v5487 = vunpack.c.l.b16 %v5417
  %v5488 = vunpack.c.h.b16 %v5417
  %v5489 = vunpack.c.l.b16 %v5418
  %v5490 = vunpack.c.h.b16 %v5418
  %v5491 = vunpack.c.l.b16 %v5419
  %v5492 = vunpack.c.h.b16 %v5419
  %v5493 = vunpack.c.l.b16 %v5420
  %v5494 = vunpack.c.h.b16 %v5420
  %v5495 = vunpack.c.l.b16 %v5421
  %v5496 = vunpack.c.h.b16 %v5421
  %v5497 = vunpack.c.l.b16 %v5422
  %v5498 = vunpack.c.h.b16 %v5422
  %v5499 = vunpack.c.l.b16 %v5423
  %v5500 = vunpack.c.h.b16 %v5423
  %v5501 = vunpack.c.l.b16 %v5424
  %v5502 = vunpack.c.h.b16 %v5424
  %v5503 = vunpack.c.l.b16 %v5425
  %v5504 = vunpack.c.h.b16 %v5425
  %v5505 = vunpack.c.l.b16 %v5426
  %v5506 = vunpack.c.h.b16 %v5426
  %v5507 = vunpack.c.l.b16 %v5427
  %v5508 = vunpack.c.h.b16 %v5427
  %v5509 = vunpack.c.l.b16 %v5428
  %v5510 = vunpack.c.h.b16 %v5428
  %v5511 = vunpack.c.l.b16 %v5429
  %v5512 = vunpack.c.h.b16 %v5429
  %v5513 = vunpack.c.l.b16 %v5430
  %v5514 = vunpack.c.h.b16 %v5430
  %v5515 = vunpack.c.l.b16 %v5431
  %v5516 = vunpack.c.h.b16 %v5431
  %v5517 = vunpack.c.l.b16 %v5432
  %v5518 = vunpack.c.h.b16 %v5432
  %v5519 = vunpack.c.l.b16 %v5433
  %v5520 = vunpack.c.h.b16 %v5433
  %v5521 = vunpack.c.l.b16 %v5434
  %v5522 = vunpack.c.h.b16 %v5434
  %v5523 = vunpack.c.l.b16 %v5435
  %v5524 = vunpack.c.h.b16 %v5435
  %v5525 = vunpack.c.l.b16 %v5436
  %v5526 = vunpack.c.h.b16 %v5436
  %v5527 = vunpack.c.l.b16 %v5437
  %v5528 = vunpack.c.h.b16 %v5437
  %v5529 = vunpack.c.l.b16 %v5438
  %v5530 = vunpack.c.h.b16 %v5438
  %v5531 = vunpack.c.l.b16 %v5439
  %v5532 = vunpack.c.h.b16 %v5439
  %v5533 = vunpack.c.l.b16 %v5440
  %v5534 = vunpack.c.h.b16 %v5440
  %v5535 = vunpack.c.l.b16 %v5441
  %v5536 = vunpack.c.h.b16 %v5441
  %v5537 = vunpack.c.l.b16 %v5442
  %v5538 = vunpack.c.h.b16 %v5442
  %v5539 = vpack.c.b16 %v5479, %v5475
  %v5540 = vpack.c.b16 %v5480, %v5476
  %v5541 = vpack.c.b16 %v5481, %v5477
  %v5542 = vpack.c.b16 %v5482, %v5478
  %v5543 = vpack.c.b16 %v5487, %v5483
  %v5544 = vpack.c.b16 %v5488, %v5484
  %v5545 = vpack.c.b16 %v5489, %v5485
  %v5546 = vpack.c.b16 %v5490, %v5486
  %v5547 = vpack.c.b16 %v5495, %v5491
  %v5548 = vpack.c.b16 %v5496, %v5492
  %v5549 = vpack.c.b16 %v5497, %v5493
  %v5550 = vpack.c.b16 %v5498, %v5494
  %v5551 = vpack.c.b16 %v5503, %v5499
  %v5552 = vpack.c.b16 %v5504, %v5500
  %v5553 = vpack.c.b16 %v5505, %v5501
  %v5554 = vpack.c.b16 %v5506, %v5502
  %v5555 = vpack.c.b16 %v5511, %v5507
  %v5556 = vpack.c.b16 %v5512, %v5508
  %v5557 = vpack.c.b16 %v5513, %v5509
  %v5558 = vpack.c.b16 %v5514, %v5510
  %v5559 = vpack.c.b16 %v5519, %v5515
  %v5560 = vpack.c.b16 %v5520, %v5516
  %v5561 = vpack.c.b16 %v5521, %v5517
  %v5562 = vpack.c.b16 %v5522, %v5518
  %v5563 = vpack.c.b16 %v5527, %v5523
  %v5564 = vpack.c.b16 %v5528, %v5524
  %v5565 = vpack.c.b16 %v5529, %v5525
  %v5566 = vpack.c.b16 %v5530, %v5526
  %v5567 = vpack.c.b16 %v5535, %v5531
  %v5568 = vpack.c.b16 %v5536, %v5532
  %v5569 = vpack.c.b16 %v5537, %v5533
  %v5570 = vpack.c.b16 %v5538, %v5534
  %5603 = vmatprep.subr.bf16.mxu0 %v5568
  %5604 = vmatpush1.bf16.msra.mxu0 %v5567
  %5605 = vmatprep.subr.bf16.mxu0 %v5564
  %5606 = vmatpush1.bf16.msra.mxu0 %v5563
  %5607 = vmatprep.subr.bf16.mxu0 %v5560
  %5608 = vmatpush1.bf16.msra.mxu0 %v5559
  %5609 = vmatprep.subr.bf16.mxu0 %v5556
  %5610 = vmatpush1.bf16.msra.mxu0 %v5555
  %5611 = vmatprep.subr.bf16.mxu0 %v5552
  %5612 = vmatpush1.bf16.msra.mxu0 %v5551
  %5613 = vmatprep.subr.bf16.mxu0 %v5548
  %5614 = vmatpush1.bf16.msra.mxu0 %v5547
  %5615 = vmatprep.subr.bf16.mxu0 %v5544
  %5616 = vmatpush1.bf16.msra.mxu0 %v5543
  %5617 = vmatprep.subr.bf16.mxu0 %v5540
  %5618 = vmatpush1.bf16.msra.mxu0 %v5539
  %5619 = vmatprep.subr.bf16.mxu0 0
  %5620 = vmatpush2.bf16.msra.mxu0 0
  %5621 = vmatprep.subr.bf16.mxu0 0
  %5622 = vmatpush2.bf16.msra.mxu0 0
  %5623 = vmatprep.subr.bf16.mxu0 0
  %5624 = vmatpush2.bf16.msra.mxu0 0
  %5625 = vmatprep.subr.bf16.mxu0 0
  %5626 = vmatpush2.bf16.msra.mxu0 0
  %5627 = vmatprep.subr.bf16.mxu0 0
  %5628 = vmatpush2.bf16.msra.mxu0 0
  %5629 = vmatprep.subr.bf16.mxu0 0
  %5630 = vmatpush2.bf16.msra.mxu0 0
  %5631 = vmatprep.subr.bf16.mxu0 0
  %5632 = vmatpush2.bf16.msra.mxu0 0
  %5633 = vmatprep.subr.bf16.mxu0 0
  %5634 = vmatpush2.bf16.msra.mxu0 0
  %5635 = vmatprep.mubr.bf16.mxu0 0
  %5636 = vmatmul.mubr.bf16.gmra.mxu0 %v5410
  %v5637 = vpop.f32.mrf.mxu0
  %v5638 = vadd.f32 0.0, %v5637
  %v5639 = vpop.f32.mrf.mxu0
  %v5640 = vadd.f32 0.0, %v5639
  %v5641 = vpop.f32.mrf.mxu0
  %v5642 = vpop.f32.mrf.mxu0
  %5643 = vdwg.mxu0
  %5644 = vmatprep.subr.bf16.mxu0 %v5570
  %5645 = vmatpush1.bf16.msra.mxu0 %v5569
  %5646 = vmatprep.subr.bf16.mxu0 %v5566
  %5647 = vmatpush1.bf16.msra.mxu0 %v5565
  %5648 = vmatprep.subr.bf16.mxu0 %v5562
  %5649 = vmatpush1.bf16.msra.mxu0 %v5561
  %5650 = vmatprep.subr.bf16.mxu0 %v5558
  %5651 = vmatpush1.bf16.msra.mxu0 %v5557
  %5652 = vmatprep.subr.bf16.mxu0 %v5554
  %5653 = vmatpush1.bf16.msra.mxu0 %v5553
  %5654 = vmatprep.subr.bf16.mxu0 %v5550
  %5655 = vmatpush1.bf16.msra.mxu0 %v5549
  %5656 = vmatprep.subr.bf16.mxu0 %v5546
  %5657 = vmatpush1.bf16.msra.mxu0 %v5545
  %5658 = vmatprep.subr.bf16.mxu0 %v5542
  %5659 = vmatpush1.bf16.msra.mxu0 %v5541
  %5660 = vmatprep.subr.bf16.mxu0 0
  %5661 = vmatpush2.bf16.msra.mxu0 0
  %5662 = vmatprep.subr.bf16.mxu0 0
  %5663 = vmatpush2.bf16.msra.mxu0 0
  %5664 = vmatprep.subr.bf16.mxu0 0
  %5665 = vmatpush2.bf16.msra.mxu0 0
  %5666 = vmatprep.subr.bf16.mxu0 0
  %5667 = vmatpush2.bf16.msra.mxu0 0
  %5668 = vmatprep.subr.bf16.mxu0 0
  %5669 = vmatpush2.bf16.msra.mxu0 0
  %5670 = vmatprep.subr.bf16.mxu0 0
  %5671 = vmatpush2.bf16.msra.mxu0 0
  %5672 = vmatprep.subr.bf16.mxu0 0
  %5673 = vmatpush2.bf16.msra.mxu0 0
  %5674 = vmatprep.subr.bf16.mxu0 0
  %5675 = vmatpush2.bf16.msra.mxu0 0
  %5676 = vmatprep.mubr.bf16.mxu0 0
  %5677 = vmatmul.mubr.bf16.gmra.mxu0 %v5410
  %v5678 = vpop.f32.mrf.mxu0
  %v5679 = vadd.f32 0.0, %v5678
  %v5680 = vpop.f32.mrf.mxu0
  %v5681 = vadd.f32 0.0, %v5680
  %v5682 = vpop.f32.mrf.mxu0
  %v5683 = vpop.f32.mrf.mxu0
  %5684 = vdwg.mxu0
  %v5685 = vadd.f32 %v5406, %v5638
  %v5686 = vadd.f32 %v5407, %v5640
  %v5687 = vadd.f32 %v5408, %v5679
  %v5688 = vadd.f32 %v5409, %v5681
  %v5689 = vxor.u32 %v5685, 2147483648
  %v5690 = vxor.u32 %v5686, 2147483648
  %v5691 = vxor.u32 %v5687, 2147483648
  %v5692 = vmul.f32 %v5689, 1.442695
  %v5693 = vpow.pop %v5692
  %v5694 = vmul.f32 %v5690, 1.442695
  %v5695 = vpow.pop %v5694
  %v5696 = vmul.f32 %v5691, 1.442695
  %v5697 = vpow.pop %v5696
  %v5698 = vadd.f32 %v5693, 1.0
  %v5699 = vadd.f32 %v5695, 1.0
  %v5700 = vadd.f32 %v5697, 1.0
  %v5701 = vrcp.pop %v5698
  %v5702 = vmul.f32 1.0, %v5701
  %v5703 = vrcp.pop %v5699
  %v5704 = vmul.f32 1.0, %v5703
  %v5705 = vrcp.pop %v5700
  %v5706 = vmul.f32 1.0, %v5705
  %v5707 = vtanh.pop %v5688
  %v5708 = vmul.f32 %v5704, %v5398
  %v5709 = vmul.f32 %v5702, %v5707
  %v5710 = vadd.f32 %v5708, %v5709
  %v5711 = vtanh.pop %v5710
  %v5712 = vmul.f32 %v5706, %v5711
  %s5713 = scalar_lea.vmem [#allocation3], 56
  %5714 = vst [vmem:[%s5713] sm:$0xff] %v5712
  %v5715 = vld [vmem:[#allocation3] sm:$0xff]
  %v5716 = vld [vmem:[#allocation3 + $0x8] sm:$0xff]
  %v5717 = vld [vmem:[#allocation3 + $0x10] sm:$0xff]
  %v5718 = vld [vmem:[#allocation3 + $0x18] sm:$0xff]
  %v5719 = vld [vmem:[#allocation3 + $0x20] sm:$0xff]
  %v5720 = vld [vmem:[#allocation3 + $0x28] sm:$0xff]
  %v5721 = vld [vmem:[#allocation3 + $0x30] sm:$0xff]
  %v5722 = vld [vmem:[#allocation3 + $0x38] sm:$0xff]
  %v5723 = vpack.c.bf16 %v5716, %v5715
  %v5724 = vpack.c.bf16 %v5718, %v5717
  %v5725 = vpack.c.bf16 %v5720, %v5719
  %v5726 = vpack.c.bf16 %v5722, %v5721
  %v5727 = vld [vmem:[%s7] sm:$0xff]
  %v5728 = vld [vmem:[%s7 + $0x8] sm:$0xff]
  %v5729 = vld [vmem:[%s7 + $0x10] sm:$0xff]
  %v5730 = vld [vmem:[%s7 + $0x18] sm:$0xff]
  %v5731 = vld [vmem:[%s7 + $0x20] sm:$0xff]
  %v5732 = vld [vmem:[%s7 + $0x28] sm:$0xff]
  %v5733 = vld [vmem:[%s7 + $0x30] sm:$0xff]
  %v5734 = vld [vmem:[%s7 + $0x38] sm:$0xff]
  %v5735 = vld [vmem:[%s7 + $0x40] sm:$0xff]
  %v5736 = vld [vmem:[%s7 + $0x48] sm:$0xff]
  %v5737 = vld [vmem:[%s7 + $0x50] sm:$0xff]
  %v5738 = vld [vmem:[%s7 + $0x58] sm:$0xff]
  %v5739 = vld [vmem:[%s7 + $0x60] sm:$0xff]
  %v5740 = vld [vmem:[%s7 + $0x68] sm:$0xff]
  %v5741 = vld [vmem:[%s7 + $0x70] sm:$0xff]
  %v5742 = vld [vmem:[%s7 + $0x78] sm:$0xff]
  %v5743 = vld [vmem:[%s7 + $0x80] sm:$0xff]
  %v5744 = vld [vmem:[%s7 + $0x88] sm:$0xff]
  %v5745 = vld [vmem:[%s7 + $0x90] sm:$0xff]
  %v5746 = vld [vmem:[%s7 + $0x98] sm:$0xff]
  %v5747 = vld [vmem:[%s7 + $0xa0] sm:$0xff]
  %v5748 = vld [vmem:[%s7 + $0xa8] sm:$0xff]
  %v5749 = vld [vmem:[%s7 + $0xb0] sm:$0xff]
  %v5750 = vld [vmem:[%s7 + $0xb8] sm:$0xff]
  %v5751 = vld [vmem:[%s7 + $0xc0] sm:$0xff]
  %v5752 = vld [vmem:[%s7 + $0xc8] sm:$0xff]
  %v5753 = vld [vmem:[%s7 + $0xd0] sm:$0xff]
  %v5754 = vld [vmem:[%s7 + $0xd8] sm:$0xff]
  %v5755 = vld [vmem:[%s7 + $0xe0] sm:$0xff]
  %v5756 = vld [vmem:[%s7 + $0xe8] sm:$0xff]
  %v5757 = vld [vmem:[%s7 + $0xf0] sm:$0xff]
  %v5758 = vld [vmem:[%s7 + $0xf8] sm:$0xff]
  %v5759 = vld [vmem:[%s9] sm:$0xf]
  %v5761 = vlaneseq
  %v5762 = vshrl.u32 %v5761, 7
  %v5763 = vsub.s32 0, %v5762
  %v5764 = vrot.slane %v5759, %v5763
  %v5765 = vlaneseq
  %v5766 = vshrl.u32 %v5765, 7
  %v5767 = vsub.s32 1, %v5766
  %v5768 = vrot.slane %v5759, %v5767
  %v5769 = vlaneseq
  %v5770 = vshrl.u32 %v5769, 7
  %v5771 = vsub.s32 2, %v5770
  %v5772 = vrot.slane %v5759, %v5771
  %v5773 = vlaneseq
  %v5774 = vshrl.u32 %v5773, 7
  %v5775 = vsub.s32 3, %v5774
  %v5776 = vrot.slane %v5759, %v5775
  %v5813 = vunpack.c.l.b16 %v5727
  %v5814 = vunpack.c.h.b16 %v5727
  %v5815 = vunpack.c.l.b16 %v5728
  %v5816 = vunpack.c.h.b16 %v5728
  %v5817 = vunpack.c.l.b16 %v5729
  %v5818 = vunpack.c.h.b16 %v5729
  %v5819 = vunpack.c.l.b16 %v5730
  %v5820 = vunpack.c.h.b16 %v5730
  %v5821 = vunpack.c.l.b16 %v5731
  %v5822 = vunpack.c.h.b16 %v5731
  %v5823 = vunpack.c.l.b16 %v5732
  %v5824 = vunpack.c.h.b16 %v5732
  %v5825 = vunpack.c.l.b16 %v5733
  %v5826 = vunpack.c.h.b16 %v5733
  %v5827 = vunpack.c.l.b16 %v5734
  %v5828 = vunpack.c.h.b16 %v5734
  %v5829 = vunpack.c.l.b16 %v5735
  %v5830 = vunpack.c.h.b16 %v5735
  %v5831 = vunpack.c.l.b16 %v5736
  %v5832 = vunpack.c.h.b16 %v5736
  %v5833 = vunpack.c.l.b16 %v5737
  %v5834 = vunpack.c.h.b16 %v5737
  %v5835 = vunpack.c.l.b16 %v5738
  %v5836 = vunpack.c.h.b16 %v5738
  %v5837 = vunpack.c.l.b16 %v5739
  %v5838 = vunpack.c.h.b16 %v5739
  %v5839 = vunpack.c.l.b16 %v5740
  %v5840 = vunpack.c.h.b16 %v5740
  %v5841 = vunpack.c.l.b16 %v5741
  %v5842 = vunpack.c.h.b16 %v5741
  %v5843 = vunpack.c.l.b16 %v5742
  %v5844 = vunpack.c.h.b16 %v5742
  %v5845 = vunpack.c.l.b16 %v5743
  %v5846 = vunpack.c.h.b16 %v5743
  %v5847 = vunpack.c.l.b16 %v5744
  %v5848 = vunpack.c.h.b16 %v5744
  %v5849 = vunpack.c.l.b16 %v5745
  %v5850 = vunpack.c.h.b16 %v5745
  %v5851 = vunpack.c.l.b16 %v5746
  %v5852 = vunpack.c.h.b16 %v5746
  %v5853 = vunpack.c.l.b16 %v5747
  %v5854 = vunpack.c.h.b16 %v5747
  %v5855 = vunpack.c.l.b16 %v5748
  %v5856 = vunpack.c.h.b16 %v5748
  %v5857 = vunpack.c.l.b16 %v5749
  %v5858 = vunpack.c.h.b16 %v5749
  %v5859 = vunpack.c.l.b16 %v5750
  %v5860 = vunpack.c.h.b16 %v5750
  %v5861 = vunpack.c.l.b16 %v5751
  %v5862 = vunpack.c.h.b16 %v5751
  %v5863 = vunpack.c.l.b16 %v5752
  %v5864 = vunpack.c.h.b16 %v5752
  %v5865 = vunpack.c.l.b16 %v5753
  %v5866 = vunpack.c.h.b16 %v5753
  %v5867 = vunpack.c.l.b16 %v5754
  %v5868 = vunpack.c.h.b16 %v5754
  %v5869 = vunpack.c.l.b16 %v5755
  %v5870 = vunpack.c.h.b16 %v5755
  %v5871 = vunpack.c.l.b16 %v5756
  %v5872 = vunpack.c.h.b16 %v5756
  %v5873 = vunpack.c.l.b16 %v5757
  %v5874 = vunpack.c.h.b16 %v5757
  %v5875 = vunpack.c.l.b16 %v5758
  %v5876 = vunpack.c.h.b16 %v5758
  %v5877 = vpack.c.b16 %v5817, %v5813
  %v5878 = vpack.c.b16 %v5818, %v5814
  %v5879 = vpack.c.b16 %v5819, %v5815
  %v5880 = vpack.c.b16 %v5820, %v5816
  %v5881 = vpack.c.b16 %v5825, %v5821
  %v5882 = vpack.c.b16 %v5826, %v5822
  %v5883 = vpack.c.b16 %v5827, %v5823
  %v5884 = vpack.c.b16 %v5828, %v5824
  %v5885 = vpack.c.b16 %v5833, %v5829
  %v5886 = vpack.c.b16 %v5834, %v5830
  %v5887 = vpack.c.b16 %v5835, %v5831
  %v5888 = vpack.c.b16 %v5836, %v5832
  %v5889 = vpack.c.b16 %v5841, %v5837
  %v5890 = vpack.c.b16 %v5842, %v5838
  %v5891 = vpack.c.b16 %v5843, %v5839
  %v5892 = vpack.c.b16 %v5844, %v5840
  %v5893 = vpack.c.b16 %v5849, %v5845
  %v5894 = vpack.c.b16 %v5850, %v5846
  %v5895 = vpack.c.b16 %v5851, %v5847
  %v5896 = vpack.c.b16 %v5852, %v5848
  %v5897 = vpack.c.b16 %v5857, %v5853
  %v5898 = vpack.c.b16 %v5858, %v5854
  %v5899 = vpack.c.b16 %v5859, %v5855
  %v5900 = vpack.c.b16 %v5860, %v5856
  %v5901 = vpack.c.b16 %v5865, %v5861
  %v5902 = vpack.c.b16 %v5866, %v5862
  %v5903 = vpack.c.b16 %v5867, %v5863
  %v5904 = vpack.c.b16 %v5868, %v5864
  %v5905 = vpack.c.b16 %v5873, %v5869
  %v5906 = vpack.c.b16 %v5874, %v5870
  %v5907 = vpack.c.b16 %v5875, %v5871
  %v5908 = vpack.c.b16 %v5876, %v5872
  %5941 = vmatprep.subr.bf16.mxu0 %v5906
  %5942 = vmatpush1.bf16.msra.mxu0 %v5905
  %5943 = vmatprep.subr.bf16.mxu0 %v5902
  %5944 = vmatpush1.bf16.msra.mxu0 %v5901
  %5945 = vmatprep.subr.bf16.mxu0 %v5898
  %5946 = vmatpush1.bf16.msra.mxu0 %v5897
  %5947 = vmatprep.subr.bf16.mxu0 %v5894
  %5948 = vmatpush1.bf16.msra.mxu0 %v5893
  %5949 = vmatprep.subr.bf16.mxu0 %v5890
  %5950 = vmatpush1.bf16.msra.mxu0 %v5889
  %5951 = vmatprep.subr.bf16.mxu0 %v5886
  %5952 = vmatpush1.bf16.msra.mxu0 %v5885
  %5953 = vmatprep.subr.bf16.mxu0 %v5882
  %5954 = vmatpush1.bf16.msra.mxu0 %v5881
  %5955 = vmatprep.subr.bf16.mxu0 %v5878
  %5956 = vmatpush1.bf16.msra.mxu0 %v5877
  %5957 = vmatprep.subr.bf16.mxu0 0
  %5958 = vmatpush2.bf16.msra.mxu0 0
  %5959 = vmatprep.subr.bf16.mxu0 0
  %5960 = vmatpush2.bf16.msra.mxu0 0
  %5961 = vmatprep.subr.bf16.mxu0 0
  %5962 = vmatpush2.bf16.msra.mxu0 0
  %5963 = vmatprep.subr.bf16.mxu0 0
  %5964 = vmatpush2.bf16.msra.mxu0 0
  %5965 = vmatprep.subr.bf16.mxu0 0
  %5966 = vmatpush2.bf16.msra.mxu0 0
  %5967 = vmatprep.subr.bf16.mxu0 0
  %5968 = vmatpush2.bf16.msra.mxu0 0
  %5969 = vmatprep.subr.bf16.mxu0 0
  %5970 = vmatpush2.bf16.msra.mxu0 0
  %5971 = vmatprep.subr.bf16.mxu0 0
  %5972 = vmatpush2.bf16.msra.mxu0 0
  %5973 = vmatprep.mubr.bf16.mxu0 0
  %5974 = vmatmul.mubr.bf16.gmra.mxu0 %v5723
  %v5975 = vpop.f32.mrf.mxu0
  %v5976 = vadd.f32 %v5764, %v5975
  %v5977 = vpop.f32.mrf.mxu0
  %v5978 = vadd.f32 %v5768, %v5977
  %v5979 = vpop.f32.mrf.mxu0
  %v5980 = vadd.f32 %v5764, %v5979
  %v5981 = vpop.f32.mrf.mxu0
  %v5982 = vadd.f32 %v5768, %v5981
  %5983 = vmatprep.mubr.bf16.mxu0 0
  %5984 = vmatmul.mubr.bf16.gmra.mxu0 %v5724
  %v5985 = vpop.f32.mrf.mxu0
  %v5986 = vadd.f32 %v5764, %v5985
  %v5987 = vpop.f32.mrf.mxu0
  %v5988 = vadd.f32 %v5768, %v5987
  %v5989 = vpop.f32.mrf.mxu0
  %v5990 = vadd.f32 %v5764, %v5989
  %v5991 = vpop.f32.mrf.mxu0
  %v5992 = vadd.f32 %v5768, %v5991
  %5993 = vmatprep.mubr.bf16.mxu0 0
  %5994 = vmatmul.mubr.bf16.gmra.mxu0 %v5725
  %v5995 = vpop.f32.mrf.mxu0
  %v5996 = vadd.f32 %v5764, %v5995
  %v5997 = vpop.f32.mrf.mxu0
  %v5998 = vadd.f32 %v5768, %v5997
  %v5999 = vpop.f32.mrf.mxu0
  %v6000 = vadd.f32 %v5764, %v5999
  %v6001 = vpop.f32.mrf.mxu0
  %v6002 = vadd.f32 %v5768, %v6001
  %6003 = vmatprep.mubr.bf16.mxu0 0
  %6004 = vmatmul.mubr.bf16.gmra.mxu0 %v5726
  %v6005 = vpop.f32.mrf.mxu0
  %v6006 = vadd.f32 %v5764, %v6005
  %v6007 = vpop.f32.mrf.mxu0
  %v6008 = vadd.f32 %v5768, %v6007
  %v6009 = vpop.f32.mrf.mxu0
  %v6010 = vadd.f32 %v5764, %v6009
  %v6011 = vpop.f32.mrf.mxu0
  %v6012 = vadd.f32 %v5768, %v6011
  %6013 = vdwg.mxu0
  %6014 = vmatprep.subr.bf16.mxu0 %v5908
  %6015 = vmatpush1.bf16.msra.mxu0 %v5907
  %6016 = vmatprep.subr.bf16.mxu0 %v5904
  %6017 = vmatpush1.bf16.msra.mxu0 %v5903
  %6018 = vmatprep.subr.bf16.mxu0 %v5900
  %6019 = vmatpush1.bf16.msra.mxu0 %v5899
  %6020 = vmatprep.subr.bf16.mxu0 %v5896
  %6021 = vmatpush1.bf16.msra.mxu0 %v5895
  %6022 = vmatprep.subr.bf16.mxu0 %v5892
  %6023 = vmatpush1.bf16.msra.mxu0 %v5891
  %6024 = vmatprep.subr.bf16.mxu0 %v5888
  %6025 = vmatpush1.bf16.msra.mxu0 %v5887
  %6026 = vmatprep.subr.bf16.mxu0 %v5884
  %6027 = vmatpush1.bf16.msra.mxu0 %v5883
  %6028 = vmatprep.subr.bf16.mxu0 %v5880
  %6029 = vmatpush1.bf16.msra.mxu0 %v5879
  %6030 = vmatprep.subr.bf16.mxu0 0
  %6031 = vmatpush2.bf16.msra.mxu0 0
  %6032 = vmatprep.subr.bf16.mxu0 0
  %6033 = vmatpush2.bf16.msra.mxu0 0
  %6034 = vmatprep.subr.bf16.mxu0 0
  %6035 = vmatpush2.bf16.msra.mxu0 0
  %6036 = vmatprep.subr.bf16.mxu0 0
  %6037 = vmatpush2.bf16.msra.mxu0 0
  %6038 = vmatprep.subr.bf16.mxu0 0
  %6039 = vmatpush2.bf16.msra.mxu0 0
  %6040 = vmatprep.subr.bf16.mxu0 0
  %6041 = vmatpush2.bf16.msra.mxu0 0
  %6042 = vmatprep.subr.bf16.mxu0 0
  %6043 = vmatpush2.bf16.msra.mxu0 0
  %6044 = vmatprep.subr.bf16.mxu0 0
  %6045 = vmatpush2.bf16.msra.mxu0 0
  %6046 = vmatprep.mubr.bf16.mxu0 0
  %6047 = vmatmul.mubr.bf16.gmra.mxu0 %v5723
  %v6048 = vpop.f32.mrf.mxu0
  %v6049 = vadd.f32 %v5772, %v6048
  %v6050 = vpop.f32.mrf.mxu0
  %v6051 = vadd.f32 %v5776, %v6050
  %v6052 = vpop.f32.mrf.mxu0
  %v6053 = vadd.f32 %v5772, %v6052
  %v6054 = vpop.f32.mrf.mxu0
  %v6055 = vadd.f32 %v5776, %v6054
  %6056 = vmatprep.mubr.bf16.mxu0 0
  %6057 = vmatmul.mubr.bf16.gmra.mxu0 %v5724
  %v6058 = vpop.f32.mrf.mxu0
  %v6059 = vadd.f32 %v5772, %v6058
  %v6060 = vpop.f32.mrf.mxu0
  %v6061 = vadd.f32 %v5776, %v6060
  %v6062 = vpop.f32.mrf.mxu0
  %v6063 = vadd.f32 %v5772, %v6062
  %v6064 = vpop.f32.mrf.mxu0
  %v6065 = vadd.f32 %v5776, %v6064
  %6066 = vmatprep.mubr.bf16.mxu0 0
  %6067 = vmatmul.mubr.bf16.gmra.mxu0 %v5725
  %v6068 = vpop.f32.mrf.mxu0
  %v6069 = vadd.f32 %v5772, %v6068
  %v6070 = vpop.f32.mrf.mxu0
  %v6071 = vadd.f32 %v5776, %v6070
  %v6072 = vpop.f32.mrf.mxu0
  %v6073 = vadd.f32 %v5772, %v6072
  %v6074 = vpop.f32.mrf.mxu0
  %v6075 = vadd.f32 %v5776, %v6074
  %6076 = vmatprep.mubr.bf16.mxu0 0
  %6077 = vmatmul.mubr.bf16.gmra.mxu0 %v5726
  %v6078 = vpop.f32.mrf.mxu0
  %v6079 = vadd.f32 %v5772, %v6078
  %v6080 = vpop.f32.mrf.mxu0
  %v6081 = vadd.f32 %v5776, %v6080
  %v6082 = vpop.f32.mrf.mxu0
  %v6083 = vadd.f32 %v5772, %v6082
  %v6084 = vpop.f32.mrf.mxu0
  %v6085 = vadd.f32 %v5776, %v6084
  %6086 = vdwg.mxu0
  %6087 = vst [vmem:[#allocation4] sm:$0xff] %v5976
  %6088 = vst [vmem:[#allocation4 + $0x8] sm:$0xff] %v5978
  %6089 = vst [vmem:[#allocation4 + $0x10] sm:$0xff] %v6049
  %6090 = vst [vmem:[#allocation4 + $0x18] sm:$0xff] %v6051
  %6091 = vst [vmem:[#allocation4 + $0x20] sm:$0xff] %v5980
  %6092 = vst [vmem:[#allocation4 + $0x28] sm:$0xff] %v5982
  %6093 = vst [vmem:[#allocation4 + $0x30] sm:$0xff] %v6053
  %6094 = vst [vmem:[#allocation4 + $0x38] sm:$0xff] %v6055
  %6095 = vst [vmem:[#allocation4 + $0x40] sm:$0xff] %v5986
  %6096 = vst [vmem:[#allocation4 + $0x48] sm:$0xff] %v5988
  %6097 = vst [vmem:[#allocation4 + $0x50] sm:$0xff] %v6059
  %6098 = vst [vmem:[#allocation4 + $0x58] sm:$0xff] %v6061
  %6099 = vst [vmem:[#allocation4 + $0x60] sm:$0xff] %v5990
  %6100 = vst [vmem:[#allocation4 + $0x68] sm:$0xff] %v5992
  %6101 = vst [vmem:[#allocation4 + $0x70] sm:$0xff] %v6063
  %6102 = vst [vmem:[#allocation4 + $0x78] sm:$0xff] %v6065
  %6103 = vst [vmem:[#allocation4 + $0x80] sm:$0xff] %v5996
  %6104 = vst [vmem:[#allocation4 + $0x88] sm:$0xff] %v5998
  %6105 = vst [vmem:[#allocation4 + $0x90] sm:$0xff] %v6069
  %6106 = vst [vmem:[#allocation4 + $0x98] sm:$0xff] %v6071
  %6107 = vst [vmem:[#allocation4 + $0xa0] sm:$0xff] %v6000
  %6108 = vst [vmem:[#allocation4 + $0xa8] sm:$0xff] %v6002
  %6109 = vst [vmem:[#allocation4 + $0xb0] sm:$0xff] %v6073
  %6110 = vst [vmem:[#allocation4 + $0xb8] sm:$0xff] %v6075
  %6111 = vst [vmem:[#allocation4 + $0xc0] sm:$0xff] %v6006
  %6112 = vst [vmem:[#allocation4 + $0xc8] sm:$0xff] %v6008
  %6113 = vst [vmem:[#allocation4 + $0xd0] sm:$0xff] %v6079
  %6114 = vst [vmem:[#allocation4 + $0xd8] sm:$0xff] %v6081
  %6115 = vst [vmem:[#allocation4 + $0xe0] sm:$0xff] %v6010
  %6116 = vst [vmem:[#allocation4 + $0xe8] sm:$0xff] %v6012
  %6117 = vst [vmem:[#allocation4 + $0xf0] sm:$0xff] %v6083
  %6118 = vst [vmem:[#allocation4 + $0xf8] sm:$0xff] %v6085
  %v6119 = vld [vmem:[%s3223] sm:$0xff]
  %v6120 = vld [vmem:[%s3223 + $0x8] sm:$0xff]
  %v6121 = vld [vmem:[%s3223 + $0x10] sm:$0xff]
  %v6122 = vld [vmem:[%s3223 + $0x18] sm:$0xff]
  %v6123 = vld [vmem:[%s8] sm:$0xff]
  %v6124 = vld [vmem:[%s8 + $0x8] sm:$0xff]
  %v6125 = vld [vmem:[%s8 + $0x10] sm:$0xff]
  %v6126 = vld [vmem:[%s8 + $0x18] sm:$0xff]
  %v6127 = vld [vmem:[%s8 + $0x20] sm:$0xff]
  %v6128 = vld [vmem:[%s8 + $0x28] sm:$0xff]
  %v6129 = vld [vmem:[%s8 + $0x30] sm:$0xff]
  %v6130 = vld [vmem:[%s8 + $0x38] sm:$0xff]
  %v6131 = vld [vmem:[%s8 + $0x40] sm:$0xff]
  %v6132 = vld [vmem:[%s8 + $0x48] sm:$0xff]
  %v6133 = vld [vmem:[%s8 + $0x50] sm:$0xff]
  %v6134 = vld [vmem:[%s8 + $0x58] sm:$0xff]
  %v6135 = vld [vmem:[%s8 + $0x60] sm:$0xff]
  %v6136 = vld [vmem:[%s8 + $0x68] sm:$0xff]
  %v6137 = vld [vmem:[%s8 + $0x70] sm:$0xff]
  %v6138 = vld [vmem:[%s8 + $0x78] sm:$0xff]
  %v6139 = vld [vmem:[%s8 + $0x80] sm:$0xff]
  %v6140 = vld [vmem:[%s8 + $0x88] sm:$0xff]
  %v6141 = vld [vmem:[%s8 + $0x90] sm:$0xff]
  %v6142 = vld [vmem:[%s8 + $0x98] sm:$0xff]
  %v6143 = vld [vmem:[%s8 + $0xa0] sm:$0xff]
  %v6144 = vld [vmem:[%s8 + $0xa8] sm:$0xff]
  %v6145 = vld [vmem:[%s8 + $0xb0] sm:$0xff]
  %v6146 = vld [vmem:[%s8 + $0xb8] sm:$0xff]
  %v6147 = vld [vmem:[%s8 + $0xc0] sm:$0xff]
  %v6148 = vld [vmem:[%s8 + $0xc8] sm:$0xff]
  %v6149 = vld [vmem:[%s8 + $0xd0] sm:$0xff]
  %v6150 = vld [vmem:[%s8 + $0xd8] sm:$0xff]
  %v6151 = vld [vmem:[%s8 + $0xe0] sm:$0xff]
  %v6152 = vld [vmem:[%s8 + $0xe8] sm:$0xff]
  %v6153 = vld [vmem:[%s8 + $0xf0] sm:$0xff]
  %v6154 = vld [vmem:[%s8 + $0xf8] sm:$0xff]
  %v6187 = vunpack.c.l.b16 %v6123
  %v6188 = vunpack.c.h.b16 %v6123
  %v6189 = vunpack.c.l.b16 %v6124
  %v6190 = vunpack.c.h.b16 %v6124
  %v6191 = vunpack.c.l.b16 %v6125
  %v6192 = vunpack.c.h.b16 %v6125
  %v6193 = vunpack.c.l.b16 %v6126
  %v6194 = vunpack.c.h.b16 %v6126
  %v6195 = vunpack.c.l.b16 %v6127
  %v6196 = vunpack.c.h.b16 %v6127
  %v6197 = vunpack.c.l.b16 %v6128
  %v6198 = vunpack.c.h.b16 %v6128
  %v6199 = vunpack.c.l.b16 %v6129
  %v6200 = vunpack.c.h.b16 %v6129
  %v6201 = vunpack.c.l.b16 %v6130
  %v6202 = vunpack.c.h.b16 %v6130
  %v6203 = vunpack.c.l.b16 %v6131
  %v6204 = vunpack.c.h.b16 %v6131
  %v6205 = vunpack.c.l.b16 %v6132
  %v6206 = vunpack.c.h.b16 %v6132
  %v6207 = vunpack.c.l.b16 %v6133
  %v6208 = vunpack.c.h.b16 %v6133
  %v6209 = vunpack.c.l.b16 %v6134
  %v6210 = vunpack.c.h.b16 %v6134
  %v6211 = vunpack.c.l.b16 %v6135
  %v6212 = vunpack.c.h.b16 %v6135
  %v6213 = vunpack.c.l.b16 %v6136
  %v6214 = vunpack.c.h.b16 %v6136
  %v6215 = vunpack.c.l.b16 %v6137
  %v6216 = vunpack.c.h.b16 %v6137
  %v6217 = vunpack.c.l.b16 %v6138
  %v6218 = vunpack.c.h.b16 %v6138
  %v6219 = vunpack.c.l.b16 %v6139
  %v6220 = vunpack.c.h.b16 %v6139
  %v6221 = vunpack.c.l.b16 %v6140
  %v6222 = vunpack.c.h.b16 %v6140
  %v6223 = vunpack.c.l.b16 %v6141
  %v6224 = vunpack.c.h.b16 %v6141
  %v6225 = vunpack.c.l.b16 %v6142
  %v6226 = vunpack.c.h.b16 %v6142
  %v6227 = vunpack.c.l.b16 %v6143
  %v6228 = vunpack.c.h.b16 %v6143
  %v6229 = vunpack.c.l.b16 %v6144
  %v6230 = vunpack.c.h.b16 %v6144
  %v6231 = vunpack.c.l.b16 %v6145
  %v6232 = vunpack.c.h.b16 %v6145
  %v6233 = vunpack.c.l.b16 %v6146
  %v6234 = vunpack.c.h.b16 %v6146
  %v6235 = vunpack.c.l.b16 %v6147
  %v6236 = vunpack.c.h.b16 %v6147
  %v6237 = vunpack.c.l.b16 %v6148
  %v6238 = vunpack.c.h.b16 %v6148
  %v6239 = vunpack.c.l.b16 %v6149
  %v6240 = vunpack.c.h.b16 %v6149
  %v6241 = vunpack.c.l.b16 %v6150
  %v6242 = vunpack.c.h.b16 %v6150
  %v6243 = vunpack.c.l.b16 %v6151
  %v6244 = vunpack.c.h.b16 %v6151
  %v6245 = vunpack.c.l.b16 %v6152
  %v6246 = vunpack.c.h.b16 %v6152
  %v6247 = vunpack.c.l.b16 %v6153
  %v6248 = vunpack.c.h.b16 %v6153
  %v6249 = vunpack.c.l.b16 %v6154
  %v6250 = vunpack.c.h.b16 %v6154
  %v6251 = vpack.c.b16 %v6191, %v6187
  %v6252 = vpack.c.b16 %v6192, %v6188
  %v6253 = vpack.c.b16 %v6193, %v6189
  %v6254 = vpack.c.b16 %v6194, %v6190
  %v6255 = vpack.c.b16 %v6199, %v6195
  %v6256 = vpack.c.b16 %v6200, %v6196
  %v6257 = vpack.c.b16 %v6201, %v6197
  %v6258 = vpack.c.b16 %v6202, %v6198
  %v6259 = vpack.c.b16 %v6207, %v6203
  %v6260 = vpack.c.b16 %v6208, %v6204
  %v6261 = vpack.c.b16 %v6209, %v6205
  %v6262 = vpack.c.b16 %v6210, %v6206
  %v6263 = vpack.c.b16 %v6215, %v6211
  %v6264 = vpack.c.b16 %v6216, %v6212
  %v6265 = vpack.c.b16 %v6217, %v6213
  %v6266 = vpack.c.b16 %v6218, %v6214
  %v6267 = vpack.c.b16 %v6223, %v6219
  %v6268 = vpack.c.b16 %v6224, %v6220
  %v6269 = vpack.c.b16 %v6225, %v6221
  %v6270 = vpack.c.b16 %v6226, %v6222
  %v6271 = vpack.c.b16 %v6231, %v6227
  %v6272 = vpack.c.b16 %v6232, %v6228
  %v6273 = vpack.c.b16 %v6233, %v6229
  %v6274 = vpack.c.b16 %v6234, %v6230
  %v6275 = vpack.c.b16 %v6239, %v6235
  %v6276 = vpack.c.b16 %v6240, %v6236
  %v6277 = vpack.c.b16 %v6241, %v6237
  %v6278 = vpack.c.b16 %v6242, %v6238
  %v6279 = vpack.c.b16 %v6247, %v6243
  %v6280 = vpack.c.b16 %v6248, %v6244
  %v6281 = vpack.c.b16 %v6249, %v6245
  %v6282 = vpack.c.b16 %v6250, %v6246
  %6315 = vmatprep.subr.bf16.mxu0 %v6280
  %6316 = vmatpush1.bf16.msra.mxu0 %v6279
  %6317 = vmatprep.subr.bf16.mxu0 %v6276
  %6318 = vmatpush1.bf16.msra.mxu0 %v6275
  %6319 = vmatprep.subr.bf16.mxu0 %v6272
  %6320 = vmatpush1.bf16.msra.mxu0 %v6271
  %6321 = vmatprep.subr.bf16.mxu0 %v6268
  %6322 = vmatpush1.bf16.msra.mxu0 %v6267
  %6323 = vmatprep.subr.bf16.mxu0 %v6264
  %6324 = vmatpush1.bf16.msra.mxu0 %v6263
  %6325 = vmatprep.subr.bf16.mxu0 %v6260
  %6326 = vmatpush1.bf16.msra.mxu0 %v6259
  %6327 = vmatprep.subr.bf16.mxu0 %v6256
  %6328 = vmatpush1.bf16.msra.mxu0 %v6255
  %6329 = vmatprep.subr.bf16.mxu0 %v6252
  %6330 = vmatpush1.bf16.msra.mxu0 %v6251
  %6331 = vmatprep.subr.bf16.mxu0 0
  %6332 = vmatpush2.bf16.msra.mxu0 0
  %6333 = vmatprep.subr.bf16.mxu0 0
  %6334 = vmatpush2.bf16.msra.mxu0 0
  %6335 = vmatprep.subr.bf16.mxu0 0
  %6336 = vmatpush2.bf16.msra.mxu0 0
  %6337 = vmatprep.subr.bf16.mxu0 0
  %6338 = vmatpush2.bf16.msra.mxu0 0
  %6339 = vmatprep.subr.bf16.mxu0 0
  %6340 = vmatpush2.bf16.msra.mxu0 0
  %6341 = vmatprep.subr.bf16.mxu0 0
  %6342 = vmatpush2.bf16.msra.mxu0 0
  %6343 = vmatprep.subr.bf16.mxu0 0
  %6344 = vmatpush2.bf16.msra.mxu0 0
  %6345 = vmatprep.subr.bf16.mxu0 0
  %6346 = vmatpush2.bf16.msra.mxu0 0
  %6347 = vmatprep.mubr.bf16.mxu0 0
  %6348 = vmatmul.mubr.bf16.gmra.mxu0 0
  %v6349 = vpop.f32.mrf.mxu0
  %v6350 = vadd.f32 0.0, %v6349
  %v6351 = vpop.f32.mrf.mxu0
  %v6352 = vadd.f32 0.0, %v6351
  %v6353 = vpop.f32.mrf.mxu0
  %v6354 = vpop.f32.mrf.mxu0
  %6355 = vdwg.mxu0
  %6356 = vmatprep.subr.bf16.mxu0 %v6282
  %6357 = vmatpush1.bf16.msra.mxu0 %v6281
  %6358 = vmatprep.subr.bf16.mxu0 %v6278
  %6359 = vmatpush1.bf16.msra.mxu0 %v6277
  %6360 = vmatprep.subr.bf16.mxu0 %v6274
  %6361 = vmatpush1.bf16.msra.mxu0 %v6273
  %6362 = vmatprep.subr.bf16.mxu0 %v6270
  %6363 = vmatpush1.bf16.msra.mxu0 %v6269
  %6364 = vmatprep.subr.bf16.mxu0 %v6266
  %6365 = vmatpush1.bf16.msra.mxu0 %v6265
  %6366 = vmatprep.subr.bf16.mxu0 %v6262
  %6367 = vmatpush1.bf16.msra.mxu0 %v6261
  %6368 = vmatprep.subr.bf16.mxu0 %v6258
  %6369 = vmatpush1.bf16.msra.mxu0 %v6257
  %6370 = vmatprep.subr.bf16.mxu0 %v6254
  %6371 = vmatpush1.bf16.msra.mxu0 %v6253
  %6372 = vmatprep.subr.bf16.mxu0 0
  %6373 = vmatpush2.bf16.msra.mxu0 0
  %6374 = vmatprep.subr.bf16.mxu0 0
  %6375 = vmatpush2.bf16.msra.mxu0 0
  %6376 = vmatprep.subr.bf16.mxu0 0
  %6377 = vmatpush2.bf16.msra.mxu0 0
  %6378 = vmatprep.subr.bf16.mxu0 0
  %6379 = vmatpush2.bf16.msra.mxu0 0
  %6380 = vmatprep.subr.bf16.mxu0 0
  %6381 = vmatpush2.bf16.msra.mxu0 0
  %6382 = vmatprep.subr.bf16.mxu0 0
  %6383 = vmatpush2.bf16.msra.mxu0 0
  %6384 = vmatprep.subr.bf16.mxu0 0
  %6385 = vmatpush2.bf16.msra.mxu0 0
  %6386 = vmatprep.subr.bf16.mxu0 0
  %6387 = vmatpush2.bf16.msra.mxu0 0
  %6388 = vmatprep.mubr.bf16.mxu0 0
  %6389 = vmatmul.mubr.bf16.gmra.mxu0 0
  %v6390 = vpop.f32.mrf.mxu0
  %v6391 = vadd.f32 0.0, %v6390
  %v6392 = vpop.f32.mrf.mxu0
  %v6393 = vadd.f32 0.0, %v6392
  %v6394 = vpop.f32.mrf.mxu0
  %v6395 = vpop.f32.mrf.mxu0
  %6396 = vdwg.mxu0
  %v6397 = vadd.f32 %v6119, %v6350
  %v6398 = vadd.f32 %v6120, %v6352
  %v6399 = vadd.f32 %v6121, %v6391
  %v6400 = vadd.f32 %v6122, %v6393
  %v6401 = vxor.u32 %v6397, 2147483648
  %v6402 = vxor.u32 %v6398, 2147483648
  %v6403 = vxor.u32 %v6399, 2147483648
  %v6404 = vmul.f32 %v6401, 1.442695
  %v6405 = vpow.pop %v6404
  %v6406 = vmul.f32 %v6402, 1.442695
  %v6407 = vpow.pop %v6406
  %v6408 = vmul.f32 %v6403, 1.442695
  %v6409 = vpow.pop %v6408
  %v6410 = vadd.f32 %v6405, 1.0
  %v6411 = vadd.f32 %v6407, 1.0
  %v6412 = vadd.f32 %v6409, 1.0
  %v6413 = vrcp.pop %v6410
  %v6414 = vmul.f32 1.0, %v6413
  %v6415 = vrcp.pop %v6411
  %v6416 = vmul.f32 1.0, %v6415
  %v6417 = vrcp.pop %v6412
  %v6418 = vmul.f32 1.0, %v6417
  %v6419 = vtanh.pop %v6400
  %v6420 = vmul.f32 %v6416, 0.0
  %v6421 = vmul.f32 %v6414, %v6419
  %v6422 = vadd.f32 %v6420, %v6421
  %v6423 = vtanh.pop %v6422
  %v6424 = vmul.f32 %v6418, %v6423
  %6425 = vst [vmem:[#allocation2] sm:$0xff] %v6424
  %v6426 = vld [vmem:[%s3533] sm:$0xff]
  %v6427 = vld [vmem:[%s3533 + $0x8] sm:$0xff]
  %v6428 = vld [vmem:[%s3533 + $0x10] sm:$0xff]
  %v6429 = vld [vmem:[%s3533 + $0x18] sm:$0xff]
  %v6430 = vpack.c.bf16 %v6424, %v6424
  %v6431 = vld [vmem:[%s8] sm:$0xff]
  %v6432 = vld [vmem:[%s8 + $0x8] sm:$0xff]
  %v6433 = vld [vmem:[%s8 + $0x10] sm:$0xff]
  %v6434 = vld [vmem:[%s8 + $0x18] sm:$0xff]
  %v6435 = vld [vmem:[%s8 + $0x20] sm:$0xff]
  %v6436 = vld [vmem:[%s8 + $0x28] sm:$0xff]
  %v6437 = vld [vmem:[%s8 + $0x30] sm:$0xff]
  %v6438 = vld [vmem:[%s8 + $0x38] sm:$0xff]
  %v6439 = vld [vmem:[%s8 + $0x40] sm:$0xff]
  %v6440 = vld [vmem:[%s8 + $0x48] sm:$0xff]
  %v6441 = vld [vmem:[%s8 + $0x50] sm:$0xff]
  %v6442 = vld [vmem:[%s8 + $0x58] sm:$0xff]
  %v6443 = vld [vmem:[%s8 + $0x60] sm:$0xff]
  %v6444 = vld [vmem:[%s8 + $0x68] sm:$0xff]
  %v6445 = vld [vmem:[%s8 + $0x70] sm:$0xff]
  %v6446 = vld [vmem:[%s8 + $0x78] sm:$0xff]
  %v6447 = vld [vmem:[%s8 + $0x80] sm:$0xff]
  %v6448 = vld [vmem:[%s8 + $0x88] sm:$0xff]
  %v6449 = vld [vmem:[%s8 + $0x90] sm:$0xff]
  %v6450 = vld [vmem:[%s8 + $0x98] sm:$0xff]
  %v6451 = vld [vmem:[%s8 + $0xa0] sm:$0xff]
  %v6452 = vld [vmem:[%s8 + $0xa8] sm:$0xff]
  %v6453 = vld [vmem:[%s8 + $0xb0] sm:$0xff]
  %v6454 = vld [vmem:[%s8 + $0xb8] sm:$0xff]
  %v6455 = vld [vmem:[%s8 + $0xc0] sm:$0xff]
  %v6456 = vld [vmem:[%s8 + $0xc8] sm:$0xff]
  %v6457 = vld [vmem:[%s8 + $0xd0] sm:$0xff]
  %v6458 = vld [vmem:[%s8 + $0xd8] sm:$0xff]
  %v6459 = vld [vmem:[%s8 + $0xe0] sm:$0xff]
  %v6460 = vld [vmem:[%s8 + $0xe8] sm:$0xff]
  %v6461 = vld [vmem:[%s8 + $0xf0] sm:$0xff]
  %v6462 = vld [vmem:[%s8 + $0xf8] sm:$0xff]
  %v6495 = vunpack.c.l.b16 %v6431
  %v6496 = vunpack.c.h.b16 %v6431
  %v6497 = vunpack.c.l.b16 %v6432
  %v6498 = vunpack.c.h.b16 %v6432
  %v6499 = vunpack.c.l.b16 %v6433
  %v6500 = vunpack.c.h.b16 %v6433
  %v6501 = vunpack.c.l.b16 %v6434
  %v6502 = vunpack.c.h.b16 %v6434
  %v6503 = vunpack.c.l.b16 %v6435
  %v6504 = vunpack.c.h.b16 %v6435
  %v6505 = vunpack.c.l.b16 %v6436
  %v6506 = vunpack.c.h.b16 %v6436
  %v6507 = vunpack.c.l.b16 %v6437
  %v6508 = vunpack.c.h.b16 %v6437
  %v6509 = vunpack.c.l.b16 %v6438
  %v6510 = vunpack.c.h.b16 %v6438
  %v6511 = vunpack.c.l.b16 %v6439
  %v6512 = vunpack.c.h.b16 %v6439
  %v6513 = vunpack.c.l.b16 %v6440
  %v6514 = vunpack.c.h.b16 %v6440
  %v6515 = vunpack.c.l.b16 %v6441
  %v6516 = vunpack.c.h.b16 %v6441
  %v6517 = vunpack.c.l.b16 %v6442
  %v6518 = vunpack.c.h.b16 %v6442
  %v6519 = vunpack.c.l.b16 %v6443
  %v6520 = vunpack.c.h.b16 %v6443
  %v6521 = vunpack.c.l.b16 %v6444
  %v6522 = vunpack.c.h.b16 %v6444
  %v6523 = vunpack.c.l.b16 %v6445
  %v6524 = vunpack.c.h.b16 %v6445
  %v6525 = vunpack.c.l.b16 %v6446
  %v6526 = vunpack.c.h.b16 %v6446
  %v6527 = vunpack.c.l.b16 %v6447
  %v6528 = vunpack.c.h.b16 %v6447
  %v6529 = vunpack.c.l.b16 %v6448
  %v6530 = vunpack.c.h.b16 %v6448
  %v6531 = vunpack.c.l.b16 %v6449
  %v6532 = vunpack.c.h.b16 %v6449
  %v6533 = vunpack.c.l.b16 %v6450
  %v6534 = vunpack.c.h.b16 %v6450
  %v6535 = vunpack.c.l.b16 %v6451
  %v6536 = vunpack.c.h.b16 %v6451
  %v6537 = vunpack.c.l.b16 %v6452
  %v6538 = vunpack.c.h.b16 %v6452
  %v6539 = vunpack.c.l.b16 %v6453
  %v6540 = vunpack.c.h.b16 %v6453
  %v6541 = vunpack.c.l.b16 %v6454
  %v6542 = vunpack.c.h.b16 %v6454
  %v6543 = vunpack.c.l.b16 %v6455
  %v6544 = vunpack.c.h.b16 %v6455
  %v6545 = vunpack.c.l.b16 %v6456
  %v6546 = vunpack.c.h.b16 %v6456
  %v6547 = vunpack.c.l.b16 %v6457
  %v6548 = vunpack.c.h.b16 %v6457
  %v6549 = vunpack.c.l.b16 %v6458
  %v6550 = vunpack.c.h.b16 %v6458
  %v6551 = vunpack.c.l.b16 %v6459
  %v6552 = vunpack.c.h.b16 %v6459
  %v6553 = vunpack.c.l.b16 %v6460
  %v6554 = vunpack.c.h.b16 %v6460
  %v6555 = vunpack.c.l.b16 %v6461
  %v6556 = vunpack.c.h.b16 %v6461
  %v6557 = vunpack.c.l.b16 %v6462
  %v6558 = vunpack.c.h.b16 %v6462
  %v6559 = vpack.c.b16 %v6499, %v6495
  %v6560 = vpack.c.b16 %v6500, %v6496
  %v6561 = vpack.c.b16 %v6501, %v6497
  %v6562 = vpack.c.b16 %v6502, %v6498
  %v6563 = vpack.c.b16 %v6507, %v6503
  %v6564 = vpack.c.b16 %v6508, %v6504
  %v6565 = vpack.c.b16 %v6509, %v6505
  %v6566 = vpack.c.b16 %v6510, %v6506
  %v6567 = vpack.c.b16 %v6515, %v6511
  %v6568 = vpack.c.b16 %v6516, %v6512
  %v6569 = vpack.c.b16 %v6517, %v6513
  %v6570 = vpack.c.b16 %v6518, %v6514
  %v6571 = vpack.c.b16 %v6523, %v6519
  %v6572 = vpack.c.b16 %v6524, %v6520
  %v6573 = vpack.c.b16 %v6525, %v6521
  %v6574 = vpack.c.b16 %v6526, %v6522
  %v6575 = vpack.c.b16 %v6531, %v6527
  %v6576 = vpack.c.b16 %v6532, %v6528
  %v6577 = vpack.c.b16 %v6533, %v6529
  %v6578 = vpack.c.b16 %v6534, %v6530
  %v6579 = vpack.c.b16 %v6539, %v6535
  %v6580 = vpack.c.b16 %v6540, %v6536
  %v6581 = vpack.c.b16 %v6541, %v6537
  %v6582 = vpack.c.b16 %v6542, %v6538
  %v6583 = vpack.c.b16 %v6547, %v6543
  %v6584 = vpack.c.b16 %v6548, %v6544
  %v6585 = vpack.c.b16 %v6549, %v6545
  %v6586 = vpack.c.b16 %v6550, %v6546
  %v6587 = vpack.c.b16 %v6555, %v6551
  %v6588 = vpack.c.b16 %v6556, %v6552
  %v6589 = vpack.c.b16 %v6557, %v6553
  %v6590 = vpack.c.b16 %v6558, %v6554
  %6623 = vmatprep.subr.bf16.mxu0 %v6588
  %6624 = vmatpush1.bf16.msra.mxu0 %v6587
  %6625 = vmatprep.subr.bf16.mxu0 %v6584
  %6626 = vmatpush1.bf16.msra.mxu0 %v6583
  %6627 = vmatprep.subr.bf16.mxu0 %v6580
  %6628 = vmatpush1.bf16.msra.mxu0 %v6579
  %6629 = vmatprep.subr.bf16.mxu0 %v6576
  %6630 = vmatpush1.bf16.msra.mxu0 %v6575
  %6631 = vmatprep.subr.bf16.mxu0 %v6572
  %6632 = vmatpush1.bf16.msra.mxu0 %v6571
  %6633 = vmatprep.subr.bf16.mxu0 %v6568
  %6634 = vmatpush1.bf16.msra.mxu0 %v6567
  %6635 = vmatprep.subr.bf16.mxu0 %v6564
  %6636 = vmatpush1.bf16.msra.mxu0 %v6563
  %6637 = vmatprep.subr.bf16.mxu0 %v6560
  %6638 = vmatpush1.bf16.msra.mxu0 %v6559
  %6639 = vmatprep.subr.bf16.mxu0 0
  %6640 = vmatpush2.bf16.msra.mxu0 0
  %6641 = vmatprep.subr.bf16.mxu0 0
  %6642 = vmatpush2.bf16.msra.mxu0 0
  %6643 = vmatprep.subr.bf16.mxu0 0
  %6644 = vmatpush2.bf16.msra.mxu0 0
  %6645 = vmatprep.subr.bf16.mxu0 0
  %6646 = vmatpush2.bf16.msra.mxu0 0
  %6647 = vmatprep.subr.bf16.mxu0 0
  %6648 = vmatpush2.bf16.msra.mxu0 0
  %6649 = vmatprep.subr.bf16.mxu0 0
  %6650 = vmatpush2.bf16.msra.mxu0 0
  %6651 = vmatprep.subr.bf16.mxu0 0
  %6652 = vmatpush2.bf16.msra.mxu0 0
  %6653 = vmatprep.subr.bf16.mxu0 0
  %6654 = vmatpush2.bf16.msra.mxu0 0
  %6655 = vmatprep.mubr.bf16.mxu0 0
  %6656 = vmatmul.mubr.bf16.gmra.mxu0 %v6430
  %v6657 = vpop.f32.mrf.mxu0
  %v6658 = vadd.f32 0.0, %v6657
  %v6659 = vpop.f32.mrf.mxu0
  %v6660 = vadd.f32 0.0, %v6659
  %v6661 = vpop.f32.mrf.mxu0
  %v6662 = vpop.f32.mrf.mxu0
  %6663 = vdwg.mxu0
  %6664 = vmatprep.subr.bf16.mxu0 %v6590
  %6665 = vmatpush1.bf16.msra.mxu0 %v6589
  %6666 = vmatprep.subr.bf16.mxu0 %v6586
  %6667 = vmatpush1.bf16.msra.mxu0 %v6585
  %6668 = vmatprep.subr.bf16.mxu0 %v6582
  %6669 = vmatpush1.bf16.msra.mxu0 %v6581
  %6670 = vmatprep.subr.bf16.mxu0 %v6578
  %6671 = vmatpush1.bf16.msra.mxu0 %v6577
  %6672 = vmatprep.subr.bf16.mxu0 %v6574
  %6673 = vmatpush1.bf16.msra.mxu0 %v6573
  %6674 = vmatprep.subr.bf16.mxu0 %v6570
  %6675 = vmatpush1.bf16.msra.mxu0 %v6569
  %6676 = vmatprep.subr.bf16.mxu0 %v6566
  %6677 = vmatpush1.bf16.msra.mxu0 %v6565
  %6678 = vmatprep.subr.bf16.mxu0 %v6562
  %6679 = vmatpush1.bf16.msra.mxu0 %v6561
  %6680 = vmatprep.subr.bf16.mxu0 0
  %6681 = vmatpush2.bf16.msra.mxu0 0
  %6682 = vmatprep.subr.bf16.mxu0 0
  %6683 = vmatpush2.bf16.msra.mxu0 0
  %6684 = vmatprep.subr.bf16.mxu0 0
  %6685 = vmatpush2.bf16.msra.mxu0 0
  %6686 = vmatprep.subr.bf16.mxu0 0
  %6687 = vmatpush2.bf16.msra.mxu0 0
  %6688 = vmatprep.subr.bf16.mxu0 0
  %6689 = vmatpush2.bf16.msra.mxu0 0
  %6690 = vmatprep.subr.bf16.mxu0 0
  %6691 = vmatpush2.bf16.msra.mxu0 0
  %6692 = vmatprep.subr.bf16.mxu0 0
  %6693 = vmatpush2.bf16.msra.mxu0 0
  %6694 = vmatprep.subr.bf16.mxu0 0
  %6695 = vmatpush2.bf16.msra.mxu0 0
  %6696 = vmatprep.mubr.bf16.mxu0 0
  %6697 = vmatmul.mubr.bf16.gmra.mxu0 %v6430
  %v6698 = vpop.f32.mrf.mxu0
  %v6699 = vadd.f32 0.0, %v6698
  %v6700 = vpop.f32.mrf.mxu0
  %v6701 = vadd.f32 0.0, %v6700
  %v6702 = vpop.f32.mrf.mxu0
  %v6703 = vpop.f32.mrf.mxu0
  %6704 = vdwg.mxu0
  %v6705 = vadd.f32 %v6426, %v6658
  %v6706 = vadd.f32 %v6427, %v6660
  %v6707 = vadd.f32 %v6428, %v6699
  %v6708 = vadd.f32 %v6429, %v6701
  %v6709 = vxor.u32 %v6705, 2147483648
  %v6710 = vxor.u32 %v6706, 2147483648
  %v6711 = vxor.u32 %v6707, 2147483648
  %v6712 = vmul.f32 %v6709, 1.442695
  %v6713 = vpow.pop %v6712
  %v6714 = vmul.f32 %v6710, 1.442695
  %v6715 = vpow.pop %v6714
  %v6716 = vmul.f32 %v6711, 1.442695
  %v6717 = vpow.pop %v6716
  %v6718 = vadd.f32 %v6713, 1.0
  %v6719 = vadd.f32 %v6715, 1.0
  %v6720 = vadd.f32 %v6717, 1.0
  %v6721 = vrcp.pop %v6718
  %v6722 = vmul.f32 1.0, %v6721
  %v6723 = vrcp.pop %v6719
  %v6724 = vmul.f32 1.0, %v6723
  %v6725 = vrcp.pop %v6720
  %v6726 = vmul.f32 1.0, %v6725
  %v6727 = vtanh.pop %v6708
  %v6728 = vmul.f32 %v6724, %v6422
  %v6729 = vmul.f32 %v6722, %v6727
  %v6730 = vadd.f32 %v6728, %v6729
  %v6731 = vtanh.pop %v6730
  %v6732 = vmul.f32 %v6726, %v6731
  %6733 = vst [vmem:[%s961] sm:$0xff] %v6732
  %v6734 = vld [vmem:[%s3845] sm:$0xff]
  %v6735 = vld [vmem:[%s3845 + $0x8] sm:$0xff]
  %v6736 = vld [vmem:[%s3845 + $0x10] sm:$0xff]
  %v6737 = vld [vmem:[%s3845 + $0x18] sm:$0xff]
  %v6738 = vpack.c.bf16 %v6732, %v6732
  %v6739 = vld [vmem:[%s8] sm:$0xff]
  %v6740 = vld [vmem:[%s8 + $0x8] sm:$0xff]
  %v6741 = vld [vmem:[%s8 + $0x10] sm:$0xff]
  %v6742 = vld [vmem:[%s8 + $0x18] sm:$0xff]
  %v6743 = vld [vmem:[%s8 + $0x20] sm:$0xff]
  %v6744 = vld [vmem:[%s8 + $0x28] sm:$0xff]
  %v6745 = vld [vmem:[%s8 + $0x30] sm:$0xff]
  %v6746 = vld [vmem:[%s8 + $0x38] sm:$0xff]
  %v6747 = vld [vmem:[%s8 + $0x40] sm:$0xff]
  %v6748 = vld [vmem:[%s8 + $0x48] sm:$0xff]
  %v6749 = vld [vmem:[%s8 + $0x50] sm:$0xff]
  %v6750 = vld [vmem:[%s8 + $0x58] sm:$0xff]
  %v6751 = vld [vmem:[%s8 + $0x60] sm:$0xff]
  %v6752 = vld [vmem:[%s8 + $0x68] sm:$0xff]
  %v6753 = vld [vmem:[%s8 + $0x70] sm:$0xff]
  %v6754 = vld [vmem:[%s8 + $0x78] sm:$0xff]
  %v6755 = vld [vmem:[%s8 + $0x80] sm:$0xff]
  %v6756 = vld [vmem:[%s8 + $0x88] sm:$0xff]
  %v6757 = vld [vmem:[%s8 + $0x90] sm:$0xff]
  %v6758 = vld [vmem:[%s8 + $0x98] sm:$0xff]
  %v6759 = vld [vmem:[%s8 + $0xa0] sm:$0xff]
  %v6760 = vld [vmem:[%s8 + $0xa8] sm:$0xff]
  %v6761 = vld [vmem:[%s8 + $0xb0] sm:$0xff]
  %v6762 = vld [vmem:[%s8 + $0xb8] sm:$0xff]
  %v6763 = vld [vmem:[%s8 + $0xc0] sm:$0xff]
  %v6764 = vld [vmem:[%s8 + $0xc8] sm:$0xff]
  %v6765 = vld [vmem:[%s8 + $0xd0] sm:$0xff]
  %v6766 = vld [vmem:[%s8 + $0xd8] sm:$0xff]
  %v6767 = vld [vmem:[%s8 + $0xe0] sm:$0xff]
  %v6768 = vld [vmem:[%s8 + $0xe8] sm:$0xff]
  %v6769 = vld [vmem:[%s8 + $0xf0] sm:$0xff]
  %v6770 = vld [vmem:[%s8 + $0xf8] sm:$0xff]
  %v6803 = vunpack.c.l.b16 %v6739
  %v6804 = vunpack.c.h.b16 %v6739
  %v6805 = vunpack.c.l.b16 %v6740
  %v6806 = vunpack.c.h.b16 %v6740
  %v6807 = vunpack.c.l.b16 %v6741
  %v6808 = vunpack.c.h.b16 %v6741
  %v6809 = vunpack.c.l.b16 %v6742
  %v6810 = vunpack.c.h.b16 %v6742
  %v6811 = vunpack.c.l.b16 %v6743
  %v6812 = vunpack.c.h.b16 %v6743
  %v6813 = vunpack.c.l.b16 %v6744
  %v6814 = vunpack.c.h.b16 %v6744
  %v6815 = vunpack.c.l.b16 %v6745
  %v6816 = vunpack.c.h.b16 %v6745
  %v6817 = vunpack.c.l.b16 %v6746
  %v6818 = vunpack.c.h.b16 %v6746
  %v6819 = vunpack.c.l.b16 %v6747
  %v6820 = vunpack.c.h.b16 %v6747
  %v6821 = vunpack.c.l.b16 %v6748
  %v6822 = vunpack.c.h.b16 %v6748
  %v6823 = vunpack.c.l.b16 %v6749
  %v6824 = vunpack.c.h.b16 %v6749
  %v6825 = vunpack.c.l.b16 %v6750
  %v6826 = vunpack.c.h.b16 %v6750
  %v6827 = vunpack.c.l.b16 %v6751
  %v6828 = vunpack.c.h.b16 %v6751
  %v6829 = vunpack.c.l.b16 %v6752
  %v6830 = vunpack.c.h.b16 %v6752
  %v6831 = vunpack.c.l.b16 %v6753
  %v6832 = vunpack.c.h.b16 %v6753
  %v6833 = vunpack.c.l.b16 %v6754
  %v6834 = vunpack.c.h.b16 %v6754
  %v6835 = vunpack.c.l.b16 %v6755
  %v6836 = vunpack.c.h.b16 %v6755
  %v6837 = vunpack.c.l.b16 %v6756
  %v6838 = vunpack.c.h.b16 %v6756
  %v6839 = vunpack.c.l.b16 %v6757
  %v6840 = vunpack.c.h.b16 %v6757
  %v6841 = vunpack.c.l.b16 %v6758
  %v6842 = vunpack.c.h.b16 %v6758
  %v6843 = vunpack.c.l.b16 %v6759
  %v6844 = vunpack.c.h.b16 %v6759
  %v6845 = vunpack.c.l.b16 %v6760
  %v6846 = vunpack.c.h.b16 %v6760
  %v6847 = vunpack.c.l.b16 %v6761
  %v6848 = vunpack.c.h.b16 %v6761
  %v6849 = vunpack.c.l.b16 %v6762
  %v6850 = vunpack.c.h.b16 %v6762
  %v6851 = vunpack.c.l.b16 %v6763
  %v6852 = vunpack.c.h.b16 %v6763
  %v6853 = vunpack.c.l.b16 %v6764
  %v6854 = vunpack.c.h.b16 %v6764
  %v6855 = vunpack.c.l.b16 %v6765
  %v6856 = vunpack.c.h.b16 %v6765
  %v6857 = vunpack.c.l.b16 %v6766
  %v6858 = vunpack.c.h.b16 %v6766
  %v6859 = vunpack.c.l.b16 %v6767
  %v6860 = vunpack.c.h.b16 %v6767
  %v6861 = vunpack.c.l.b16 %v6768
  %v6862 = vunpack.c.h.b16 %v6768
  %v6863 = vunpack.c.l.b16 %v6769
  %v6864 = vunpack.c.h.b16 %v6769
  %v6865 = vunpack.c.l.b16 %v6770
  %v6866 = vunpack.c.h.b16 %v6770
  %v6867 = vpack.c.b16 %v6807, %v6803
  %v6868 = vpack.c.b16 %v6808, %v6804
  %v6869 = vpack.c.b16 %v6809, %v6805
  %v6870 = vpack.c.b16 %v6810, %v6806
  %v6871 = vpack.c.b16 %v6815, %v6811
  %v6872 = vpack.c.b16 %v6816, %v6812
  %v6873 = vpack.c.b16 %v6817, %v6813
  %v6874 = vpack.c.b16 %v6818, %v6814
  %v6875 = vpack.c.b16 %v6823, %v6819
  %v6876 = vpack.c.b16 %v6824, %v6820
  %v6877 = vpack.c.b16 %v6825, %v6821
  %v6878 = vpack.c.b16 %v6826, %v6822
  %v6879 = vpack.c.b16 %v6831, %v6827
  %v6880 = vpack.c.b16 %v6832, %v6828
  %v6881 = vpack.c.b16 %v6833, %v6829
  %v6882 = vpack.c.b16 %v6834, %v6830
  %v6883 = vpack.c.b16 %v6839, %v6835
  %v6884 = vpack.c.b16 %v6840, %v6836
  %v6885 = vpack.c.b16 %v6841, %v6837
  %v6886 = vpack.c.b16 %v6842, %v6838
  %v6887 = vpack.c.b16 %v6847, %v6843
  %v6888 = vpack.c.b16 %v6848, %v6844
  %v6889 = vpack.c.b16 %v6849, %v6845
  %v6890 = vpack.c.b16 %v6850, %v6846
  %v6891 = vpack.c.b16 %v6855, %v6851
  %v6892 = vpack.c.b16 %v6856, %v6852
  %v6893 = vpack.c.b16 %v6857, %v6853
  %v6894 = vpack.c.b16 %v6858, %v6854
  %v6895 = vpack.c.b16 %v6863, %v6859
  %v6896 = vpack.c.b16 %v6864, %v6860
  %v6897 = vpack.c.b16 %v6865, %v6861
  %v6898 = vpack.c.b16 %v6866, %v6862
  %6931 = vmatprep.subr.bf16.mxu0 %v6896
  %6932 = vmatpush1.bf16.msra.mxu0 %v6895
  %6933 = vmatprep.subr.bf16.mxu0 %v6892
  %6934 = vmatpush1.bf16.msra.mxu0 %v6891
  %6935 = vmatprep.subr.bf16.mxu0 %v6888
  %6936 = vmatpush1.bf16.msra.mxu0 %v6887
  %6937 = vmatprep.subr.bf16.mxu0 %v6884
  %6938 = vmatpush1.bf16.msra.mxu0 %v6883
  %6939 = vmatprep.subr.bf16.mxu0 %v6880
  %6940 = vmatpush1.bf16.msra.mxu0 %v6879
  %6941 = vmatprep.subr.bf16.mxu0 %v6876
  %6942 = vmatpush1.bf16.msra.mxu0 %v6875
  %6943 = vmatprep.subr.bf16.mxu0 %v6872
  %6944 = vmatpush1.bf16.msra.mxu0 %v6871
  %6945 = vmatprep.subr.bf16.mxu0 %v6868
  %6946 = vmatpush1.bf16.msra.mxu0 %v6867
  %6947 = vmatprep.subr.bf16.mxu0 0
  %6948 = vmatpush2.bf16.msra.mxu0 0
  %6949 = vmatprep.subr.bf16.mxu0 0
  %6950 = vmatpush2.bf16.msra.mxu0 0
  %6951 = vmatprep.subr.bf16.mxu0 0
  %6952 = vmatpush2.bf16.msra.mxu0 0
  %6953 = vmatprep.subr.bf16.mxu0 0
  %6954 = vmatpush2.bf16.msra.mxu0 0
  %6955 = vmatprep.subr.bf16.mxu0 0
  %6956 = vmatpush2.bf16.msra.mxu0 0
  %6957 = vmatprep.subr.bf16.mxu0 0
  %6958 = vmatpush2.bf16.msra.mxu0 0
  %6959 = vmatprep.subr.bf16.mxu0 0
  %6960 = vmatpush2.bf16.msra.mxu0 0
  %6961 = vmatprep.subr.bf16.mxu0 0
  %6962 = vmatpush2.bf16.msra.mxu0 0
  %6963 = vmatprep.mubr.bf16.mxu0 0
  %6964 = vmatmul.mubr.bf16.gmra.mxu0 %v6738
  %v6965 = vpop.f32.mrf.mxu0
  %v6966 = vadd.f32 0.0, %v6965
  %v6967 = vpop.f32.mrf.mxu0
  %v6968 = vadd.f32 0.0, %v6967
  %v6969 = vpop.f32.mrf.mxu0
  %v6970 = vpop.f32.mrf.mxu0
  %6971 = vdwg.mxu0
  %6972 = vmatprep.subr.bf16.mxu0 %v6898
  %6973 = vmatpush1.bf16.msra.mxu0 %v6897
  %6974 = vmatprep.subr.bf16.mxu0 %v6894
  %6975 = vmatpush1.bf16.msra.mxu0 %v6893
  %6976 = vmatprep.subr.bf16.mxu0 %v6890
  %6977 = vmatpush1.bf16.msra.mxu0 %v6889
  %6978 = vmatprep.subr.bf16.mxu0 %v6886
  %6979 = vmatpush1.bf16.msra.mxu0 %v6885
  %6980 = vmatprep.subr.bf16.mxu0 %v6882
  %6981 = vmatpush1.bf16.msra.mxu0 %v6881
  %6982 = vmatprep.subr.bf16.mxu0 %v6878
  %6983 = vmatpush1.bf16.msra.mxu0 %v6877
  %6984 = vmatprep.subr.bf16.mxu0 %v6874
  %6985 = vmatpush1.bf16.msra.mxu0 %v6873
  %6986 = vmatprep.subr.bf16.mxu0 %v6870
  %6987 = vmatpush1.bf16.msra.mxu0 %v6869
  %6988 = vmatprep.subr.bf16.mxu0 0
  %6989 = vmatpush2.bf16.msra.mxu0 0
  %6990 = vmatprep.subr.bf16.mxu0 0
  %6991 = vmatpush2.bf16.msra.mxu0 0
  %6992 = vmatprep.subr.bf16.mxu0 0
  %6993 = vmatpush2.bf16.msra.mxu0 0
  %6994 = vmatprep.subr.bf16.mxu0 0
  %6995 = vmatpush2.bf16.msra.mxu0 0
  %6996 = vmatprep.subr.bf16.mxu0 0
  %6997 = vmatpush2.bf16.msra.mxu0 0
  %6998 = vmatprep.subr.bf16.mxu0 0
  %6999 = vmatpush2.bf16.msra.mxu0 0
  %7000 = vmatprep.subr.bf16.mxu0 0
  %7001 = vmatpush2.bf16.msra.mxu0 0
  %7002 = vmatprep.subr.bf16.mxu0 0
  %7003 = vmatpush2.bf16.msra.mxu0 0
  %7004 = vmatprep.mubr.bf16.mxu0 0
  %7005 = vmatmul.mubr.bf16.gmra.mxu0 %v6738
  %v7006 = vpop.f32.mrf.mxu0
  %v7007 = vadd.f32 0.0, %v7006
  %v7008 = vpop.f32.mrf.mxu0
  %v7009 = vadd.f32 0.0, %v7008
  %v7010 = vpop.f32.mrf.mxu0
  %v7011 = vpop.f32.mrf.mxu0
  %7012 = vdwg.mxu0
  %v7013 = vadd.f32 %v6734, %v6966
  %v7014 = vadd.f32 %v6735, %v6968
  %v7015 = vadd.f32 %v6736, %v7007
  %v7016 = vadd.f32 %v6737, %v7009
  %v7017 = vxor.u32 %v7013, 2147483648
  %v7018 = vxor.u32 %v7014, 2147483648
  %v7019 = vxor.u32 %v7015, 2147483648
  %v7020 = vmul.f32 %v7017, 1.442695
  %v7021 = vpow.pop %v7020
  %v7022 = vmul.f32 %v7018, 1.442695
  %v7023 = vpow.pop %v7022
  %v7024 = vmul.f32 %v7019, 1.442695
  %v7025 = vpow.pop %v7024
  %v7026 = vadd.f32 %v7021, 1.0
  %v7027 = vadd.f32 %v7023, 1.0
  %v7028 = vadd.f32 %v7025, 1.0
  %v7029 = vrcp.pop %v7026
  %v7030 = vmul.f32 1.0, %v7029
  %v7031 = vrcp.pop %v7027
  %v7032 = vmul.f32 1.0, %v7031
  %v7033 = vrcp.pop %v7028
  %v7034 = vmul.f32 1.0, %v7033
  %v7035 = vtanh.pop %v7016
  %v7036 = vmul.f32 %v7032, %v6730
  %v7037 = vmul.f32 %v7030, %v7035
  %v7038 = vadd.f32 %v7036, %v7037
  %v7039 = vtanh.pop %v7038
  %v7040 = vmul.f32 %v7034, %v7039
  %7041 = vst [vmem:[%s1270] sm:$0xff] %v7040
  %v7042 = vld [vmem:[%s4157] sm:$0xff]
  %v7043 = vld [vmem:[%s4157 + $0x8] sm:$0xff]
  %v7044 = vld [vmem:[%s4157 + $0x10] sm:$0xff]
  %v7045 = vld [vmem:[%s4157 + $0x18] sm:$0xff]
  %v7046 = vpack.c.bf16 %v7040, %v7040
  %v7047 = vld [vmem:[%s8] sm:$0xff]
  %v7048 = vld [vmem:[%s8 + $0x8] sm:$0xff]
  %v7049 = vld [vmem:[%s8 + $0x10] sm:$0xff]
  %v7050 = vld [vmem:[%s8 + $0x18] sm:$0xff]
  %v7051 = vld [vmem:[%s8 + $0x20] sm:$0xff]
  %v7052 = vld [vmem:[%s8 + $0x28] sm:$0xff]
  %v7053 = vld [vmem:[%s8 + $0x30] sm:$0xff]
  %v7054 = vld [vmem:[%s8 + $0x38] sm:$0xff]
  %v7055 = vld [vmem:[%s8 + $0x40] sm:$0xff]
  %v7056 = vld [vmem:[%s8 + $0x48] sm:$0xff]
  %v7057 = vld [vmem:[%s8 + $0x50] sm:$0xff]
  %v7058 = vld [vmem:[%s8 + $0x58] sm:$0xff]
  %v7059 = vld [vmem:[%s8 + $0x60] sm:$0xff]
  %v7060 = vld [vmem:[%s8 + $0x68] sm:$0xff]
  %v7061 = vld [vmem:[%s8 + $0x70] sm:$0xff]
  %v7062 = vld [vmem:[%s8 + $0x78] sm:$0xff]
  %v7063 = vld [vmem:[%s8 + $0x80] sm:$0xff]
  %v7064 = vld [vmem:[%s8 + $0x88] sm:$0xff]
  %v7065 = vld [vmem:[%s8 + $0x90] sm:$0xff]
  %v7066 = vld [vmem:[%s8 + $0x98] sm:$0xff]
  %v7067 = vld [vmem:[%s8 + $0xa0] sm:$0xff]
  %v7068 = vld [vmem:[%s8 + $0xa8] sm:$0xff]
  %v7069 = vld [vmem:[%s8 + $0xb0] sm:$0xff]
  %v7070 = vld [vmem:[%s8 + $0xb8] sm:$0xff]
  %v7071 = vld [vmem:[%s8 + $0xc0] sm:$0xff]
  %v7072 = vld [vmem:[%s8 + $0xc8] sm:$0xff]
  %v7073 = vld [vmem:[%s8 + $0xd0] sm:$0xff]
  %v7074 = vld [vmem:[%s8 + $0xd8] sm:$0xff]
  %v7075 = vld [vmem:[%s8 + $0xe0] sm:$0xff]
  %v7076 = vld [vmem:[%s8 + $0xe8] sm:$0xff]
  %v7077 = vld [vmem:[%s8 + $0xf0] sm:$0xff]
  %v7078 = vld [vmem:[%s8 + $0xf8] sm:$0xff]
  %v7111 = vunpack.c.l.b16 %v7047
  %v7112 = vunpack.c.h.b16 %v7047
  %v7113 = vunpack.c.l.b16 %v7048
  %v7114 = vunpack.c.h.b16 %v7048
  %v7115 = vunpack.c.l.b16 %v7049
  %v7116 = vunpack.c.h.b16 %v7049
  %v7117 = vunpack.c.l.b16 %v7050
  %v7118 = vunpack.c.h.b16 %v7050
  %v7119 = vunpack.c.l.b16 %v7051
  %v7120 = vunpack.c.h.b16 %v7051
  %v7121 = vunpack.c.l.b16 %v7052
  %v7122 = vunpack.c.h.b16 %v7052
  %v7123 = vunpack.c.l.b16 %v7053
  %v7124 = vunpack.c.h.b16 %v7053
  %v7125 = vunpack.c.l.b16 %v7054
  %v7126 = vunpack.c.h.b16 %v7054
  %v7127 = vunpack.c.l.b16 %v7055
  %v7128 = vunpack.c.h.b16 %v7055
  %v7129 = vunpack.c.l.b16 %v7056
  %v7130 = vunpack.c.h.b16 %v7056
  %v7131 = vunpack.c.l.b16 %v7057
  %v7132 = vunpack.c.h.b16 %v7057
  %v7133 = vunpack.c.l.b16 %v7058
  %v7134 = vunpack.c.h.b16 %v7058
  %v7135 = vunpack.c.l.b16 %v7059
  %v7136 = vunpack.c.h.b16 %v7059
  %v7137 = vunpack.c.l.b16 %v7060
  %v7138 = vunpack.c.h.b16 %v7060
  %v7139 = vunpack.c.l.b16 %v7061
  %v7140 = vunpack.c.h.b16 %v7061
  %v7141 = vunpack.c.l.b16 %v7062
  %v7142 = vunpack.c.h.b16 %v7062
  %v7143 = vunpack.c.l.b16 %v7063
  %v7144 = vunpack.c.h.b16 %v7063
  %v7145 = vunpack.c.l.b16 %v7064
  %v7146 = vunpack.c.h.b16 %v7064
  %v7147 = vunpack.c.l.b16 %v7065
  %v7148 = vunpack.c.h.b16 %v7065
  %v7149 = vunpack.c.l.b16 %v7066
  %v7150 = vunpack.c.h.b16 %v7066
  %v7151 = vunpack.c.l.b16 %v7067
  %v7152 = vunpack.c.h.b16 %v7067
  %v7153 = vunpack.c.l.b16 %v7068
  %v7154 = vunpack.c.h.b16 %v7068
  %v7155 = vunpack.c.l.b16 %v7069
  %v7156 = vunpack.c.h.b16 %v7069
  %v7157 = vunpack.c.l.b16 %v7070
  %v7158 = vunpack.c.h.b16 %v7070
  %v7159 = vunpack.c.l.b16 %v7071
  %v7160 = vunpack.c.h.b16 %v7071
  %v7161 = vunpack.c.l.b16 %v7072
  %v7162 = vunpack.c.h.b16 %v7072
  %v7163 = vunpack.c.l.b16 %v7073
  %v7164 = vunpack.c.h.b16 %v7073
  %v7165 = vunpack.c.l.b16 %v7074
  %v7166 = vunpack.c.h.b16 %v7074
  %v7167 = vunpack.c.l.b16 %v7075
  %v7168 = vunpack.c.h.b16 %v7075
  %v7169 = vunpack.c.l.b16 %v7076
  %v7170 = vunpack.c.h.b16 %v7076
  %v7171 = vunpack.c.l.b16 %v7077
  %v7172 = vunpack.c.h.b16 %v7077
  %v7173 = vunpack.c.l.b16 %v7078
  %v7174 = vunpack.c.h.b16 %v7078
  %v7175 = vpack.c.b16 %v7115, %v7111
  %v7176 = vpack.c.b16 %v7116, %v7112
  %v7177 = vpack.c.b16 %v7117, %v7113
  %v7178 = vpack.c.b16 %v7118, %v7114
  %v7179 = vpack.c.b16 %v7123, %v7119
  %v7180 = vpack.c.b16 %v7124, %v7120
  %v7181 = vpack.c.b16 %v7125, %v7121
  %v7182 = vpack.c.b16 %v7126, %v7122
  %v7183 = vpack.c.b16 %v7131, %v7127
  %v7184 = vpack.c.b16 %v7132, %v7128
  %v7185 = vpack.c.b16 %v7133, %v7129
  %v7186 = vpack.c.b16 %v7134, %v7130
  %v7187 = vpack.c.b16 %v7139, %v7135
  %v7188 = vpack.c.b16 %v7140, %v7136
  %v7189 = vpack.c.b16 %v7141, %v7137
  %v7190 = vpack.c.b16 %v7142, %v7138
  %v7191 = vpack.c.b16 %v7147, %v7143
  %v7192 = vpack.c.b16 %v7148, %v7144
  %v7193 = vpack.c.b16 %v7149, %v7145
  %v7194 = vpack.c.b16 %v7150, %v7146
  %v7195 = vpack.c.b16 %v7155, %v7151
  %v7196 = vpack.c.b16 %v7156, %v7152
  %v7197 = vpack.c.b16 %v7157, %v7153
  %v7198 = vpack.c.b16 %v7158, %v7154
  %v7199 = vpack.c.b16 %v7163, %v7159
  %v7200 = vpack.c.b16 %v7164, %v7160
  %v7201 = vpack.c.b16 %v7165, %v7161
  %v7202 = vpack.c.b16 %v7166, %v7162
  %v7203 = vpack.c.b16 %v7171, %v7167
  %v7204 = vpack.c.b16 %v7172, %v7168
  %v7205 = vpack.c.b16 %v7173, %v7169
  %v7206 = vpack.c.b16 %v7174, %v7170
  %7239 = vmatprep.subr.bf16.mxu0 %v7204
  %7240 = vmatpush1.bf16.msra.mxu0 %v7203
  %7241 = vmatprep.subr.bf16.mxu0 %v7200
  %7242 = vmatpush1.bf16.msra.mxu0 %v7199
  %7243 = vmatprep.subr.bf16.mxu0 %v7196
  %7244 = vmatpush1.bf16.msra.mxu0 %v7195
  %7245 = vmatprep.subr.bf16.mxu0 %v7192
  %7246 = vmatpush1.bf16.msra.mxu0 %v7191
  %7247 = vmatprep.subr.bf16.mxu0 %v7188
  %7248 = vmatpush1.bf16.msra.mxu0 %v7187
  %7249 = vmatprep.subr.bf16.mxu0 %v7184
  %7250 = vmatpush1.bf16.msra.mxu0 %v7183
  %7251 = vmatprep.subr.bf16.mxu0 %v7180
  %7252 = vmatpush1.bf16.msra.mxu0 %v7179
  %7253 = vmatprep.subr.bf16.mxu0 %v7176
  %7254 = vmatpush1.bf16.msra.mxu0 %v7175
  %7255 = vmatprep.subr.bf16.mxu0 0
  %7256 = vmatpush2.bf16.msra.mxu0 0
  %7257 = vmatprep.subr.bf16.mxu0 0
  %7258 = vmatpush2.bf16.msra.mxu0 0
  %7259 = vmatprep.subr.bf16.mxu0 0
  %7260 = vmatpush2.bf16.msra.mxu0 0
  %7261 = vmatprep.subr.bf16.mxu0 0
  %7262 = vmatpush2.bf16.msra.mxu0 0
  %7263 = vmatprep.subr.bf16.mxu0 0
  %7264 = vmatpush2.bf16.msra.mxu0 0
  %7265 = vmatprep.subr.bf16.mxu0 0
  %7266 = vmatpush2.bf16.msra.mxu0 0
  %7267 = vmatprep.subr.bf16.mxu0 0
  %7268 = vmatpush2.bf16.msra.mxu0 0
  %7269 = vmatprep.subr.bf16.mxu0 0
  %7270 = vmatpush2.bf16.msra.mxu0 0
  %7271 = vmatprep.mubr.bf16.mxu0 0
  %7272 = vmatmul.mubr.bf16.gmra.mxu0 %v7046
  %v7273 = vpop.f32.mrf.mxu0
  %v7274 = vadd.f32 0.0, %v7273
  %v7275 = vpop.f32.mrf.mxu0
  %v7276 = vadd.f32 0.0, %v7275
  %v7277 = vpop.f32.mrf.mxu0
  %v7278 = vpop.f32.mrf.mxu0
  %7279 = vdwg.mxu0
  %7280 = vmatprep.subr.bf16.mxu0 %v7206
  %7281 = vmatpush1.bf16.msra.mxu0 %v7205
  %7282 = vmatprep.subr.bf16.mxu0 %v7202
  %7283 = vmatpush1.bf16.msra.mxu0 %v7201
  %7284 = vmatprep.subr.bf16.mxu0 %v7198
  %7285 = vmatpush1.bf16.msra.mxu0 %v7197
  %7286 = vmatprep.subr.bf16.mxu0 %v7194
  %7287 = vmatpush1.bf16.msra.mxu0 %v7193
  %7288 = vmatprep.subr.bf16.mxu0 %v7190
  %7289 = vmatpush1.bf16.msra.mxu0 %v7189
  %7290 = vmatprep.subr.bf16.mxu0 %v7186
  %7291 = vmatpush1.bf16.msra.mxu0 %v7185
  %7292 = vmatprep.subr.bf16.mxu0 %v7182
  %7293 = vmatpush1.bf16.msra.mxu0 %v7181
  %7294 = vmatprep.subr.bf16.mxu0 %v7178
  %7295 = vmatpush1.bf16.msra.mxu0 %v7177
  %7296 = vmatprep.subr.bf16.mxu0 0
  %7297 = vmatpush2.bf16.msra.mxu0 0
  %7298 = vmatprep.subr.bf16.mxu0 0
  %7299 = vmatpush2.bf16.msra.mxu0 0
  %7300 = vmatprep.subr.bf16.mxu0 0
  %7301 = vmatpush2.bf16.msra.mxu0 0
  %7302 = vmatprep.subr.bf16.mxu0 0
  %7303 = vmatpush2.bf16.msra.mxu0 0
  %7304 = vmatprep.subr.bf16.mxu0 0
  %7305 = vmatpush2.bf16.msra.mxu0 0
  %7306 = vmatprep.subr.bf16.mxu0 0
  %7307 = vmatpush2.bf16.msra.mxu0 0
  %7308 = vmatprep.subr.bf16.mxu0 0
  %7309 = vmatpush2.bf16.msra.mxu0 0
  %7310 = vmatprep.subr.bf16.mxu0 0
  %7311 = vmatpush2.bf16.msra.mxu0 0
  %7312 = vmatprep.mubr.bf16.mxu0 0
  %7313 = vmatmul.mubr.bf16.gmra.mxu0 %v7046
  %v7314 = vpop.f32.mrf.mxu0
  %v7315 = vadd.f32 0.0, %v7314
  %v7316 = vpop.f32.mrf.mxu0
  %v7317 = vadd.f32 0.0, %v7316
  %v7318 = vpop.f32.mrf.mxu0
  %v7319 = vpop.f32.mrf.mxu0
  %7320 = vdwg.mxu0
  %v7321 = vadd.f32 %v7042, %v7274
  %v7322 = vadd.f32 %v7043, %v7276
  %v7323 = vadd.f32 %v7044, %v7315
  %v7324 = vadd.f32 %v7045, %v7317
  %v7325 = vxor.u32 %v7321, 2147483648
  %v7326 = vxor.u32 %v7322, 2147483648
  %v7327 = vxor.u32 %v7323, 2147483648
  %v7328 = vmul.f32 %v7325, 1.442695
  %v7329 = vpow.pop %v7328
  %v7330 = vmul.f32 %v7326, 1.442695
  %v7331 = vpow.pop %v7330
  %v7332 = vmul.f32 %v7327, 1.442695
  %v7333 = vpow.pop %v7332
  %v7334 = vadd.f32 %v7329, 1.0
  %v7335 = vadd.f32 %v7331, 1.0
  %v7336 = vadd.f32 %v7333, 1.0
  %v7337 = vrcp.pop %v7334
  %v7338 = vmul.f32 1.0, %v7337
  %v7339 = vrcp.pop %v7335
  %v7340 = vmul.f32 1.0, %v7339
  %v7341 = vrcp.pop %v7336
  %v7342 = vmul.f32 1.0, %v7341
  %v7343 = vtanh.pop %v7324
  %v7344 = vmul.f32 %v7340, %v7038
  %v7345 = vmul.f32 %v7338, %v7343
  %v7346 = vadd.f32 %v7344, %v7345
  %v7347 = vtanh.pop %v7346
  %v7348 = vmul.f32 %v7342, %v7347
  %7349 = vst [vmem:[%s1579] sm:$0xff] %v7348
  %v7350 = vld [vmem:[%s4469] sm:$0xff]
  %v7351 = vld [vmem:[%s4469 + $0x8] sm:$0xff]
  %v7352 = vld [vmem:[%s4469 + $0x10] sm:$0xff]
  %v7353 = vld [vmem:[%s4469 + $0x18] sm:$0xff]
  %v7354 = vpack.c.bf16 %v7348, %v7348
  %v7355 = vld [vmem:[%s8] sm:$0xff]
  %v7356 = vld [vmem:[%s8 + $0x8] sm:$0xff]
  %v7357 = vld [vmem:[%s8 + $0x10] sm:$0xff]
  %v7358 = vld [vmem:[%s8 + $0x18] sm:$0xff]
  %v7359 = vld [vmem:[%s8 + $0x20] sm:$0xff]
  %v7360 = vld [vmem:[%s8 + $0x28] sm:$0xff]
  %v7361 = vld [vmem:[%s8 + $0x30] sm:$0xff]
  %v7362 = vld [vmem:[%s8 + $0x38] sm:$0xff]
  %v7363 = vld [vmem:[%s8 + $0x40] sm:$0xff]
  %v7364 = vld [vmem:[%s8 + $0x48] sm:$0xff]
  %v7365 = vld [vmem:[%s8 + $0x50] sm:$0xff]
  %v7366 = vld [vmem:[%s8 + $0x58] sm:$0xff]
  %v7367 = vld [vmem:[%s8 + $0x60] sm:$0xff]
  %v7368 = vld [vmem:[%s8 + $0x68] sm:$0xff]
  %v7369 = vld [vmem:[%s8 + $0x70] sm:$0xff]
  %v7370 = vld [vmem:[%s8 + $0x78] sm:$0xff]
  %v7371 = vld [vmem:[%s8 + $0x80] sm:$0xff]
  %v7372 = vld [vmem:[%s8 + $0x88] sm:$0xff]
  %v7373 = vld [vmem:[%s8 + $0x90] sm:$0xff]
  %v7374 = vld [vmem:[%s8 + $0x98] sm:$0xff]
  %v7375 = vld [vmem:[%s8 + $0xa0] sm:$0xff]
  %v7376 = vld [vmem:[%s8 + $0xa8] sm:$0xff]
  %v7377 = vld [vmem:[%s8 + $0xb0] sm:$0xff]
  %v7378 = vld [vmem:[%s8 + $0xb8] sm:$0xff]
  %v7379 = vld [vmem:[%s8 + $0xc0] sm:$0xff]
  %v7380 = vld [vmem:[%s8 + $0xc8] sm:$0xff]
  %v7381 = vld [vmem:[%s8 + $0xd0] sm:$0xff]
  %v7382 = vld [vmem:[%s8 + $0xd8] sm:$0xff]
  %v7383 = vld [vmem:[%s8 + $0xe0] sm:$0xff]
  %v7384 = vld [vmem:[%s8 + $0xe8] sm:$0xff]
  %v7385 = vld [vmem:[%s8 + $0xf0] sm:$0xff]
  %v7386 = vld [vmem:[%s8 + $0xf8] sm:$0xff]
  %v7419 = vunpack.c.l.b16 %v7355
  %v7420 = vunpack.c.h.b16 %v7355
  %v7421 = vunpack.c.l.b16 %v7356
  %v7422 = vunpack.c.h.b16 %v7356
  %v7423 = vunpack.c.l.b16 %v7357
  %v7424 = vunpack.c.h.b16 %v7357
  %v7425 = vunpack.c.l.b16 %v7358
  %v7426 = vunpack.c.h.b16 %v7358
  %v7427 = vunpack.c.l.b16 %v7359
  %v7428 = vunpack.c.h.b16 %v7359
  %v7429 = vunpack.c.l.b16 %v7360
  %v7430 = vunpack.c.h.b16 %v7360
  %v7431 = vunpack.c.l.b16 %v7361
  %v7432 = vunpack.c.h.b16 %v7361
  %v7433 = vunpack.c.l.b16 %v7362
  %v7434 = vunpack.c.h.b16 %v7362
  %v7435 = vunpack.c.l.b16 %v7363
  %v7436 = vunpack.c.h.b16 %v7363
  %v7437 = vunpack.c.l.b16 %v7364
  %v7438 = vunpack.c.h.b16 %v7364
  %v7439 = vunpack.c.l.b16 %v7365
  %v7440 = vunpack.c.h.b16 %v7365
  %v7441 = vunpack.c.l.b16 %v7366
  %v7442 = vunpack.c.h.b16 %v7366
  %v7443 = vunpack.c.l.b16 %v7367
  %v7444 = vunpack.c.h.b16 %v7367
  %v7445 = vunpack.c.l.b16 %v7368
  %v7446 = vunpack.c.h.b16 %v7368
  %v7447 = vunpack.c.l.b16 %v7369
  %v7448 = vunpack.c.h.b16 %v7369
  %v7449 = vunpack.c.l.b16 %v7370
  %v7450 = vunpack.c.h.b16 %v7370
  %v7451 = vunpack.c.l.b16 %v7371
  %v7452 = vunpack.c.h.b16 %v7371
  %v7453 = vunpack.c.l.b16 %v7372
  %v7454 = vunpack.c.h.b16 %v7372
  %v7455 = vunpack.c.l.b16 %v7373
  %v7456 = vunpack.c.h.b16 %v7373
  %v7457 = vunpack.c.l.b16 %v7374
  %v7458 = vunpack.c.h.b16 %v7374
  %v7459 = vunpack.c.l.b16 %v7375
  %v7460 = vunpack.c.h.b16 %v7375
  %v7461 = vunpack.c.l.b16 %v7376
  %v7462 = vunpack.c.h.b16 %v7376
  %v7463 = vunpack.c.l.b16 %v7377
  %v7464 = vunpack.c.h.b16 %v7377
  %v7465 = vunpack.c.l.b16 %v7378
  %v7466 = vunpack.c.h.b16 %v7378
  %v7467 = vunpack.c.l.b16 %v7379
  %v7468 = vunpack.c.h.b16 %v7379
  %v7469 = vunpack.c.l.b16 %v7380
  %v7470 = vunpack.c.h.b16 %v7380
  %v7471 = vunpack.c.l.b16 %v7381
  %v7472 = vunpack.c.h.b16 %v7381
  %v7473 = vunpack.c.l.b16 %v7382
  %v7474 = vunpack.c.h.b16 %v7382
  %v7475 = vunpack.c.l.b16 %v7383
  %v7476 = vunpack.c.h.b16 %v7383
  %v7477 = vunpack.c.l.b16 %v7384
  %v7478 = vunpack.c.h.b16 %v7384
  %v7479 = vunpack.c.l.b16 %v7385
  %v7480 = vunpack.c.h.b16 %v7385
  %v7481 = vunpack.c.l.b16 %v7386
  %v7482 = vunpack.c.h.b16 %v7386
  %v7483 = vpack.c.b16 %v7423, %v7419
  %v7484 = vpack.c.b16 %v7424, %v7420
  %v7485 = vpack.c.b16 %v7425, %v7421
  %v7486 = vpack.c.b16 %v7426, %v7422
  %v7487 = vpack.c.b16 %v7431, %v7427
  %v7488 = vpack.c.b16 %v7432, %v7428
  %v7489 = vpack.c.b16 %v7433, %v7429
  %v7490 = vpack.c.b16 %v7434, %v7430
  %v7491 = vpack.c.b16 %v7439, %v7435
  %v7492 = vpack.c.b16 %v7440, %v7436
  %v7493 = vpack.c.b16 %v7441, %v7437
  %v7494 = vpack.c.b16 %v7442, %v7438
  %v7495 = vpack.c.b16 %v7447, %v7443
  %v7496 = vpack.c.b16 %v7448, %v7444
  %v7497 = vpack.c.b16 %v7449, %v7445
  %v7498 = vpack.c.b16 %v7450, %v7446
  %v7499 = vpack.c.b16 %v7455, %v7451
  %v7500 = vpack.c.b16 %v7456, %v7452
  %v7501 = vpack.c.b16 %v7457, %v7453
  %v7502 = vpack.c.b16 %v7458, %v7454
  %v7503 = vpack.c.b16 %v7463, %v7459
  %v7504 = vpack.c.b16 %v7464, %v7460
  %v7505 = vpack.c.b16 %v7465, %v7461
  %v7506 = vpack.c.b16 %v7466, %v7462
  %v7507 = vpack.c.b16 %v7471, %v7467
  %v7508 = vpack.c.b16 %v7472, %v7468
  %v7509 = vpack.c.b16 %v7473, %v7469
  %v7510 = vpack.c.b16 %v7474, %v7470
  %v7511 = vpack.c.b16 %v7479, %v7475
  %v7512 = vpack.c.b16 %v7480, %v7476
  %v7513 = vpack.c.b16 %v7481, %v7477
  %v7514 = vpack.c.b16 %v7482, %v7478
  %7547 = vmatprep.subr.bf16.mxu0 %v7512
  %7548 = vmatpush1.bf16.msra.mxu0 %v7511
  %7549 = vmatprep.subr.bf16.mxu0 %v7508
  %7550 = vmatpush1.bf16.msra.mxu0 %v7507
  %7551 = vmatprep.subr.bf16.mxu0 %v7504
  %7552 = vmatpush1.bf16.msra.mxu0 %v7503
  %7553 = vmatprep.subr.bf16.mxu0 %v7500
  %7554 = vmatpush1.bf16.msra.mxu0 %v7499
  %7555 = vmatprep.subr.bf16.mxu0 %v7496
  %7556 = vmatpush1.bf16.msra.mxu0 %v7495
  %7557 = vmatprep.subr.bf16.mxu0 %v7492
  %7558 = vmatpush1.bf16.msra.mxu0 %v7491
  %7559 = vmatprep.subr.bf16.mxu0 %v7488
  %7560 = vmatpush1.bf16.msra.mxu0 %v7487
  %7561 = vmatprep.subr.bf16.mxu0 %v7484
  %7562 = vmatpush1.bf16.msra.mxu0 %v7483
  %7563 = vmatprep.subr.bf16.mxu0 0
  %7564 = vmatpush2.bf16.msra.mxu0 0
  %7565 = vmatprep.subr.bf16.mxu0 0
  %7566 = vmatpush2.bf16.msra.mxu0 0
  %7567 = vmatprep.subr.bf16.mxu0 0
  %7568 = vmatpush2.bf16.msra.mxu0 0
  %7569 = vmatprep.subr.bf16.mxu0 0
  %7570 = vmatpush2.bf16.msra.mxu0 0
  %7571 = vmatprep.subr.bf16.mxu0 0
  %7572 = vmatpush2.bf16.msra.mxu0 0
  %7573 = vmatprep.subr.bf16.mxu0 0
  %7574 = vmatpush2.bf16.msra.mxu0 0
  %7575 = vmatprep.subr.bf16.mxu0 0
  %7576 = vmatpush2.bf16.msra.mxu0 0
  %7577 = vmatprep.subr.bf16.mxu0 0
  %7578 = vmatpush2.bf16.msra.mxu0 0
  %7579 = vmatprep.mubr.bf16.mxu0 0
  %7580 = vmatmul.mubr.bf16.gmra.mxu0 %v7354
  %v7581 = vpop.f32.mrf.mxu0
  %v7582 = vadd.f32 0.0, %v7581
  %v7583 = vpop.f32.mrf.mxu0
  %v7584 = vadd.f32 0.0, %v7583
  %v7585 = vpop.f32.mrf.mxu0
  %v7586 = vpop.f32.mrf.mxu0
  %7587 = vdwg.mxu0
  %7588 = vmatprep.subr.bf16.mxu0 %v7514
  %7589 = vmatpush1.bf16.msra.mxu0 %v7513
  %7590 = vmatprep.subr.bf16.mxu0 %v7510
  %7591 = vmatpush1.bf16.msra.mxu0 %v7509
  %7592 = vmatprep.subr.bf16.mxu0 %v7506
  %7593 = vmatpush1.bf16.msra.mxu0 %v7505
  %7594 = vmatprep.subr.bf16.mxu0 %v7502
  %7595 = vmatpush1.bf16.msra.mxu0 %v7501
  %7596 = vmatprep.subr.bf16.mxu0 %v7498
  %7597 = vmatpush1.bf16.msra.mxu0 %v7497
  %7598 = vmatprep.subr.bf16.mxu0 %v7494
  %7599 = vmatpush1.bf16.msra.mxu0 %v7493
  %7600 = vmatprep.subr.bf16.mxu0 %v7490
  %7601 = vmatpush1.bf16.msra.mxu0 %v7489
  %7602 = vmatprep.subr.bf16.mxu0 %v7486
  %7603 = vmatpush1.bf16.msra.mxu0 %v7485
  %7604 = vmatprep.subr.bf16.mxu0 0
  %7605 = vmatpush2.bf16.msra.mxu0 0
  %7606 = vmatprep.subr.bf16.mxu0 0
  %7607 = vmatpush2.bf16.msra.mxu0 0
  %7608 = vmatprep.subr.bf16.mxu0 0
  %7609 = vmatpush2.bf16.msra.mxu0 0
  %7610 = vmatprep.subr.bf16.mxu0 0
  %7611 = vmatpush2.bf16.msra.mxu0 0
  %7612 = vmatprep.subr.bf16.mxu0 0
  %7613 = vmatpush2.bf16.msra.mxu0 0
  %7614 = vmatprep.subr.bf16.mxu0 0
  %7615 = vmatpush2.bf16.msra.mxu0 0
  %7616 = vmatprep.subr.bf16.mxu0 0
  %7617 = vmatpush2.bf16.msra.mxu0 0
  %7618 = vmatprep.subr.bf16.mxu0 0
  %7619 = vmatpush2.bf16.msra.mxu0 0
  %7620 = vmatprep.mubr.bf16.mxu0 0
  %7621 = vmatmul.mubr.bf16.gmra.mxu0 %v7354
  %v7622 = vpop.f32.mrf.mxu0
  %v7623 = vadd.f32 0.0, %v7622
  %v7624 = vpop.f32.mrf.mxu0
  %v7625 = vadd.f32 0.0, %v7624
  %v7626 = vpop.f32.mrf.mxu0
  %v7627 = vpop.f32.mrf.mxu0
  %7628 = vdwg.mxu0
  %v7629 = vadd.f32 %v7350, %v7582
  %v7630 = vadd.f32 %v7351, %v7584
  %v7631 = vadd.f32 %v7352, %v7623
  %v7632 = vadd.f32 %v7353, %v7625
  %v7633 = vxor.u32 %v7629, 2147483648
  %v7634 = vxor.u32 %v7630, 2147483648
  %v7635 = vxor.u32 %v7631, 2147483648
  %v7636 = vmul.f32 %v7633, 1.442695
  %v7637 = vpow.pop %v7636
  %v7638 = vmul.f32 %v7634, 1.442695
  %v7639 = vpow.pop %v7638
  %v7640 = vmul.f32 %v7635, 1.442695
  %v7641 = vpow.pop %v7640
  %v7642 = vadd.f32 %v7637, 1.0
  %v7643 = vadd.f32 %v7639, 1.0
  %v7644 = vadd.f32 %v7641, 1.0
  %v7645 = vrcp.pop %v7642
  %v7646 = vmul.f32 1.0, %v7645
  %v7647 = vrcp.pop %v7643
  %v7648 = vmul.f32 1.0, %v7647
  %v7649 = vrcp.pop %v7644
  %v7650 = vmul.f32 1.0, %v7649
  %v7651 = vtanh.pop %v7632
  %v7652 = vmul.f32 %v7648, %v7346
  %v7653 = vmul.f32 %v7646, %v7651
  %v7654 = vadd.f32 %v7652, %v7653
  %v7655 = vtanh.pop %v7654
  %v7656 = vmul.f32 %v7650, %v7655
  %7657 = vst [vmem:[%s1888] sm:$0xff] %v7656
  %v7658 = vld [vmem:[%s4781] sm:$0xff]
  %v7659 = vld [vmem:[%s4781 + $0x8] sm:$0xff]
  %v7660 = vld [vmem:[%s4781 + $0x10] sm:$0xff]
  %v7661 = vld [vmem:[%s4781 + $0x18] sm:$0xff]
  %v7662 = vpack.c.bf16 %v7656, %v7656
  %v7663 = vld [vmem:[%s8] sm:$0xff]
  %v7664 = vld [vmem:[%s8 + $0x8] sm:$0xff]
  %v7665 = vld [vmem:[%s8 + $0x10] sm:$0xff]
  %v7666 = vld [vmem:[%s8 + $0x18] sm:$0xff]
  %v7667 = vld [vmem:[%s8 + $0x20] sm:$0xff]
  %v7668 = vld [vmem:[%s8 + $0x28] sm:$0xff]
  %v7669 = vld [vmem:[%s8 + $0x30] sm:$0xff]
  %v7670 = vld [vmem:[%s8 + $0x38] sm:$0xff]
  %v7671 = vld [vmem:[%s8 + $0x40] sm:$0xff]
  %v7672 = vld [vmem:[%s8 + $0x48] sm:$0xff]
  %v7673 = vld [vmem:[%s8 + $0x50] sm:$0xff]
  %v7674 = vld [vmem:[%s8 + $0x58] sm:$0xff]
  %v7675 = vld [vmem:[%s8 + $0x60] sm:$0xff]
  %v7676 = vld [vmem:[%s8 + $0x68] sm:$0xff]
  %v7677 = vld [vmem:[%s8 + $0x70] sm:$0xff]
  %v7678 = vld [vmem:[%s8 + $0x78] sm:$0xff]
  %v7679 = vld [vmem:[%s8 + $0x80] sm:$0xff]
  %v7680 = vld [vmem:[%s8 + $0x88] sm:$0xff]
  %v7681 = vld [vmem:[%s8 + $0x90] sm:$0xff]
  %v7682 = vld [vmem:[%s8 + $0x98] sm:$0xff]
  %v7683 = vld [vmem:[%s8 + $0xa0] sm:$0xff]
  %v7684 = vld [vmem:[%s8 + $0xa8] sm:$0xff]
  %v7685 = vld [vmem:[%s8 + $0xb0] sm:$0xff]
  %v7686 = vld [vmem:[%s8 + $0xb8] sm:$0xff]
  %v7687 = vld [vmem:[%s8 + $0xc0] sm:$0xff]
  %v7688 = vld [vmem:[%s8 + $0xc8] sm:$0xff]
  %v7689 = vld [vmem:[%s8 + $0xd0] sm:$0xff]
  %v7690 = vld [vmem:[%s8 + $0xd8] sm:$0xff]
  %v7691 = vld [vmem:[%s8 + $0xe0] sm:$0xff]
  %v7692 = vld [vmem:[%s8 + $0xe8] sm:$0xff]
  %v7693 = vld [vmem:[%s8 + $0xf0] sm:$0xff]
  %v7694 = vld [vmem:[%s8 + $0xf8] sm:$0xff]
  %v7727 = vunpack.c.l.b16 %v7663
  %v7728 = vunpack.c.h.b16 %v7663
  %v7729 = vunpack.c.l.b16 %v7664
  %v7730 = vunpack.c.h.b16 %v7664
  %v7731 = vunpack.c.l.b16 %v7665
  %v7732 = vunpack.c.h.b16 %v7665
  %v7733 = vunpack.c.l.b16 %v7666
  %v7734 = vunpack.c.h.b16 %v7666
  %v7735 = vunpack.c.l.b16 %v7667
  %v7736 = vunpack.c.h.b16 %v7667
  %v7737 = vunpack.c.l.b16 %v7668
  %v7738 = vunpack.c.h.b16 %v7668
  %v7739 = vunpack.c.l.b16 %v7669
  %v7740 = vunpack.c.h.b16 %v7669
  %v7741 = vunpack.c.l.b16 %v7670
  %v7742 = vunpack.c.h.b16 %v7670
  %v7743 = vunpack.c.l.b16 %v7671
  %v7744 = vunpack.c.h.b16 %v7671
  %v7745 = vunpack.c.l.b16 %v7672
  %v7746 = vunpack.c.h.b16 %v7672
  %v7747 = vunpack.c.l.b16 %v7673
  %v7748 = vunpack.c.h.b16 %v7673
  %v7749 = vunpack.c.l.b16 %v7674
  %v7750 = vunpack.c.h.b16 %v7674
  %v7751 = vunpack.c.l.b16 %v7675
  %v7752 = vunpack.c.h.b16 %v7675
  %v7753 = vunpack.c.l.b16 %v7676
  %v7754 = vunpack.c.h.b16 %v7676
  %v7755 = vunpack.c.l.b16 %v7677
  %v7756 = vunpack.c.h.b16 %v7677
  %v7757 = vunpack.c.l.b16 %v7678
  %v7758 = vunpack.c.h.b16 %v7678
  %v7759 = vunpack.c.l.b16 %v7679
  %v7760 = vunpack.c.h.b16 %v7679
  %v7761 = vunpack.c.l.b16 %v7680
  %v7762 = vunpack.c.h.b16 %v7680
  %v7763 = vunpack.c.l.b16 %v7681
  %v7764 = vunpack.c.h.b16 %v7681
  %v7765 = vunpack.c.l.b16 %v7682
  %v7766 = vunpack.c.h.b16 %v7682
  %v7767 = vunpack.c.l.b16 %v7683
  %v7768 = vunpack.c.h.b16 %v7683
  %v7769 = vunpack.c.l.b16 %v7684
  %v7770 = vunpack.c.h.b16 %v7684
  %v7771 = vunpack.c.l.b16 %v7685
  %v7772 = vunpack.c.h.b16 %v7685
  %v7773 = vunpack.c.l.b16 %v7686
  %v7774 = vunpack.c.h.b16 %v7686
  %v7775 = vunpack.c.l.b16 %v7687
  %v7776 = vunpack.c.h.b16 %v7687
  %v7777 = vunpack.c.l.b16 %v7688
  %v7778 = vunpack.c.h.b16 %v7688
  %v7779 = vunpack.c.l.b16 %v7689
  %v7780 = vunpack.c.h.b16 %v7689
  %v7781 = vunpack.c.l.b16 %v7690
  %v7782 = vunpack.c.h.b16 %v7690
  %v7783 = vunpack.c.l.b16 %v7691
  %v7784 = vunpack.c.h.b16 %v7691
  %v7785 = vunpack.c.l.b16 %v7692
  %v7786 = vunpack.c.h.b16 %v7692
  %v7787 = vunpack.c.l.b16 %v7693
  %v7788 = vunpack.c.h.b16 %v7693
  %v7789 = vunpack.c.l.b16 %v7694
  %v7790 = vunpack.c.h.b16 %v7694
  %v7791 = vpack.c.b16 %v7731, %v7727
  %v7792 = vpack.c.b16 %v7732, %v7728
  %v7793 = vpack.c.b16 %v7733, %v7729
  %v7794 = vpack.c.b16 %v7734, %v7730
  %v7795 = vpack.c.b16 %v7739, %v7735
  %v7796 = vpack.c.b16 %v7740, %v7736
  %v7797 = vpack.c.b16 %v7741, %v7737
  %v7798 = vpack.c.b16 %v7742, %v7738
  %v7799 = vpack.c.b16 %v7747, %v7743
  %v7800 = vpack.c.b16 %v7748, %v7744
  %v7801 = vpack.c.b16 %v7749, %v7745
  %v7802 = vpack.c.b16 %v7750, %v7746
  %v7803 = vpack.c.b16 %v7755, %v7751
  %v7804 = vpack.c.b16 %v7756, %v7752
  %v7805 = vpack.c.b16 %v7757, %v7753
  %v7806 = vpack.c.b16 %v7758, %v7754
  %v7807 = vpack.c.b16 %v7763, %v7759
  %v7808 = vpack.c.b16 %v7764, %v7760
  %v7809 = vpack.c.b16 %v7765, %v7761
  %v7810 = vpack.c.b16 %v7766, %v7762
  %v7811 = vpack.c.b16 %v7771, %v7767
  %v7812 = vpack.c.b16 %v7772, %v7768
  %v7813 = vpack.c.b16 %v7773, %v7769
  %v7814 = vpack.c.b16 %v7774, %v7770
  %v7815 = vpack.c.b16 %v7779, %v7775
  %v7816 = vpack.c.b16 %v7780, %v7776
  %v7817 = vpack.c.b16 %v7781, %v7777
  %v7818 = vpack.c.b16 %v7782, %v7778
  %v7819 = vpack.c.b16 %v7787, %v7783
  %v7820 = vpack.c.b16 %v7788, %v7784
  %v7821 = vpack.c.b16 %v7789, %v7785
  %v7822 = vpack.c.b16 %v7790, %v7786
  %7855 = vmatprep.subr.bf16.mxu0 %v7820
  %7856 = vmatpush1.bf16.msra.mxu0 %v7819
  %7857 = vmatprep.subr.bf16.mxu0 %v7816
  %7858 = vmatpush1.bf16.msra.mxu0 %v7815
  %7859 = vmatprep.subr.bf16.mxu0 %v7812
  %7860 = vmatpush1.bf16.msra.mxu0 %v7811
  %7861 = vmatprep.subr.bf16.mxu0 %v7808
  %7862 = vmatpush1.bf16.msra.mxu0 %v7807
  %7863 = vmatprep.subr.bf16.mxu0 %v7804
  %7864 = vmatpush1.bf16.msra.mxu0 %v7803
  %7865 = vmatprep.subr.bf16.mxu0 %v7800
  %7866 = vmatpush1.bf16.msra.mxu0 %v7799
  %7867 = vmatprep.subr.bf16.mxu0 %v7796
  %7868 = vmatpush1.bf16.msra.mxu0 %v7795
  %7869 = vmatprep.subr.bf16.mxu0 %v7792
  %7870 = vmatpush1.bf16.msra.mxu0 %v7791
  %7871 = vmatprep.subr.bf16.mxu0 0
  %7872 = vmatpush2.bf16.msra.mxu0 0
  %7873 = vmatprep.subr.bf16.mxu0 0
  %7874 = vmatpush2.bf16.msra.mxu0 0
  %7875 = vmatprep.subr.bf16.mxu0 0
  %7876 = vmatpush2.bf16.msra.mxu0 0
  %7877 = vmatprep.subr.bf16.mxu0 0
  %7878 = vmatpush2.bf16.msra.mxu0 0
  %7879 = vmatprep.subr.bf16.mxu0 0
  %7880 = vmatpush2.bf16.msra.mxu0 0
  %7881 = vmatprep.subr.bf16.mxu0 0
  %7882 = vmatpush2.bf16.msra.mxu0 0
  %7883 = vmatprep.subr.bf16.mxu0 0
  %7884 = vmatpush2.bf16.msra.mxu0 0
  %7885 = vmatprep.subr.bf16.mxu0 0
  %7886 = vmatpush2.bf16.msra.mxu0 0
  %7887 = vmatprep.mubr.bf16.mxu0 0
  %7888 = vmatmul.mubr.bf16.gmra.mxu0 %v7662
  %v7889 = vpop.f32.mrf.mxu0
  %v7890 = vadd.f32 0.0, %v7889
  %v7891 = vpop.f32.mrf.mxu0
  %v7892 = vadd.f32 0.0, %v7891
  %v7893 = vpop.f32.mrf.mxu0
  %v7894 = vpop.f32.mrf.mxu0
  %7895 = vdwg.mxu0
  %7896 = vmatprep.subr.bf16.mxu0 %v7822
  %7897 = vmatpush1.bf16.msra.mxu0 %v7821
  %7898 = vmatprep.subr.bf16.mxu0 %v7818
  %7899 = vmatpush1.bf16.msra.mxu0 %v7817
  %7900 = vmatprep.subr.bf16.mxu0 %v7814
  %7901 = vmatpush1.bf16.msra.mxu0 %v7813
  %7902 = vmatprep.subr.bf16.mxu0 %v7810
  %7903 = vmatpush1.bf16.msra.mxu0 %v7809
  %7904 = vmatprep.subr.bf16.mxu0 %v7806
  %7905 = vmatpush1.bf16.msra.mxu0 %v7805
  %7906 = vmatprep.subr.bf16.mxu0 %v7802
  %7907 = vmatpush1.bf16.msra.mxu0 %v7801
  %7908 = vmatprep.subr.bf16.mxu0 %v7798
  %7909 = vmatpush1.bf16.msra.mxu0 %v7797
  %7910 = vmatprep.subr.bf16.mxu0 %v7794
  %7911 = vmatpush1.bf16.msra.mxu0 %v7793
  %7912 = vmatprep.subr.bf16.mxu0 0
  %7913 = vmatpush2.bf16.msra.mxu0 0
  %7914 = vmatprep.subr.bf16.mxu0 0
  %7915 = vmatpush2.bf16.msra.mxu0 0
  %7916 = vmatprep.subr.bf16.mxu0 0
  %7917 = vmatpush2.bf16.msra.mxu0 0
  %7918 = vmatprep.subr.bf16.mxu0 0
  %7919 = vmatpush2.bf16.msra.mxu0 0
  %7920 = vmatprep.subr.bf16.mxu0 0
  %7921 = vmatpush2.bf16.msra.mxu0 0
  %7922 = vmatprep.subr.bf16.mxu0 0
  %7923 = vmatpush2.bf16.msra.mxu0 0
  %7924 = vmatprep.subr.bf16.mxu0 0
  %7925 = vmatpush2.bf16.msra.mxu0 0
  %7926 = vmatprep.subr.bf16.mxu0 0
  %7927 = vmatpush2.bf16.msra.mxu0 0
  %7928 = vmatprep.mubr.bf16.mxu0 0
  %7929 = vmatmul.mubr.bf16.gmra.mxu0 %v7662
  %v7930 = vpop.f32.mrf.mxu0
  %v7931 = vadd.f32 0.0, %v7930
  %v7932 = vpop.f32.mrf.mxu0
  %v7933 = vadd.f32 0.0, %v7932
  %v7934 = vpop.f32.mrf.mxu0
  %v7935 = vpop.f32.mrf.mxu0
  %7936 = vdwg.mxu0
  %v7937 = vadd.f32 %v7658, %v7890
  %v7938 = vadd.f32 %v7659, %v7892
  %v7939 = vadd.f32 %v7660, %v7931
  %v7940 = vadd.f32 %v7661, %v7933
  %v7941 = vxor.u32 %v7937, 2147483648
  %v7942 = vxor.u32 %v7938, 2147483648
  %v7943 = vxor.u32 %v7939, 2147483648
  %v7944 = vmul.f32 %v7941, 1.442695
  %v7945 = vpow.pop %v7944
  %v7946 = vmul.f32 %v7942, 1.442695
  %v7947 = vpow.pop %v7946
  %v7948 = vmul.f32 %v7943, 1.442695
  %v7949 = vpow.pop %v7948
  %v7950 = vadd.f32 %v7945, 1.0
  %v7951 = vadd.f32 %v7947, 1.0
  %v7952 = vadd.f32 %v7949, 1.0
  %v7953 = vrcp.pop %v7950
  %v7954 = vmul.f32 1.0, %v7953
  %v7955 = vrcp.pop %v7951
  %v7956 = vmul.f32 1.0, %v7955
  %v7957 = vrcp.pop %v7952
  %v7958 = vmul.f32 1.0, %v7957
  %v7959 = vtanh.pop %v7940
  %v7960 = vmul.f32 %v7956, %v7654
  %v7961 = vmul.f32 %v7954, %v7959
  %v7962 = vadd.f32 %v7960, %v7961
  %v7963 = vtanh.pop %v7962
  %v7964 = vmul.f32 %v7958, %v7963
  %7965 = vst [vmem:[%s2197] sm:$0xff] %v7964
  %v7966 = vld [vmem:[%s5093] sm:$0xff]
  %v7967 = vld [vmem:[%s5093 + $0x8] sm:$0xff]
  %v7968 = vld [vmem:[%s5093 + $0x10] sm:$0xff]
  %v7969 = vld [vmem:[%s5093 + $0x18] sm:$0xff]
  %v7970 = vpack.c.bf16 %v7964, %v7964
  %v7971 = vld [vmem:[%s8] sm:$0xff]
  %v7972 = vld [vmem:[%s8 + $0x8] sm:$0xff]
  %v7973 = vld [vmem:[%s8 + $0x10] sm:$0xff]
  %v7974 = vld [vmem:[%s8 + $0x18] sm:$0xff]
  %v7975 = vld [vmem:[%s8 + $0x20] sm:$0xff]
  %v7976 = vld [vmem:[%s8 + $0x28] sm:$0xff]
  %v7977 = vld [vmem:[%s8 + $0x30] sm:$0xff]
  %v7978 = vld [vmem:[%s8 + $0x38] sm:$0xff]
  %v7979 = vld [vmem:[%s8 + $0x40] sm:$0xff]
  %v7980 = vld [vmem:[%s8 + $0x48] sm:$0xff]
  %v7981 = vld [vmem:[%s8 + $0x50] sm:$0xff]
  %v7982 = vld [vmem:[%s8 + $0x58] sm:$0xff]
  %v7983 = vld [vmem:[%s8 + $0x60] sm:$0xff]
  %v7984 = vld [vmem:[%s8 + $0x68] sm:$0xff]
  %v7985 = vld [vmem:[%s8 + $0x70] sm:$0xff]
  %v7986 = vld [vmem:[%s8 + $0x78] sm:$0xff]
  %v7987 = vld [vmem:[%s8 + $0x80] sm:$0xff]
  %v7988 = vld [vmem:[%s8 + $0x88] sm:$0xff]
  %v7989 = vld [vmem:[%s8 + $0x90] sm:$0xff]
  %v7990 = vld [vmem:[%s8 + $0x98] sm:$0xff]
  %v7991 = vld [vmem:[%s8 + $0xa0] sm:$0xff]
  %v7992 = vld [vmem:[%s8 + $0xa8] sm:$0xff]
  %v7993 = vld [vmem:[%s8 + $0xb0] sm:$0xff]
  %v7994 = vld [vmem:[%s8 + $0xb8] sm:$0xff]
  %v7995 = vld [vmem:[%s8 + $0xc0] sm:$0xff]
  %v7996 = vld [vmem:[%s8 + $0xc8] sm:$0xff]
  %v7997 = vld [vmem:[%s8 + $0xd0] sm:$0xff]
  %v7998 = vld [vmem:[%s8 + $0xd8] sm:$0xff]
  %v7999 = vld [vmem:[%s8 + $0xe0] sm:$0xff]
  %v8000 = vld [vmem:[%s8 + $0xe8] sm:$0xff]
  %v8001 = vld [vmem:[%s8 + $0xf0] sm:$0xff]
  %v8002 = vld [vmem:[%s8 + $0xf8] sm:$0xff]
  %v8035 = vunpack.c.l.b16 %v7971
  %v8036 = vunpack.c.h.b16 %v7971
  %v8037 = vunpack.c.l.b16 %v7972
  %v8038 = vunpack.c.h.b16 %v7972
  %v8039 = vunpack.c.l.b16 %v7973
  %v8040 = vunpack.c.h.b16 %v7973
  %v8041 = vunpack.c.l.b16 %v7974
  %v8042 = vunpack.c.h.b16 %v7974
  %v8043 = vunpack.c.l.b16 %v7975
  %v8044 = vunpack.c.h.b16 %v7975
  %v8045 = vunpack.c.l.b16 %v7976
  %v8046 = vunpack.c.h.b16 %v7976
  %v8047 = vunpack.c.l.b16 %v7977
  %v8048 = vunpack.c.h.b16 %v7977
  %v8049 = vunpack.c.l.b16 %v7978
  %v8050 = vunpack.c.h.b16 %v7978
  %v8051 = vunpack.c.l.b16 %v7979
  %v8052 = vunpack.c.h.b16 %v7979
  %v8053 = vunpack.c.l.b16 %v7980
  %v8054 = vunpack.c.h.b16 %v7980
  %v8055 = vunpack.c.l.b16 %v7981
  %v8056 = vunpack.c.h.b16 %v7981
  %v8057 = vunpack.c.l.b16 %v7982
  %v8058 = vunpack.c.h.b16 %v7982
  %v8059 = vunpack.c.l.b16 %v7983
  %v8060 = vunpack.c.h.b16 %v7983
  %v8061 = vunpack.c.l.b16 %v7984
  %v8062 = vunpack.c.h.b16 %v7984
  %v8063 = vunpack.c.l.b16 %v7985
  %v8064 = vunpack.c.h.b16 %v7985
  %v8065 = vunpack.c.l.b16 %v7986
  %v8066 = vunpack.c.h.b16 %v7986
  %v8067 = vunpack.c.l.b16 %v7987
  %v8068 = vunpack.c.h.b16 %v7987
  %v8069 = vunpack.c.l.b16 %v7988
  %v8070 = vunpack.c.h.b16 %v7988
  %v8071 = vunpack.c.l.b16 %v7989
  %v8072 = vunpack.c.h.b16 %v7989
  %v8073 = vunpack.c.l.b16 %v7990
  %v8074 = vunpack.c.h.b16 %v7990
  %v8075 = vunpack.c.l.b16 %v7991
  %v8076 = vunpack.c.h.b16 %v7991
  %v8077 = vunpack.c.l.b16 %v7992
  %v8078 = vunpack.c.h.b16 %v7992
  %v8079 = vunpack.c.l.b16 %v7993
  %v8080 = vunpack.c.h.b16 %v7993
  %v8081 = vunpack.c.l.b16 %v7994
  %v8082 = vunpack.c.h.b16 %v7994
  %v8083 = vunpack.c.l.b16 %v7995
  %v8084 = vunpack.c.h.b16 %v7995
  %v8085 = vunpack.c.l.b16 %v7996
  %v8086 = vunpack.c.h.b16 %v7996
  %v8087 = vunpack.c.l.b16 %v7997
  %v8088 = vunpack.c.h.b16 %v7997
  %v8089 = vunpack.c.l.b16 %v7998
  %v8090 = vunpack.c.h.b16 %v7998
  %v8091 = vunpack.c.l.b16 %v7999
  %v8092 = vunpack.c.h.b16 %v7999
  %v8093 = vunpack.c.l.b16 %v8000
  %v8094 = vunpack.c.h.b16 %v8000
  %v8095 = vunpack.c.l.b16 %v8001
  %v8096 = vunpack.c.h.b16 %v8001
  %v8097 = vunpack.c.l.b16 %v8002
  %v8098 = vunpack.c.h.b16 %v8002
  %v8099 = vpack.c.b16 %v8039, %v8035
  %v8100 = vpack.c.b16 %v8040, %v8036
  %v8101 = vpack.c.b16 %v8041, %v8037
  %v8102 = vpack.c.b16 %v8042, %v8038
  %v8103 = vpack.c.b16 %v8047, %v8043
  %v8104 = vpack.c.b16 %v8048, %v8044
  %v8105 = vpack.c.b16 %v8049, %v8045
  %v8106 = vpack.c.b16 %v8050, %v8046
  %v8107 = vpack.c.b16 %v8055, %v8051
  %v8108 = vpack.c.b16 %v8056, %v8052
  %v8109 = vpack.c.b16 %v8057, %v8053
  %v8110 = vpack.c.b16 %v8058, %v8054
  %v8111 = vpack.c.b16 %v8063, %v8059
  %v8112 = vpack.c.b16 %v8064, %v8060
  %v8113 = vpack.c.b16 %v8065, %v8061
  %v8114 = vpack.c.b16 %v8066, %v8062
  %v8115 = vpack.c.b16 %v8071, %v8067
  %v8116 = vpack.c.b16 %v8072, %v8068
  %v8117 = vpack.c.b16 %v8073, %v8069
  %v8118 = vpack.c.b16 %v8074, %v8070
  %v8119 = vpack.c.b16 %v8079, %v8075
  %v8120 = vpack.c.b16 %v8080, %v8076
  %v8121 = vpack.c.b16 %v8081, %v8077
  %v8122 = vpack.c.b16 %v8082, %v8078
  %v8123 = vpack.c.b16 %v8087, %v8083
  %v8124 = vpack.c.b16 %v8088, %v8084
  %v8125 = vpack.c.b16 %v8089, %v8085
  %v8126 = vpack.c.b16 %v8090, %v8086
  %v8127 = vpack.c.b16 %v8095, %v8091
  %v8128 = vpack.c.b16 %v8096, %v8092
  %v8129 = vpack.c.b16 %v8097, %v8093
  %v8130 = vpack.c.b16 %v8098, %v8094
  %8163 = vmatprep.subr.bf16.mxu0 %v8128
  %8164 = vmatpush1.bf16.msra.mxu0 %v8127
  %8165 = vmatprep.subr.bf16.mxu0 %v8124
  %8166 = vmatpush1.bf16.msra.mxu0 %v8123
  %8167 = vmatprep.subr.bf16.mxu0 %v8120
  %8168 = vmatpush1.bf16.msra.mxu0 %v8119
  %8169 = vmatprep.subr.bf16.mxu0 %v8116
  %8170 = vmatpush1.bf16.msra.mxu0 %v8115
  %8171 = vmatprep.subr.bf16.mxu0 %v8112
  %8172 = vmatpush1.bf16.msra.mxu0 %v8111
  %8173 = vmatprep.subr.bf16.mxu0 %v8108
  %8174 = vmatpush1.bf16.msra.mxu0 %v8107
  %8175 = vmatprep.subr.bf16.mxu0 %v8104
  %8176 = vmatpush1.bf16.msra.mxu0 %v8103
  %8177 = vmatprep.subr.bf16.mxu0 %v8100
  %8178 = vmatpush1.bf16.msra.mxu0 %v8099
  %8179 = vmatprep.subr.bf16.mxu0 0
  %8180 = vmatpush2.bf16.msra.mxu0 0
  %8181 = vmatprep.subr.bf16.mxu0 0
  %8182 = vmatpush2.bf16.msra.mxu0 0
  %8183 = vmatprep.subr.bf16.mxu0 0
  %8184 = vmatpush2.bf16.msra.mxu0 0
  %8185 = vmatprep.subr.bf16.mxu0 0
  %8186 = vmatpush2.bf16.msra.mxu0 0
  %8187 = vmatprep.subr.bf16.mxu0 0
  %8188 = vmatpush2.bf16.msra.mxu0 0
  %8189 = vmatprep.subr.bf16.mxu0 0
  %8190 = vmatpush2.bf16.msra.mxu0 0
  %8191 = vmatprep.subr.bf16.mxu0 0
  %8192 = vmatpush2.bf16.msra.mxu0 0
  %8193 = vmatprep.subr.bf16.mxu0 0
  %8194 = vmatpush2.bf16.msra.mxu0 0
  %8195 = vmatprep.mubr.bf16.mxu0 0
  %8196 = vmatmul.mubr.bf16.gmra.mxu0 %v7970
  %v8197 = vpop.f32.mrf.mxu0
  %v8198 = vadd.f32 0.0, %v8197
  %v8199 = vpop.f32.mrf.mxu0
  %v8200 = vadd.f32 0.0, %v8199
  %v8201 = vpop.f32.mrf.mxu0
  %v8202 = vpop.f32.mrf.mxu0
  %8203 = vdwg.mxu0
  %8204 = vmatprep.subr.bf16.mxu0 %v8130
  %8205 = vmatpush1.bf16.msra.mxu0 %v8129
  %8206 = vmatprep.subr.bf16.mxu0 %v8126
  %8207 = vmatpush1.bf16.msra.mxu0 %v8125
  %8208 = vmatprep.subr.bf16.mxu0 %v8122
  %8209 = vmatpush1.bf16.msra.mxu0 %v8121
  %8210 = vmatprep.subr.bf16.mxu0 %v8118
  %8211 = vmatpush1.bf16.msra.mxu0 %v8117
  %8212 = vmatprep.subr.bf16.mxu0 %v8114
  %8213 = vmatpush1.bf16.msra.mxu0 %v8113
  %8214 = vmatprep.subr.bf16.mxu0 %v8110
  %8215 = vmatpush1.bf16.msra.mxu0 %v8109
  %8216 = vmatprep.subr.bf16.mxu0 %v8106
  %8217 = vmatpush1.bf16.msra.mxu0 %v8105
  %8218 = vmatprep.subr.bf16.mxu0 %v8102
  %8219 = vmatpush1.bf16.msra.mxu0 %v8101
  %8220 = vmatprep.subr.bf16.mxu0 0
  %8221 = vmatpush2.bf16.msra.mxu0 0
  %8222 = vmatprep.subr.bf16.mxu0 0
  %8223 = vmatpush2.bf16.msra.mxu0 0
  %8224 = vmatprep.subr.bf16.mxu0 0
  %8225 = vmatpush2.bf16.msra.mxu0 0
  %8226 = vmatprep.subr.bf16.mxu0 0
  %8227 = vmatpush2.bf16.msra.mxu0 0
  %8228 = vmatprep.subr.bf16.mxu0 0
  %8229 = vmatpush2.bf16.msra.mxu0 0
  %8230 = vmatprep.subr.bf16.mxu0 0
  %8231 = vmatpush2.bf16.msra.mxu0 0
  %8232 = vmatprep.subr.bf16.mxu0 0
  %8233 = vmatpush2.bf16.msra.mxu0 0
  %8234 = vmatprep.subr.bf16.mxu0 0
  %8235 = vmatpush2.bf16.msra.mxu0 0
  %8236 = vmatprep.mubr.bf16.mxu0 0
  %8237 = vmatmul.mubr.bf16.gmra.mxu0 %v7970
  %v8238 = vpop.f32.mrf.mxu0
  %v8239 = vadd.f32 0.0, %v8238
  %v8240 = vpop.f32.mrf.mxu0
  %v8241 = vadd.f32 0.0, %v8240
  %v8242 = vpop.f32.mrf.mxu0
  %v8243 = vpop.f32.mrf.mxu0
  %8244 = vdwg.mxu0
  %v8245 = vadd.f32 %v7966, %v8198
  %v8246 = vadd.f32 %v7967, %v8200
  %v8247 = vadd.f32 %v7968, %v8239
  %v8248 = vadd.f32 %v7969, %v8241
  %v8249 = vxor.u32 %v8245, 2147483648
  %v8250 = vxor.u32 %v8246, 2147483648
  %v8251 = vxor.u32 %v8247, 2147483648
  %v8252 = vmul.f32 %v8249, 1.442695
  %v8253 = vpow.pop %v8252
  %v8254 = vmul.f32 %v8250, 1.442695
  %v8255 = vpow.pop %v8254
  %v8256 = vmul.f32 %v8251, 1.442695
  %v8257 = vpow.pop %v8256
  %v8258 = vadd.f32 %v8253, 1.0
  %v8259 = vadd.f32 %v8255, 1.0
  %v8260 = vadd.f32 %v8257, 1.0
  %v8261 = vrcp.pop %v8258
  %v8262 = vmul.f32 1.0, %v8261
  %v8263 = vrcp.pop %v8259
  %v8264 = vmul.f32 1.0, %v8263
  %v8265 = vrcp.pop %v8260
  %v8266 = vmul.f32 1.0, %v8265
  %v8267 = vtanh.pop %v8248
  %v8268 = vmul.f32 %v8264, %v7962
  %v8269 = vmul.f32 %v8262, %v8267
  %v8270 = vadd.f32 %v8268, %v8269
  %v8271 = vtanh.pop %v8270
  %v8272 = vmul.f32 %v8266, %v8271
  %8273 = vst [vmem:[%s2506] sm:$0xff] %v8272
  %v8274 = vld [vmem:[%s5405] sm:$0xff]
  %v8275 = vld [vmem:[%s5405 + $0x8] sm:$0xff]
  %v8276 = vld [vmem:[%s5405 + $0x10] sm:$0xff]
  %v8277 = vld [vmem:[%s5405 + $0x18] sm:$0xff]
  %v8278 = vpack.c.bf16 %v8272, %v8272
  %v8279 = vld [vmem:[%s8] sm:$0xff]
  %v8280 = vld [vmem:[%s8 + $0x8] sm:$0xff]
  %v8281 = vld [vmem:[%s8 + $0x10] sm:$0xff]
  %v8282 = vld [vmem:[%s8 + $0x18] sm:$0xff]
  %v8283 = vld [vmem:[%s8 + $0x20] sm:$0xff]
  %v8284 = vld [vmem:[%s8 + $0x28] sm:$0xff]
  %v8285 = vld [vmem:[%s8 + $0x30] sm:$0xff]
  %v8286 = vld [vmem:[%s8 + $0x38] sm:$0xff]
  %v8287 = vld [vmem:[%s8 + $0x40] sm:$0xff]
  %v8288 = vld [vmem:[%s8 + $0x48] sm:$0xff]
  %v8289 = vld [vmem:[%s8 + $0x50] sm:$0xff]
  %v8290 = vld [vmem:[%s8 + $0x58] sm:$0xff]
  %v8291 = vld [vmem:[%s8 + $0x60] sm:$0xff]
  %v8292 = vld [vmem:[%s8 + $0x68] sm:$0xff]
  %v8293 = vld [vmem:[%s8 + $0x70] sm:$0xff]
  %v8294 = vld [vmem:[%s8 + $0x78] sm:$0xff]
  %v8295 = vld [vmem:[%s8 + $0x80] sm:$0xff]
  %v8296 = vld [vmem:[%s8 + $0x88] sm:$0xff]
  %v8297 = vld [vmem:[%s8 + $0x90] sm:$0xff]
  %v8298 = vld [vmem:[%s8 + $0x98] sm:$0xff]
  %v8299 = vld [vmem:[%s8 + $0xa0] sm:$0xff]
  %v8300 = vld [vmem:[%s8 + $0xa8] sm:$0xff]
  %v8301 = vld [vmem:[%s8 + $0xb0] sm:$0xff]
  %v8302 = vld [vmem:[%s8 + $0xb8] sm:$0xff]
  %v8303 = vld [vmem:[%s8 + $0xc0] sm:$0xff]
  %v8304 = vld [vmem:[%s8 + $0xc8] sm:$0xff]
  %v8305 = vld [vmem:[%s8 + $0xd0] sm:$0xff]
  %v8306 = vld [vmem:[%s8 + $0xd8] sm:$0xff]
  %v8307 = vld [vmem:[%s8 + $0xe0] sm:$0xff]
  %v8308 = vld [vmem:[%s8 + $0xe8] sm:$0xff]
  %v8309 = vld [vmem:[%s8 + $0xf0] sm:$0xff]
  %v8310 = vld [vmem:[%s8 + $0xf8] sm:$0xff]
  %v8343 = vunpack.c.l.b16 %v8279
  %v8344 = vunpack.c.h.b16 %v8279
  %v8345 = vunpack.c.l.b16 %v8280
  %v8346 = vunpack.c.h.b16 %v8280
  %v8347 = vunpack.c.l.b16 %v8281
  %v8348 = vunpack.c.h.b16 %v8281
  %v8349 = vunpack.c.l.b16 %v8282
  %v8350 = vunpack.c.h.b16 %v8282
  %v8351 = vunpack.c.l.b16 %v8283
  %v8352 = vunpack.c.h.b16 %v8283
  %v8353 = vunpack.c.l.b16 %v8284
  %v8354 = vunpack.c.h.b16 %v8284
  %v8355 = vunpack.c.l.b16 %v8285
  %v8356 = vunpack.c.h.b16 %v8285
  %v8357 = vunpack.c.l.b16 %v8286
  %v8358 = vunpack.c.h.b16 %v8286
  %v8359 = vunpack.c.l.b16 %v8287
  %v8360 = vunpack.c.h.b16 %v8287
  %v8361 = vunpack.c.l.b16 %v8288
  %v8362 = vunpack.c.h.b16 %v8288
  %v8363 = vunpack.c.l.b16 %v8289
  %v8364 = vunpack.c.h.b16 %v8289
  %v8365 = vunpack.c.l.b16 %v8290
  %v8366 = vunpack.c.h.b16 %v8290
  %v8367 = vunpack.c.l.b16 %v8291
  %v8368 = vunpack.c.h.b16 %v8291
  %v8369 = vunpack.c.l.b16 %v8292
  %v8370 = vunpack.c.h.b16 %v8292
  %v8371 = vunpack.c.l.b16 %v8293
  %v8372 = vunpack.c.h.b16 %v8293
  %v8373 = vunpack.c.l.b16 %v8294
  %v8374 = vunpack.c.h.b16 %v8294
  %v8375 = vunpack.c.l.b16 %v8295
  %v8376 = vunpack.c.h.b16 %v8295
  %v8377 = vunpack.c.l.b16 %v8296
  %v8378 = vunpack.c.h.b16 %v8296
  %v8379 = vunpack.c.l.b16 %v8297
  %v8380 = vunpack.c.h.b16 %v8297
  %v8381 = vunpack.c.l.b16 %v8298
  %v8382 = vunpack.c.h.b16 %v8298
  %v8383 = vunpack.c.l.b16 %v8299
  %v8384 = vunpack.c.h.b16 %v8299
  %v8385 = vunpack.c.l.b16 %v8300
  %v8386 = vunpack.c.h.b16 %v8300
  %v8387 = vunpack.c.l.b16 %v8301
  %v8388 = vunpack.c.h.b16 %v8301
  %v8389 = vunpack.c.l.b16 %v8302
  %v8390 = vunpack.c.h.b16 %v8302
  %v8391 = vunpack.c.l.b16 %v8303
  %v8392 = vunpack.c.h.b16 %v8303
  %v8393 = vunpack.c.l.b16 %v8304
  %v8394 = vunpack.c.h.b16 %v8304
  %v8395 = vunpack.c.l.b16 %v8305
  %v8396 = vunpack.c.h.b16 %v8305
  %v8397 = vunpack.c.l.b16 %v8306
  %v8398 = vunpack.c.h.b16 %v8306
  %v8399 = vunpack.c.l.b16 %v8307
  %v8400 = vunpack.c.h.b16 %v8307
  %v8401 = vunpack.c.l.b16 %v8308
  %v8402 = vunpack.c.h.b16 %v8308
  %v8403 = vunpack.c.l.b16 %v8309
  %v8404 = vunpack.c.h.b16 %v8309
  %v8405 = vunpack.c.l.b16 %v8310
  %v8406 = vunpack.c.h.b16 %v8310
  %v8407 = vpack.c.b16 %v8347, %v8343
  %v8408 = vpack.c.b16 %v8348, %v8344
  %v8409 = vpack.c.b16 %v8349, %v8345
  %v8410 = vpack.c.b16 %v8350, %v8346
  %v8411 = vpack.c.b16 %v8355, %v8351
  %v8412 = vpack.c.b16 %v8356, %v8352
  %v8413 = vpack.c.b16 %v8357, %v8353
  %v8414 = vpack.c.b16 %v8358, %v8354
  %v8415 = vpack.c.b16 %v8363, %v8359
  %v8416 = vpack.c.b16 %v8364, %v8360
  %v8417 = vpack.c.b16 %v8365, %v8361
  %v8418 = vpack.c.b16 %v8366, %v8362
  %v8419 = vpack.c.b16 %v8371, %v8367
  %v8420 = vpack.c.b16 %v8372, %v8368
  %v8421 = vpack.c.b16 %v8373, %v8369
  %v8422 = vpack.c.b16 %v8374, %v8370
  %v8423 = vpack.c.b16 %v8379, %v8375
  %v8424 = vpack.c.b16 %v8380, %v8376
  %v8425 = vpack.c.b16 %v8381, %v8377
  %v8426 = vpack.c.b16 %v8382, %v8378
  %v8427 = vpack.c.b16 %v8387, %v8383
  %v8428 = vpack.c.b16 %v8388, %v8384
  %v8429 = vpack.c.b16 %v8389, %v8385
  %v8430 = vpack.c.b16 %v8390, %v8386
  %v8431 = vpack.c.b16 %v8395, %v8391
  %v8432 = vpack.c.b16 %v8396, %v8392
  %v8433 = vpack.c.b16 %v8397, %v8393
  %v8434 = vpack.c.b16 %v8398, %v8394
  %v8435 = vpack.c.b16 %v8403, %v8399
  %v8436 = vpack.c.b16 %v8404, %v8400
  %v8437 = vpack.c.b16 %v8405, %v8401
  %v8438 = vpack.c.b16 %v8406, %v8402
  %8471 = vmatprep.subr.bf16.mxu0 %v8436
  %8472 = vmatpush1.bf16.msra.mxu0 %v8435
  %8473 = vmatprep.subr.bf16.mxu0 %v8432
  %8474 = vmatpush1.bf16.msra.mxu0 %v8431
  %8475 = vmatprep.subr.bf16.mxu0 %v8428
  %8476 = vmatpush1.bf16.msra.mxu0 %v8427
  %8477 = vmatprep.subr.bf16.mxu0 %v8424
  %8478 = vmatpush1.bf16.msra.mxu0 %v8423
  %8479 = vmatprep.subr.bf16.mxu0 %v8420
  %8480 = vmatpush1.bf16.msra.mxu0 %v8419
  %8481 = vmatprep.subr.bf16.mxu0 %v8416
  %8482 = vmatpush1.bf16.msra.mxu0 %v8415
  %8483 = vmatprep.subr.bf16.mxu0 %v8412
  %8484 = vmatpush1.bf16.msra.mxu0 %v8411
  %8485 = vmatprep.subr.bf16.mxu0 %v8408
  %8486 = vmatpush1.bf16.msra.mxu0 %v8407
  %8487 = vmatprep.subr.bf16.mxu0 0
  %8488 = vmatpush2.bf16.msra.mxu0 0
  %8489 = vmatprep.subr.bf16.mxu0 0
  %8490 = vmatpush2.bf16.msra.mxu0 0
  %8491 = vmatprep.subr.bf16.mxu0 0
  %8492 = vmatpush2.bf16.msra.mxu0 0
  %8493 = vmatprep.subr.bf16.mxu0 0
  %8494 = vmatpush2.bf16.msra.mxu0 0
  %8495 = vmatprep.subr.bf16.mxu0 0
  %8496 = vmatpush2.bf16.msra.mxu0 0
  %8497 = vmatprep.subr.bf16.mxu0 0
  %8498 = vmatpush2.bf16.msra.mxu0 0
  %8499 = vmatprep.subr.bf16.mxu0 0
  %8500 = vmatpush2.bf16.msra.mxu0 0
  %8501 = vmatprep.subr.bf16.mxu0 0
  %8502 = vmatpush2.bf16.msra.mxu0 0
  %8503 = vmatprep.mubr.bf16.mxu0 0
  %8504 = vmatmul.mubr.bf16.gmra.mxu0 %v8278
  %v8505 = vpop.f32.mrf.mxu0
  %v8506 = vadd.f32 0.0, %v8505
  %v8507 = vpop.f32.mrf.mxu0
  %v8508 = vadd.f32 0.0, %v8507
  %v8509 = vpop.f32.mrf.mxu0
  %v8510 = vpop.f32.mrf.mxu0
  %8511 = vdwg.mxu0
  %8512 = vmatprep.subr.bf16.mxu0 %v8438
  %8513 = vmatpush1.bf16.msra.mxu0 %v8437
  %8514 = vmatprep.subr.bf16.mxu0 %v8434
  %8515 = vmatpush1.bf16.msra.mxu0 %v8433
  %8516 = vmatprep.subr.bf16.mxu0 %v8430
  %8517 = vmatpush1.bf16.msra.mxu0 %v8429
  %8518 = vmatprep.subr.bf16.mxu0 %v8426
  %8519 = vmatpush1.bf16.msra.mxu0 %v8425
  %8520 = vmatprep.subr.bf16.mxu0 %v8422
  %8521 = vmatpush1.bf16.msra.mxu0 %v8421
  %8522 = vmatprep.subr.bf16.mxu0 %v8418
  %8523 = vmatpush1.bf16.msra.mxu0 %v8417
  %8524 = vmatprep.subr.bf16.mxu0 %v8414
  %8525 = vmatpush1.bf16.msra.mxu0 %v8413
  %8526 = vmatprep.subr.bf16.mxu0 %v8410
  %8527 = vmatpush1.bf16.msra.mxu0 %v8409
  %8528 = vmatprep.subr.bf16.mxu0 0
  %8529 = vmatpush2.bf16.msra.mxu0 0
  %8530 = vmatprep.subr.bf16.mxu0 0
  %8531 = vmatpush2.bf16.msra.mxu0 0
  %8532 = vmatprep.subr.bf16.mxu0 0
  %8533 = vmatpush2.bf16.msra.mxu0 0
  %8534 = vmatprep.subr.bf16.mxu0 0
  %8535 = vmatpush2.bf16.msra.mxu0 0
  %8536 = vmatprep.subr.bf16.mxu0 0
  %8537 = vmatpush2.bf16.msra.mxu0 0
  %8538 = vmatprep.subr.bf16.mxu0 0
  %8539 = vmatpush2.bf16.msra.mxu0 0
  %8540 = vmatprep.subr.bf16.mxu0 0
  %8541 = vmatpush2.bf16.msra.mxu0 0
  %8542 = vmatprep.subr.bf16.mxu0 0
  %8543 = vmatpush2.bf16.msra.mxu0 0
  %8544 = vmatprep.mubr.bf16.mxu0 0
  %8545 = vmatmul.mubr.bf16.gmra.mxu0 %v8278
  %v8546 = vpop.f32.mrf.mxu0
  %v8547 = vadd.f32 0.0, %v8546
  %v8548 = vpop.f32.mrf.mxu0
  %v8549 = vadd.f32 0.0, %v8548
  %v8550 = vpop.f32.mrf.mxu0
  %v8551 = vpop.f32.mrf.mxu0
  %8552 = vdwg.mxu0
  %v8553 = vadd.f32 %v8274, %v8506
  %v8554 = vadd.f32 %v8275, %v8508
  %v8555 = vadd.f32 %v8276, %v8547
  %v8556 = vadd.f32 %v8277, %v8549
  %v8557 = vxor.u32 %v8553, 2147483648
  %v8558 = vxor.u32 %v8554, 2147483648
  %v8559 = vxor.u32 %v8555, 2147483648
  %v8560 = vmul.f32 %v8557, 1.442695
  %v8561 = vpow.pop %v8560
  %v8562 = vmul.f32 %v8558, 1.442695
  %v8563 = vpow.pop %v8562
  %v8564 = vmul.f32 %v8559, 1.442695
  %v8565 = vpow.pop %v8564
  %v8566 = vadd.f32 %v8561, 1.0
  %v8567 = vadd.f32 %v8563, 1.0
  %v8568 = vadd.f32 %v8565, 1.0
  %v8569 = vrcp.pop %v8566
  %v8570 = vmul.f32 1.0, %v8569
  %v8571 = vrcp.pop %v8567
  %v8572 = vmul.f32 1.0, %v8571
  %v8573 = vrcp.pop %v8568
  %v8574 = vmul.f32 1.0, %v8573
  %v8575 = vtanh.pop %v8556
  %v8576 = vmul.f32 %v8572, %v8270
  %v8577 = vmul.f32 %v8570, %v8575
  %v8578 = vadd.f32 %v8576, %v8577
  %v8579 = vtanh.pop %v8578
  %v8580 = vmul.f32 %v8574, %v8579
  %8581 = vst [vmem:[%s2815] sm:$0xff] %v8580
  %v8582 = vld [vmem:[#allocation2] sm:$0xff]
  %v8583 = vld [vmem:[#allocation2 + $0x8] sm:$0xff]
  %v8584 = vld [vmem:[#allocation2 + $0x10] sm:$0xff]
  %v8585 = vld [vmem:[#allocation2 + $0x18] sm:$0xff]
  %v8586 = vld [vmem:[#allocation2 + $0x20] sm:$0xff]
  %v8587 = vld [vmem:[#allocation2 + $0x28] sm:$0xff]
  %v8588 = vld [vmem:[#allocation2 + $0x30] sm:$0xff]
  %v8589 = vld [vmem:[#allocation2 + $0x38] sm:$0xff]
  %v8590 = vpack.c.bf16 %v8583, %v8582
  %v8591 = vpack.c.bf16 %v8585, %v8584
  %v8592 = vpack.c.bf16 %v8587, %v8586
  %v8593 = vpack.c.bf16 %v8589, %v8588
  %v8594 = vld [vmem:[%s10] sm:$0xff]
  %v8595 = vld [vmem:[%s10 + $0x8] sm:$0xff]
  %v8596 = vld [vmem:[%s10 + $0x10] sm:$0xff]
  %v8597 = vld [vmem:[%s10 + $0x18] sm:$0xff]
  %v8598 = vld [vmem:[%s10 + $0x20] sm:$0xff]
  %v8599 = vld [vmem:[%s10 + $0x28] sm:$0xff]
  %v8600 = vld [vmem:[%s10 + $0x30] sm:$0xff]
  %v8601 = vld [vmem:[%s10 + $0x38] sm:$0xff]
  %v8602 = vld [vmem:[%s10 + $0x40] sm:$0xff]
  %v8603 = vld [vmem:[%s10 + $0x48] sm:$0xff]
  %v8604 = vld [vmem:[%s10 + $0x50] sm:$0xff]
  %v8605 = vld [vmem:[%s10 + $0x58] sm:$0xff]
  %v8606 = vld [vmem:[%s10 + $0x60] sm:$0xff]
  %v8607 = vld [vmem:[%s10 + $0x68] sm:$0xff]
  %v8608 = vld [vmem:[%s10 + $0x70] sm:$0xff]
  %v8609 = vld [vmem:[%s10 + $0x78] sm:$0xff]
  %v8610 = vld [vmem:[%s10 + $0x80] sm:$0xff]
  %v8611 = vld [vmem:[%s10 + $0x88] sm:$0xff]
  %v8612 = vld [vmem:[%s10 + $0x90] sm:$0xff]
  %v8613 = vld [vmem:[%s10 + $0x98] sm:$0xff]
  %v8614 = vld [vmem:[%s10 + $0xa0] sm:$0xff]
  %v8615 = vld [vmem:[%s10 + $0xa8] sm:$0xff]
  %v8616 = vld [vmem:[%s10 + $0xb0] sm:$0xff]
  %v8617 = vld [vmem:[%s10 + $0xb8] sm:$0xff]
  %v8618 = vld [vmem:[%s10 + $0xc0] sm:$0xff]
  %v8619 = vld [vmem:[%s10 + $0xc8] sm:$0xff]
  %v8620 = vld [vmem:[%s10 + $0xd0] sm:$0xff]
  %v8621 = vld [vmem:[%s10 + $0xd8] sm:$0xff]
  %v8622 = vld [vmem:[%s10 + $0xe0] sm:$0xff]
  %v8623 = vld [vmem:[%s10 + $0xe8] sm:$0xff]
  %v8624 = vld [vmem:[%s10 + $0xf0] sm:$0xff]
  %v8625 = vld [vmem:[%s10 + $0xf8] sm:$0xff]
  %v8626 = vld [vmem:[%s12] sm:$0xf]
  %v8628 = vlaneseq
  %v8629 = vshrl.u32 %v8628, 7
  %v8630 = vsub.s32 0, %v8629
  %v8631 = vrot.slane %v8626, %v8630
  %v8632 = vlaneseq
  %v8633 = vshrl.u32 %v8632, 7
  %v8634 = vsub.s32 1, %v8633
  %v8635 = vrot.slane %v8626, %v8634
  %v8636 = vlaneseq
  %v8637 = vshrl.u32 %v8636, 7
  %v8638 = vsub.s32 2, %v8637
  %v8639 = vrot.slane %v8626, %v8638
  %v8640 = vlaneseq
  %v8641 = vshrl.u32 %v8640, 7
  %v8642 = vsub.s32 3, %v8641
  %v8643 = vrot.slane %v8626, %v8642
  %v8680 = vunpack.c.l.b16 %v8594
  %v8681 = vunpack.c.h.b16 %v8594
  %v8682 = vunpack.c.l.b16 %v8595
  %v8683 = vunpack.c.h.b16 %v8595
  %v8684 = vunpack.c.l.b16 %v8596
  %v8685 = vunpack.c.h.b16 %v8596
  %v8686 = vunpack.c.l.b16 %v8597
  %v8687 = vunpack.c.h.b16 %v8597
  %v8688 = vunpack.c.l.b16 %v8598
  %v8689 = vunpack.c.h.b16 %v8598
  %v8690 = vunpack.c.l.b16 %v8599
  %v8691 = vunpack.c.h.b16 %v8599
  %v8692 = vunpack.c.l.b16 %v8600
  %v8693 = vunpack.c.h.b16 %v8600
  %v8694 = vunpack.c.l.b16 %v8601
  %v8695 = vunpack.c.h.b16 %v8601
  %v8696 = vunpack.c.l.b16 %v8602
  %v8697 = vunpack.c.h.b16 %v8602
  %v8698 = vunpack.c.l.b16 %v8603
  %v8699 = vunpack.c.h.b16 %v8603
  %v8700 = vunpack.c.l.b16 %v8604
  %v8701 = vunpack.c.h.b16 %v8604
  %v8702 = vunpack.c.l.b16 %v8605
  %v8703 = vunpack.c.h.b16 %v8605
  %v8704 = vunpack.c.l.b16 %v8606
  %v8705 = vunpack.c.h.b16 %v8606
  %v8706 = vunpack.c.l.b16 %v8607
  %v8707 = vunpack.c.h.b16 %v8607
  %v8708 = vunpack.c.l.b16 %v8608
  %v8709 = vunpack.c.h.b16 %v8608
  %v8710 = vunpack.c.l.b16 %v8609
  %v8711 = vunpack.c.h.b16 %v8609
  %v8712 = vunpack.c.l.b16 %v8610
  %v8713 = vunpack.c.h.b16 %v8610
  %v8714 = vunpack.c.l.b16 %v8611
  %v8715 = vunpack.c.h.b16 %v8611
  %v8716 = vunpack.c.l.b16 %v8612
  %v8717 = vunpack.c.h.b16 %v8612
  %v8718 = vunpack.c.l.b16 %v8613
  %v8719 = vunpack.c.h.b16 %v8613
  %v8720 = vunpack.c.l.b16 %v8614
  %v8721 = vunpack.c.h.b16 %v8614
  %v8722 = vunpack.c.l.b16 %v8615
  %v8723 = vunpack.c.h.b16 %v8615
  %v8724 = vunpack.c.l.b16 %v8616
  %v8725 = vunpack.c.h.b16 %v8616
  %v8726 = vunpack.c.l.b16 %v8617
  %v8727 = vunpack.c.h.b16 %v8617
  %v8728 = vunpack.c.l.b16 %v8618
  %v8729 = vunpack.c.h.b16 %v8618
  %v8730 = vunpack.c.l.b16 %v8619
  %v8731 = vunpack.c.h.b16 %v8619
  %v8732 = vunpack.c.l.b16 %v8620
  %v8733 = vunpack.c.h.b16 %v8620
  %v8734 = vunpack.c.l.b16 %v8621
  %v8735 = vunpack.c.h.b16 %v8621
  %v8736 = vunpack.c.l.b16 %v8622
  %v8737 = vunpack.c.h.b16 %v8622
  %v8738 = vunpack.c.l.b16 %v8623
  %v8739 = vunpack.c.h.b16 %v8623
  %v8740 = vunpack.c.l.b16 %v8624
  %v8741 = vunpack.c.h.b16 %v8624
  %v8742 = vunpack.c.l.b16 %v8625
  %v8743 = vunpack.c.h.b16 %v8625
  %v8744 = vpack.c.b16 %v8684, %v8680
  %v8745 = vpack.c.b16 %v8685, %v8681
  %v8746 = vpack.c.b16 %v8686, %v8682
  %v8747 = vpack.c.b16 %v8687, %v8683
  %v8748 = vpack.c.b16 %v8692, %v8688
  %v8749 = vpack.c.b16 %v8693, %v8689
  %v8750 = vpack.c.b16 %v8694, %v8690
  %v8751 = vpack.c.b16 %v8695, %v8691
  %v8752 = vpack.c.b16 %v8700, %v8696
  %v8753 = vpack.c.b16 %v8701, %v8697
  %v8754 = vpack.c.b16 %v8702, %v8698
  %v8755 = vpack.c.b16 %v8703, %v8699
  %v8756 = vpack.c.b16 %v8708, %v8704
  %v8757 = vpack.c.b16 %v8709, %v8705
  %v8758 = vpack.c.b16 %v8710, %v8706
  %v8759 = vpack.c.b16 %v8711, %v8707
  %v8760 = vpack.c.b16 %v8716, %v8712
  %v8761 = vpack.c.b16 %v8717, %v8713
  %v8762 = vpack.c.b16 %v8718, %v8714
  %v8763 = vpack.c.b16 %v8719, %v8715
  %v8764 = vpack.c.b16 %v8724, %v8720
  %v8765 = vpack.c.b16 %v8725, %v8721
  %v8766 = vpack.c.b16 %v8726, %v8722
  %v8767 = vpack.c.b16 %v8727, %v8723
  %v8768 = vpack.c.b16 %v8732, %v8728
  %v8769 = vpack.c.b16 %v8733, %v8729
  %v8770 = vpack.c.b16 %v8734, %v8730
  %v8771 = vpack.c.b16 %v8735, %v8731
  %v8772 = vpack.c.b16 %v8740, %v8736
  %v8773 = vpack.c.b16 %v8741, %v8737
  %v8774 = vpack.c.b16 %v8742, %v8738
  %v8775 = vpack.c.b16 %v8743, %v8739
  %8808 = vmatprep.subr.bf16.mxu0 %v8773
  %8809 = vmatpush1.bf16.msra.mxu0 %v8772
  %8810 = vmatprep.subr.bf16.mxu0 %v8769
  %8811 = vmatpush1.bf16.msra.mxu0 %v8768
  %8812 = vmatprep.subr.bf16.mxu0 %v8765
  %8813 = vmatpush1.bf16.msra.mxu0 %v8764
  %8814 = vmatprep.subr.bf16.mxu0 %v8761
  %8815 = vmatpush1.bf16.msra.mxu0 %v8760
  %8816 = vmatprep.subr.bf16.mxu0 %v8757
  %8817 = vmatpush1.bf16.msra.mxu0 %v8756
  %8818 = vmatprep.subr.bf16.mxu0 %v8753
  %8819 = vmatpush1.bf16.msra.mxu0 %v8752
  %8820 = vmatprep.subr.bf16.mxu0 %v8749
  %8821 = vmatpush1.bf16.msra.mxu0 %v8748
  %8822 = vmatprep.subr.bf16.mxu0 %v8745
  %8823 = vmatpush1.bf16.msra.mxu0 %v8744
  %8824 = vmatprep.subr.bf16.mxu0 0
  %8825 = vmatpush2.bf16.msra.mxu0 0
  %8826 = vmatprep.subr.bf16.mxu0 0
  %8827 = vmatpush2.bf16.msra.mxu0 0
  %8828 = vmatprep.subr.bf16.mxu0 0
  %8829 = vmatpush2.bf16.msra.mxu0 0
  %8830 = vmatprep.subr.bf16.mxu0 0
  %8831 = vmatpush2.bf16.msra.mxu0 0
  %8832 = vmatprep.subr.bf16.mxu0 0
  %8833 = vmatpush2.bf16.msra.mxu0 0
  %8834 = vmatprep.subr.bf16.mxu0 0
  %8835 = vmatpush2.bf16.msra.mxu0 0
  %8836 = vmatprep.subr.bf16.mxu0 0
  %8837 = vmatpush2.bf16.msra.mxu0 0
  %8838 = vmatprep.subr.bf16.mxu0 0
  %8839 = vmatpush2.bf16.msra.mxu0 0
  %8840 = vmatprep.mubr.bf16.mxu0 0
  %8841 = vmatmul.mubr.bf16.gmra.mxu0 %v8590
  %v8842 = vpop.f32.mrf.mxu0
  %v8843 = vadd.f32 %v8631, %v8842
  %v8844 = vpop.f32.mrf.mxu0
  %v8845 = vadd.f32 %v8635, %v8844
  %v8846 = vpop.f32.mrf.mxu0
  %v8847 = vadd.f32 %v8631, %v8846
  %v8848 = vpop.f32.mrf.mxu0
  %v8849 = vadd.f32 %v8635, %v8848
  %8850 = vmatprep.mubr.bf16.mxu0 0
  %8851 = vmatmul.mubr.bf16.gmra.mxu0 %v8591
  %v8852 = vpop.f32.mrf.mxu0
  %v8853 = vadd.f32 %v8631, %v8852
  %v8854 = vpop.f32.mrf.mxu0
  %v8855 = vadd.f32 %v8635, %v8854
  %v8856 = vpop.f32.mrf.mxu0
  %v8857 = vadd.f32 %v8631, %v8856
  %v8858 = vpop.f32.mrf.mxu0
  %v8859 = vadd.f32 %v8635, %v8858
  %8860 = vmatprep.mubr.bf16.mxu0 0
  %8861 = vmatmul.mubr.bf16.gmra.mxu0 %v8592
  %v8862 = vpop.f32.mrf.mxu0
  %v8863 = vadd.f32 %v8631, %v8862
  %v8864 = vpop.f32.mrf.mxu0
  %v8865 = vadd.f32 %v8635, %v8864
  %v8866 = vpop.f32.mrf.mxu0
  %v8867 = vadd.f32 %v8631, %v8866
  %v8868 = vpop.f32.mrf.mxu0
  %v8869 = vadd.f32 %v8635, %v8868
  %8870 = vmatprep.mubr.bf16.mxu0 0
  %8871 = vmatmul.mubr.bf16.gmra.mxu0 %v8593
  %v8872 = vpop.f32.mrf.mxu0
  %v8873 = vadd.f32 %v8631, %v8872
  %v8874 = vpop.f32.mrf.mxu0
  %v8875 = vadd.f32 %v8635, %v8874
  %v8876 = vpop.f32.mrf.mxu0
  %v8877 = vadd.f32 %v8631, %v8876
  %v8878 = vpop.f32.mrf.mxu0
  %v8879 = vadd.f32 %v8635, %v8878
  %8880 = vdwg.mxu0
  %8881 = vmatprep.subr.bf16.mxu0 %v8775
  %8882 = vmatpush1.bf16.msra.mxu0 %v8774
  %8883 = vmatprep.subr.bf16.mxu0 %v8771
  %8884 = vmatpush1.bf16.msra.mxu0 %v8770
  %8885 = vmatprep.subr.bf16.mxu0 %v8767
  %8886 = vmatpush1.bf16.msra.mxu0 %v8766
  %8887 = vmatprep.subr.bf16.mxu0 %v8763
  %8888 = vmatpush1.bf16.msra.mxu0 %v8762
  %8889 = vmatprep.subr.bf16.mxu0 %v8759
  %8890 = vmatpush1.bf16.msra.mxu0 %v8758
  %8891 = vmatprep.subr.bf16.mxu0 %v8755
  %8892 = vmatpush1.bf16.msra.mxu0 %v8754
  %8893 = vmatprep.subr.bf16.mxu0 %v8751
  %8894 = vmatpush1.bf16.msra.mxu0 %v8750
  %8895 = vmatprep.subr.bf16.mxu0 %v8747
  %8896 = vmatpush1.bf16.msra.mxu0 %v8746
  %8897 = vmatprep.subr.bf16.mxu0 0
  %8898 = vmatpush2.bf16.msra.mxu0 0
  %8899 = vmatprep.subr.bf16.mxu0 0
  %8900 = vmatpush2.bf16.msra.mxu0 0
  %8901 = vmatprep.subr.bf16.mxu0 0
  %8902 = vmatpush2.bf16.msra.mxu0 0
  %8903 = vmatprep.subr.bf16.mxu0 0
  %8904 = vmatpush2.bf16.msra.mxu0 0
  %8905 = vmatprep.subr.bf16.mxu0 0
  %8906 = vmatpush2.bf16.msra.mxu0 0
  %8907 = vmatprep.subr.bf16.mxu0 0
  %8908 = vmatpush2.bf16.msra.mxu0 0
  %8909 = vmatprep.subr.bf16.mxu0 0
  %8910 = vmatpush2.bf16.msra.mxu0 0
  %8911 = vmatprep.subr.bf16.mxu0 0
  %8912 = vmatpush2.bf16.msra.mxu0 0
  %8913 = vmatprep.mubr.bf16.mxu0 0
  %8914 = vmatmul.mubr.bf16.gmra.mxu0 %v8590
  %v8915 = vpop.f32.mrf.mxu0
  %v8916 = vadd.f32 %v8639, %v8915
  %v8917 = vpop.f32.mrf.mxu0
  %v8918 = vadd.f32 %v8643, %v8917
  %v8919 = vpop.f32.mrf.mxu0
  %v8920 = vadd.f32 %v8639, %v8919
  %v8921 = vpop.f32.mrf.mxu0
  %v8922 = vadd.f32 %v8643, %v8921
  %8923 = vmatprep.mubr.bf16.mxu0 0
  %8924 = vmatmul.mubr.bf16.gmra.mxu0 %v8591
  %v8925 = vpop.f32.mrf.mxu0
  %v8926 = vadd.f32 %v8639, %v8925
  %v8927 = vpop.f32.mrf.mxu0
  %v8928 = vadd.f32 %v8643, %v8927
  %v8929 = vpop.f32.mrf.mxu0
  %v8930 = vadd.f32 %v8639, %v8929
  %v8931 = vpop.f32.mrf.mxu0
  %v8932 = vadd.f32 %v8643, %v8931
  %8933 = vmatprep.mubr.bf16.mxu0 0
  %8934 = vmatmul.mubr.bf16.gmra.mxu0 %v8592
  %v8935 = vpop.f32.mrf.mxu0
  %v8936 = vadd.f32 %v8639, %v8935
  %v8937 = vpop.f32.mrf.mxu0
  %v8938 = vadd.f32 %v8643, %v8937
  %v8939 = vpop.f32.mrf.mxu0
  %v8940 = vadd.f32 %v8639, %v8939
  %v8941 = vpop.f32.mrf.mxu0
  %v8942 = vadd.f32 %v8643, %v8941
  %8943 = vmatprep.mubr.bf16.mxu0 0
  %8944 = vmatmul.mubr.bf16.gmra.mxu0 %v8593
  %v8945 = vpop.f32.mrf.mxu0
  %v8946 = vadd.f32 %v8639, %v8945
  %v8947 = vpop.f32.mrf.mxu0
  %v8948 = vadd.f32 %v8643, %v8947
  %v8949 = vpop.f32.mrf.mxu0
  %v8950 = vadd.f32 %v8639, %v8949
  %v8951 = vpop.f32.mrf.mxu0
  %v8952 = vadd.f32 %v8643, %v8951
  %8953 = vdwg.mxu0
  %8954 = vst [vmem:[#allocation4] sm:$0xff] %v8843
  %8955 = vst [vmem:[#allocation4 + $0x8] sm:$0xff] %v8845
  %8956 = vst [vmem:[#allocation4 + $0x10] sm:$0xff] %v8916
  %8957 = vst [vmem:[#allocation4 + $0x18] sm:$0xff] %v8918
  %8958 = vst [vmem:[#allocation4 + $0x20] sm:$0xff] %v8847
  %8959 = vst [vmem:[#allocation4 + $0x28] sm:$0xff] %v8849
  %8960 = vst [vmem:[#allocation4 + $0x30] sm:$0xff] %v8920
  %8961 = vst [vmem:[#allocation4 + $0x38] sm:$0xff] %v8922
  %8962 = vst [vmem:[#allocation4 + $0x40] sm:$0xff] %v8853
  %8963 = vst [vmem:[#allocation4 + $0x48] sm:$0xff] %v8855
  %8964 = vst [vmem:[#allocation4 + $0x50] sm:$0xff] %v8926
  %8965 = vst [vmem:[#allocation4 + $0x58] sm:$0xff] %v8928
  %8966 = vst [vmem:[#allocation4 + $0x60] sm:$0xff] %v8857
  %8967 = vst [vmem:[#allocation4 + $0x68] sm:$0xff] %v8859
  %8968 = vst [vmem:[#allocation4 + $0x70] sm:$0xff] %v8930
  %8969 = vst [vmem:[#allocation4 + $0x78] sm:$0xff] %v8932
  %8970 = vst [vmem:[#allocation4 + $0x80] sm:$0xff] %v8863
  %8971 = vst [vmem:[#allocation4 + $0x88] sm:$0xff] %v8865
  %8972 = vst [vmem:[#allocation4 + $0x90] sm:$0xff] %v8936
  %8973 = vst [vmem:[#allocation4 + $0x98] sm:$0xff] %v8938
  %8974 = vst [vmem:[#allocation4 + $0xa0] sm:$0xff] %v8867
  %8975 = vst [vmem:[#allocation4 + $0xa8] sm:$0xff] %v8869
  %8976 = vst [vmem:[#allocation4 + $0xb0] sm:$0xff] %v8940
  %8977 = vst [vmem:[#allocation4 + $0xb8] sm:$0xff] %v8942
  %8978 = vst [vmem:[#allocation4 + $0xc0] sm:$0xff] %v8873
  %8979 = vst [vmem:[#allocation4 + $0xc8] sm:$0xff] %v8875
  %8980 = vst [vmem:[#allocation4 + $0xd0] sm:$0xff] %v8946
  %8981 = vst [vmem:[#allocation4 + $0xd8] sm:$0xff] %v8948
  %8982 = vst [vmem:[#allocation4 + $0xe0] sm:$0xff] %v8877
  %8983 = vst [vmem:[#allocation4 + $0xe8] sm:$0xff] %v8879
  %8984 = vst [vmem:[#allocation4 + $0xf0] sm:$0xff] %v8950
  %8985 = vst [vmem:[#allocation4 + $0xf8] sm:$0xff] %v8952
  %v8986 = vld [vmem:[%s3223] sm:$0xff]
  %v8987 = vld [vmem:[%s3223 + $0x8] sm:$0xff]
  %v8988 = vld [vmem:[%s3223 + $0x10] sm:$0xff]
  %v8989 = vld [vmem:[%s3223 + $0x18] sm:$0xff]
  %v8990 = vld [vmem:[%s11] sm:$0xff]
  %v8991 = vld [vmem:[%s11 + $0x8] sm:$0xff]
  %v8992 = vld [vmem:[%s11 + $0x10] sm:$0xff]
  %v8993 = vld [vmem:[%s11 + $0x18] sm:$0xff]
  %v8994 = vld [vmem:[%s11 + $0x20] sm:$0xff]
  %v8995 = vld [vmem:[%s11 + $0x28] sm:$0xff]
  %v8996 = vld [vmem:[%s11 + $0x30] sm:$0xff]
  %v8997 = vld [vmem:[%s11 + $0x38] sm:$0xff]
  %v8998 = vld [vmem:[%s11 + $0x40] sm:$0xff]
  %v8999 = vld [vmem:[%s11 + $0x48] sm:$0xff]
  %v9000 = vld [vmem:[%s11 + $0x50] sm:$0xff]
  %v9001 = vld [vmem:[%s11 + $0x58] sm:$0xff]
  %v9002 = vld [vmem:[%s11 + $0x60] sm:$0xff]
  %v9003 = vld [vmem:[%s11 + $0x68] sm:$0xff]
  %v9004 = vld [vmem:[%s11 + $0x70] sm:$0xff]
  %v9005 = vld [vmem:[%s11 + $0x78] sm:$0xff]
  %v9006 = vld [vmem:[%s11 + $0x80] sm:$0xff]
  %v9007 = vld [vmem:[%s11 + $0x88] sm:$0xff]
  %v9008 = vld [vmem:[%s11 + $0x90] sm:$0xff]
  %v9009 = vld [vmem:[%s11 + $0x98] sm:$0xff]
  %v9010 = vld [vmem:[%s11 + $0xa0] sm:$0xff]
  %v9011 = vld [vmem:[%s11 + $0xa8] sm:$0xff]
  %v9012 = vld [vmem:[%s11 + $0xb0] sm:$0xff]
  %v9013 = vld [vmem:[%s11 + $0xb8] sm:$0xff]
  %v9014 = vld [vmem:[%s11 + $0xc0] sm:$0xff]
  %v9015 = vld [vmem:[%s11 + $0xc8] sm:$0xff]
  %v9016 = vld [vmem:[%s11 + $0xd0] sm:$0xff]
  %v9017 = vld [vmem:[%s11 + $0xd8] sm:$0xff]
  %v9018 = vld [vmem:[%s11 + $0xe0] sm:$0xff]
  %v9019 = vld [vmem:[%s11 + $0xe8] sm:$0xff]
  %v9020 = vld [vmem:[%s11 + $0xf0] sm:$0xff]
  %v9021 = vld [vmem:[%s11 + $0xf8] sm:$0xff]
  %v9054 = vunpack.c.l.b16 %v8990
  %v9055 = vunpack.c.h.b16 %v8990
  %v9056 = vunpack.c.l.b16 %v8991
  %v9057 = vunpack.c.h.b16 %v8991
  %v9058 = vunpack.c.l.b16 %v8992
  %v9059 = vunpack.c.h.b16 %v8992
  %v9060 = vunpack.c.l.b16 %v8993
  %v9061 = vunpack.c.h.b16 %v8993
  %v9062 = vunpack.c.l.b16 %v8994
  %v9063 = vunpack.c.h.b16 %v8994
  %v9064 = vunpack.c.l.b16 %v8995
  %v9065 = vunpack.c.h.b16 %v8995
  %v9066 = vunpack.c.l.b16 %v8996
  %v9067 = vunpack.c.h.b16 %v8996
  %v9068 = vunpack.c.l.b16 %v8997
  %v9069 = vunpack.c.h.b16 %v8997
  %v9070 = vunpack.c.l.b16 %v8998
  %v9071 = vunpack.c.h.b16 %v8998
  %v9072 = vunpack.c.l.b16 %v8999
  %v9073 = vunpack.c.h.b16 %v8999
  %v9074 = vunpack.c.l.b16 %v9000
  %v9075 = vunpack.c.h.b16 %v9000
  %v9076 = vunpack.c.l.b16 %v9001
  %v9077 = vunpack.c.h.b16 %v9001
  %v9078 = vunpack.c.l.b16 %v9002
  %v9079 = vunpack.c.h.b16 %v9002
  %v9080 = vunpack.c.l.b16 %v9003
  %v9081 = vunpack.c.h.b16 %v9003
  %v9082 = vunpack.c.l.b16 %v9004
  %v9083 = vunpack.c.h.b16 %v9004
  %v9084 = vunpack.c.l.b16 %v9005
  %v9085 = vunpack.c.h.b16 %v9005
  %v9086 = vunpack.c.l.b16 %v9006
  %v9087 = vunpack.c.h.b16 %v9006
  %v9088 = vunpack.c.l.b16 %v9007
  %v9089 = vunpack.c.h.b16 %v9007
  %v9090 = vunpack.c.l.b16 %v9008
  %v9091 = vunpack.c.h.b16 %v9008
  %v9092 = vunpack.c.l.b16 %v9009
  %v9093 = vunpack.c.h.b16 %v9009
  %v9094 = vunpack.c.l.b16 %v9010
  %v9095 = vunpack.c.h.b16 %v9010
  %v9096 = vunpack.c.l.b16 %v9011
  %v9097 = vunpack.c.h.b16 %v9011
  %v9098 = vunpack.c.l.b16 %v9012
  %v9099 = vunpack.c.h.b16 %v9012
  %v9100 = vunpack.c.l.b16 %v9013
  %v9101 = vunpack.c.h.b16 %v9013
  %v9102 = vunpack.c.l.b16 %v9014
  %v9103 = vunpack.c.h.b16 %v9014
  %v9104 = vunpack.c.l.b16 %v9015
  %v9105 = vunpack.c.h.b16 %v9015
  %v9106 = vunpack.c.l.b16 %v9016
  %v9107 = vunpack.c.h.b16 %v9016
  %v9108 = vunpack.c.l.b16 %v9017
  %v9109 = vunpack.c.h.b16 %v9017
  %v9110 = vunpack.c.l.b16 %v9018
  %v9111 = vunpack.c.h.b16 %v9018
  %v9112 = vunpack.c.l.b16 %v9019
  %v9113 = vunpack.c.h.b16 %v9019
  %v9114 = vunpack.c.l.b16 %v9020
  %v9115 = vunpack.c.h.b16 %v9020
  %v9116 = vunpack.c.l.b16 %v9021
  %v9117 = vunpack.c.h.b16 %v9021
  %v9118 = vpack.c.b16 %v9058, %v9054
  %v9119 = vpack.c.b16 %v9059, %v9055
  %v9120 = vpack.c.b16 %v9060, %v9056
  %v9121 = vpack.c.b16 %v9061, %v9057
  %v9122 = vpack.c.b16 %v9066, %v9062
  %v9123 = vpack.c.b16 %v9067, %v9063
  %v9124 = vpack.c.b16 %v9068, %v9064
  %v9125 = vpack.c.b16 %v9069, %v9065
  %v9126 = vpack.c.b16 %v9074, %v9070
  %v9127 = vpack.c.b16 %v9075, %v9071
  %v9128 = vpack.c.b16 %v9076, %v9072
  %v9129 = vpack.c.b16 %v9077, %v9073
  %v9130 = vpack.c.b16 %v9082, %v9078
  %v9131 = vpack.c.b16 %v9083, %v9079
  %v9132 = vpack.c.b16 %v9084, %v9080
  %v9133 = vpack.c.b16 %v9085, %v9081
  %v9134 = vpack.c.b16 %v9090, %v9086
  %v9135 = vpack.c.b16 %v9091, %v9087
  %v9136 = vpack.c.b16 %v9092, %v9088
  %v9137 = vpack.c.b16 %v9093, %v9089
  %v9138 = vpack.c.b16 %v9098, %v9094
  %v9139 = vpack.c.b16 %v9099, %v9095
  %v9140 = vpack.c.b16 %v9100, %v9096
  %v9141 = vpack.c.b16 %v9101, %v9097
  %v9142 = vpack.c.b16 %v9106, %v9102
  %v9143 = vpack.c.b16 %v9107, %v9103
  %v9144 = vpack.c.b16 %v9108, %v9104
  %v9145 = vpack.c.b16 %v9109, %v9105
  %v9146 = vpack.c.b16 %v9114, %v9110
  %v9147 = vpack.c.b16 %v9115, %v9111
  %v9148 = vpack.c.b16 %v9116, %v9112
  %v9149 = vpack.c.b16 %v9117, %v9113
  %9182 = vmatprep.subr.bf16.mxu0 %v9147
  %9183 = vmatpush1.bf16.msra.mxu0 %v9146
  %9184 = vmatprep.subr.bf16.mxu0 %v9143
  %9185 = vmatpush1.bf16.msra.mxu0 %v9142
  %9186 = vmatprep.subr.bf16.mxu0 %v9139
  %9187 = vmatpush1.bf16.msra.mxu0 %v9138
  %9188 = vmatprep.subr.bf16.mxu0 %v9135
  %9189 = vmatpush1.bf16.msra.mxu0 %v9134
  %9190 = vmatprep.subr.bf16.mxu0 %v9131
  %9191 = vmatpush1.bf16.msra.mxu0 %v9130
  %9192 = vmatprep.subr.bf16.mxu0 %v9127
  %9193 = vmatpush1.bf16.msra.mxu0 %v9126
  %9194 = vmatprep.subr.bf16.mxu0 %v9123
  %9195 = vmatpush1.bf16.msra.mxu0 %v9122
  %9196 = vmatprep.subr.bf16.mxu0 %v9119
  %9197 = vmatpush1.bf16.msra.mxu0 %v9118
  %9198 = vmatprep.subr.bf16.mxu0 0
  %9199 = vmatpush2.bf16.msra.mxu0 0
  %9200 = vmatprep.subr.bf16.mxu0 0
  %9201 = vmatpush2.bf16.msra.mxu0 0
  %9202 = vmatprep.subr.bf16.mxu0 0
  %9203 = vmatpush2.bf16.msra.mxu0 0
  %9204 = vmatprep.subr.bf16.mxu0 0
  %9205 = vmatpush2.bf16.msra.mxu0 0
  %9206 = vmatprep.subr.bf16.mxu0 0
  %9207 = vmatpush2.bf16.msra.mxu0 0
  %9208 = vmatprep.subr.bf16.mxu0 0
  %9209 = vmatpush2.bf16.msra.mxu0 0
  %9210 = vmatprep.subr.bf16.mxu0 0
  %9211 = vmatpush2.bf16.msra.mxu0 0
  %9212 = vmatprep.subr.bf16.mxu0 0
  %9213 = vmatpush2.bf16.msra.mxu0 0
  %9214 = vmatprep.mubr.bf16.mxu0 0
  %9215 = vmatmul.mubr.bf16.gmra.mxu0 0
  %v9216 = vpop.f32.mrf.mxu0
  %v9217 = vadd.f32 0.0, %v9216
  %v9218 = vpop.f32.mrf.mxu0
  %v9219 = vadd.f32 0.0, %v9218
  %v9220 = vpop.f32.mrf.mxu0
  %v9221 = vpop.f32.mrf.mxu0
  %9222 = vdwg.mxu0
  %9223 = vmatprep.subr.bf16.mxu0 %v9149
  %9224 = vmatpush1.bf16.msra.mxu0 %v9148
  %9225 = vmatprep.subr.bf16.mxu0 %v9145
  %9226 = vmatpush1.bf16.msra.mxu0 %v9144
  %9227 = vmatprep.subr.bf16.mxu0 %v9141
  %9228 = vmatpush1.bf16.msra.mxu0 %v9140
  %9229 = vmatprep.subr.bf16.mxu0 %v9137
  %9230 = vmatpush1.bf16.msra.mxu0 %v9136
  %9231 = vmatprep.subr.bf16.mxu0 %v9133
  %9232 = vmatpush1.bf16.msra.mxu0 %v9132
  %9233 = vmatprep.subr.bf16.mxu0 %v9129
  %9234 = vmatpush1.bf16.msra.mxu0 %v9128
  %9235 = vmatprep.subr.bf16.mxu0 %v9125
  %9236 = vmatpush1.bf16.msra.mxu0 %v9124
  %9237 = vmatprep.subr.bf16.mxu0 %v9121
  %9238 = vmatpush1.bf16.msra.mxu0 %v9120
  %9239 = vmatprep.subr.bf16.mxu0 0
  %9240 = vmatpush2.bf16.msra.mxu0 0
  %9241 = vmatprep.subr.bf16.mxu0 0
  %9242 = vmatpush2.bf16.msra.mxu0 0
  %9243 = vmatprep.subr.bf16.mxu0 0
  %9244 = vmatpush2.bf16.msra.mxu0 0
  %9245 = vmatprep.subr.bf16.mxu0 0
  %9246 = vmatpush2.bf16.msra.mxu0 0
  %9247 = vmatprep.subr.bf16.mxu0 0
  %9248 = vmatpush2.bf16.msra.mxu0 0
  %9249 = vmatprep.subr.bf16.mxu0 0
  %9250 = vmatpush2.bf16.msra.mxu0 0
  %9251 = vmatprep.subr.bf16.mxu0 0
  %9252 = vmatpush2.bf16.msra.mxu0 0
  %9253 = vmatprep.subr.bf16.mxu0 0
  %9254 = vmatpush2.bf16.msra.mxu0 0
  %9255 = vmatprep.mubr.bf16.mxu0 0
  %9256 = vmatmul.mubr.bf16.gmra.mxu0 0
  %v9257 = vpop.f32.mrf.mxu0
  %v9258 = vadd.f32 0.0, %v9257
  %v9259 = vpop.f32.mrf.mxu0
  %v9260 = vadd.f32 0.0, %v9259
  %v9261 = vpop.f32.mrf.mxu0
  %v9262 = vpop.f32.mrf.mxu0
  %9263 = vdwg.mxu0
  %v9264 = vadd.f32 %v8986, %v9217
  %v9265 = vadd.f32 %v8987, %v9219
  %v9266 = vadd.f32 %v8988, %v9258
  %v9267 = vadd.f32 %v8989, %v9260
  %v9268 = vxor.u32 %v9264, 2147483648
  %v9269 = vxor.u32 %v9265, 2147483648
  %v9270 = vxor.u32 %v9266, 2147483648
  %v9271 = vmul.f32 %v9268, 1.442695
  %v9272 = vpow.pop %v9271
  %v9273 = vmul.f32 %v9269, 1.442695
  %v9274 = vpow.pop %v9273
  %v9275 = vmul.f32 %v9270, 1.442695
  %v9276 = vpow.pop %v9275
  %v9277 = vadd.f32 %v9272, 1.0
  %v9278 = vadd.f32 %v9274, 1.0
  %v9279 = vadd.f32 %v9276, 1.0
  %v9280 = vrcp.pop %v9277
  %v9281 = vmul.f32 1.0, %v9280
  %v9282 = vrcp.pop %v9278
  %v9283 = vmul.f32 1.0, %v9282
  %v9284 = vrcp.pop %v9279
  %v9285 = vmul.f32 1.0, %v9284
  %v9286 = vtanh.pop %v9267
  %v9287 = vmul.f32 %v9283, 0.0
  %v9288 = vmul.f32 %v9281, %v9286
  %v9289 = vadd.f32 %v9287, %v9288
  %v9290 = vtanh.pop %v9289
  %v9291 = vmul.f32 %v9285, %v9290
  %9292 = vst [vmem:[%s13] sm:$0xff] %v9291
  %v9293 = vld [vmem:[%s3533] sm:$0xff]
  %v9294 = vld [vmem:[%s3533 + $0x8] sm:$0xff]
  %v9295 = vld [vmem:[%s3533 + $0x10] sm:$0xff]
  %v9296 = vld [vmem:[%s3533 + $0x18] sm:$0xff]
  %v9297 = vpack.c.bf16 %v9291, %v9291
  %v9298 = vld [vmem:[%s11] sm:$0xff]
  %v9299 = vld [vmem:[%s11 + $0x8] sm:$0xff]
  %v9300 = vld [vmem:[%s11 + $0x10] sm:$0xff]
  %v9301 = vld [vmem:[%s11 + $0x18] sm:$0xff]
  %v9302 = vld [vmem:[%s11 + $0x20] sm:$0xff]
  %v9303 = vld [vmem:[%s11 + $0x28] sm:$0xff]
  %v9304 = vld [vmem:[%s11 + $0x30] sm:$0xff]
  %v9305 = vld [vmem:[%s11 + $0x38] sm:$0xff]
  %v9306 = vld [vmem:[%s11 + $0x40] sm:$0xff]
  %v9307 = vld [vmem:[%s11 + $0x48] sm:$0xff]
  %v9308 = vld [vmem:[%s11 + $0x50] sm:$0xff]
  %v9309 = vld [vmem:[%s11 + $0x58] sm:$0xff]
  %v9310 = vld [vmem:[%s11 + $0x60] sm:$0xff]
  %v9311 = vld [vmem:[%s11 + $0x68] sm:$0xff]
  %v9312 = vld [vmem:[%s11 + $0x70] sm:$0xff]
  %v9313 = vld [vmem:[%s11 + $0x78] sm:$0xff]
  %v9314 = vld [vmem:[%s11 + $0x80] sm:$0xff]
  %v9315 = vld [vmem:[%s11 + $0x88] sm:$0xff]
  %v9316 = vld [vmem:[%s11 + $0x90] sm:$0xff]
  %v9317 = vld [vmem:[%s11 + $0x98] sm:$0xff]
  %v9318 = vld [vmem:[%s11 + $0xa0] sm:$0xff]
  %v9319 = vld [vmem:[%s11 + $0xa8] sm:$0xff]
  %v9320 = vld [vmem:[%s11 + $0xb0] sm:$0xff]
  %v9321 = vld [vmem:[%s11 + $0xb8] sm:$0xff]
  %v9322 = vld [vmem:[%s11 + $0xc0] sm:$0xff]
  %v9323 = vld [vmem:[%s11 + $0xc8] sm:$0xff]
  %v9324 = vld [vmem:[%s11 + $0xd0] sm:$0xff]
  %v9325 = vld [vmem:[%s11 + $0xd8] sm:$0xff]
  %v9326 = vld [vmem:[%s11 + $0xe0] sm:$0xff]
  %v9327 = vld [vmem:[%s11 + $0xe8] sm:$0xff]
  %v9328 = vld [vmem:[%s11 + $0xf0] sm:$0xff]
  %v9329 = vld [vmem:[%s11 + $0xf8] sm:$0xff]
  %v9362 = vunpack.c.l.b16 %v9298
  %v9363 = vunpack.c.h.b16 %v9298
  %v9364 = vunpack.c.l.b16 %v9299
  %v9365 = vunpack.c.h.b16 %v9299
  %v9366 = vunpack.c.l.b16 %v9300
  %v9367 = vunpack.c.h.b16 %v9300
  %v9368 = vunpack.c.l.b16 %v9301
  %v9369 = vunpack.c.h.b16 %v9301
  %v9370 = vunpack.c.l.b16 %v9302
  %v9371 = vunpack.c.h.b16 %v9302
  %v9372 = vunpack.c.l.b16 %v9303
  %v9373 = vunpack.c.h.b16 %v9303
  %v9374 = vunpack.c.l.b16 %v9304
  %v9375 = vunpack.c.h.b16 %v9304
  %v9376 = vunpack.c.l.b16 %v9305
  %v9377 = vunpack.c.h.b16 %v9305
  %v9378 = vunpack.c.l.b16 %v9306
  %v9379 = vunpack.c.h.b16 %v9306
  %v9380 = vunpack.c.l.b16 %v9307
  %v9381 = vunpack.c.h.b16 %v9307
  %v9382 = vunpack.c.l.b16 %v9308
  %v9383 = vunpack.c.h.b16 %v9308
  %v9384 = vunpack.c.l.b16 %v9309
  %v9385 = vunpack.c.h.b16 %v9309
  %v9386 = vunpack.c.l.b16 %v9310
  %v9387 = vunpack.c.h.b16 %v9310
  %v9388 = vunpack.c.l.b16 %v9311
  %v9389 = vunpack.c.h.b16 %v9311
  %v9390 = vunpack.c.l.b16 %v9312
  %v9391 = vunpack.c.h.b16 %v9312
  %v9392 = vunpack.c.l.b16 %v9313
  %v9393 = vunpack.c.h.b16 %v9313
  %v9394 = vunpack.c.l.b16 %v9314
  %v9395 = vunpack.c.h.b16 %v9314
  %v9396 = vunpack.c.l.b16 %v9315
  %v9397 = vunpack.c.h.b16 %v9315
  %v9398 = vunpack.c.l.b16 %v9316
  %v9399 = vunpack.c.h.b16 %v9316
  %v9400 = vunpack.c.l.b16 %v9317
  %v9401 = vunpack.c.h.b16 %v9317
  %v9402 = vunpack.c.l.b16 %v9318
  %v9403 = vunpack.c.h.b16 %v9318
  %v9404 = vunpack.c.l.b16 %v9319
  %v9405 = vunpack.c.h.b16 %v9319
  %v9406 = vunpack.c.l.b16 %v9320
  %v9407 = vunpack.c.h.b16 %v9320
  %v9408 = vunpack.c.l.b16 %v9321
  %v9409 = vunpack.c.h.b16 %v9321
  %v9410 = vunpack.c.l.b16 %v9322
  %v9411 = vunpack.c.h.b16 %v9322
  %v9412 = vunpack.c.l.b16 %v9323
  %v9413 = vunpack.c.h.b16 %v9323
  %v9414 = vunpack.c.l.b16 %v9324
  %v9415 = vunpack.c.h.b16 %v9324
  %v9416 = vunpack.c.l.b16 %v9325
  %v9417 = vunpack.c.h.b16 %v9325
  %v9418 = vunpack.c.l.b16 %v9326
  %v9419 = vunpack.c.h.b16 %v9326
  %v9420 = vunpack.c.l.b16 %v9327
  %v9421 = vunpack.c.h.b16 %v9327
  %v9422 = vunpack.c.l.b16 %v9328
  %v9423 = vunpack.c.h.b16 %v9328
  %v9424 = vunpack.c.l.b16 %v9329
  %v9425 = vunpack.c.h.b16 %v9329
  %v9426 = vpack.c.b16 %v9366, %v9362
  %v9427 = vpack.c.b16 %v9367, %v9363
  %v9428 = vpack.c.b16 %v9368, %v9364
  %v9429 = vpack.c.b16 %v9369, %v9365
  %v9430 = vpack.c.b16 %v9374, %v9370
  %v9431 = vpack.c.b16 %v9375, %v9371
  %v9432 = vpack.c.b16 %v9376, %v9372
  %v9433 = vpack.c.b16 %v9377, %v9373
  %v9434 = vpack.c.b16 %v9382, %v9378
  %v9435 = vpack.c.b16 %v9383, %v9379
  %v9436 = vpack.c.b16 %v9384, %v9380
  %v9437 = vpack.c.b16 %v9385, %v9381
  %v9438 = vpack.c.b16 %v9390, %v9386
  %v9439 = vpack.c.b16 %v9391, %v9387
  %v9440 = vpack.c.b16 %v9392, %v9388
  %v9441 = vpack.c.b16 %v9393, %v9389
  %v9442 = vpack.c.b16 %v9398, %v9394
  %v9443 = vpack.c.b16 %v9399, %v9395
  %v9444 = vpack.c.b16 %v9400, %v9396
  %v9445 = vpack.c.b16 %v9401, %v9397
  %v9446 = vpack.c.b16 %v9406, %v9402
  %v9447 = vpack.c.b16 %v9407, %v9403
  %v9448 = vpack.c.b16 %v9408, %v9404
  %v9449 = vpack.c.b16 %v9409, %v9405
  %v9450 = vpack.c.b16 %v9414, %v9410
  %v9451 = vpack.c.b16 %v9415, %v9411
  %v9452 = vpack.c.b16 %v9416, %v9412
  %v9453 = vpack.c.b16 %v9417, %v9413
  %v9454 = vpack.c.b16 %v9422, %v9418
  %v9455 = vpack.c.b16 %v9423, %v9419
  %v9456 = vpack.c.b16 %v9424, %v9420
  %v9457 = vpack.c.b16 %v9425, %v9421
  %9490 = vmatprep.subr.bf16.mxu0 %v9455
  %9491 = vmatpush1.bf16.msra.mxu0 %v9454
  %9492 = vmatprep.subr.bf16.mxu0 %v9451
  %9493 = vmatpush1.bf16.msra.mxu0 %v9450
  %9494 = vmatprep.subr.bf16.mxu0 %v9447
  %9495 = vmatpush1.bf16.msra.mxu0 %v9446
  %9496 = vmatprep.subr.bf16.mxu0 %v9443
  %9497 = vmatpush1.bf16.msra.mxu0 %v9442
  %9498 = vmatprep.subr.bf16.mxu0 %v9439
  %9499 = vmatpush1.bf16.msra.mxu0 %v9438
  %9500 = vmatprep.subr.bf16.mxu0 %v9435
  %9501 = vmatpush1.bf16.msra.mxu0 %v9434
  %9502 = vmatprep.subr.bf16.mxu0 %v9431
  %9503 = vmatpush1.bf16.msra.mxu0 %v9430
  %9504 = vmatprep.subr.bf16.mxu0 %v9427
  %9505 = vmatpush1.bf16.msra.mxu0 %v9426
  %9506 = vmatprep.subr.bf16.mxu0 0
  %9507 = vmatpush2.bf16.msra.mxu0 0
  %9508 = vmatprep.subr.bf16.mxu0 0
  %9509 = vmatpush2.bf16.msra.mxu0 0
  %9510 = vmatprep.subr.bf16.mxu0 0
  %9511 = vmatpush2.bf16.msra.mxu0 0
  %9512 = vmatprep.subr.bf16.mxu0 0
  %9513 = vmatpush2.bf16.msra.mxu0 0
  %9514 = vmatprep.subr.bf16.mxu0 0
  %9515 = vmatpush2.bf16.msra.mxu0 0
  %9516 = vmatprep.subr.bf16.mxu0 0
  %9517 = vmatpush2.bf16.msra.mxu0 0
  %9518 = vmatprep.subr.bf16.mxu0 0
  %9519 = vmatpush2.bf16.msra.mxu0 0
  %9520 = vmatprep.subr.bf16.mxu0 0
  %9521 = vmatpush2.bf16.msra.mxu0 0
  %9522 = vmatprep.mubr.bf16.mxu0 0
  %9523 = vmatmul.mubr.bf16.gmra.mxu0 %v9297
  %v9524 = vpop.f32.mrf.mxu0
  %v9525 = vadd.f32 0.0, %v9524
  %v9526 = vpop.f32.mrf.mxu0
  %v9527 = vadd.f32 0.0, %v9526
  %v9528 = vpop.f32.mrf.mxu0
  %v9529 = vpop.f32.mrf.mxu0
  %9530 = vdwg.mxu0
  %9531 = vmatprep.subr.bf16.mxu0 %v9457
  %9532 = vmatpush1.bf16.msra.mxu0 %v9456
  %9533 = vmatprep.subr.bf16.mxu0 %v9453
  %9534 = vmatpush1.bf16.msra.mxu0 %v9452
  %9535 = vmatprep.subr.bf16.mxu0 %v9449
  %9536 = vmatpush1.bf16.msra.mxu0 %v9448
  %9537 = vmatprep.subr.bf16.mxu0 %v9445
  %9538 = vmatpush1.bf16.msra.mxu0 %v9444
  %9539 = vmatprep.subr.bf16.mxu0 %v9441
  %9540 = vmatpush1.bf16.msra.mxu0 %v9440
  %9541 = vmatprep.subr.bf16.mxu0 %v9437
  %9542 = vmatpush1.bf16.msra.mxu0 %v9436
  %9543 = vmatprep.subr.bf16.mxu0 %v9433
  %9544 = vmatpush1.bf16.msra.mxu0 %v9432
  %9545 = vmatprep.subr.bf16.mxu0 %v9429
  %9546 = vmatpush1.bf16.msra.mxu0 %v9428
  %9547 = vmatprep.subr.bf16.mxu0 0
  %9548 = vmatpush2.bf16.msra.mxu0 0
  %9549 = vmatprep.subr.bf16.mxu0 0
  %9550 = vmatpush2.bf16.msra.mxu0 0
  %9551 = vmatprep.subr.bf16.mxu0 0
  %9552 = vmatpush2.bf16.msra.mxu0 0
  %9553 = vmatprep.subr.bf16.mxu0 0
  %9554 = vmatpush2.bf16.msra.mxu0 0
  %9555 = vmatprep.subr.bf16.mxu0 0
  %9556 = vmatpush2.bf16.msra.mxu0 0
  %9557 = vmatprep.subr.bf16.mxu0 0
  %9558 = vmatpush2.bf16.msra.mxu0 0
  %9559 = vmatprep.subr.bf16.mxu0 0
  %9560 = vmatpush2.bf16.msra.mxu0 0
  %9561 = vmatprep.subr.bf16.mxu0 0
  %9562 = vmatpush2.bf16.msra.mxu0 0
  %9563 = vmatprep.mubr.bf16.mxu0 0
  %9564 = vmatmul.mubr.bf16.gmra.mxu0 %v9297
  %v9565 = vpop.f32.mrf.mxu0
  %v9566 = vadd.f32 0.0, %v9565
  %v9567 = vpop.f32.mrf.mxu0
  %v9568 = vadd.f32 0.0, %v9567
  %v9569 = vpop.f32.mrf.mxu0
  %v9570 = vpop.f32.mrf.mxu0
  %9571 = vdwg.mxu0
  %v9572 = vadd.f32 %v9293, %v9525
  %v9573 = vadd.f32 %v9294, %v9527
  %v9574 = vadd.f32 %v9295, %v9566
  %v9575 = vadd.f32 %v9296, %v9568
  %v9576 = vxor.u32 %v9572, 2147483648
  %v9577 = vxor.u32 %v9573, 2147483648
  %v9578 = vxor.u32 %v9574, 2147483648
  %v9579 = vmul.f32 %v9576, 1.442695
  %v9580 = vpow.pop %v9579
  %v9581 = vmul.f32 %v9577, 1.442695
  %v9582 = vpow.pop %v9581
  %v9583 = vmul.f32 %v9578, 1.442695
  %v9584 = vpow.pop %v9583
  %v9585 = vadd.f32 %v9580, 1.0
  %v9586 = vadd.f32 %v9582, 1.0
  %v9587 = vadd.f32 %v9584, 1.0
  %v9588 = vrcp.pop %v9585
  %v9589 = vmul.f32 1.0, %v9588
  %v9590 = vrcp.pop %v9586
  %v9591 = vmul.f32 1.0, %v9590
  %v9592 = vrcp.pop %v9587
  %v9593 = vmul.f32 1.0, %v9592
  %v9594 = vtanh.pop %v9575
  %v9595 = vmul.f32 %v9591, %v9289
  %v9596 = vmul.f32 %v9589, %v9594
  %v9597 = vadd.f32 %v9595, %v9596
  %v9598 = vtanh.pop %v9597
  %v9599 = vmul.f32 %v9593, %v9598
  %s9600 = scalar_lea.vmem %s13, 8
  %9601 = vst [vmem:[%s9600] sm:$0xff] %v9599
  %v9602 = vld [vmem:[%s3845] sm:$0xff]
  %v9603 = vld [vmem:[%s3845 + $0x8] sm:$0xff]
  %v9604 = vld [vmem:[%s3845 + $0x10] sm:$0xff]
  %v9605 = vld [vmem:[%s3845 + $0x18] sm:$0xff]
  %v9606 = vpack.c.bf16 %v9599, %v9599
  %v9607 = vld [vmem:[%s11] sm:$0xff]
  %v9608 = vld [vmem:[%s11 + $0x8] sm:$0xff]
  %v9609 = vld [vmem:[%s11 + $0x10] sm:$0xff]
  %v9610 = vld [vmem:[%s11 + $0x18] sm:$0xff]
  %v9611 = vld [vmem:[%s11 + $0x20] sm:$0xff]
  %v9612 = vld [vmem:[%s11 + $0x28] sm:$0xff]
  %v9613 = vld [vmem:[%s11 + $0x30] sm:$0xff]
  %v9614 = vld [vmem:[%s11 + $0x38] sm:$0xff]
  %v9615 = vld [vmem:[%s11 + $0x40] sm:$0xff]
  %v9616 = vld [vmem:[%s11 + $0x48] sm:$0xff]
  %v9617 = vld [vmem:[%s11 + $0x50] sm:$0xff]
  %v9618 = vld [vmem:[%s11 + $0x58] sm:$0xff]
  %v9619 = vld [vmem:[%s11 + $0x60] sm:$0xff]
  %v9620 = vld [vmem:[%s11 + $0x68] sm:$0xff]
  %v9621 = vld [vmem:[%s11 + $0x70] sm:$0xff]
  %v9622 = vld [vmem:[%s11 + $0x78] sm:$0xff]
  %v9623 = vld [vmem:[%s11 + $0x80] sm:$0xff]
  %v9624 = vld [vmem:[%s11 + $0x88] sm:$0xff]
  %v9625 = vld [vmem:[%s11 + $0x90] sm:$0xff]
  %v9626 = vld [vmem:[%s11 + $0x98] sm:$0xff]
  %v9627 = vld [vmem:[%s11 + $0xa0] sm:$0xff]
  %v9628 = vld [vmem:[%s11 + $0xa8] sm:$0xff]
  %v9629 = vld [vmem:[%s11 + $0xb0] sm:$0xff]
  %v9630 = vld [vmem:[%s11 + $0xb8] sm:$0xff]
  %v9631 = vld [vmem:[%s11 + $0xc0] sm:$0xff]
  %v9632 = vld [vmem:[%s11 + $0xc8] sm:$0xff]
  %v9633 = vld [vmem:[%s11 + $0xd0] sm:$0xff]
  %v9634 = vld [vmem:[%s11 + $0xd8] sm:$0xff]
  %v9635 = vld [vmem:[%s11 + $0xe0] sm:$0xff]
  %v9636 = vld [vmem:[%s11 + $0xe8] sm:$0xff]
  %v9637 = vld [vmem:[%s11 + $0xf0] sm:$0xff]
  %v9638 = vld [vmem:[%s11 + $0xf8] sm:$0xff]
  %v9671 = vunpack.c.l.b16 %v9607
  %v9672 = vunpack.c.h.b16 %v9607
  %v9673 = vunpack.c.l.b16 %v9608
  %v9674 = vunpack.c.h.b16 %v9608
  %v9675 = vunpack.c.l.b16 %v9609
  %v9676 = vunpack.c.h.b16 %v9609
  %v9677 = vunpack.c.l.b16 %v9610
  %v9678 = vunpack.c.h.b16 %v9610
  %v9679 = vunpack.c.l.b16 %v9611
  %v9680 = vunpack.c.h.b16 %v9611
  %v9681 = vunpack.c.l.b16 %v9612
  %v9682 = vunpack.c.h.b16 %v9612
  %v9683 = vunpack.c.l.b16 %v9613
  %v9684 = vunpack.c.h.b16 %v9613
  %v9685 = vunpack.c.l.b16 %v9614
  %v9686 = vunpack.c.h.b16 %v9614
  %v9687 = vunpack.c.l.b16 %v9615
  %v9688 = vunpack.c.h.b16 %v9615
  %v9689 = vunpack.c.l.b16 %v9616
  %v9690 = vunpack.c.h.b16 %v9616
  %v9691 = vunpack.c.l.b16 %v9617
  %v9692 = vunpack.c.h.b16 %v9617
  %v9693 = vunpack.c.l.b16 %v9618
  %v9694 = vunpack.c.h.b16 %v9618
  %v9695 = vunpack.c.l.b16 %v9619
  %v9696 = vunpack.c.h.b16 %v9619
  %v9697 = vunpack.c.l.b16 %v9620
  %v9698 = vunpack.c.h.b16 %v9620
  %v9699 = vunpack.c.l.b16 %v9621
  %v9700 = vunpack.c.h.b16 %v9621
  %v9701 = vunpack.c.l.b16 %v9622
  %v9702 = vunpack.c.h.b16 %v9622
  %v9703 = vunpack.c.l.b16 %v9623
  %v9704 = vunpack.c.h.b16 %v9623
  %v9705 = vunpack.c.l.b16 %v9624
  %v9706 = vunpack.c.h.b16 %v9624
  %v9707 = vunpack.c.l.b16 %v9625
  %v9708 = vunpack.c.h.b16 %v9625
  %v9709 = vunpack.c.l.b16 %v9626
  %v9710 = vunpack.c.h.b16 %v9626
  %v9711 = vunpack.c.l.b16 %v9627
  %v9712 = vunpack.c.h.b16 %v9627
  %v9713 = vunpack.c.l.b16 %v9628
  %v9714 = vunpack.c.h.b16 %v9628
  %v9715 = vunpack.c.l.b16 %v9629
  %v9716 = vunpack.c.h.b16 %v9629
  %v9717 = vunpack.c.l.b16 %v9630
  %v9718 = vunpack.c.h.b16 %v9630
  %v9719 = vunpack.c.l.b16 %v9631
  %v9720 = vunpack.c.h.b16 %v9631
  %v9721 = vunpack.c.l.b16 %v9632
  %v9722 = vunpack.c.h.b16 %v9632
  %v9723 = vunpack.c.l.b16 %v9633
  %v9724 = vunpack.c.h.b16 %v9633
  %v9725 = vunpack.c.l.b16 %v9634
  %v9726 = vunpack.c.h.b16 %v9634
  %v9727 = vunpack.c.l.b16 %v9635
  %v9728 = vunpack.c.h.b16 %v9635
  %v9729 = vunpack.c.l.b16 %v9636
  %v9730 = vunpack.c.h.b16 %v9636
  %v9731 = vunpack.c.l.b16 %v9637
  %v9732 = vunpack.c.h.b16 %v9637
  %v9733 = vunpack.c.l.b16 %v9638
  %v9734 = vunpack.c.h.b16 %v9638
  %v9735 = vpack.c.b16 %v9675, %v9671
  %v9736 = vpack.c.b16 %v9676, %v9672
  %v9737 = vpack.c.b16 %v9677, %v9673
  %v9738 = vpack.c.b16 %v9678, %v9674
  %v9739 = vpack.c.b16 %v9683, %v9679
  %v9740 = vpack.c.b16 %v9684, %v9680
  %v9741 = vpack.c.b16 %v9685, %v9681
  %v9742 = vpack.c.b16 %v9686, %v9682
  %v9743 = vpack.c.b16 %v9691, %v9687
  %v9744 = vpack.c.b16 %v9692, %v9688
  %v9745 = vpack.c.b16 %v9693, %v9689
  %v9746 = vpack.c.b16 %v9694, %v9690
  %v9747 = vpack.c.b16 %v9699, %v9695
  %v9748 = vpack.c.b16 %v9700, %v9696
  %v9749 = vpack.c.b16 %v9701, %v9697
  %v9750 = vpack.c.b16 %v9702, %v9698
  %v9751 = vpack.c.b16 %v9707, %v9703
  %v9752 = vpack.c.b16 %v9708, %v9704
  %v9753 = vpack.c.b16 %v9709, %v9705
  %v9754 = vpack.c.b16 %v9710, %v9706
  %v9755 = vpack.c.b16 %v9715, %v9711
  %v9756 = vpack.c.b16 %v9716, %v9712
  %v9757 = vpack.c.b16 %v9717, %v9713
  %v9758 = vpack.c.b16 %v9718, %v9714
  %v9759 = vpack.c.b16 %v9723, %v9719
  %v9760 = vpack.c.b16 %v9724, %v9720
  %v9761 = vpack.c.b16 %v9725, %v9721
  %v9762 = vpack.c.b16 %v9726, %v9722
  %v9763 = vpack.c.b16 %v9731, %v9727
  %v9764 = vpack.c.b16 %v9732, %v9728
  %v9765 = vpack.c.b16 %v9733, %v9729
  %v9766 = vpack.c.b16 %v9734, %v9730
  %9799 = vmatprep.subr.bf16.mxu0 %v9764
  %9800 = vmatpush1.bf16.msra.mxu0 %v9763
  %9801 = vmatprep.subr.bf16.mxu0 %v9760
  %9802 = vmatpush1.bf16.msra.mxu0 %v9759
  %9803 = vmatprep.subr.bf16.mxu0 %v9756
  %9804 = vmatpush1.bf16.msra.mxu0 %v9755
  %9805 = vmatprep.subr.bf16.mxu0 %v9752
  %9806 = vmatpush1.bf16.msra.mxu0 %v9751
  %9807 = vmatprep.subr.bf16.mxu0 %v9748
  %9808 = vmatpush1.bf16.msra.mxu0 %v9747
  %9809 = vmatprep.subr.bf16.mxu0 %v9744
  %9810 = vmatpush1.bf16.msra.mxu0 %v9743
  %9811 = vmatprep.subr.bf16.mxu0 %v9740
  %9812 = vmatpush1.bf16.msra.mxu0 %v9739
  %9813 = vmatprep.subr.bf16.mxu0 %v9736
  %9814 = vmatpush1.bf16.msra.mxu0 %v9735
  %9815 = vmatprep.subr.bf16.mxu0 0
  %9816 = vmatpush2.bf16.msra.mxu0 0
  %9817 = vmatprep.subr.bf16.mxu0 0
  %9818 = vmatpush2.bf16.msra.mxu0 0
  %9819 = vmatprep.subr.bf16.mxu0 0
  %9820 = vmatpush2.bf16.msra.mxu0 0
  %9821 = vmatprep.subr.bf16.mxu0 0
  %9822 = vmatpush2.bf16.msra.mxu0 0
  %9823 = vmatprep.subr.bf16.mxu0 0
  %9824 = vmatpush2.bf16.msra.mxu0 0
  %9825 = vmatprep.subr.bf16.mxu0 0
  %9826 = vmatpush2.bf16.msra.mxu0 0
  %9827 = vmatprep.subr.bf16.mxu0 0
  %9828 = vmatpush2.bf16.msra.mxu0 0
  %9829 = vmatprep.subr.bf16.mxu0 0
  %9830 = vmatpush2.bf16.msra.mxu0 0
  %9831 = vmatprep.mubr.bf16.mxu0 0
  %9832 = vmatmul.mubr.bf16.gmra.mxu0 %v9606
  %v9833 = vpop.f32.mrf.mxu0
  %v9834 = vadd.f32 0.0, %v9833
  %v9835 = vpop.f32.mrf.mxu0
  %v9836 = vadd.f32 0.0, %v9835
  %v9837 = vpop.f32.mrf.mxu0
  %v9838 = vpop.f32.mrf.mxu0
  %9839 = vdwg.mxu0
  %9840 = vmatprep.subr.bf16.mxu0 %v9766
  %9841 = vmatpush1.bf16.msra.mxu0 %v9765
  %9842 = vmatprep.subr.bf16.mxu0 %v9762
  %9843 = vmatpush1.bf16.msra.mxu0 %v9761
  %9844 = vmatprep.subr.bf16.mxu0 %v9758
  %9845 = vmatpush1.bf16.msra.mxu0 %v9757
  %9846 = vmatprep.subr.bf16.mxu0 %v9754
  %9847 = vmatpush1.bf16.msra.mxu0 %v9753
  %9848 = vmatprep.subr.bf16.mxu0 %v9750
  %9849 = vmatpush1.bf16.msra.mxu0 %v9749
  %9850 = vmatprep.subr.bf16.mxu0 %v9746
  %9851 = vmatpush1.bf16.msra.mxu0 %v9745
  %9852 = vmatprep.subr.bf16.mxu0 %v9742
  %9853 = vmatpush1.bf16.msra.mxu0 %v9741
  %9854 = vmatprep.subr.bf16.mxu0 %v9738
  %9855 = vmatpush1.bf16.msra.mxu0 %v9737
  %9856 = vmatprep.subr.bf16.mxu0 0
  %9857 = vmatpush2.bf16.msra.mxu0 0
  %9858 = vmatprep.subr.bf16.mxu0 0
  %9859 = vmatpush2.bf16.msra.mxu0 0
  %9860 = vmatprep.subr.bf16.mxu0 0
  %9861 = vmatpush2.bf16.msra.mxu0 0
  %9862 = vmatprep.subr.bf16.mxu0 0
  %9863 = vmatpush2.bf16.msra.mxu0 0
  %9864 = vmatprep.subr.bf16.mxu0 0
  %9865 = vmatpush2.bf16.msra.mxu0 0
  %9866 = vmatprep.subr.bf16.mxu0 0
  %9867 = vmatpush2.bf16.msra.mxu0 0
  %9868 = vmatprep.subr.bf16.mxu0 0
  %9869 = vmatpush2.bf16.msra.mxu0 0
  %9870 = vmatprep.subr.bf16.mxu0 0
  %9871 = vmatpush2.bf16.msra.mxu0 0
  %9872 = vmatprep.mubr.bf16.mxu0 0
  %9873 = vmatmul.mubr.bf16.gmra.mxu0 %v9606
  %v9874 = vpop.f32.mrf.mxu0
  %v9875 = vadd.f32 0.0, %v9874
  %v9876 = vpop.f32.mrf.mxu0
  %v9877 = vadd.f32 0.0, %v9876
  %v9878 = vpop.f32.mrf.mxu0
  %v9879 = vpop.f32.mrf.mxu0
  %9880 = vdwg.mxu0
  %v9881 = vadd.f32 %v9602, %v9834
  %v9882 = vadd.f32 %v9603, %v9836
  %v9883 = vadd.f32 %v9604, %v9875
  %v9884 = vadd.f32 %v9605, %v9877
  %v9885 = vxor.u32 %v9881, 2147483648
  %v9886 = vxor.u32 %v9882, 2147483648
  %v9887 = vxor.u32 %v9883, 2147483648
  %v9888 = vmul.f32 %v9885, 1.442695
  %v9889 = vpow.pop %v9888
  %v9890 = vmul.f32 %v9886, 1.442695
  %v9891 = vpow.pop %v9890
  %v9892 = vmul.f32 %v9887, 1.442695
  %v9893 = vpow.pop %v9892
  %v9894 = vadd.f32 %v9889, 1.0
  %v9895 = vadd.f32 %v9891, 1.0
  %v9896 = vadd.f32 %v9893, 1.0
  %v9897 = vrcp.pop %v9894
  %v9898 = vmul.f32 1.0, %v9897
  %v9899 = vrcp.pop %v9895
  %v9900 = vmul.f32 1.0, %v9899
  %v9901 = vrcp.pop %v9896
  %v9902 = vmul.f32 1.0, %v9901
  %v9903 = vtanh.pop %v9884
  %v9904 = vmul.f32 %v9900, %v9597
  %v9905 = vmul.f32 %v9898, %v9903
  %v9906 = vadd.f32 %v9904, %v9905
  %v9907 = vtanh.pop %v9906
  %v9908 = vmul.f32 %v9902, %v9907
  %s9909 = scalar_lea.vmem %s13, 16
  %9910 = vst [vmem:[%s9909] sm:$0xff] %v9908
  %v9911 = vld [vmem:[%s4157] sm:$0xff]
  %v9912 = vld [vmem:[%s4157 + $0x8] sm:$0xff]
  %v9913 = vld [vmem:[%s4157 + $0x10] sm:$0xff]
  %v9914 = vld [vmem:[%s4157 + $0x18] sm:$0xff]
  %v9915 = vpack.c.bf16 %v9908, %v9908
  %v9916 = vld [vmem:[%s11] sm:$0xff]
  %v9917 = vld [vmem:[%s11 + $0x8] sm:$0xff]
  %v9918 = vld [vmem:[%s11 + $0x10] sm:$0xff]
  %v9919 = vld [vmem:[%s11 + $0x18] sm:$0xff]
  %v9920 = vld [vmem:[%s11 + $0x20] sm:$0xff]
  %v9921 = vld [vmem:[%s11 + $0x28] sm:$0xff]
  %v9922 = vld [vmem:[%s11 + $0x30] sm:$0xff]
  %v9923 = vld [vmem:[%s11 + $0x38] sm:$0xff]
  %v9924 = vld [vmem:[%s11 + $0x40] sm:$0xff]
  %v9925 = vld [vmem:[%s11 + $0x48] sm:$0xff]
  %v9926 = vld [vmem:[%s11 + $0x50] sm:$0xff]
  %v9927 = vld [vmem:[%s11 + $0x58] sm:$0xff]
  %v9928 = vld [vmem:[%s11 + $0x60] sm:$0xff]
  %v9929 = vld [vmem:[%s11 + $0x68] sm:$0xff]
  %v9930 = vld [vmem:[%s11 + $0x70] sm:$0xff]
  %v9931 = vld [vmem:[%s11 + $0x78] sm:$0xff]
  %v9932 = vld [vmem:[%s11 + $0x80] sm:$0xff]
  %v9933 = vld [vmem:[%s11 + $0x88] sm:$0xff]
  %v9934 = vld [vmem:[%s11 + $0x90] sm:$0xff]
  %v9935 = vld [vmem:[%s11 + $0x98] sm:$0xff]
  %v9936 = vld [vmem:[%s11 + $0xa0] sm:$0xff]
  %v9937 = vld [vmem:[%s11 + $0xa8] sm:$0xff]
  %v9938 = vld [vmem:[%s11 + $0xb0] sm:$0xff]
  %v9939 = vld [vmem:[%s11 + $0xb8] sm:$0xff]
  %v9940 = vld [vmem:[%s11 + $0xc0] sm:$0xff]
  %v9941 = vld [vmem:[%s11 + $0xc8] sm:$0xff]
  %v9942 = vld [vmem:[%s11 + $0xd0] sm:$0xff]
  %v9943 = vld [vmem:[%s11 + $0xd8] sm:$0xff]
  %v9944 = vld [vmem:[%s11 + $0xe0] sm:$0xff]
  %v9945 = vld [vmem:[%s11 + $0xe8] sm:$0xff]
  %v9946 = vld [vmem:[%s11 + $0xf0] sm:$0xff]
  %v9947 = vld [vmem:[%s11 + $0xf8] sm:$0xff]
  %v9980 = vunpack.c.l.b16 %v9916
  %v9981 = vunpack.c.h.b16 %v9916
  %v9982 = vunpack.c.l.b16 %v9917
  %v9983 = vunpack.c.h.b16 %v9917
  %v9984 = vunpack.c.l.b16 %v9918
  %v9985 = vunpack.c.h.b16 %v9918
  %v9986 = vunpack.c.l.b16 %v9919
  %v9987 = vunpack.c.h.b16 %v9919
  %v9988 = vunpack.c.l.b16 %v9920
  %v9989 = vunpack.c.h.b16 %v9920
  %v9990 = vunpack.c.l.b16 %v9921
  %v9991 = vunpack.c.h.b16 %v9921
  %v9992 = vunpack.c.l.b16 %v9922
  %v9993 = vunpack.c.h.b16 %v9922
  %v9994 = vunpack.c.l.b16 %v9923
  %v9995 = vunpack.c.h.b16 %v9923
  %v9996 = vunpack.c.l.b16 %v9924
  %v9997 = vunpack.c.h.b16 %v9924
  %v9998 = vunpack.c.l.b16 %v9925
  %v9999 = vunpack.c.h.b16 %v9925
  %v10000 = vunpack.c.l.b16 %v9926
  %v10001 = vunpack.c.h.b16 %v9926
  %v10002 = vunpack.c.l.b16 %v9927
  %v10003 = vunpack.c.h.b16 %v9927
  %v10004 = vunpack.c.l.b16 %v9928
  %v10005 = vunpack.c.h.b16 %v9928
  %v10006 = vunpack.c.l.b16 %v9929
  %v10007 = vunpack.c.h.b16 %v9929
  %v10008 = vunpack.c.l.b16 %v9930
  %v10009 = vunpack.c.h.b16 %v9930
  %v10010 = vunpack.c.l.b16 %v9931
  %v10011 = vunpack.c.h.b16 %v9931
  %v10012 = vunpack.c.l.b16 %v9932
  %v10013 = vunpack.c.h.b16 %v9932
  %v10014 = vunpack.c.l.b16 %v9933
  %v10015 = vunpack.c.h.b16 %v9933
  %v10016 = vunpack.c.l.b16 %v9934
  %v10017 = vunpack.c.h.b16 %v9934
  %v10018 = vunpack.c.l.b16 %v9935
  %v10019 = vunpack.c.h.b16 %v9935
  %v10020 = vunpack.c.l.b16 %v9936
  %v10021 = vunpack.c.h.b16 %v9936
  %v10022 = vunpack.c.l.b16 %v9937
  %v10023 = vunpack.c.h.b16 %v9937
  %v10024 = vunpack.c.l.b16 %v9938
  %v10025 = vunpack.c.h.b16 %v9938
  %v10026 = vunpack.c.l.b16 %v9939
  %v10027 = vunpack.c.h.b16 %v9939
  %v10028 = vunpack.c.l.b16 %v9940
  %v10029 = vunpack.c.h.b16 %v9940
  %v10030 = vunpack.c.l.b16 %v9941
  %v10031 = vunpack.c.h.b16 %v9941
  %v10032 = vunpack.c.l.b16 %v9942
  %v10033 = vunpack.c.h.b16 %v9942
  %v10034 = vunpack.c.l.b16 %v9943
  %v10035 = vunpack.c.h.b16 %v9943
  %v10036 = vunpack.c.l.b16 %v9944
  %v10037 = vunpack.c.h.b16 %v9944
  %v10038 = vunpack.c.l.b16 %v9945
  %v10039 = vunpack.c.h.b16 %v9945
  %v10040 = vunpack.c.l.b16 %v9946
  %v10041 = vunpack.c.h.b16 %v9946
  %v10042 = vunpack.c.l.b16 %v9947
  %v10043 = vunpack.c.h.b16 %v9947
  %v10044 = vpack.c.b16 %v9984, %v9980
  %v10045 = vpack.c.b16 %v9985, %v9981
  %v10046 = vpack.c.b16 %v9986, %v9982
  %v10047 = vpack.c.b16 %v9987, %v9983
  %v10048 = vpack.c.b16 %v9992, %v9988
  %v10049 = vpack.c.b16 %v9993, %v9989
  %v10050 = vpack.c.b16 %v9994, %v9990
  %v10051 = vpack.c.b16 %v9995, %v9991
  %v10052 = vpack.c.b16 %v10000, %v9996
  %v10053 = vpack.c.b16 %v10001, %v9997
  %v10054 = vpack.c.b16 %v10002, %v9998
  %v10055 = vpack.c.b16 %v10003, %v9999
  %v10056 = vpack.c.b16 %v10008, %v10004
  %v10057 = vpack.c.b16 %v10009, %v10005
  %v10058 = vpack.c.b16 %v10010, %v10006
  %v10059 = vpack.c.b16 %v10011, %v10007
  %v10060 = vpack.c.b16 %v10016, %v10012
  %v10061 = vpack.c.b16 %v10017, %v10013
  %v10062 = vpack.c.b16 %v10018, %v10014
  %v10063 = vpack.c.b16 %v10019, %v10015
  %v10064 = vpack.c.b16 %v10024, %v10020
  %v10065 = vpack.c.b16 %v10025, %v10021
  %v10066 = vpack.c.b16 %v10026, %v10022
  %v10067 = vpack.c.b16 %v10027, %v10023
  %v10068 = vpack.c.b16 %v10032, %v10028
  %v10069 = vpack.c.b16 %v10033, %v10029
  %v10070 = vpack.c.b16 %v10034, %v10030
  %v10071 = vpack.c.b16 %v10035, %v10031
  %v10072 = vpack.c.b16 %v10040, %v10036
  %v10073 = vpack.c.b16 %v10041, %v10037
  %v10074 = vpack.c.b16 %v10042, %v10038
  %v10075 = vpack.c.b16 %v10043, %v10039
  %10108 = vmatprep.subr.bf16.mxu0 %v10073
  %10109 = vmatpush1.bf16.msra.mxu0 %v10072
  %10110 = vmatprep.subr.bf16.mxu0 %v10069
  %10111 = vmatpush1.bf16.msra.mxu0 %v10068
  %10112 = vmatprep.subr.bf16.mxu0 %v10065
  %10113 = vmatpush1.bf16.msra.mxu0 %v10064
  %10114 = vmatprep.subr.bf16.mxu0 %v10061
  %10115 = vmatpush1.bf16.msra.mxu0 %v10060
  %10116 = vmatprep.subr.bf16.mxu0 %v10057
  %10117 = vmatpush1.bf16.msra.mxu0 %v10056
  %10118 = vmatprep.subr.bf16.mxu0 %v10053
  %10119 = vmatpush1.bf16.msra.mxu0 %v10052
  %10120 = vmatprep.subr.bf16.mxu0 %v10049
  %10121 = vmatpush1.bf16.msra.mxu0 %v10048
  %10122 = vmatprep.subr.bf16.mxu0 %v10045
  %10123 = vmatpush1.bf16.msra.mxu0 %v10044
  %10124 = vmatprep.subr.bf16.mxu0 0
  %10125 = vmatpush2.bf16.msra.mxu0 0
  %10126 = vmatprep.subr.bf16.mxu0 0
  %10127 = vmatpush2.bf16.msra.mxu0 0
  %10128 = vmatprep.subr.bf16.mxu0 0
  %10129 = vmatpush2.bf16.msra.mxu0 0
  %10130 = vmatprep.subr.bf16.mxu0 0
  %10131 = vmatpush2.bf16.msra.mxu0 0
  %10132 = vmatprep.subr.bf16.mxu0 0
  %10133 = vmatpush2.bf16.msra.mxu0 0
  %10134 = vmatprep.subr.bf16.mxu0 0
  %10135 = vmatpush2.bf16.msra.mxu0 0
  %10136 = vmatprep.subr.bf16.mxu0 0
  %10137 = vmatpush2.bf16.msra.mxu0 0
  %10138 = vmatprep.subr.bf16.mxu0 0
  %10139 = vmatpush2.bf16.msra.mxu0 0
  %10140 = vmatprep.mubr.bf16.mxu0 0
  %10141 = vmatmul.mubr.bf16.gmra.mxu0 %v9915
  %v10142 = vpop.f32.mrf.mxu0
  %v10143 = vadd.f32 0.0, %v10142
  %v10144 = vpop.f32.mrf.mxu0
  %v10145 = vadd.f32 0.0, %v10144
  %v10146 = vpop.f32.mrf.mxu0
  %v10147 = vpop.f32.mrf.mxu0
  %10148 = vdwg.mxu0
  %10149 = vmatprep.subr.bf16.mxu0 %v10075
  %10150 = vmatpush1.bf16.msra.mxu0 %v10074
  %10151 = vmatprep.subr.bf16.mxu0 %v10071
  %10152 = vmatpush1.bf16.msra.mxu0 %v10070
  %10153 = vmatprep.subr.bf16.mxu0 %v10067
  %10154 = vmatpush1.bf16.msra.mxu0 %v10066
  %10155 = vmatprep.subr.bf16.mxu0 %v10063
  %10156 = vmatpush1.bf16.msra.mxu0 %v10062
  %10157 = vmatprep.subr.bf16.mxu0 %v10059
  %10158 = vmatpush1.bf16.msra.mxu0 %v10058
  %10159 = vmatprep.subr.bf16.mxu0 %v10055
  %10160 = vmatpush1.bf16.msra.mxu0 %v10054
  %10161 = vmatprep.subr.bf16.mxu0 %v10051
  %10162 = vmatpush1.bf16.msra.mxu0 %v10050
  %10163 = vmatprep.subr.bf16.mxu0 %v10047
  %10164 = vmatpush1.bf16.msra.mxu0 %v10046
  %10165 = vmatprep.subr.bf16.mxu0 0
  %10166 = vmatpush2.bf16.msra.mxu0 0
  %10167 = vmatprep.subr.bf16.mxu0 0
  %10168 = vmatpush2.bf16.msra.mxu0 0
  %10169 = vmatprep.subr.bf16.mxu0 0
  %10170 = vmatpush2.bf16.msra.mxu0 0
  %10171 = vmatprep.subr.bf16.mxu0 0
  %10172 = vmatpush2.bf16.msra.mxu0 0
  %10173 = vmatprep.subr.bf16.mxu0 0
  %10174 = vmatpush2.bf16.msra.mxu0 0
  %10175 = vmatprep.subr.bf16.mxu0 0
  %10176 = vmatpush2.bf16.msra.mxu0 0
  %10177 = vmatprep.subr.bf16.mxu0 0
  %10178 = vmatpush2.bf16.msra.mxu0 0
  %10179 = vmatprep.subr.bf16.mxu0 0
  %10180 = vmatpush2.bf16.msra.mxu0 0
  %10181 = vmatprep.mubr.bf16.mxu0 0
  %10182 = vmatmul.mubr.bf16.gmra.mxu0 %v9915
  %v10183 = vpop.f32.mrf.mxu0
  %v10184 = vadd.f32 0.0, %v10183
  %v10185 = vpop.f32.mrf.mxu0
  %v10186 = vadd.f32 0.0, %v10185
  %v10187 = vpop.f32.mrf.mxu0
  %v10188 = vpop.f32.mrf.mxu0
  %10189 = vdwg.mxu0
  %v10190 = vadd.f32 %v9911, %v10143
  %v10191 = vadd.f32 %v9912, %v10145
  %v10192 = vadd.f32 %v9913, %v10184
  %v10193 = vadd.f32 %v9914, %v10186
  %v10194 = vxor.u32 %v10190, 2147483648
  %v10195 = vxor.u32 %v10191, 2147483648
  %v10196 = vxor.u32 %v10192, 2147483648
  %v10197 = vmul.f32 %v10194, 1.442695
  %v10198 = vpow.pop %v10197
  %v10199 = vmul.f32 %v10195, 1.442695
  %v10200 = vpow.pop %v10199
  %v10201 = vmul.f32 %v10196, 1.442695
  %v10202 = vpow.pop %v10201
  %v10203 = vadd.f32 %v10198, 1.0
  %v10204 = vadd.f32 %v10200, 1.0
  %v10205 = vadd.f32 %v10202, 1.0
  %v10206 = vrcp.pop %v10203
  %v10207 = vmul.f32 1.0, %v10206
  %v10208 = vrcp.pop %v10204
  %v10209 = vmul.f32 1.0, %v10208
  %v10210 = vrcp.pop %v10205
  %v10211 = vmul.f32 1.0, %v10210
  %v10212 = vtanh.pop %v10193
  %v10213 = vmul.f32 %v10209, %v9906
  %v10214 = vmul.f32 %v10207, %v10212
  %v10215 = vadd.f32 %v10213, %v10214
  %v10216 = vtanh.pop %v10215
  %v10217 = vmul.f32 %v10211, %v10216
  %s10218 = scalar_lea.vmem %s13, 24
  %10219 = vst [vmem:[%s10218] sm:$0xff] %v10217
  %v10220 = vld [vmem:[%s4469] sm:$0xff]
  %v10221 = vld [vmem:[%s4469 + $0x8] sm:$0xff]
  %v10222 = vld [vmem:[%s4469 + $0x10] sm:$0xff]
  %v10223 = vld [vmem:[%s4469 + $0x18] sm:$0xff]
  %v10224 = vpack.c.bf16 %v10217, %v10217
  %v10225 = vld [vmem:[%s11] sm:$0xff]
  %v10226 = vld [vmem:[%s11 + $0x8] sm:$0xff]
  %v10227 = vld [vmem:[%s11 + $0x10] sm:$0xff]
  %v10228 = vld [vmem:[%s11 + $0x18] sm:$0xff]
  %v10229 = vld [vmem:[%s11 + $0x20] sm:$0xff]
  %v10230 = vld [vmem:[%s11 + $0x28] sm:$0xff]
  %v10231 = vld [vmem:[%s11 + $0x30] sm:$0xff]
  %v10232 = vld [vmem:[%s11 + $0x38] sm:$0xff]
  %v10233 = vld [vmem:[%s11 + $0x40] sm:$0xff]
  %v10234 = vld [vmem:[%s11 + $0x48] sm:$0xff]
  %v10235 = vld [vmem:[%s11 + $0x50] sm:$0xff]
  %v10236 = vld [vmem:[%s11 + $0x58] sm:$0xff]
  %v10237 = vld [vmem:[%s11 + $0x60] sm:$0xff]
  %v10238 = vld [vmem:[%s11 + $0x68] sm:$0xff]
  %v10239 = vld [vmem:[%s11 + $0x70] sm:$0xff]
  %v10240 = vld [vmem:[%s11 + $0x78] sm:$0xff]
  %v10241 = vld [vmem:[%s11 + $0x80] sm:$0xff]
  %v10242 = vld [vmem:[%s11 + $0x88] sm:$0xff]
  %v10243 = vld [vmem:[%s11 + $0x90] sm:$0xff]
  %v10244 = vld [vmem:[%s11 + $0x98] sm:$0xff]
  %v10245 = vld [vmem:[%s11 + $0xa0] sm:$0xff]
  %v10246 = vld [vmem:[%s11 + $0xa8] sm:$0xff]
  %v10247 = vld [vmem:[%s11 + $0xb0] sm:$0xff]
  %v10248 = vld [vmem:[%s11 + $0xb8] sm:$0xff]
  %v10249 = vld [vmem:[%s11 + $0xc0] sm:$0xff]
  %v10250 = vld [vmem:[%s11 + $0xc8] sm:$0xff]
  %v10251 = vld [vmem:[%s11 + $0xd0] sm:$0xff]
  %v10252 = vld [vmem:[%s11 + $0xd8] sm:$0xff]
  %v10253 = vld [vmem:[%s11 + $0xe0] sm:$0xff]
  %v10254 = vld [vmem:[%s11 + $0xe8] sm:$0xff]
  %v10255 = vld [vmem:[%s11 + $0xf0] sm:$0xff]
  %v10256 = vld [vmem:[%s11 + $0xf8] sm:$0xff]
  %v10289 = vunpack.c.l.b16 %v10225
  %v10290 = vunpack.c.h.b16 %v10225
  %v10291 = vunpack.c.l.b16 %v10226
  %v10292 = vunpack.c.h.b16 %v10226
  %v10293 = vunpack.c.l.b16 %v10227
  %v10294 = vunpack.c.h.b16 %v10227
  %v10295 = vunpack.c.l.b16 %v10228
  %v10296 = vunpack.c.h.b16 %v10228
  %v10297 = vunpack.c.l.b16 %v10229
  %v10298 = vunpack.c.h.b16 %v10229
  %v10299 = vunpack.c.l.b16 %v10230
  %v10300 = vunpack.c.h.b16 %v10230
  %v10301 = vunpack.c.l.b16 %v10231
  %v10302 = vunpack.c.h.b16 %v10231
  %v10303 = vunpack.c.l.b16 %v10232
  %v10304 = vunpack.c.h.b16 %v10232
  %v10305 = vunpack.c.l.b16 %v10233
  %v10306 = vunpack.c.h.b16 %v10233
  %v10307 = vunpack.c.l.b16 %v10234
  %v10308 = vunpack.c.h.b16 %v10234
  %v10309 = vunpack.c.l.b16 %v10235
  %v10310 = vunpack.c.h.b16 %v10235
  %v10311 = vunpack.c.l.b16 %v10236
  %v10312 = vunpack.c.h.b16 %v10236
  %v10313 = vunpack.c.l.b16 %v10237
  %v10314 = vunpack.c.h.b16 %v10237
  %v10315 = vunpack.c.l.b16 %v10238
  %v10316 = vunpack.c.h.b16 %v10238
  %v10317 = vunpack.c.l.b16 %v10239
  %v10318 = vunpack.c.h.b16 %v10239
  %v10319 = vunpack.c.l.b16 %v10240
  %v10320 = vunpack.c.h.b16 %v10240
  %v10321 = vunpack.c.l.b16 %v10241
  %v10322 = vunpack.c.h.b16 %v10241
  %v10323 = vunpack.c.l.b16 %v10242
  %v10324 = vunpack.c.h.b16 %v10242
  %v10325 = vunpack.c.l.b16 %v10243
  %v10326 = vunpack.c.h.b16 %v10243
  %v10327 = vunpack.c.l.b16 %v10244
  %v10328 = vunpack.c.h.b16 %v10244
  %v10329 = vunpack.c.l.b16 %v10245
  %v10330 = vunpack.c.h.b16 %v10245
  %v10331 = vunpack.c.l.b16 %v10246
  %v10332 = vunpack.c.h.b16 %v10246
  %v10333 = vunpack.c.l.b16 %v10247
  %v10334 = vunpack.c.h.b16 %v10247
  %v10335 = vunpack.c.l.b16 %v10248
  %v10336 = vunpack.c.h.b16 %v10248
  %v10337 = vunpack.c.l.b16 %v10249
  %v10338 = vunpack.c.h.b16 %v10249
  %v10339 = vunpack.c.l.b16 %v10250
  %v10340 = vunpack.c.h.b16 %v10250
  %v10341 = vunpack.c.l.b16 %v10251
  %v10342 = vunpack.c.h.b16 %v10251
  %v10343 = vunpack.c.l.b16 %v10252
  %v10344 = vunpack.c.h.b16 %v10252
  %v10345 = vunpack.c.l.b16 %v10253
  %v10346 = vunpack.c.h.b16 %v10253
  %v10347 = vunpack.c.l.b16 %v10254
  %v10348 = vunpack.c.h.b16 %v10254
  %v10349 = vunpack.c.l.b16 %v10255
  %v10350 = vunpack.c.h.b16 %v10255
  %v10351 = vunpack.c.l.b16 %v10256
  %v10352 = vunpack.c.h.b16 %v10256
  %v10353 = vpack.c.b16 %v10293, %v10289
  %v10354 = vpack.c.b16 %v10294, %v10290
  %v10355 = vpack.c.b16 %v10295, %v10291
  %v10356 = vpack.c.b16 %v10296, %v10292
  %v10357 = vpack.c.b16 %v10301, %v10297
  %v10358 = vpack.c.b16 %v10302, %v10298
  %v10359 = vpack.c.b16 %v10303, %v10299
  %v10360 = vpack.c.b16 %v10304, %v10300
  %v10361 = vpack.c.b16 %v10309, %v10305
  %v10362 = vpack.c.b16 %v10310, %v10306
  %v10363 = vpack.c.b16 %v10311, %v10307
  %v10364 = vpack.c.b16 %v10312, %v10308
  %v10365 = vpack.c.b16 %v10317, %v10313
  %v10366 = vpack.c.b16 %v10318, %v10314
  %v10367 = vpack.c.b16 %v10319, %v10315
  %v10368 = vpack.c.b16 %v10320, %v10316
  %v10369 = vpack.c.b16 %v10325, %v10321
  %v10370 = vpack.c.b16 %v10326, %v10322
  %v10371 = vpack.c.b16 %v10327, %v10323
  %v10372 = vpack.c.b16 %v10328, %v10324
  %v10373 = vpack.c.b16 %v10333, %v10329
  %v10374 = vpack.c.b16 %v10334, %v10330
  %v10375 = vpack.c.b16 %v10335, %v10331
  %v10376 = vpack.c.b16 %v10336, %v10332
  %v10377 = vpack.c.b16 %v10341, %v10337
  %v10378 = vpack.c.b16 %v10342, %v10338
  %v10379 = vpack.c.b16 %v10343, %v10339
  %v10380 = vpack.c.b16 %v10344, %v10340
  %v10381 = vpack.c.b16 %v10349, %v10345
  %v10382 = vpack.c.b16 %v10350, %v10346
  %v10383 = vpack.c.b16 %v10351, %v10347
  %v10384 = vpack.c.b16 %v10352, %v10348
  %10417 = vmatprep.subr.bf16.mxu0 %v10382
  %10418 = vmatpush1.bf16.msra.mxu0 %v10381
  %10419 = vmatprep.subr.bf16.mxu0 %v10378
  %10420 = vmatpush1.bf16.msra.mxu0 %v10377
  %10421 = vmatprep.subr.bf16.mxu0 %v10374
  %10422 = vmatpush1.bf16.msra.mxu0 %v10373
  %10423 = vmatprep.subr.bf16.mxu0 %v10370
  %10424 = vmatpush1.bf16.msra.mxu0 %v10369
  %10425 = vmatprep.subr.bf16.mxu0 %v10366
  %10426 = vmatpush1.bf16.msra.mxu0 %v10365
  %10427 = vmatprep.subr.bf16.mxu0 %v10362
  %10428 = vmatpush1.bf16.msra.mxu0 %v10361
  %10429 = vmatprep.subr.bf16.mxu0 %v10358
  %10430 = vmatpush1.bf16.msra.mxu0 %v10357
  %10431 = vmatprep.subr.bf16.mxu0 %v10354
  %10432 = vmatpush1.bf16.msra.mxu0 %v10353
  %10433 = vmatprep.subr.bf16.mxu0 0
  %10434 = vmatpush2.bf16.msra.mxu0 0
  %10435 = vmatprep.subr.bf16.mxu0 0
  %10436 = vmatpush2.bf16.msra.mxu0 0
  %10437 = vmatprep.subr.bf16.mxu0 0
  %10438 = vmatpush2.bf16.msra.mxu0 0
  %10439 = vmatprep.subr.bf16.mxu0 0
  %10440 = vmatpush2.bf16.msra.mxu0 0
  %10441 = vmatprep.subr.bf16.mxu0 0
  %10442 = vmatpush2.bf16.msra.mxu0 0
  %10443 = vmatprep.subr.bf16.mxu0 0
  %10444 = vmatpush2.bf16.msra.mxu0 0
  %10445 = vmatprep.subr.bf16.mxu0 0
  %10446 = vmatpush2.bf16.msra.mxu0 0
  %10447 = vmatprep.subr.bf16.mxu0 0
  %10448 = vmatpush2.bf16.msra.mxu0 0
  %10449 = vmatprep.mubr.bf16.mxu0 0
  %10450 = vmatmul.mubr.bf16.gmra.mxu0 %v10224
  %v10451 = vpop.f32.mrf.mxu0
  %v10452 = vadd.f32 0.0, %v10451
  %v10453 = vpop.f32.mrf.mxu0
  %v10454 = vadd.f32 0.0, %v10453
  %v10455 = vpop.f32.mrf.mxu0
  %v10456 = vpop.f32.mrf.mxu0
  %10457 = vdwg.mxu0
  %10458 = vmatprep.subr.bf16.mxu0 %v10384
  %10459 = vmatpush1.bf16.msra.mxu0 %v10383
  %10460 = vmatprep.subr.bf16.mxu0 %v10380
  %10461 = vmatpush1.bf16.msra.mxu0 %v10379
  %10462 = vmatprep.subr.bf16.mxu0 %v10376
  %10463 = vmatpush1.bf16.msra.mxu0 %v10375
  %10464 = vmatprep.subr.bf16.mxu0 %v10372
  %10465 = vmatpush1.bf16.msra.mxu0 %v10371
  %10466 = vmatprep.subr.bf16.mxu0 %v10368
  %10467 = vmatpush1.bf16.msra.mxu0 %v10367
  %10468 = vmatprep.subr.bf16.mxu0 %v10364
  %10469 = vmatpush1.bf16.msra.mxu0 %v10363
  %10470 = vmatprep.subr.bf16.mxu0 %v10360
  %10471 = vmatpush1.bf16.msra.mxu0 %v10359
  %10472 = vmatprep.subr.bf16.mxu0 %v10356
  %10473 = vmatpush1.bf16.msra.mxu0 %v10355
  %10474 = vmatprep.subr.bf16.mxu0 0
  %10475 = vmatpush2.bf16.msra.mxu0 0
  %10476 = vmatprep.subr.bf16.mxu0 0
  %10477 = vmatpush2.bf16.msra.mxu0 0
  %10478 = vmatprep.subr.bf16.mxu0 0
  %10479 = vmatpush2.bf16.msra.mxu0 0
  %10480 = vmatprep.subr.bf16.mxu0 0
  %10481 = vmatpush2.bf16.msra.mxu0 0
  %10482 = vmatprep.subr.bf16.mxu0 0
  %10483 = vmatpush2.bf16.msra.mxu0 0
  %10484 = vmatprep.subr.bf16.mxu0 0
  %10485 = vmatpush2.bf16.msra.mxu0 0
  %10486 = vmatprep.subr.bf16.mxu0 0
  %10487 = vmatpush2.bf16.msra.mxu0 0
  %10488 = vmatprep.subr.bf16.mxu0 0
  %10489 = vmatpush2.bf16.msra.mxu0 0
  %10490 = vmatprep.mubr.bf16.mxu0 0
  %10491 = vmatmul.mubr.bf16.gmra.mxu0 %v10224
  %v10492 = vpop.f32.mrf.mxu0
  %v10493 = vadd.f32 0.0, %v10492
  %v10494 = vpop.f32.mrf.mxu0
  %v10495 = vadd.f32 0.0, %v10494
  %v10496 = vpop.f32.mrf.mxu0
  %v10497 = vpop.f32.mrf.mxu0
  %10498 = vdwg.mxu0
  %v10499 = vadd.f32 %v10220, %v10452
  %v10500 = vadd.f32 %v10221, %v10454
  %v10501 = vadd.f32 %v10222, %v10493
  %v10502 = vadd.f32 %v10223, %v10495
  %v10503 = vxor.u32 %v10499, 2147483648
  %v10504 = vxor.u32 %v10500, 2147483648
  %v10505 = vxor.u32 %v10501, 2147483648
  %v10506 = vmul.f32 %v10503, 1.442695
  %v10507 = vpow.pop %v10506
  %v10508 = vmul.f32 %v10504, 1.442695
  %v10509 = vpow.pop %v10508
  %v10510 = vmul.f32 %v10505, 1.442695
  %v10511 = vpow.pop %v10510
  %v10512 = vadd.f32 %v10507, 1.0
  %v10513 = vadd.f32 %v10509, 1.0
  %v10514 = vadd.f32 %v10511, 1.0
  %v10515 = vrcp.pop %v10512
  %v10516 = vmul.f32 1.0, %v10515
  %v10517 = vrcp.pop %v10513
  %v10518 = vmul.f32 1.0, %v10517
  %v10519 = vrcp.pop %v10514
  %v10520 = vmul.f32 1.0, %v10519
  %v10521 = vtanh.pop %v10502
  %v10522 = vmul.f32 %v10518, %v10215
  %v10523 = vmul.f32 %v10516, %v10521
  %v10524 = vadd.f32 %v10522, %v10523
  %v10525 = vtanh.pop %v10524
  %v10526 = vmul.f32 %v10520, %v10525
  %s10527 = scalar_lea.vmem %s13, 32
  %10528 = vst [vmem:[%s10527] sm:$0xff] %v10526
  %v10529 = vld [vmem:[%s4781] sm:$0xff]
  %v10530 = vld [vmem:[%s4781 + $0x8] sm:$0xff]
  %v10531 = vld [vmem:[%s4781 + $0x10] sm:$0xff]
  %v10532 = vld [vmem:[%s4781 + $0x18] sm:$0xff]
  %v10533 = vpack.c.bf16 %v10526, %v10526
  %v10534 = vld [vmem:[%s11] sm:$0xff]
  %v10535 = vld [vmem:[%s11 + $0x8] sm:$0xff]
  %v10536 = vld [vmem:[%s11 + $0x10] sm:$0xff]
  %v10537 = vld [vmem:[%s11 + $0x18] sm:$0xff]
  %v10538 = vld [vmem:[%s11 + $0x20] sm:$0xff]
  %v10539 = vld [vmem:[%s11 + $0x28] sm:$0xff]
  %v10540 = vld [vmem:[%s11 + $0x30] sm:$0xff]
  %v10541 = vld [vmem:[%s11 + $0x38] sm:$0xff]
  %v10542 = vld [vmem:[%s11 + $0x40] sm:$0xff]
  %v10543 = vld [vmem:[%s11 + $0x48] sm:$0xff]
  %v10544 = vld [vmem:[%s11 + $0x50] sm:$0xff]
  %v10545 = vld [vmem:[%s11 + $0x58] sm:$0xff]
  %v10546 = vld [vmem:[%s11 + $0x60] sm:$0xff]
  %v10547 = vld [vmem:[%s11 + $0x68] sm:$0xff]
  %v10548 = vld [vmem:[%s11 + $0x70] sm:$0xff]
  %v10549 = vld [vmem:[%s11 + $0x78] sm:$0xff]
  %v10550 = vld [vmem:[%s11 + $0x80] sm:$0xff]
  %v10551 = vld [vmem:[%s11 + $0x88] sm:$0xff]
  %v10552 = vld [vmem:[%s11 + $0x90] sm:$0xff]
  %v10553 = vld [vmem:[%s11 + $0x98] sm:$0xff]
  %v10554 = vld [vmem:[%s11 + $0xa0] sm:$0xff]
  %v10555 = vld [vmem:[%s11 + $0xa8] sm:$0xff]
  %v10556 = vld [vmem:[%s11 + $0xb0] sm:$0xff]
  %v10557 = vld [vmem:[%s11 + $0xb8] sm:$0xff]
  %v10558 = vld [vmem:[%s11 + $0xc0] sm:$0xff]
  %v10559 = vld [vmem:[%s11 + $0xc8] sm:$0xff]
  %v10560 = vld [vmem:[%s11 + $0xd0] sm:$0xff]
  %v10561 = vld [vmem:[%s11 + $0xd8] sm:$0xff]
  %v10562 = vld [vmem:[%s11 + $0xe0] sm:$0xff]
  %v10563 = vld [vmem:[%s11 + $0xe8] sm:$0xff]
  %v10564 = vld [vmem:[%s11 + $0xf0] sm:$0xff]
  %v10565 = vld [vmem:[%s11 + $0xf8] sm:$0xff]
  %v10598 = vunpack.c.l.b16 %v10534
  %v10599 = vunpack.c.h.b16 %v10534
  %v10600 = vunpack.c.l.b16 %v10535
  %v10601 = vunpack.c.h.b16 %v10535
  %v10602 = vunpack.c.l.b16 %v10536
  %v10603 = vunpack.c.h.b16 %v10536
  %v10604 = vunpack.c.l.b16 %v10537
  %v10605 = vunpack.c.h.b16 %v10537
  %v10606 = vunpack.c.l.b16 %v10538
  %v10607 = vunpack.c.h.b16 %v10538
  %v10608 = vunpack.c.l.b16 %v10539
  %v10609 = vunpack.c.h.b16 %v10539
  %v10610 = vunpack.c.l.b16 %v10540
  %v10611 = vunpack.c.h.b16 %v10540
  %v10612 = vunpack.c.l.b16 %v10541
  %v10613 = vunpack.c.h.b16 %v10541
  %v10614 = vunpack.c.l.b16 %v10542
  %v10615 = vunpack.c.h.b16 %v10542
  %v10616 = vunpack.c.l.b16 %v10543
  %v10617 = vunpack.c.h.b16 %v10543
  %v10618 = vunpack.c.l.b16 %v10544
  %v10619 = vunpack.c.h.b16 %v10544
  %v10620 = vunpack.c.l.b16 %v10545
  %v10621 = vunpack.c.h.b16 %v10545
  %v10622 = vunpack.c.l.b16 %v10546
  %v10623 = vunpack.c.h.b16 %v10546
  %v10624 = vunpack.c.l.b16 %v10547
  %v10625 = vunpack.c.h.b16 %v10547
  %v10626 = vunpack.c.l.b16 %v10548
  %v10627 = vunpack.c.h.b16 %v10548
  %v10628 = vunpack.c.l.b16 %v10549
  %v10629 = vunpack.c.h.b16 %v10549
  %v10630 = vunpack.c.l.b16 %v10550
  %v10631 = vunpack.c.h.b16 %v10550
  %v10632 = vunpack.c.l.b16 %v10551
  %v10633 = vunpack.c.h.b16 %v10551
  %v10634 = vunpack.c.l.b16 %v10552
  %v10635 = vunpack.c.h.b16 %v10552
  %v10636 = vunpack.c.l.b16 %v10553
  %v10637 = vunpack.c.h.b16 %v10553
  %v10638 = vunpack.c.l.b16 %v10554
  %v10639 = vunpack.c.h.b16 %v10554
  %v10640 = vunpack.c.l.b16 %v10555
  %v10641 = vunpack.c.h.b16 %v10555
  %v10642 = vunpack.c.l.b16 %v10556
  %v10643 = vunpack.c.h.b16 %v10556
  %v10644 = vunpack.c.l.b16 %v10557
  %v10645 = vunpack.c.h.b16 %v10557
  %v10646 = vunpack.c.l.b16 %v10558
  %v10647 = vunpack.c.h.b16 %v10558
  %v10648 = vunpack.c.l.b16 %v10559
  %v10649 = vunpack.c.h.b16 %v10559
  %v10650 = vunpack.c.l.b16 %v10560
  %v10651 = vunpack.c.h.b16 %v10560
  %v10652 = vunpack.c.l.b16 %v10561
  %v10653 = vunpack.c.h.b16 %v10561
  %v10654 = vunpack.c.l.b16 %v10562
  %v10655 = vunpack.c.h.b16 %v10562
  %v10656 = vunpack.c.l.b16 %v10563
  %v10657 = vunpack.c.h.b16 %v10563
  %v10658 = vunpack.c.l.b16 %v10564
  %v10659 = vunpack.c.h.b16 %v10564
  %v10660 = vunpack.c.l.b16 %v10565
  %v10661 = vunpack.c.h.b16 %v10565
  %v10662 = vpack.c.b16 %v10602, %v10598
  %v10663 = vpack.c.b16 %v10603, %v10599
  %v10664 = vpack.c.b16 %v10604, %v10600
  %v10665 = vpack.c.b16 %v10605, %v10601
  %v10666 = vpack.c.b16 %v10610, %v10606
  %v10667 = vpack.c.b16 %v10611, %v10607
  %v10668 = vpack.c.b16 %v10612, %v10608
  %v10669 = vpack.c.b16 %v10613, %v10609
  %v10670 = vpack.c.b16 %v10618, %v10614
  %v10671 = vpack.c.b16 %v10619, %v10615
  %v10672 = vpack.c.b16 %v10620, %v10616
  %v10673 = vpack.c.b16 %v10621, %v10617
  %v10674 = vpack.c.b16 %v10626, %v10622
  %v10675 = vpack.c.b16 %v10627, %v10623
  %v10676 = vpack.c.b16 %v10628, %v10624
  %v10677 = vpack.c.b16 %v10629, %v10625
  %v10678 = vpack.c.b16 %v10634, %v10630
  %v10679 = vpack.c.b16 %v10635, %v10631
  %v10680 = vpack.c.b16 %v10636, %v10632
  %v10681 = vpack.c.b16 %v10637, %v10633
  %v10682 = vpack.c.b16 %v10642, %v10638
  %v10683 = vpack.c.b16 %v10643, %v10639
  %v10684 = vpack.c.b16 %v10644, %v10640
  %v10685 = vpack.c.b16 %v10645, %v10641
  %v10686 = vpack.c.b16 %v10650, %v10646
  %v10687 = vpack.c.b16 %v10651, %v10647
  %v10688 = vpack.c.b16 %v10652, %v10648
  %v10689 = vpack.c.b16 %v10653, %v10649
  %v10690 = vpack.c.b16 %v10658, %v10654
  %v10691 = vpack.c.b16 %v10659, %v10655
  %v10692 = vpack.c.b16 %v10660, %v10656
  %v10693 = vpack.c.b16 %v10661, %v10657
  %10726 = vmatprep.subr.bf16.mxu0 %v10691
  %10727 = vmatpush1.bf16.msra.mxu0 %v10690
  %10728 = vmatprep.subr.bf16.mxu0 %v10687
  %10729 = vmatpush1.bf16.msra.mxu0 %v10686
  %10730 = vmatprep.subr.bf16.mxu0 %v10683
  %10731 = vmatpush1.bf16.msra.mxu0 %v10682
  %10732 = vmatprep.subr.bf16.mxu0 %v10679
  %10733 = vmatpush1.bf16.msra.mxu0 %v10678
  %10734 = vmatprep.subr.bf16.mxu0 %v10675
  %10735 = vmatpush1.bf16.msra.mxu0 %v10674
  %10736 = vmatprep.subr.bf16.mxu0 %v10671
  %10737 = vmatpush1.bf16.msra.mxu0 %v10670
  %10738 = vmatprep.subr.bf16.mxu0 %v10667
  %10739 = vmatpush1.bf16.msra.mxu0 %v10666
  %10740 = vmatprep.subr.bf16.mxu0 %v10663
  %10741 = vmatpush1.bf16.msra.mxu0 %v10662
  %10742 = vmatprep.subr.bf16.mxu0 0
  %10743 = vmatpush2.bf16.msra.mxu0 0
  %10744 = vmatprep.subr.bf16.mxu0 0
  %10745 = vmatpush2.bf16.msra.mxu0 0
  %10746 = vmatprep.subr.bf16.mxu0 0
  %10747 = vmatpush2.bf16.msra.mxu0 0
  %10748 = vmatprep.subr.bf16.mxu0 0
  %10749 = vmatpush2.bf16.msra.mxu0 0
  %10750 = vmatprep.subr.bf16.mxu0 0
  %10751 = vmatpush2.bf16.msra.mxu0 0
  %10752 = vmatprep.subr.bf16.mxu0 0
  %10753 = vmatpush2.bf16.msra.mxu0 0
  %10754 = vmatprep.subr.bf16.mxu0 0
  %10755 = vmatpush2.bf16.msra.mxu0 0
  %10756 = vmatprep.subr.bf16.mxu0 0
  %10757 = vmatpush2.bf16.msra.mxu0 0
  %10758 = vmatprep.mubr.bf16.mxu0 0
  %10759 = vmatmul.mubr.bf16.gmra.mxu0 %v10533
  %v10760 = vpop.f32.mrf.mxu0
  %v10761 = vadd.f32 0.0, %v10760
  %v10762 = vpop.f32.mrf.mxu0
  %v10763 = vadd.f32 0.0, %v10762
  %v10764 = vpop.f32.mrf.mxu0
  %v10765 = vpop.f32.mrf.mxu0
  %10766 = vdwg.mxu0
  %10767 = vmatprep.subr.bf16.mxu0 %v10693
  %10768 = vmatpush1.bf16.msra.mxu0 %v10692
  %10769 = vmatprep.subr.bf16.mxu0 %v10689
  %10770 = vmatpush1.bf16.msra.mxu0 %v10688
  %10771 = vmatprep.subr.bf16.mxu0 %v10685
  %10772 = vmatpush1.bf16.msra.mxu0 %v10684
  %10773 = vmatprep.subr.bf16.mxu0 %v10681
  %10774 = vmatpush1.bf16.msra.mxu0 %v10680
  %10775 = vmatprep.subr.bf16.mxu0 %v10677
  %10776 = vmatpush1.bf16.msra.mxu0 %v10676
  %10777 = vmatprep.subr.bf16.mxu0 %v10673
  %10778 = vmatpush1.bf16.msra.mxu0 %v10672
  %10779 = vmatprep.subr.bf16.mxu0 %v10669
  %10780 = vmatpush1.bf16.msra.mxu0 %v10668
  %10781 = vmatprep.subr.bf16.mxu0 %v10665
  %10782 = vmatpush1.bf16.msra.mxu0 %v10664
  %10783 = vmatprep.subr.bf16.mxu0 0
  %10784 = vmatpush2.bf16.msra.mxu0 0
  %10785 = vmatprep.subr.bf16.mxu0 0
  %10786 = vmatpush2.bf16.msra.mxu0 0
  %10787 = vmatprep.subr.bf16.mxu0 0
  %10788 = vmatpush2.bf16.msra.mxu0 0
  %10789 = vmatprep.subr.bf16.mxu0 0
  %10790 = vmatpush2.bf16.msra.mxu0 0
  %10791 = vmatprep.subr.bf16.mxu0 0
  %10792 = vmatpush2.bf16.msra.mxu0 0
  %10793 = vmatprep.subr.bf16.mxu0 0
  %10794 = vmatpush2.bf16.msra.mxu0 0
  %10795 = vmatprep.subr.bf16.mxu0 0
  %10796 = vmatpush2.bf16.msra.mxu0 0
  %10797 = vmatprep.subr.bf16.mxu0 0
  %10798 = vmatpush2.bf16.msra.mxu0 0
  %10799 = vmatprep.mubr.bf16.mxu0 0
  %10800 = vmatmul.mubr.bf16.gmra.mxu0 %v10533
  %v10801 = vpop.f32.mrf.mxu0
  %v10802 = vadd.f32 0.0, %v10801
  %v10803 = vpop.f32.mrf.mxu0
  %v10804 = vadd.f32 0.0, %v10803
  %v10805 = vpop.f32.mrf.mxu0
  %v10806 = vpop.f32.mrf.mxu0
  %10807 = vdwg.mxu0
  %v10808 = vadd.f32 %v10529, %v10761
  %v10809 = vadd.f32 %v10530, %v10763
  %v10810 = vadd.f32 %v10531, %v10802
  %v10811 = vadd.f32 %v10532, %v10804
  %v10812 = vxor.u32 %v10808, 2147483648
  %v10813 = vxor.u32 %v10809, 2147483648
  %v10814 = vxor.u32 %v10810, 2147483648
  %v10815 = vmul.f32 %v10812, 1.442695
  %v10816 = vpow.pop %v10815
  %v10817 = vmul.f32 %v10813, 1.442695
  %v10818 = vpow.pop %v10817
  %v10819 = vmul.f32 %v10814, 1.442695
  %v10820 = vpow.pop %v10819
  %v10821 = vadd.f32 %v10816, 1.0
  %v10822 = vadd.f32 %v10818, 1.0
  %v10823 = vadd.f32 %v10820, 1.0
  %v10824 = vrcp.pop %v10821
  %v10825 = vmul.f32 1.0, %v10824
  %v10826 = vrcp.pop %v10822
  %v10827 = vmul.f32 1.0, %v10826
  %v10828 = vrcp.pop %v10823
  %v10829 = vmul.f32 1.0, %v10828
  %v10830 = vtanh.pop %v10811
  %v10831 = vmul.f32 %v10827, %v10524
  %v10832 = vmul.f32 %v10825, %v10830
  %v10833 = vadd.f32 %v10831, %v10832
  %v10834 = vtanh.pop %v10833
  %v10835 = vmul.f32 %v10829, %v10834
  %s10836 = scalar_lea.vmem %s13, 40
  %10837 = vst [vmem:[%s10836] sm:$0xff] %v10835
  %v10838 = vld [vmem:[%s5093] sm:$0xff]
  %v10839 = vld [vmem:[%s5093 + $0x8] sm:$0xff]
  %v10840 = vld [vmem:[%s5093 + $0x10] sm:$0xff]
  %v10841 = vld [vmem:[%s5093 + $0x18] sm:$0xff]
  %v10842 = vpack.c.bf16 %v10835, %v10835
  %v10843 = vld [vmem:[%s11] sm:$0xff]
  %v10844 = vld [vmem:[%s11 + $0x8] sm:$0xff]
  %v10845 = vld [vmem:[%s11 + $0x10] sm:$0xff]
  %v10846 = vld [vmem:[%s11 + $0x18] sm:$0xff]
  %v10847 = vld [vmem:[%s11 + $0x20] sm:$0xff]
  %v10848 = vld [vmem:[%s11 + $0x28] sm:$0xff]
  %v10849 = vld [vmem:[%s11 + $0x30] sm:$0xff]
  %v10850 = vld [vmem:[%s11 + $0x38] sm:$0xff]
  %v10851 = vld [vmem:[%s11 + $0x40] sm:$0xff]
  %v10852 = vld [vmem:[%s11 + $0x48] sm:$0xff]
  %v10853 = vld [vmem:[%s11 + $0x50] sm:$0xff]
  %v10854 = vld [vmem:[%s11 + $0x58] sm:$0xff]
  %v10855 = vld [vmem:[%s11 + $0x60] sm:$0xff]
  %v10856 = vld [vmem:[%s11 + $0x68] sm:$0xff]
  %v10857 = vld [vmem:[%s11 + $0x70] sm:$0xff]
  %v10858 = vld [vmem:[%s11 + $0x78] sm:$0xff]
  %v10859 = vld [vmem:[%s11 + $0x80] sm:$0xff]
  %v10860 = vld [vmem:[%s11 + $0x88] sm:$0xff]
  %v10861 = vld [vmem:[%s11 + $0x90] sm:$0xff]
  %v10862 = vld [vmem:[%s11 + $0x98] sm:$0xff]
  %v10863 = vld [vmem:[%s11 + $0xa0] sm:$0xff]
  %v10864 = vld [vmem:[%s11 + $0xa8] sm:$0xff]
  %v10865 = vld [vmem:[%s11 + $0xb0] sm:$0xff]
  %v10866 = vld [vmem:[%s11 + $0xb8] sm:$0xff]
  %v10867 = vld [vmem:[%s11 + $0xc0] sm:$0xff]
  %v10868 = vld [vmem:[%s11 + $0xc8] sm:$0xff]
  %v10869 = vld [vmem:[%s11 + $0xd0] sm:$0xff]
  %v10870 = vld [vmem:[%s11 + $0xd8] sm:$0xff]
  %v10871 = vld [vmem:[%s11 + $0xe0] sm:$0xff]
  %v10872 = vld [vmem:[%s11 + $0xe8] sm:$0xff]
  %v10873 = vld [vmem:[%s11 + $0xf0] sm:$0xff]
  %v10874 = vld [vmem:[%s11 + $0xf8] sm:$0xff]
  %v10907 = vunpack.c.l.b16 %v10843
  %v10908 = vunpack.c.h.b16 %v10843
  %v10909 = vunpack.c.l.b16 %v10844
  %v10910 = vunpack.c.h.b16 %v10844
  %v10911 = vunpack.c.l.b16 %v10845
  %v10912 = vunpack.c.h.b16 %v10845
  %v10913 = vunpack.c.l.b16 %v10846
  %v10914 = vunpack.c.h.b16 %v10846
  %v10915 = vunpack.c.l.b16 %v10847
  %v10916 = vunpack.c.h.b16 %v10847
  %v10917 = vunpack.c.l.b16 %v10848
  %v10918 = vunpack.c.h.b16 %v10848
  %v10919 = vunpack.c.l.b16 %v10849
  %v10920 = vunpack.c.h.b16 %v10849
  %v10921 = vunpack.c.l.b16 %v10850
  %v10922 = vunpack.c.h.b16 %v10850
  %v10923 = vunpack.c.l.b16 %v10851
  %v10924 = vunpack.c.h.b16 %v10851
  %v10925 = vunpack.c.l.b16 %v10852
  %v10926 = vunpack.c.h.b16 %v10852
  %v10927 = vunpack.c.l.b16 %v10853
  %v10928 = vunpack.c.h.b16 %v10853
  %v10929 = vunpack.c.l.b16 %v10854
  %v10930 = vunpack.c.h.b16 %v10854
  %v10931 = vunpack.c.l.b16 %v10855
  %v10932 = vunpack.c.h.b16 %v10855
  %v10933 = vunpack.c.l.b16 %v10856
  %v10934 = vunpack.c.h.b16 %v10856
  %v10935 = vunpack.c.l.b16 %v10857
  %v10936 = vunpack.c.h.b16 %v10857
  %v10937 = vunpack.c.l.b16 %v10858
  %v10938 = vunpack.c.h.b16 %v10858
  %v10939 = vunpack.c.l.b16 %v10859
  %v10940 = vunpack.c.h.b16 %v10859
  %v10941 = vunpack.c.l.b16 %v10860
  %v10942 = vunpack.c.h.b16 %v10860
  %v10943 = vunpack.c.l.b16 %v10861
  %v10944 = vunpack.c.h.b16 %v10861
  %v10945 = vunpack.c.l.b16 %v10862
  %v10946 = vunpack.c.h.b16 %v10862
  %v10947 = vunpack.c.l.b16 %v10863
  %v10948 = vunpack.c.h.b16 %v10863
  %v10949 = vunpack.c.l.b16 %v10864
  %v10950 = vunpack.c.h.b16 %v10864
  %v10951 = vunpack.c.l.b16 %v10865
  %v10952 = vunpack.c.h.b16 %v10865
  %v10953 = vunpack.c.l.b16 %v10866
  %v10954 = vunpack.c.h.b16 %v10866
  %v10955 = vunpack.c.l.b16 %v10867
  %v10956 = vunpack.c.h.b16 %v10867
  %v10957 = vunpack.c.l.b16 %v10868
  %v10958 = vunpack.c.h.b16 %v10868
  %v10959 = vunpack.c.l.b16 %v10869
  %v10960 = vunpack.c.h.b16 %v10869
  %v10961 = vunpack.c.l.b16 %v10870
  %v10962 = vunpack.c.h.b16 %v10870
  %v10963 = vunpack.c.l.b16 %v10871
  %v10964 = vunpack.c.h.b16 %v10871
  %v10965 = vunpack.c.l.b16 %v10872
  %v10966 = vunpack.c.h.b16 %v10872
  %v10967 = vunpack.c.l.b16 %v10873
  %v10968 = vunpack.c.h.b16 %v10873
  %v10969 = vunpack.c.l.b16 %v10874
  %v10970 = vunpack.c.h.b16 %v10874
  %v10971 = vpack.c.b16 %v10911, %v10907
  %v10972 = vpack.c.b16 %v10912, %v10908
  %v10973 = vpack.c.b16 %v10913, %v10909
  %v10974 = vpack.c.b16 %v10914, %v10910
  %v10975 = vpack.c.b16 %v10919, %v10915
  %v10976 = vpack.c.b16 %v10920, %v10916
  %v10977 = vpack.c.b16 %v10921, %v10917
  %v10978 = vpack.c.b16 %v10922, %v10918
  %v10979 = vpack.c.b16 %v10927, %v10923
  %v10980 = vpack.c.b16 %v10928, %v10924
  %v10981 = vpack.c.b16 %v10929, %v10925
  %v10982 = vpack.c.b16 %v10930, %v10926
  %v10983 = vpack.c.b16 %v10935, %v10931
  %v10984 = vpack.c.b16 %v10936, %v10932
  %v10985 = vpack.c.b16 %v10937, %v10933
  %v10986 = vpack.c.b16 %v10938, %v10934
  %v10987 = vpack.c.b16 %v10943, %v10939
  %v10988 = vpack.c.b16 %v10944, %v10940
  %v10989 = vpack.c.b16 %v10945, %v10941
  %v10990 = vpack.c.b16 %v10946, %v10942
  %v10991 = vpack.c.b16 %v10951, %v10947
  %v10992 = vpack.c.b16 %v10952, %v10948
  %v10993 = vpack.c.b16 %v10953, %v10949
  %v10994 = vpack.c.b16 %v10954, %v10950
  %v10995 = vpack.c.b16 %v10959, %v10955
  %v10996 = vpack.c.b16 %v10960, %v10956
  %v10997 = vpack.c.b16 %v10961, %v10957
  %v10998 = vpack.c.b16 %v10962, %v10958
  %v10999 = vpack.c.b16 %v10967, %v10963
  %v11000 = vpack.c.b16 %v10968, %v10964
  %v11001 = vpack.c.b16 %v10969, %v10965
  %v11002 = vpack.c.b16 %v10970, %v10966
  %11035 = vmatprep.subr.bf16.mxu0 %v11000
  %11036 = vmatpush1.bf16.msra.mxu0 %v10999
  %11037 = vmatprep.subr.bf16.mxu0 %v10996
  %11038 = vmatpush1.bf16.msra.mxu0 %v10995
  %11039 = vmatprep.subr.bf16.mxu0 %v10992
  %11040 = vmatpush1.bf16.msra.mxu0 %v10991
  %11041 = vmatprep.subr.bf16.mxu0 %v10988
  %11042 = vmatpush1.bf16.msra.mxu0 %v10987
  %11043 = vmatprep.subr.bf16.mxu0 %v10984
  %11044 = vmatpush1.bf16.msra.mxu0 %v10983
  %11045 = vmatprep.subr.bf16.mxu0 %v10980
  %11046 = vmatpush1.bf16.msra.mxu0 %v10979
  %11047 = vmatprep.subr.bf16.mxu0 %v10976
  %11048 = vmatpush1.bf16.msra.mxu0 %v10975
  %11049 = vmatprep.subr.bf16.mxu0 %v10972
  %11050 = vmatpush1.bf16.msra.mxu0 %v10971
  %11051 = vmatprep.subr.bf16.mxu0 0
  %11052 = vmatpush2.bf16.msra.mxu0 0
  %11053 = vmatprep.subr.bf16.mxu0 0
  %11054 = vmatpush2.bf16.msra.mxu0 0
  %11055 = vmatprep.subr.bf16.mxu0 0
  %11056 = vmatpush2.bf16.msra.mxu0 0
  %11057 = vmatprep.subr.bf16.mxu0 0
  %11058 = vmatpush2.bf16.msra.mxu0 0
  %11059 = vmatprep.subr.bf16.mxu0 0
  %11060 = vmatpush2.bf16.msra.mxu0 0
  %11061 = vmatprep.subr.bf16.mxu0 0
  %11062 = vmatpush2.bf16.msra.mxu0 0
  %11063 = vmatprep.subr.bf16.mxu0 0
  %11064 = vmatpush2.bf16.msra.mxu0 0
  %11065 = vmatprep.subr.bf16.mxu0 0
  %11066 = vmatpush2.bf16.msra.mxu0 0
  %11067 = vmatprep.mubr.bf16.mxu0 0
  %11068 = vmatmul.mubr.bf16.gmra.mxu0 %v10842
  %v11069 = vpop.f32.mrf.mxu0
  %v11070 = vadd.f32 0.0, %v11069
  %v11071 = vpop.f32.mrf.mxu0
  %v11072 = vadd.f32 0.0, %v11071
  %v11073 = vpop.f32.mrf.mxu0
  %v11074 = vpop.f32.mrf.mxu0
  %11075 = vdwg.mxu0
  %11076 = vmatprep.subr.bf16.mxu0 %v11002
  %11077 = vmatpush1.bf16.msra.mxu0 %v11001
  %11078 = vmatprep.subr.bf16.mxu0 %v10998
  %11079 = vmatpush1.bf16.msra.mxu0 %v10997
  %11080 = vmatprep.subr.bf16.mxu0 %v10994
  %11081 = vmatpush1.bf16.msra.mxu0 %v10993
  %11082 = vmatprep.subr.bf16.mxu0 %v10990
  %11083 = vmatpush1.bf16.msra.mxu0 %v10989
  %11084 = vmatprep.subr.bf16.mxu0 %v10986
  %11085 = vmatpush1.bf16.msra.mxu0 %v10985
  %11086 = vmatprep.subr.bf16.mxu0 %v10982
  %11087 = vmatpush1.bf16.msra.mxu0 %v10981
  %11088 = vmatprep.subr.bf16.mxu0 %v10978
  %11089 = vmatpush1.bf16.msra.mxu0 %v10977
  %11090 = vmatprep.subr.bf16.mxu0 %v10974
  %11091 = vmatpush1.bf16.msra.mxu0 %v10973
  %11092 = vmatprep.subr.bf16.mxu0 0
  %11093 = vmatpush2.bf16.msra.mxu0 0
  %11094 = vmatprep.subr.bf16.mxu0 0
  %11095 = vmatpush2.bf16.msra.mxu0 0
  %11096 = vmatprep.subr.bf16.mxu0 0
  %11097 = vmatpush2.bf16.msra.mxu0 0
  %11098 = vmatprep.subr.bf16.mxu0 0
  %11099 = vmatpush2.bf16.msra.mxu0 0
  %11100 = vmatprep.subr.bf16.mxu0 0
  %11101 = vmatpush2.bf16.msra.mxu0 0
  %11102 = vmatprep.subr.bf16.mxu0 0
  %11103 = vmatpush2.bf16.msra.mxu0 0
  %11104 = vmatprep.subr.bf16.mxu0 0
  %11105 = vmatpush2.bf16.msra.mxu0 0
  %11106 = vmatprep.subr.bf16.mxu0 0
  %11107 = vmatpush2.bf16.msra.mxu0 0
  %11108 = vmatprep.mubr.bf16.mxu0 0
  %11109 = vmatmul.mubr.bf16.gmra.mxu0 %v10842
  %v11110 = vpop.f32.mrf.mxu0
  %v11111 = vadd.f32 0.0, %v11110
  %v11112 = vpop.f32.mrf.mxu0
  %v11113 = vadd.f32 0.0, %v11112
  %v11114 = vpop.f32.mrf.mxu0
  %v11115 = vpop.f32.mrf.mxu0
  %11116 = vdwg.mxu0
  %v11117 = vadd.f32 %v10838, %v11070
  %v11118 = vadd.f32 %v10839, %v11072
  %v11119 = vadd.f32 %v10840, %v11111
  %v11120 = vadd.f32 %v10841, %v11113
  %v11121 = vxor.u32 %v11117, 2147483648
  %v11122 = vxor.u32 %v11118, 2147483648
  %v11123 = vxor.u32 %v11119, 2147483648
  %v11124 = vmul.f32 %v11121, 1.442695
  %v11125 = vpow.pop %v11124
  %v11126 = vmul.f32 %v11122, 1.442695
  %v11127 = vpow.pop %v11126
  %v11128 = vmul.f32 %v11123, 1.442695
  %v11129 = vpow.pop %v11128
  %v11130 = vadd.f32 %v11125, 1.0
  %v11131 = vadd.f32 %v11127, 1.0
  %v11132 = vadd.f32 %v11129, 1.0
  %v11133 = vrcp.pop %v11130
  %v11134 = vmul.f32 1.0, %v11133
  %v11135 = vrcp.pop %v11131
  %v11136 = vmul.f32 1.0, %v11135
  %v11137 = vrcp.pop %v11132
  %v11138 = vmul.f32 1.0, %v11137
  %v11139 = vtanh.pop %v11120
  %v11140 = vmul.f32 %v11136, %v10833
  %v11141 = vmul.f32 %v11134, %v11139
  %v11142 = vadd.f32 %v11140, %v11141
  %v11143 = vtanh.pop %v11142
  %v11144 = vmul.f32 %v11138, %v11143
  %s11145 = scalar_lea.vmem %s13, 48
  %11146 = vst [vmem:[%s11145] sm:$0xff] %v11144
  %v11147 = vld [vmem:[%s5405] sm:$0xff]
  %v11148 = vld [vmem:[%s5405 + $0x8] sm:$0xff]
  %v11149 = vld [vmem:[%s5405 + $0x10] sm:$0xff]
  %v11150 = vld [vmem:[%s5405 + $0x18] sm:$0xff]
  %v11151 = vpack.c.bf16 %v11144, %v11144
  %v11152 = vld [vmem:[%s11] sm:$0xff]
  %v11153 = vld [vmem:[%s11 + $0x8] sm:$0xff]
  %v11154 = vld [vmem:[%s11 + $0x10] sm:$0xff]
  %v11155 = vld [vmem:[%s11 + $0x18] sm:$0xff]
  %v11156 = vld [vmem:[%s11 + $0x20] sm:$0xff]
  %v11157 = vld [vmem:[%s11 + $0x28] sm:$0xff]
  %v11158 = vld [vmem:[%s11 + $0x30] sm:$0xff]
  %v11159 = vld [vmem:[%s11 + $0x38] sm:$0xff]
  %v11160 = vld [vmem:[%s11 + $0x40] sm:$0xff]
  %v11161 = vld [vmem:[%s11 + $0x48] sm:$0xff]
  %v11162 = vld [vmem:[%s11 + $0x50] sm:$0xff]
  %v11163 = vld [vmem:[%s11 + $0x58] sm:$0xff]
  %v11164 = vld [vmem:[%s11 + $0x60] sm:$0xff]
  %v11165 = vld [vmem:[%s11 + $0x68] sm:$0xff]
  %v11166 = vld [vmem:[%s11 + $0x70] sm:$0xff]
  %v11167 = vld [vmem:[%s11 + $0x78] sm:$0xff]
  %v11168 = vld [vmem:[%s11 + $0x80] sm:$0xff]
  %v11169 = vld [vmem:[%s11 + $0x88] sm:$0xff]
  %v11170 = vld [vmem:[%s11 + $0x90] sm:$0xff]
  %v11171 = vld [vmem:[%s11 + $0x98] sm:$0xff]
  %v11172 = vld [vmem:[%s11 + $0xa0] sm:$0xff]
  %v11173 = vld [vmem:[%s11 + $0xa8] sm:$0xff]
  %v11174 = vld [vmem:[%s11 + $0xb0] sm:$0xff]
  %v11175 = vld [vmem:[%s11 + $0xb8] sm:$0xff]
  %v11176 = vld [vmem:[%s11 + $0xc0] sm:$0xff]
  %v11177 = vld [vmem:[%s11 + $0xc8] sm:$0xff]
  %v11178 = vld [vmem:[%s11 + $0xd0] sm:$0xff]
  %v11179 = vld [vmem:[%s11 + $0xd8] sm:$0xff]
  %v11180 = vld [vmem:[%s11 + $0xe0] sm:$0xff]
  %v11181 = vld [vmem:[%s11 + $0xe8] sm:$0xff]
  %v11182 = vld [vmem:[%s11 + $0xf0] sm:$0xff]
  %v11183 = vld [vmem:[%s11 + $0xf8] sm:$0xff]
  %v11216 = vunpack.c.l.b16 %v11152
  %v11217 = vunpack.c.h.b16 %v11152
  %v11218 = vunpack.c.l.b16 %v11153
  %v11219 = vunpack.c.h.b16 %v11153
  %v11220 = vunpack.c.l.b16 %v11154
  %v11221 = vunpack.c.h.b16 %v11154
  %v11222 = vunpack.c.l.b16 %v11155
  %v11223 = vunpack.c.h.b16 %v11155
  %v11224 = vunpack.c.l.b16 %v11156
  %v11225 = vunpack.c.h.b16 %v11156
  %v11226 = vunpack.c.l.b16 %v11157
  %v11227 = vunpack.c.h.b16 %v11157
  %v11228 = vunpack.c.l.b16 %v11158
  %v11229 = vunpack.c.h.b16 %v11158
  %v11230 = vunpack.c.l.b16 %v11159
  %v11231 = vunpack.c.h.b16 %v11159
  %v11232 = vunpack.c.l.b16 %v11160
  %v11233 = vunpack.c.h.b16 %v11160
  %v11234 = vunpack.c.l.b16 %v11161
  %v11235 = vunpack.c.h.b16 %v11161
  %v11236 = vunpack.c.l.b16 %v11162
  %v11237 = vunpack.c.h.b16 %v11162
  %v11238 = vunpack.c.l.b16 %v11163
  %v11239 = vunpack.c.h.b16 %v11163
  %v11240 = vunpack.c.l.b16 %v11164
  %v11241 = vunpack.c.h.b16 %v11164
  %v11242 = vunpack.c.l.b16 %v11165
  %v11243 = vunpack.c.h.b16 %v11165
  %v11244 = vunpack.c.l.b16 %v11166
  %v11245 = vunpack.c.h.b16 %v11166
  %v11246 = vunpack.c.l.b16 %v11167
  %v11247 = vunpack.c.h.b16 %v11167
  %v11248 = vunpack.c.l.b16 %v11168
  %v11249 = vunpack.c.h.b16 %v11168
  %v11250 = vunpack.c.l.b16 %v11169
  %v11251 = vunpack.c.h.b16 %v11169
  %v11252 = vunpack.c.l.b16 %v11170
  %v11253 = vunpack.c.h.b16 %v11170
  %v11254 = vunpack.c.l.b16 %v11171
  %v11255 = vunpack.c.h.b16 %v11171
  %v11256 = vunpack.c.l.b16 %v11172
  %v11257 = vunpack.c.h.b16 %v11172
  %v11258 = vunpack.c.l.b16 %v11173
  %v11259 = vunpack.c.h.b16 %v11173
  %v11260 = vunpack.c.l.b16 %v11174
  %v11261 = vunpack.c.h.b16 %v11174
  %v11262 = vunpack.c.l.b16 %v11175
  %v11263 = vunpack.c.h.b16 %v11175
  %v11264 = vunpack.c.l.b16 %v11176
  %v11265 = vunpack.c.h.b16 %v11176
  %v11266 = vunpack.c.l.b16 %v11177
  %v11267 = vunpack.c.h.b16 %v11177
  %v11268 = vunpack.c.l.b16 %v11178
  %v11269 = vunpack.c.h.b16 %v11178
  %v11270 = vunpack.c.l.b16 %v11179
  %v11271 = vunpack.c.h.b16 %v11179
  %v11272 = vunpack.c.l.b16 %v11180
  %v11273 = vunpack.c.h.b16 %v11180
  %v11274 = vunpack.c.l.b16 %v11181
  %v11275 = vunpack.c.h.b16 %v11181
  %v11276 = vunpack.c.l.b16 %v11182
  %v11277 = vunpack.c.h.b16 %v11182
  %v11278 = vunpack.c.l.b16 %v11183
  %v11279 = vunpack.c.h.b16 %v11183
  %v11280 = vpack.c.b16 %v11220, %v11216
  %v11281 = vpack.c.b16 %v11221, %v11217
  %v11282 = vpack.c.b16 %v11222, %v11218
  %v11283 = vpack.c.b16 %v11223, %v11219
  %v11284 = vpack.c.b16 %v11228, %v11224
  %v11285 = vpack.c.b16 %v11229, %v11225
  %v11286 = vpack.c.b16 %v11230, %v11226
  %v11287 = vpack.c.b16 %v11231, %v11227
  %v11288 = vpack.c.b16 %v11236, %v11232
  %v11289 = vpack.c.b16 %v11237, %v11233
  %v11290 = vpack.c.b16 %v11238, %v11234
  %v11291 = vpack.c.b16 %v11239, %v11235
  %v11292 = vpack.c.b16 %v11244, %v11240
  %v11293 = vpack.c.b16 %v11245, %v11241
  %v11294 = vpack.c.b16 %v11246, %v11242
  %v11295 = vpack.c.b16 %v11247, %v11243
  %v11296 = vpack.c.b16 %v11252, %v11248
  %v11297 = vpack.c.b16 %v11253, %v11249
  %v11298 = vpack.c.b16 %v11254, %v11250
  %v11299 = vpack.c.b16 %v11255, %v11251
  %v11300 = vpack.c.b16 %v11260, %v11256
  %v11301 = vpack.c.b16 %v11261, %v11257
  %v11302 = vpack.c.b16 %v11262, %v11258
  %v11303 = vpack.c.b16 %v11263, %v11259
  %v11304 = vpack.c.b16 %v11268, %v11264
  %v11305 = vpack.c.b16 %v11269, %v11265
  %v11306 = vpack.c.b16 %v11270, %v11266
  %v11307 = vpack.c.b16 %v11271, %v11267
  %v11308 = vpack.c.b16 %v11276, %v11272
  %v11309 = vpack.c.b16 %v11277, %v11273
  %v11310 = vpack.c.b16 %v11278, %v11274
  %v11311 = vpack.c.b16 %v11279, %v11275
  %11344 = vmatprep.subr.bf16.mxu0 %v11309
  %11345 = vmatpush1.bf16.msra.mxu0 %v11308
  %11346 = vmatprep.subr.bf16.mxu0 %v11305
  %11347 = vmatpush1.bf16.msra.mxu0 %v11304
  %11348 = vmatprep.subr.bf16.mxu0 %v11301
  %11349 = vmatpush1.bf16.msra.mxu0 %v11300
  %11350 = vmatprep.subr.bf16.mxu0 %v11297
  %11351 = vmatpush1.bf16.msra.mxu0 %v11296
  %11352 = vmatprep.subr.bf16.mxu0 %v11293
  %11353 = vmatpush1.bf16.msra.mxu0 %v11292
  %11354 = vmatprep.subr.bf16.mxu0 %v11289
  %11355 = vmatpush1.bf16.msra.mxu0 %v11288
  %11356 = vmatprep.subr.bf16.mxu0 %v11285
  %11357 = vmatpush1.bf16.msra.mxu0 %v11284
  %11358 = vmatprep.subr.bf16.mxu0 %v11281
  %11359 = vmatpush1.bf16.msra.mxu0 %v11280
  %11360 = vmatprep.subr.bf16.mxu0 0
  %11361 = vmatpush2.bf16.msra.mxu0 0
  %11362 = vmatprep.subr.bf16.mxu0 0
  %11363 = vmatpush2.bf16.msra.mxu0 0
  %11364 = vmatprep.subr.bf16.mxu0 0
  %11365 = vmatpush2.bf16.msra.mxu0 0
  %11366 = vmatprep.subr.bf16.mxu0 0
  %11367 = vmatpush2.bf16.msra.mxu0 0
  %11368 = vmatprep.subr.bf16.mxu0 0
  %11369 = vmatpush2.bf16.msra.mxu0 0
  %11370 = vmatprep.subr.bf16.mxu0 0
  %11371 = vmatpush2.bf16.msra.mxu0 0
  %11372 = vmatprep.subr.bf16.mxu0 0
  %11373 = vmatpush2.bf16.msra.mxu0 0
  %11374 = vmatprep.subr.bf16.mxu0 0
  %11375 = vmatpush2.bf16.msra.mxu0 0
  %11376 = vmatprep.mubr.bf16.mxu0 0
  %11377 = vmatmul.mubr.bf16.gmra.mxu0 %v11151
  %v11378 = vpop.f32.mrf.mxu0
  %v11379 = vadd.f32 0.0, %v11378
  %v11380 = vpop.f32.mrf.mxu0
  %v11381 = vadd.f32 0.0, %v11380
  %v11382 = vpop.f32.mrf.mxu0
  %v11383 = vpop.f32.mrf.mxu0
  %11384 = vdwg.mxu0
  %11385 = vmatprep.subr.bf16.mxu0 %v11311
  %11386 = vmatpush1.bf16.msra.mxu0 %v11310
  %11387 = vmatprep.subr.bf16.mxu0 %v11307
  %11388 = vmatpush1.bf16.msra.mxu0 %v11306
  %11389 = vmatprep.subr.bf16.mxu0 %v11303
  %11390 = vmatpush1.bf16.msra.mxu0 %v11302
  %11391 = vmatprep.subr.bf16.mxu0 %v11299
  %11392 = vmatpush1.bf16.msra.mxu0 %v11298
  %11393 = vmatprep.subr.bf16.mxu0 %v11295
  %11394 = vmatpush1.bf16.msra.mxu0 %v11294
  %11395 = vmatprep.subr.bf16.mxu0 %v11291
  %11396 = vmatpush1.bf16.msra.mxu0 %v11290
  %11397 = vmatprep.subr.bf16.mxu0 %v11287
  %11398 = vmatpush1.bf16.msra.mxu0 %v11286
  %11399 = vmatprep.subr.bf16.mxu0 %v11283
  %11400 = vmatpush1.bf16.msra.mxu0 %v11282
  %11401 = vmatprep.subr.bf16.mxu0 0
  %11402 = vmatpush2.bf16.msra.mxu0 0
  %11403 = vmatprep.subr.bf16.mxu0 0
  %11404 = vmatpush2.bf16.msra.mxu0 0
  %11405 = vmatprep.subr.bf16.mxu0 0
  %11406 = vmatpush2.bf16.msra.mxu0 0
  %11407 = vmatprep.subr.bf16.mxu0 0
  %11408 = vmatpush2.bf16.msra.mxu0 0
  %11409 = vmatprep.subr.bf16.mxu0 0
  %11410 = vmatpush2.bf16.msra.mxu0 0
  %11411 = vmatprep.subr.bf16.mxu0 0
  %11412 = vmatpush2.bf16.msra.mxu0 0
  %11413 = vmatprep.subr.bf16.mxu0 0
  %11414 = vmatpush2.bf16.msra.mxu0 0
  %11415 = vmatprep.subr.bf16.mxu0 0
  %11416 = vmatpush2.bf16.msra.mxu0 0
  %11417 = vmatprep.mubr.bf16.mxu0 0
  %11418 = vmatmul.mubr.bf16.gmra.mxu0 %v11151
  %v11419 = vpop.f32.mrf.mxu0
  %v11420 = vadd.f32 0.0, %v11419
  %v11421 = vpop.f32.mrf.mxu0
  %v11422 = vadd.f32 0.0, %v11421
  %v11423 = vpop.f32.mrf.mxu0
  %v11424 = vpop.f32.mrf.mxu0
  %11425 = vdwg.mxu0
  %v11426 = vadd.f32 %v11147, %v11379
  %v11427 = vadd.f32 %v11148, %v11381
  %v11428 = vadd.f32 %v11149, %v11420
  %v11429 = vadd.f32 %v11150, %v11422
  %v11430 = vxor.u32 %v11426, 2147483648
  %v11431 = vxor.u32 %v11427, 2147483648
  %v11432 = vxor.u32 %v11428, 2147483648
  %v11433 = vmul.f32 %v11430, 1.442695
  %v11434 = vpow.pop %v11433
  %v11435 = vmul.f32 %v11431, 1.442695
  %v11436 = vpow.pop %v11435
  %v11437 = vmul.f32 %v11432, 1.442695
  %v11438 = vpow.pop %v11437
  %v11439 = vadd.f32 %v11434, 1.0
  %v11440 = vadd.f32 %v11436, 1.0
  %v11441 = vadd.f32 %v11438, 1.0
  %v11442 = vrcp.pop %v11439
  %v11443 = vmul.f32 1.0, %v11442
  %v11444 = vrcp.pop %v11440
  %v11445 = vmul.f32 1.0, %v11444
  %v11446 = vrcp.pop %v11441
  %v11447 = vmul.f32 1.0, %v11446
  %v11448 = vtanh.pop %v11429
  %v11449 = vmul.f32 %v11445, %v11142
  %v11450 = vmul.f32 %v11443, %v11448
  %v11451 = vadd.f32 %v11449, %v11450
  %v11452 = vtanh.pop %v11451
  %v11453 = vmul.f32 %v11447, %v11452
  %s11454 = scalar_lea.vmem %s13, 56
  %11455 = vst [vmem:[%s11454] sm:$0xff] %v11453
  // Predicated region
  $region54: #{aernn_dec_forward.1} parent=0 // pred_check
    _
  $region55: #{aernn_dec_forward.1} parent=0 // pred_check_branch
    %11457 = sbr.rel (0) target = $region57
  $region56: #{aernn_dec_forward.1} parent=0 // pred_region
    _
  $region57: #{aernn_dec_forward.1} parent=0 // pred_fallthru
    _
  // Predicated region
  $region58: #{aernn_dec_forward.1} parent=0 // pred_check
    _
  $region59: #{aernn_dec_forward.1} parent=0 // pred_check_branch
    %11459 = sbr.rel (0) target = $region61
  $region60: #{aernn_dec_forward.1} parent=0 // pred_region
    _
  $region61: #{aernn_dec_forward.1} parent=0 // pred_fallthru
    _

</llo_original>
